<compile_context>
chip_gen: v5e
topology: v5e:2x2
jax: 0.10.0
libtpu: 0.0.40
codegen_flags: <defaults>
</compile_context>

<pallas_src>
import numpy as np
import jax
import jax.numpy as jnp
from jax.experimental import pallas as pl
from jax.experimental.pallas import tpu as pltpu


# ----------------------------------------------------------------------------
# Pallas kernel factory: U decode timesteps per grid iteration.
# Grid = (batch_tiles, time_tiles); h/c carry lives in VMEM scratch.
# ----------------------------------------------------------------------------
def _make_decoder_kernel(num_unroll):
    def kernel(dl_ref, enc_ref, att1_ref, gcls_ref, h0_ref, c0_ref, emb_ref,
               wda_ref, bda_ref, wfa_ref, bfa_ref, wfb_ref, bfb_ref,
               wg_ref, wfc_ref, bfc_ref,
               preds_ref, h_sc, c_sc):
        ti = pl.program_id(1)                       # time-tile index (inner, "arbitrary")
        U = num_unroll
        D = h_sc.shape[-1]

        # init_hidden_state: h0/c0 precomputed in the wrapper, just copy at t==0
        @pl.when(ti == 0)
        def _init():
            h_sc[...] = h0_ref[...]
            c_sc[...] = c0_ref[...]

        enc = enc_ref[...]                          # (TB, P, E)   (compute dtype)
        att1 = att1_ref[...]                        # (TB, P, A)   hoisted enc@W_ea + b_ea
        gates_const = gcls_ref[...]                 # (TB, 4D)     hoisted cls@W_ih_cls + b_ih + b_hh
        dl = dl_ref[...]                            # (TB, 1) int32
        cdt = wg_ref.dtype                          # matmul compute dtype (f32 or bf16)

        h = h_sc[...]
        c = c_sc[...]
        for u in range(U):                          # short static unroll
            t = ti * U + u

            # ---------------- Attention ----------------
            att2 = jnp.dot(h, wda_ref[...],
                           preferred_element_type=jnp.float32) + bda_ref[...]      # (TB, A)
            att = jnp.maximum(att1 + att2[:, None, :], 0.0)                        # relu
            score = jnp.sum(att * wfa_ref[...], axis=-1) + bfa_ref[...]            # (TB, P)
            score = score - jnp.max(score, axis=1, keepdims=True)
            esc = jnp.exp(score)
            inv = pl.reciprocal(jnp.sum(esc, axis=1, keepdims=True), approx=True)
            alpha = esc * inv                                                      # softmax over pixels
            # attention-weighted encoding as a batched matmul (MXU)
            awe = jnp.einsum('bqp,bpe->bqe', alpha[:, None, :].astype(enc.dtype), enc,
                             preferred_element_type=jnp.float32)[:, 0, :]          # (TB, E)

            # gating
            gate = jax.nn.sigmoid(jnp.dot(h, wfb_ref[...],
                                          preferred_element_type=jnp.float32) + bfb_ref[...])
            awe = gate * awe

            # ---------------- LSTM cell (single fused gate matmul) ----------------
            x = jnp.concatenate([emb_ref[u], awe, h], axis=-1).astype(cdt)         # (TB, EMB+E+D)
            gates = jnp.dot(x, wg_ref[...],
                            preferred_element_type=jnp.float32) + gates_const      # (TB, 4D)
            i_g = jax.nn.sigmoid(gates[:, 0:D])
            f_g = jax.nn.sigmoid(gates[:, D:2 * D])
            g_g = jnp.tanh(gates[:, 2 * D:3 * D])
            o_g = jax.nn.sigmoid(gates[:, 3 * D:4 * D])
            c = f_g * c + i_g * g_g
            h = o_g * jnp.tanh(c)

            # ---------------- fc + masked prediction write ----------------
            preds = jnp.dot(h.astype(cdt), wfc_ref[...],
                            preferred_element_type=jnp.float32) + bfc_ref[...]     # (TB, Vp)
            preds_ref[u] = jnp.where(dl > t, preds, 0.0)

        h_sc[...] = h
        c_sc[...] = c

    return kernel


# ----------------------------------------------------------------------------
# Wrapper: sort, gathers, hoisted time-invariant compute, layout, pallas_call.
# ----------------------------------------------------------------------------
def decoder_forward(params, encoder_out, encoded_captions, caption_lengths, class_k,
                    *, unroll=4, batch_tile=None, max_decode_len=None,
                    compute_dtype=jnp.float32):
    p = params
    f32 = jnp.float32

    B = encoder_out.shape[0]
    E = encoder_out.shape[-1]
    enc = encoder_out.reshape(B, -1, E).astype(f32)          # (B, P, E)
    P = enc.shape[1]

    cap = caption_lengths[:, 0]
    sort_ind = jnp.argsort(-cap)                             # stable, descending
    cap_s = cap[sort_ind]
    enc = enc[sort_ind]
    caps = encoded_captions[sort_ind]

    embeddings = p['embedding'][caps]                        # (B, L, EMB)
    # NOTE: torch code does NOT re-sort class_k -> reproduce that behaviour.
    cls0 = p['class_embedding'][class_k][:, 0, :]            # (B, C)

    decode_lengths = (cap_s - 1).astype(jnp.int32)
    if max_decode_len is None:
        T = int(jnp.max(decode_lengths))                     # host sync + per-T recompile
    else:
        T = int(max_decode_len)                              # static -> no sync, no recompile

    D = p['whh'].shape[0]
    A = p['wda'].shape[1]
    EMB = embeddings.shape[-1]
    V = p['wfc'].shape[1]
    Vp = ((V + 127) // 128) * 128                            # lane-dense output vocab

    U = max(1, min(int(unroll), T))
    T_pad = ((T + U - 1) // U) * U
    NT = T_pad // U
    TB = B if batch_tile is None else int(batch_tile)
    assert B % TB == 0
    NB = B // TB

    # ---- hoisted time-invariant compute (pure JAX, runs once) ----
    mean_enc = jnp.mean(enc, axis=1)                                        # (B, E)
    h0 = (mean_enc @ p['wh_enc'] + cls0 @ p['wh_cls'] + p['bh']).astype(f32)
    c0 = (mean_enc @ p['wc_enc'] + cls0 @ p['wc_cls'] + p['bc']).astype(f32)
    att1 = (jnp.einsum('bpe,ea->bpa', enc, p['wea']) + p['bea']).astype(f32)        # (B, P, A)
    gates_cls = (cls0 @ p['wih_cls'] + p['bih'] + p['bhh']).astype(f32)             # (B, 4D)
    w_gates = jnp.concatenate([p['wih_emb'], p['wih_enc'], p['whh']], axis=0)       # (EMB+E+D, 4D)
    wfc = jnp.zeros((D, Vp), f32).at[:, :V].set(p['wfc'])
    bfc = jnp.zeros((1, Vp), f32).at[:, :V].set(p['bfc'])

    emb_T = jnp.transpose(embeddings[:, :T, :], (1, 0, 2)).astype(f32)      # (T, B, EMB)
    if T_pad > T:
        emb_T = jnp.concatenate(
            [emb_T, jnp.zeros((T_pad - T, B, EMB), f32)], axis=0)           # (T_pad, B, EMB)
    dl2d = decode_lengths.reshape(B, 1)

    # optional bf16 MXU path (accumulation stays f32 via preferred_element_type)
    cdt = compute_dtype
    enc_k = enc.astype(cdt)
    w_gates = w_gates.astype(cdt)
    wfc = wfc.astype(cdt)

    def build_call(single_buffer_weights):
        def wspec(shape):
            im = lambda b, i, _n=len(shape): (0,) * _n
            if single_buffer_weights and hasattr(pl, "Buffered"):
                # constant-index weights: no benefit from double-buffering
                return pl.BlockSpec(shape, im, pipeline_mode=pl.Buffered(1))
            return pl.BlockSpec(shape, im)

        def bspec(shape):
            return pl.BlockSpec(shape, lambda b, i, _n=len(shape): (b,) + (0,) * (_n - 1))

        in_specs = [
            bspec((TB, 1)),                                  # decode lengths
            bspec((TB, P, E)),                               # encoder_out (sorted)
            bspec((TB, P, A)),                               # hoisted att1
            bspec((TB, 4 * D)),                              # hoisted cls gate contribution + biases
            bspec((TB, D)),                                  # h0
            bspec((TB, D)),                                  # c0
            pl.BlockSpec((U, TB, EMB), lambda b, i: (i, b, 0)),   # word embeddings, time-major
            wspec((D, A)), wspec((1, A)),                    # decoder_att
            wspec((1, A)), wspec((1, 1)),                    # full_att
            wspec((D, E)), wspec((1, E)),                    # f_beta
            wspec((EMB + E + D, 4 * D)),                     # fused [W_ih_emb; W_ih_enc; W_hh]
            wspec((D, Vp)), wspec((1, Vp)),                  # fc (vocab padded lane-dense)
        ]
        grid_spec = pltpu.PrefetchScalarGridSpec(
            num_scalar_prefetch=0,
            grid=(NB, NT),
            in_specs=in_specs,
            out_specs=pl.BlockSpec((U, TB, Vp), lambda b, i: (i, b, 0)),
            scratch_shapes=[pltpu.VMEM((TB, D), jnp.float32),
                            pltpu.VMEM((TB, D), jnp.float32)],
        )
        return pl.pallas_call(
            _make_decoder_kernel(U),
            out_shape=jax.ShapeDtypeStruct((T_pad, B, Vp), jnp.float32),
            grid_spec=grid_spec,
            compiler_params=pltpu.CompilerParams(
                dimension_semantics=("parallel", "arbitrary"),
                vmem_limit_bytes=32 * 1024 * 1024),
        )

    args = (dl2d, enc_k, att1, gates_cls, h0, c0, emb_T,
            p['wda'], p['bda'], p['wfa'], p['bfa'], p['wfb'], p['bfb'],
            w_gates, wfc, bfc)
    try:
        preds_T = build_call(True)(*args)
        preds_T = jax.block_until_ready(preds_T)
    except Exception:
        # pl.Buffered(1) (single-buffered resident weights) not supported on this
        # jax version -> fall back to default double-buffered BlockSpecs.
        preds_T = build_call(False)(*args)

    predictions = jnp.transpose(preds_T, (1, 0, 2))[:, :T, :V]      # (B, T, V)
    return predictions, caps, decode_lengths, sort_ind


# ----------------------------------------------------------------------------
# Deterministic parameter init (weights pre-transposed to (in, out); LSTM and
# init_h / init_c weights split along the concatenated input dimension).
# ----------------------------------------------------------------------------
def init_params(key, A, EMB, D, V, E, C=512, n_classes=200):
    ks = iter(jax.random.split(key, 40))

    def u(shape, lim):
        return jax.random.uniform(next(ks), shape, jnp.float32, -lim, lim)

    p = {}
    p['embedding'] = u((V, EMB), 0.1)
    p['class_embedding'] = u((n_classes, C), 0.1)
    # Attention
    p['wea'] = u((E, A), 1.0 / np.sqrt(E)); p['bea'] = u((1, A), 1.0 / np.sqrt(E))
    p['wda'] = u((D, A), 1.0 / np.sqrt(D)); p['bda'] = u((1, A), 1.0 / np.sqrt(D))
    p['wfa'] = u((1, A), 1.0 / np.sqrt(A)); p['bfa'] = u((1, 1), 1.0 / np.sqrt(A))
    # init_h / init_c (input dim = E + C)
    lim = 1.0 / np.sqrt(E + C)
    p['wh_enc'] = u((E, D), lim); p['wh_cls'] = u((C, D), lim); p['bh'] = u((1, D), lim)
    p['wc_enc'] = u((E, D), lim); p['wc_cls'] = u((C, D), lim); p['bc'] = u((1, D), lim)
    # f_beta
    p['wfb'] = u((D, E), 1.0 / np.sqrt(D)); p['bfb'] = u((1, E), 1.0 / np.sqrt(D))
    # LSTMCell (input dim = EMB + E + C), gate order [i, f, g, o]
    lim = 1.0 / np.sqrt(D)
    p['wih_emb'] = u((EMB, 4 * D), lim)
    p['wih_enc'] = u((E, 4 * D), lim)
    p['wih_cls'] = u((C, 4 * D), lim)
    p['bih'] = u((1, 4 * D), lim)
    p['whh'] = u((D, 4 * D), lim)
    p['bhh'] = u((1, 4 * D), lim)
    # fc
    p['wfc'] = u((D, V), 0.1)
    p['bfc'] = jnp.zeros((1, V), jnp.float32)
    return p


# ----------------------------------------------------------------------------
# NumPy reference mirroring the PyTorch forward exactly (shrinking batch).
# ----------------------------------------------------------------------------
def reference_forward(params, encoder_out, encoded_captions, caption_lengths, class_k):
    def sigmoid(x):
        return 1.0 / (1.0 + np.exp(-x))

    pn = {k: np.asarray(v, np.float32) for k, v in params.items()}
    enc_out = np.asarray(encoder_out, np.float32)
    caps_in = np.asarray(encoded_captions)
    cl = np.asarray(caption_lengths)
    ck = np.asarray(class_k)

    B, E = enc_out.shape[0], enc_out.shape[-1]
    enc = enc_out.reshape(B, -1, E)
    cap = cl[:, 0]
    sort_ind = np.argsort(-cap, kind='stable')
    cap_s = cap[sort_ind]
    enc = enc[sort_ind]
    caps = caps_in[sort_ind]
    emb = pn['embedding'][caps]
    cls = pn['class_embedding'][ck][:, 0, :]          # not re-sorted (as in torch code)

    mean_enc = enc.mean(axis=1)
    h = mean_enc @ pn['wh_enc'] + cls @ pn['wh_cls'] + pn['bh']
    c = mean_enc @ pn['wc_enc'] + cls @ pn['wc_cls'] + pn['bc']

    dl = cap_s - 1
    T = int(dl.max())
    D = h.shape[1]
    V = pn['wfc'].shape[1]
    preds_all = np.zeros((B, T, V), np.float32)

    for t in range(T):
        bt = int(np.sum(dl > t))
        e_a, h_a, c_a, cls_a = enc[:bt], h[:bt], c[:bt], cls[:bt]
        att1 = e_a @ pn['wea'] + pn['bea']
        att2 = h_a @ pn['wda'] + pn['bda']
        att = np.maximum(att1 + att2[:, None, :], 0.0)
        score = (att * pn['wfa']).sum(-1) + pn['bfa'][0, 0]
        score = score - score.max(axis=1, keepdims=True)
        ex = np.exp(score)
        alpha = ex / ex.sum(axis=1, keepdims=True)
        awe = (e_a * alpha[:, :, None]).sum(axis=1)
        gate = sigmoid(h_a @ pn['wfb'] + pn['bfb'])
        awe = gate * awe
        gates = (emb[:bt, t] @ pn['wih_emb'] + awe @ pn['wih_enc'] +
                 cls_a @ pn['wih_cls'] + pn['bih'] +
                 h_a @ pn['whh'] + pn['bhh'])
        i_g = sigmoid(gates[:, :D]); f_g = sigmoid(gates[:, D:2 * D])
        g_g = np.tanh(gates[:, 2 * D:3 * D]); o_g = sigmoid(gates[:, 3 * D:])
        c_new = f_g * c_a + i_g * g_g
        h_new = o_g * np.tanh(c_new)
        h[:bt] = h_new
        c[:bt] = c_new
        preds_all[:bt, t] = h_new @ pn['wfc'] + pn['bfc']
    return preds_all, caps, dl, sort_ind


if __name__ == "__main__":
    # small, forward-consistent shapes
    A, EMB, D, V, E, C = 32, 32, 64, 48, 32, 512
    B, HW, L, K = 4, 2, 8, 2

    key = jax.random.PRNGKey(0)
    kp, k1, k2, k3 = jax.random.split(key, 4)
    params = init_params(kp, A, EMB, D, V, E, C)

    encoder_out = jax.random.normal(k1, (B, HW, HW, E), jnp.float32)
    encoded_captions = jax.random.randint(k2, (B, L), 0, V)
    caption_lengths = jnp.array([[6], [8], [4], [7]], jnp.int32)
    class_k = jax.random.randint(k3, (B, K), 0, 200)

    preds, caps_s, dec_lens, sort_ind = decoder_forward(
        params, encoder_out, encoded_captions, caption_lengths, class_k,
        unroll=4, max_decode_len=L - 1)     # static T: no host sync / per-T recompile
    preds = jax.block_until_ready(preds)

    ref_preds, ref_caps, ref_dl, ref_si = reference_forward(
        params, encoder_out, encoded_captions, caption_lengths, class_k)

    assert preds.shape == ref_preds.shape
    assert np.all(np.isfinite(np.asarray(preds)))
    np.testing.assert_allclose(np.asarray(preds), ref_preds, atol=2e-2, rtol=2e-2)
    assert np.array_equal(np.asarray(caps_s), ref_caps)
    assert np.array_equal(np.asarray(sort_ind), ref_si)
    assert np.array_equal(np.asarray(dec_lens), ref_dl)

    print("KERNEL_OK")
</pallas_src>

<mosaic_0001>
module attributes {stable_mosaic.version = 11 : i64} {
  func.func @kernel(%arg0: i32, %arg1: i32, %arg2: memref<4x1xi32, #tpu.memory_space<vmem>>, %arg3: memref<4x4x32xf32, #tpu.memory_space<vmem>>, %arg4: memref<4x4x32xf32, #tpu.memory_space<vmem>>, %arg5: memref<4x256xf32, #tpu.memory_space<vmem>>, %arg6: memref<4x64xf32, #tpu.memory_space<vmem>>, %arg7: memref<4x64xf32, #tpu.memory_space<vmem>>, %arg8: memref<4x4x32xf32, #tpu.memory_space<vmem>>, %arg9: memref<64x32xf32, #tpu.memory_space<vmem>>, %arg10: memref<1x32xf32, #tpu.memory_space<vmem>>, %arg11: memref<1x32xf32, #tpu.memory_space<vmem>>, %arg12: memref<1x1xf32, #tpu.memory_space<vmem>>, %arg13: memref<64x32xf32, #tpu.memory_space<vmem>>, %arg14: memref<1x32xf32, #tpu.memory_space<vmem>>, %arg15: memref<128x256xf32, #tpu.memory_space<vmem>>, %arg16: memref<64x128xf32, #tpu.memory_space<vmem>>, %arg17: memref<1x128xf32, #tpu.memory_space<vmem>>, %arg18: memref<4x4x128xf32, #tpu.memory_space<vmem>>, %arg19: memref<4x64xf32, #tpu.memory_space<vmem>>, %arg20: memref<4x64xf32, #tpu.memory_space<vmem>>) attributes {dimension_semantics = [#tpu.dimension_semantics<parallel>, #tpu.dimension_semantics<arbitrary>], iteration_bounds = array<i64: 1, 2>, scalar_prefetch = 0 : i64, scratch_operands = 2 : i64, tpu.core_type = #tpu.core_type<tc>, window_params = [{transform_indices = @transform_0, window_bounds = array<i64: 4, 1>}, {transform_indices = @transform_1, window_bounds = array<i64: 4, 4, 32>}, {transform_indices = @transform_2, window_bounds = array<i64: 4, 4, 32>}, {transform_indices = @transform_3, window_bounds = array<i64: 4, 256>}, {transform_indices = @transform_4, window_bounds = array<i64: 4, 64>}, {transform_indices = @transform_5, window_bounds = array<i64: 4, 64>}, {transform_indices = @transform_6, window_bounds = array<i64: 4, 4, 32>}, {pipeline_mode = #tpu.pipeline_mode<synchronous>, transform_indices = @transform_7, window_bounds = array<i64: 64, 32>}, {pipeline_mode = #tpu.pipeline_mode<synchronous>, transform_indices = @transform_8, window_bounds = array<i64: 1, 32>}, {pipeline_mode = #tpu.pipeline_mode<synchronous>, transform_indices = @transform_9, window_bounds = array<i64: 1, 32>}, {pipeline_mode = #tpu.pipeline_mode<synchronous>, transform_indices = @transform_10, window_bounds = array<i64: 1, 1>}, {pipeline_mode = #tpu.pipeline_mode<synchronous>, transform_indices = @transform_11, window_bounds = array<i64: 64, 32>}, {pipeline_mode = #tpu.pipeline_mode<synchronous>, transform_indices = @transform_12, window_bounds = array<i64: 1, 32>}, {pipeline_mode = #tpu.pipeline_mode<synchronous>, transform_indices = @transform_13, window_bounds = array<i64: 128, 256>}, {pipeline_mode = #tpu.pipeline_mode<synchronous>, transform_indices = @transform_14, window_bounds = array<i64: 64, 128>}, {pipeline_mode = #tpu.pipeline_mode<synchronous>, transform_indices = @transform_15, window_bounds = array<i64: 1, 128>}, {transform_indices = @transform_16, window_bounds = array<i64: 4, 4, 128>}]} {
    %c0_i32 = arith.constant 0 : i32
    %0 = arith.cmpi eq, %arg1, %c0_i32 : i32
    %1 = arith.extui %0 : i1 to i32
    %c0_i32_0 = arith.constant 0 : i32
    %2 = arith.cmpi ne, %1, %c0_i32_0 : i32
    scf.if %2 {
      %c0_170 = arith.constant 0 : index
      %c0_171 = arith.constant 0 : index
      %367 = vector.load %arg6[%c0_170, %c0_171] : memref<4x64xf32, #tpu.memory_space<vmem>>, vector<4x64xf32>
      %c0_172 = arith.constant 0 : index
      %c0_173 = arith.constant 0 : index
      %368 = vector.load %arg19[%c0_172, %c0_173] : memref<4x64xf32, #tpu.memory_space<vmem>>, vector<4x64xf32>
      tpu.vector_store %arg19[%c0_172, %c0_173], %367 {strides = array<i32>} : memref<4x64xf32, #tpu.memory_space<vmem>>, vector<4x64xf32>,
      %c0_174 = arith.constant 0 : index
      %c0_175 = arith.constant 0 : index
      %369 = vector.load %arg7[%c0_174, %c0_175] : memref<4x64xf32, #tpu.memory_space<vmem>>, vector<4x64xf32>
      %c0_176 = arith.constant 0 : index
      %c0_177 = arith.constant 0 : index
      %370 = vector.load %arg20[%c0_176, %c0_177] : memref<4x64xf32, #tpu.memory_space<vmem>>, vector<4x64xf32>
      tpu.vector_store %arg20[%c0_176, %c0_177], %369 {strides = array<i32>} : memref<4x64xf32, #tpu.memory_space<vmem>>, vector<4x64xf32>,
    } else {
    }
    %c0 = arith.constant 0 : index
    %c0_1 = arith.constant 0 : index
    %c0_2 = arith.constant 0 : index
    %3 = vector.load %arg3[%c0, %c0_1, %c0_2] : memref<4x4x32xf32, #tpu.memory_space<vmem>>, vector<4x4x32xf32>
    %c0_3 = arith.constant 0 : index
    %c0_4 = arith.constant 0 : index
    %c0_5 = arith.constant 0 : index
    %4 = vector.load %arg4[%c0_3, %c0_4, %c0_5] : memref<4x4x32xf32, #tpu.memory_space<vmem>>, vector<4x4x32xf32>
    %c0_6 = arith.constant 0 : index
    %c0_7 = arith.constant 0 : index
    %5 = vector.load %arg5[%c0_6, %c0_7] : memref<4x256xf32, #tpu.memory_space<vmem>>, vector<4x256xf32>
    %c0_8 = arith.constant 0 : index
    %c0_9 = arith.constant 0 : index
    %6 = vector.load %arg2[%c0_8, %c0_9] : memref<4x1xi32, #tpu.memory_space<vmem>>, vector<4x1xi32>
    %c0_10 = arith.constant 0 : index
    %c0_11 = arith.constant 0 : index
    %7 = vector.load %arg19[%c0_10, %c0_11] : memref<4x64xf32, #tpu.memory_space<vmem>>, vector<4x64xf32>
    %c0_12 = arith.constant 0 : index
    %c0_13 = arith.constant 0 : index
    %8 = vector.load %arg20[%c0_12, %c0_13] : memref<4x64xf32, #tpu.memory_space<vmem>>, vector<4x64xf32>
    %c4_i32 = arith.constant 4 : i32
    %9 = arith.muli %arg1, %c4_i32 : i32
    %c0_i32_14 = arith.constant 0 : i32
    %10 = arith.addi %9, %c0_i32_14 : i32
    %c0_15 = arith.constant 0 : index
    %c0_16 = arith.constant 0 : index
    %11 = vector.load %arg9[%c0_15, %c0_16] : memref<64x32xf32, #tpu.memory_space<vmem>>, vector<64x32xf32>
    %cst = arith.constant dense<0.000000e+00> : vector<4x32xf32>
    %12 = tpu.matmul %7, %11, %cst {dimension_numbers = #tpu.dot_dimension_numbers<[1], [0], [0], [1], [0, 0, 1, 1], [], []>} : vector<4x64xf32>, vector<64x32xf32>, vector<4x32xf32> -> vector<4x32xf32>
    %c0_17 = arith.constant 0 : index
    %c0_18 = arith.constant 0 : index
    %13 = vector.load %arg10[%c0_17, %c0_18] : memref<1x32xf32, #tpu.memory_space<vmem>>, vector<1x32xf32>
    %14 = vector.broadcast %13 : vector<1x32xf32> to vector<4x32xf32>
    %15 = arith.addf %12, %14 : vector<4x32xf32>
    %16 = vector.shape_cast %15 : vector<4x32xf32> to vector<4x1x32xf32>
    %17 = vector.broadcast %16 : vector<4x1x32xf32> to vector<4x4x32xf32>
    %18 = arith.addf %4, %17 : vector<4x4x32xf32>
    %cst_19 = arith.constant 0.000000e+00 : f32
    %19 = vector.broadcast %cst_19 : f32 to vector<4x4x32xf32>
    %20 = arith.maximumf %18, %19 : vector<4x4x32xf32>
    %c0_20 = arith.constant 0 : index
    %c0_21 = arith.constant 0 : index
    %21 = vector.load %arg11[%c0_20, %c0_21] : memref<1x32xf32, #tpu.memory_space<vmem>>, vector<1x32xf32>
    %22 = vector.shape_cast %21 : vector<1x32xf32> to vector<1x1x32xf32>
    %23 = vector.broadcast %22 : vector<1x1x32xf32> to vector<4x4x32xf32>
    %24 = arith.mulf %20, %23 : vector<4x4x32xf32>
    %cst_22 = arith.constant dense<0.000000e+00> : vector<4x4xf32>
    %25 = vector.multi_reduction <add>, %24, %cst_22 [2] : vector<4x4x32xf32> to vector<4x4xf32>
    %c0_23 = arith.constant 0 : index
    %c0_24 = arith.constant 0 : index
    %26 = vector.load %arg12[%c0_23, %c0_24] : memref<1x1xf32, #tpu.memory_space<vmem>>, vector<1x1xf32>
    %27 = vector.broadcast %26 : vector<1x1xf32> to vector<4x4xf32>
    %28 = arith.addf %25, %27 : vector<4x4xf32>
    %cst_25 = arith.constant dense<0xFF800000> : vector<4xf32>
    %29 = vector.multi_reduction <maximumf>, %28, %cst_25 [1] : vector<4x4xf32> to vector<4xf32>
    %30 = vector.shape_cast %29 : vector<4xf32> to vector<4x1xf32>
    %31 = vector.broadcast %30 : vector<4x1xf32> to vector<4x4xf32>
    %32 = arith.subf %28, %31 : vector<4x4xf32>
    %33 = math.exp %32 : vector<4x4xf32>
    %cst_26 = arith.constant dense<0.000000e+00> : vector<4xf32>
    %34 = vector.multi_reduction <add>, %33, %cst_26 [1] : vector<4x4xf32> to vector<4xf32>
    %35 = vector.shape_cast %34 : vector<4xf32> to vector<4x1xf32>
    %36 = tpu.reciprocal %35 {approx = true} : vector<4x1xf32> -> vector<4x1xf32>
    %37 = vector.broadcast %36 : vector<4x1xf32> to vector<4x4xf32>
    %38 = arith.mulf %33, %37 : vector<4x4xf32>
    %39 = vector.shape_cast %38 : vector<4x4xf32> to vector<4x1x4xf32>
    "tpu.trace_start"() <{level = 10 : i32, message = "bqp,bpe->bqe"}> : () -> ()
    %cst_27 = arith.constant dense<0.000000e+00> : vector<4x1x32xf32>
    %40 = tpu.matmul %39, %3, %cst_27 {dimension_numbers = #tpu.dot_dimension_numbers<[2], [1], [1], [2], [0, 0, 0, 1, 1, 2], [0], [0]>} : vector<4x1x4xf32>, vector<4x4x32xf32>, vector<4x1x32xf32> -> vector<4x1x32xf32>
    "tpu.trace_stop"() : () -> ()
    %41 = vector.shape_cast %40 : vector<4x1x32xf32> to vector<4x32xf32>
    %c0_28 = arith.constant 0 : index
    %c0_29 = arith.constant 0 : index
    %42 = vector.load %arg13[%c0_28, %c0_29] : memref<64x32xf32, #tpu.memory_space<vmem>>, vector<64x32xf32>
    %cst_30 = arith.constant dense<0.000000e+00> : vector<4x32xf32>
    %43 = tpu.matmul %7, %42, %cst_30 {dimension_numbers = #tpu.dot_dimension_numbers<[1], [0], [0], [1], [0, 0, 1, 1], [], []>} : vector<4x64xf32>, vector<64x32xf32>, vector<4x32xf32> -> vector<4x32xf32>
    %c0_31 = arith.constant 0 : index
    %c0_32 = arith.constant 0 : index
    %44 = vector.load %arg14[%c0_31, %c0_32] : memref<1x32xf32, #tpu.memory_space<vmem>>, vector<1x32xf32>
    %45 = vector.broadcast %44 : vector<1x32xf32> to vector<4x32xf32>
    %46 = arith.addf %43, %45 : vector<4x32xf32>
    %47 = arith.negf %46 : vector<4x32xf32>
    %48 = math.exp %47 : vector<4x32xf32>
    %cst_33 = arith.constant 1.000000e+00 : f32
    %49 = vector.broadcast %cst_33 : f32 to vector<4x32xf32>
    %50 = arith.addf %49, %48 : vector<4x32xf32>
    %51 = arith.divf %49, %50 : vector<4x32xf32>
    %52 = arith.mulf %51, %41 : vector<4x32xf32>
    %c0_34 = arith.constant 0 : index
    %c0_35 = arith.constant 0 : index
    %c0_36 = arith.constant 0 : index
    %53 = vector.load %arg8[%c0_34, %c0_35, %c0_36] : memref<4x4x32xf32, #tpu.memory_space<vmem>>, vector<1x4x32xf32>
    %54 = vector.shape_cast %53 : vector<1x4x32xf32> to vector<4x32xf32>
    %55 = tpu.concatenate %54, %52, %7 in 1 : vector<4x32xf32>, vector<4x32xf32>, vector<4x64xf32> -> vector<4x128xf32>
    %c0_37 = arith.constant 0 : index
    %c0_38 = arith.constant 0 : index
    %56 = vector.load %arg15[%c0_37, %c0_38] : memref<128x256xf32, #tpu.memory_space<vmem>>, vector<128x256xf32>
    %cst_39 = arith.constant dense<0.000000e+00> : vector<4x256xf32>
    %57 = tpu.matmul %55, %56, %cst_39 {dimension_numbers = #tpu.dot_dimension_numbers<[1], [0], [0], [1], [0, 0, 1, 1], [], []>} : vector<4x128xf32>, vector<128x256xf32>, vector<4x256xf32> -> vector<4x256xf32>
    %58 = arith.addf %57, %5 : vector<4x256xf32>
    %59 = vector.extract_strided_slice %58 {offsets = [0, 0], sizes = [4, 64], strides = [1, 1]} : vector<4x256xf32> to vector<4x64xf32>
    %60 = arith.negf %59 : vector<4x64xf32>
    %61 = math.exp %60 : vector<4x64xf32>
    %cst_40 = arith.constant 1.000000e+00 : f32
    %62 = vector.broadcast %cst_40 : f32 to vector<4x64xf32>
    %63 = arith.addf %62, %61 : vector<4x64xf32>
    %64 = arith.divf %62, %63 : vector<4x64xf32>
    %65 = vector.extract_strided_slice %58 {offsets = [0, 64], sizes = [4, 64], strides = [1, 1]} : vector<4x256xf32> to vector<4x64xf32>
    %66 = arith.negf %65 : vector<4x64xf32>
    %67 = math.exp %66 : vector<4x64xf32>
    %cst_41 = arith.constant 1.000000e+00 : f32
    %68 = vector.broadcast %cst_41 : f32 to vector<4x64xf32>
    %69 = arith.addf %68, %67 : vector<4x64xf32>
    %70 = arith.divf %68, %69 : vector<4x64xf32>
    %71 = vector.extract_strided_slice %58 {offsets = [0, 128], sizes = [4, 64], strides = [1, 1]} : vector<4x256xf32> to vector<4x64xf32>
    %72 = math.tanh %71 : vector<4x64xf32>
    %73 = vector.extract_strided_slice %58 {offsets = [0, 192], sizes = [4, 64], strides = [1, 1]} : vector<4x256xf32> to vector<4x64xf32>
    %74 = arith.negf %73 : vector<4x64xf32>
    %75 = math.exp %74 : vector<4x64xf32>
    %cst_42 = arith.constant 1.000000e+00 : f32
    %76 = vector.broadcast %cst_42 : f32 to vector<4x64xf32>
    %77 = arith.addf %76, %75 : vector<4x64xf32>
    %78 = arith.divf %76, %77 : vector<4x64xf32>
    %79 = arith.mulf %70, %8 : vector<4x64xf32>
    %80 = arith.mulf %64, %72 : vector<4x64xf32>
    %81 = arith.addf %79, %80 : vector<4x64xf32>
    %82 = math.tanh %81 : vector<4x64xf32>
    %83 = arith.mulf %78, %82 : vector<4x64xf32>
    %c0_43 = arith.constant 0 : index
    %c0_44 = arith.constant 0 : index
    %84 = vector.load %arg16[%c0_43, %c0_44] : memref<64x128xf32, #tpu.memory_space<vmem>>, vector<64x128xf32>
    %cst_45 = arith.constant dense<0.000000e+00> : vector<4x128xf32>
    %85 = tpu.matmul %83, %84, %cst_45 {dimension_numbers = #tpu.dot_dimension_numbers<[1], [0], [0], [1], [0, 0, 1, 1], [], []>} : vector<4x64xf32>, vector<64x128xf32>, vector<4x128xf32> -> vector<4x128xf32>
    %c0_46 = arith.constant 0 : index
    %c0_47 = arith.constant 0 : index
    %86 = vector.load %arg17[%c0_46, %c0_47] : memref<1x128xf32, #tpu.memory_space<vmem>>, vector<1x128xf32>
    %87 = vector.broadcast %86 : vector<1x128xf32> to vector<4x128xf32>
    %88 = arith.addf %85, %87 : vector<4x128xf32>
    %89 = vector.broadcast %10 : i32 to vector<4x1xi32>
    %90 = arith.cmpi sgt, %6, %89 : vector<4x1xi32>
    %cst_48 = arith.constant 0.000000e+00 : f32
    %91 = vector.shape_cast %90 : vector<4x1xi1> to vector<4x1xi1>
    %92 = vector.broadcast %91 : vector<4x1xi1> to vector<4x128xi1>
    %93 = vector.broadcast %cst_48 : f32 to vector<4x128xf32>
    %94 = arith.select %92, %88, %93 : vector<4x128xi1>, vector<4x128xf32>
    %c0_49 = arith.constant 0 : index
    %c0_50 = arith.constant 0 : index
    %c0_51 = arith.constant 0 : index
    %95 = vector.load %arg18[%c0_49, %c0_50, %c0_51] : memref<4x4x128xf32, #tpu.memory_space<vmem>>, vector<1x4x128xf32>
    %96 = vector.shape_cast %95 : vector<1x4x128xf32> to vector<4x128xf32>
    %97 = vector.shape_cast %94 : vector<4x128xf32> to vector<1x4x128xf32>
    tpu.vector_store %arg18[%c0_49, %c0_50, %c0_51], %97 {strides = array<i32>} : memref<4x4x128xf32, #tpu.memory_space<vmem>>, vector<1x4x128xf32>,
    %c4_i32_52 = arith.constant 4 : i32
    %98 = arith.muli %arg1, %c4_i32_52 : i32
    %c1_i32 = arith.constant 1 : i32
    %99 = arith.addi %98, %c1_i32 : i32
    %c0_53 = arith.constant 0 : index
    %c0_54 = arith.constant 0 : index
    %100 = vector.load %arg9[%c0_53, %c0_54] : memref<64x32xf32, #tpu.memory_space<vmem>>, vector<64x32xf32>
    %cst_55 = arith.constant dense<0.000000e+00> : vector<4x32xf32>
    %101 = tpu.matmul %83, %100, %cst_55 {dimension_numbers = #tpu.dot_dimension_numbers<[1], [0], [0], [1], [0, 0, 1, 1], [], []>} : vector<4x64xf32>, vector<64x32xf32>, vector<4x32xf32> -> vector<4x32xf32>
    %c0_56 = arith.constant 0 : index
    %c0_57 = arith.constant 0 : index
    %102 = vector.load %arg10[%c0_56, %c0_57] : memref<1x32xf32, #tpu.memory_space<vmem>>, vector<1x32xf32>
    %103 = vector.broadcast %102 : vector<1x32xf32> to vector<4x32xf32>
    %104 = arith.addf %101, %103 : vector<4x32xf32>
    %105 = vector.shape_cast %104 : vector<4x32xf32> to vector<4x1x32xf32>
    %106 = vector.broadcast %105 : vector<4x1x32xf32> to vector<4x4x32xf32>
    %107 = arith.addf %4, %106 : vector<4x4x32xf32>
    %cst_58 = arith.constant 0.000000e+00 : f32
    %108 = vector.broadcast %cst_58 : f32 to vector<4x4x32xf32>
    %109 = arith.maximumf %107, %108 : vector<4x4x32xf32>
    %c0_59 = arith.constant 0 : index
    %c0_60 = arith.constant 0 : index
    %110 = vector.load %arg11[%c0_59, %c0_60] : memref<1x32xf32, #tpu.memory_space<vmem>>, vector<1x32xf32>
    %111 = vector.shape_cast %110 : vector<1x32xf32> to vector<1x1x32xf32>
    %112 = vector.broadcast %111 : vector<1x1x32xf32> to vector<4x4x32xf32>
    %113 = arith.mulf %109, %112 : vector<4x4x32xf32>
    %cst_61 = arith.constant dense<0.000000e+00> : vector<4x4xf32>
    %114 = vector.multi_reduction <add>, %113, %cst_61 [2] : vector<4x4x32xf32> to vector<4x4xf32>
    %c0_62 = arith.constant 0 : index
    %c0_63 = arith.constant 0 : index
    %115 = vector.load %arg12[%c0_62, %c0_63] : memref<1x1xf32, #tpu.memory_space<vmem>>, vector<1x1xf32>
    %116 = vector.broadcast %115 : vector<1x1xf32> to vector<4x4xf32>
    %117 = arith.addf %114, %116 : vector<4x4xf32>
    %cst_64 = arith.constant dense<0xFF800000> : vector<4xf32>
    %118 = vector.multi_reduction <maximumf>, %117, %cst_64 [1] : vector<4x4xf32> to vector<4xf32>
    %119 = vector.shape_cast %118 : vector<4xf32> to vector<4x1xf32>
    %120 = vector.broadcast %119 : vector<4x1xf32> to vector<4x4xf32>
    %121 = arith.subf %117, %120 : vector<4x4xf32>
    %122 = math.exp %121 : vector<4x4xf32>
    %cst_65 = arith.constant dense<0.000000e+00> : vector<4xf32>
    %123 = vector.multi_reduction <add>, %122, %cst_65 [1] : vector<4x4xf32> to vector<4xf32>
    %124 = vector.shape_cast %123 : vector<4xf32> to vector<4x1xf32>
    %125 = tpu.reciprocal %124 {approx = true} : vector<4x1xf32> -> vector<4x1xf32>
    %126 = vector.broadcast %125 : vector<4x1xf32> to vector<4x4xf32>
    %127 = arith.mulf %122, %126 : vector<4x4xf32>
    %128 = vector.shape_cast %127 : vector<4x4xf32> to vector<4x1x4xf32>
    "tpu.trace_start"() <{level = 10 : i32, message = "bqp,bpe->bqe"}> : () -> ()
    %cst_66 = arith.constant dense<0.000000e+00> : vector<4x1x32xf32>
    %129 = tpu.matmul %128, %3, %cst_66 {dimension_numbers = #tpu.dot_dimension_numbers<[2], [1], [1], [2], [0, 0, 0, 1, 1, 2], [0], [0]>} : vector<4x1x4xf32>, vector<4x4x32xf32>, vector<4x1x32xf32> -> vector<4x1x32xf32>
    "tpu.trace_stop"() : () -> ()
    %130 = vector.shape_cast %129 : vector<4x1x32xf32> to vector<4x32xf32>
    %c0_67 = arith.constant 0 : index
    %c0_68 = arith.constant 0 : index
    %131 = vector.load %arg13[%c0_67, %c0_68] : memref<64x32xf32, #tpu.memory_space<vmem>>, vector<64x32xf32>
    %cst_69 = arith.constant dense<0.000000e+00> : vector<4x32xf32>
    %132 = tpu.matmul %83, %131, %cst_69 {dimension_numbers = #tpu.dot_dimension_numbers<[1], [0], [0], [1], [0, 0, 1, 1], [], []>} : vector<4x64xf32>, vector<64x32xf32>, vector<4x32xf32> -> vector<4x32xf32>
    %c0_70 = arith.constant 0 : index
    %c0_71 = arith.constant 0 : index
    %133 = vector.load %arg14[%c0_70, %c0_71] : memref<1x32xf32, #tpu.memory_space<vmem>>, vector<1x32xf32>
    %134 = vector.broadcast %133 : vector<1x32xf32> to vector<4x32xf32>
    %135 = arith.addf %132, %134 : vector<4x32xf32>
    %136 = arith.negf %135 : vector<4x32xf32>
    %137 = math.exp %136 : vector<4x32xf32>
    %cst_72 = arith.constant 1.000000e+00 : f32
    %138 = vector.broadcast %cst_72 : f32 to vector<4x32xf32>
    %139 = arith.addf %138, %137 : vector<4x32xf32>
    %140 = arith.divf %138, %139 : vector<4x32xf32>
    %141 = arith.mulf %140, %130 : vector<4x32xf32>
    %c1 = arith.constant 1 : index
    %c0_73 = arith.constant 0 : index
    %c0_74 = arith.constant 0 : index
    %142 = vector.load %arg8[%c1, %c0_73, %c0_74] : memref<4x4x32xf32, #tpu.memory_space<vmem>>, vector<1x4x32xf32>
    %143 = vector.shape_cast %142 : vector<1x4x32xf32> to vector<4x32xf32>
    %144 = tpu.concatenate %143, %141, %83 in 1 : vector<4x32xf32>, vector<4x32xf32>, vector<4x64xf32> -> vector<4x128xf32>
    %c0_75 = arith.constant 0 : index
    %c0_76 = arith.constant 0 : index
    %145 = vector.load %arg15[%c0_75, %c0_76] : memref<128x256xf32, #tpu.memory_space<vmem>>, vector<128x256xf32>
    %cst_77 = arith.constant dense<0.000000e+00> : vector<4x256xf32>
    %146 = tpu.matmul %144, %145, %cst_77 {dimension_numbers = #tpu.dot_dimension_numbers<[1], [0], [0], [1], [0, 0, 1, 1], [], []>} : vector<4x128xf32>, vector<128x256xf32>, vector<4x256xf32> -> vector<4x256xf32>
    %147 = arith.addf %146, %5 : vector<4x256xf32>
    %148 = vector.extract_strided_slice %147 {offsets = [0, 0], sizes = [4, 64], strides = [1, 1]} : vector<4x256xf32> to vector<4x64xf32>
    %149 = arith.negf %148 : vector<4x64xf32>
    %150 = math.exp %149 : vector<4x64xf32>
    %cst_78 = arith.constant 1.000000e+00 : f32
    %151 = vector.broadcast %cst_78 : f32 to vector<4x64xf32>
    %152 = arith.addf %151, %150 : vector<4x64xf32>
    %153 = arith.divf %151, %152 : vector<4x64xf32>
    %154 = vector.extract_strided_slice %147 {offsets = [0, 64], sizes = [4, 64], strides = [1, 1]} : vector<4x256xf32> to vector<4x64xf32>
    %155 = arith.negf %154 : vector<4x64xf32>
    %156 = math.exp %155 : vector<4x64xf32>
    %cst_79 = arith.constant 1.000000e+00 : f32
    %157 = vector.broadcast %cst_79 : f32 to vector<4x64xf32>
    %158 = arith.addf %157, %156 : vector<4x64xf32>
    %159 = arith.divf %157, %158 : vector<4x64xf32>
    %160 = vector.extract_strided_slice %147 {offsets = [0, 128], sizes = [4, 64], strides = [1, 1]} : vector<4x256xf32> to vector<4x64xf32>
    %161 = math.tanh %160 : vector<4x64xf32>
    %162 = vector.extract_strided_slice %147 {offsets = [0, 192], sizes = [4, 64], strides = [1, 1]} : vector<4x256xf32> to vector<4x64xf32>
    %163 = arith.negf %162 : vector<4x64xf32>
    %164 = math.exp %163 : vector<4x64xf32>
    %cst_80 = arith.constant 1.000000e+00 : f32
    %165 = vector.broadcast %cst_80 : f32 to vector<4x64xf32>
    %166 = arith.addf %165, %164 : vector<4x64xf32>
    %167 = arith.divf %165, %166 : vector<4x64xf32>
    %168 = arith.mulf %159, %81 : vector<4x64xf32>
    %169 = arith.mulf %153, %161 : vector<4x64xf32>
    %170 = arith.addf %168, %169 : vector<4x64xf32>
    %171 = math.tanh %170 : vector<4x64xf32>
    %172 = arith.mulf %167, %171 : vector<4x64xf32>
    %c0_81 = arith.constant 0 : index
    %c0_82 = arith.constant 0 : index
    %173 = vector.load %arg16[%c0_81, %c0_82] : memref<64x128xf32, #tpu.memory_space<vmem>>, vector<64x128xf32>
    %cst_83 = arith.constant dense<0.000000e+00> : vector<4x128xf32>
    %174 = tpu.matmul %172, %173, %cst_83 {dimension_numbers = #tpu.dot_dimension_numbers<[1], [0], [0], [1], [0, 0, 1, 1], [], []>} : vector<4x64xf32>, vector<64x128xf32>, vector<4x128xf32> -> vector<4x128xf32>
    %c0_84 = arith.constant 0 : index
    %c0_85 = arith.constant 0 : index
    %175 = vector.load %arg17[%c0_84, %c0_85] : memref<1x128xf32, #tpu.memory_space<vmem>>, vector<1x128xf32>
    %176 = vector.broadcast %175 : vector<1x128xf32> to vector<4x128xf32>
    %177 = arith.addf %174, %176 : vector<4x128xf32>
    %178 = vector.broadcast %99 : i32 to vector<4x1xi32>
    %179 = arith.cmpi sgt, %6, %178 : vector<4x1xi32>
    %cst_86 = arith.constant 0.000000e+00 : f32
    %180 = vector.shape_cast %179 : vector<4x1xi1> to vector<4x1xi1>
    %181 = vector.broadcast %180 : vector<4x1xi1> to vector<4x128xi1>
    %182 = vector.broadcast %cst_86 : f32 to vector<4x128xf32>
    %183 = arith.select %181, %177, %182 : vector<4x128xi1>, vector<4x128xf32>
    %c1_87 = arith.constant 1 : index
    %c0_88 = arith.constant 0 : index
    %c0_89 = arith.constant 0 : index
    %184 = vector.load %arg18[%c1_87, %c0_88, %c0_89] : memref<4x4x128xf32, #tpu.memory_space<vmem>>, vector<1x4x128xf32>
    %185 = vector.shape_cast %184 : vector<1x4x128xf32> to vector<4x128xf32>
    %186 = vector.shape_cast %183 : vector<4x128xf32> to vector<1x4x128xf32>
    tpu.vector_store %arg18[%c1_87, %c0_88, %c0_89], %186 {strides = array<i32>} : memref<4x4x128xf32, #tpu.memory_space<vmem>>, vector<1x4x128xf32>,
    %c4_i32_90 = arith.constant 4 : i32
    %187 = arith.muli %arg1, %c4_i32_90 : i32
    %c2_i32 = arith.constant 2 : i32
    %188 = arith.addi %187, %c2_i32 : i32
    %c0_91 = arith.constant 0 : index
    %c0_92 = arith.constant 0 : index
    %189 = vector.load %arg9[%c0_91, %c0_92] : memref<64x32xf32, #tpu.memory_space<vmem>>, vector<64x32xf32>
    %cst_93 = arith.constant dense<0.000000e+00> : vector<4x32xf32>
    %190 = tpu.matmul %172, %189, %cst_93 {dimension_numbers = #tpu.dot_dimension_numbers<[1], [0], [0], [1], [0, 0, 1, 1], [], []>} : vector<4x64xf32>, vector<64x32xf32>, vector<4x32xf32> -> vector<4x32xf32>
    %c0_94 = arith.constant 0 : index
    %c0_95 = arith.constant 0 : index
    %191 = vector.load %arg10[%c0_94, %c0_95] : memref<1x32xf32, #tpu.memory_space<vmem>>, vector<1x32xf32>
    %192 = vector.broadcast %191 : vector<1x32xf32> to vector<4x32xf32>
    %193 = arith.addf %190, %192 : vector<4x32xf32>
    %194 = vector.shape_cast %193 : vector<4x32xf32> to vector<4x1x32xf32>
    %195 = vector.broadcast %194 : vector<4x1x32xf32> to vector<4x4x32xf32>
    %196 = arith.addf %4, %195 : vector<4x4x32xf32>
    %cst_96 = arith.constant 0.000000e+00 : f32
    %197 = vector.broadcast %cst_96 : f32 to vector<4x4x32xf32>
    %198 = arith.maximumf %196, %197 : vector<4x4x32xf32>
    %c0_97 = arith.constant 0 : index
    %c0_98 = arith.constant 0 : index
    %199 = vector.load %arg11[%c0_97, %c0_98] : memref<1x32xf32, #tpu.memory_space<vmem>>, vector<1x32xf32>
    %200 = vector.shape_cast %199 : vector<1x32xf32> to vector<1x1x32xf32>
    %201 = vector.broadcast %200 : vector<1x1x32xf32> to vector<4x4x32xf32>
    %202 = arith.mulf %198, %201 : vector<4x4x32xf32>
    %cst_99 = arith.constant dense<0.000000e+00> : vector<4x4xf32>
    %203 = vector.multi_reduction <add>, %202, %cst_99 [2] : vector<4x4x32xf32> to vector<4x4xf32>
    %c0_100 = arith.constant 0 : index
    %c0_101 = arith.constant 0 : index
    %204 = vector.load %arg12[%c0_100, %c0_101] : memref<1x1xf32, #tpu.memory_space<vmem>>, vector<1x1xf32>
    %205 = vector.broadcast %204 : vector<1x1xf32> to vector<4x4xf32>
    %206 = arith.addf %203, %205 : vector<4x4xf32>
    %cst_102 = arith.constant dense<0xFF800000> : vector<4xf32>
    %207 = vector.multi_reduction <maximumf>, %206, %cst_102 [1] : vector<4x4xf32> to vector<4xf32>
    %208 = vector.shape_cast %207 : vector<4xf32> to vector<4x1xf32>
    %209 = vector.broadcast %208 : vector<4x1xf32> to vector<4x4xf32>
    %210 = arith.subf %206, %209 : vector<4x4xf32>
    %211 = math.exp %210 : vector<4x4xf32>
    %cst_103 = arith.constant dense<0.000000e+00> : vector<4xf32>
    %212 = vector.multi_reduction <add>, %211, %cst_103 [1] : vector<4x4xf32> to vector<4xf32>
    %213 = vector.shape_cast %212 : vector<4xf32> to vector<4x1xf32>
    %214 = tpu.reciprocal %213 {approx = true} : vector<4x1xf32> -> vector<4x1xf32>
    %215 = vector.broadcast %214 : vector<4x1xf32> to vector<4x4xf32>
    %216 = arith.mulf %211, %215 : vector<4x4xf32>
    %217 = vector.shape_cast %216 : vector<4x4xf32> to vector<4x1x4xf32>
    "tpu.trace_start"() <{level = 10 : i32, message = "bqp,bpe->bqe"}> : () -> ()
    %cst_104 = arith.constant dense<0.000000e+00> : vector<4x1x32xf32>
    %218 = tpu.matmul %217, %3, %cst_104 {dimension_numbers = #tpu.dot_dimension_numbers<[2], [1], [1], [2], [0, 0, 0, 1, 1, 2], [0], [0]>} : vector<4x1x4xf32>, vector<4x4x32xf32>, vector<4x1x32xf32> -> vector<4x1x32xf32>
    "tpu.trace_stop"() : () -> ()
    %219 = vector.shape_cast %218 : vector<4x1x32xf32> to vector<4x32xf32>
    %c0_105 = arith.constant 0 : index
    %c0_106 = arith.constant 0 : index
    %220 = vector.load %arg13[%c0_105, %c0_106] : memref<64x32xf32, #tpu.memory_space<vmem>>, vector<64x32xf32>
    %cst_107 = arith.constant dense<0.000000e+00> : vector<4x32xf32>
    %221 = tpu.matmul %172, %220, %cst_107 {dimension_numbers = #tpu.dot_dimension_numbers<[1], [0], [0], [1], [0, 0, 1, 1], [], []>} : vector<4x64xf32>, vector<64x32xf32>, vector<4x32xf32> -> vector<4x32xf32>
    %c0_108 = arith.constant 0 : index
    %c0_109 = arith.constant 0 : index
    %222 = vector.load %arg14[%c0_108, %c0_109] : memref<1x32xf32, #tpu.memory_space<vmem>>, vector<1x32xf32>
    %223 = vector.broadcast %222 : vector<1x32xf32> to vector<4x32xf32>
    %224 = arith.addf %221, %223 : vector<4x32xf32>
    %225 = arith.negf %224 : vector<4x32xf32>
    %226 = math.exp %225 : vector<4x32xf32>
    %cst_110 = arith.constant 1.000000e+00 : f32
    %227 = vector.broadcast %cst_110 : f32 to vector<4x32xf32>
    %228 = arith.addf %227, %226 : vector<4x32xf32>
    %229 = arith.divf %227, %228 : vector<4x32xf32>
    %230 = arith.mulf %229, %219 : vector<4x32xf32>
    %c2 = arith.constant 2 : index
    %c0_111 = arith.constant 0 : index
    %c0_112 = arith.constant 0 : index
    %231 = vector.load %arg8[%c2, %c0_111, %c0_112] : memref<4x4x32xf32, #tpu.memory_space<vmem>>, vector<1x4x32xf32>
    %232 = vector.shape_cast %231 : vector<1x4x32xf32> to vector<4x32xf32>
    %233 = tpu.concatenate %232, %230, %172 in 1 : vector<4x32xf32>, vector<4x32xf32>, vector<4x64xf32> -> vector<4x128xf32>
    %c0_113 = arith.constant 0 : index
    %c0_114 = arith.constant 0 : index
    %234 = vector.load %arg15[%c0_113, %c0_114] : memref<128x256xf32, #tpu.memory_space<vmem>>, vector<128x256xf32>
    %cst_115 = arith.constant dense<0.000000e+00> : vector<4x256xf32>
    %235 = tpu.matmul %233, %234, %cst_115 {dimension_numbers = #tpu.dot_dimension_numbers<[1], [0], [0], [1], [0, 0, 1, 1], [], []>} : vector<4x128xf32>, vector<128x256xf32>, vector<4x256xf32> -> vector<4x256xf32>
    %236 = arith.addf %235, %5 : vector<4x256xf32>
    %237 = vector.extract_strided_slice %236 {offsets = [0, 0], sizes = [4, 64], strides = [1, 1]} : vector<4x256xf32> to vector<4x64xf32>
    %238 = arith.negf %237 : vector<4x64xf32>
    %239 = math.exp %238 : vector<4x64xf32>
    %cst_116 = arith.constant 1.000000e+00 : f32
    %240 = vector.broadcast %cst_116 : f32 to vector<4x64xf32>
    %241 = arith.addf %240, %239 : vector<4x64xf32>
    %242 = arith.divf %240, %241 : vector<4x64xf32>
    %243 = vector.extract_strided_slice %236 {offsets = [0, 64], sizes = [4, 64], strides = [1, 1]} : vector<4x256xf32> to vector<4x64xf32>
    %244 = arith.negf %243 : vector<4x64xf32>
    %245 = math.exp %244 : vector<4x64xf32>
    %cst_117 = arith.constant 1.000000e+00 : f32
    %246 = vector.broadcast %cst_117 : f32 to vector<4x64xf32>
    %247 = arith.addf %246, %245 : vector<4x64xf32>
    %248 = arith.divf %246, %247 : vector<4x64xf32>
    %249 = vector.extract_strided_slice %236 {offsets = [0, 128], sizes = [4, 64], strides = [1, 1]} : vector<4x256xf32> to vector<4x64xf32>
    %250 = math.tanh %249 : vector<4x64xf32>
    %251 = vector.extract_strided_slice %236 {offsets = [0, 192], sizes = [4, 64], strides = [1, 1]} : vector<4x256xf32> to vector<4x64xf32>
    %252 = arith.negf %251 : vector<4x64xf32>
    %253 = math.exp %252 : vector<4x64xf32>
    %cst_118 = arith.constant 1.000000e+00 : f32
    %254 = vector.broadcast %cst_118 : f32 to vector<4x64xf32>
    %255 = arith.addf %254, %253 : vector<4x64xf32>
    %256 = arith.divf %254, %255 : vector<4x64xf32>
    %257 = arith.mulf %248, %170 : vector<4x64xf32>
    %258 = arith.mulf %242, %250 : vector<4x64xf32>
    %259 = arith.addf %257, %258 : vector<4x64xf32>
    %260 = math.tanh %259 : vector<4x64xf32>
    %261 = arith.mulf %256, %260 : vector<4x64xf32>
    %c0_119 = arith.constant 0 : index
    %c0_120 = arith.constant 0 : index
    %262 = vector.load %arg16[%c0_119, %c0_120] : memref<64x128xf32, #tpu.memory_space<vmem>>, vector<64x128xf32>
    %cst_121 = arith.constant dense<0.000000e+00> : vector<4x128xf32>
    %263 = tpu.matmul %261, %262, %cst_121 {dimension_numbers = #tpu.dot_dimension_numbers<[1], [0], [0], [1], [0, 0, 1, 1], [], []>} : vector<4x64xf32>, vector<64x128xf32>, vector<4x128xf32> -> vector<4x128xf32>
    %c0_122 = arith.constant 0 : index
    %c0_123 = arith.constant 0 : index
    %264 = vector.load %arg17[%c0_122, %c0_123] : memref<1x128xf32, #tpu.memory_space<vmem>>, vector<1x128xf32>
    %265 = vector.broadcast %264 : vector<1x128xf32> to vector<4x128xf32>
    %266 = arith.addf %263, %265 : vector<4x128xf32>
    %267 = vector.broadcast %188 : i32 to vector<4x1xi32>
    %268 = arith.cmpi sgt, %6, %267 : vector<4x1xi32>
    %cst_124 = arith.constant 0.000000e+00 : f32
    %269 = vector.shape_cast %268 : vector<4x1xi1> to vector<4x1xi1>
    %270 = vector.broadcast %269 : vector<4x1xi1> to vector<4x128xi1>
    %271 = vector.broadcast %cst_124 : f32 to vector<4x128xf32>
    %272 = arith.select %270, %266, %271 : vector<4x128xi1>, vector<4x128xf32>
    %c2_125 = arith.constant 2 : index
    %c0_126 = arith.constant 0 : index
    %c0_127 = arith.constant 0 : index
    %273 = vector.load %arg18[%c2_125, %c0_126, %c0_127] : memref<4x4x128xf32, #tpu.memory_space<vmem>>, vector<1x4x128xf32>
    %274 = vector.shape_cast %273 : vector<1x4x128xf32> to vector<4x128xf32>
    %275 = vector.shape_cast %272 : vector<4x128xf32> to vector<1x4x128xf32>
    tpu.vector_store %arg18[%c2_125, %c0_126, %c0_127], %275 {strides = array<i32>} : memref<4x4x128xf32, #tpu.memory_space<vmem>>, vector<1x4x128xf32>,
    %c4_i32_128 = arith.constant 4 : i32
    %276 = arith.muli %arg1, %c4_i32_128 : i32
    %c3_i32 = arith.constant 3 : i32
    %277 = arith.addi %276, %c3_i32 : i32
    %c0_129 = arith.constant 0 : index
    %c0_130 = arith.constant 0 : index
    %278 = vector.load %arg9[%c0_129, %c0_130] : memref<64x32xf32, #tpu.memory_space<vmem>>, vector<64x32xf32>
    %cst_131 = arith.constant dense<0.000000e+00> : vector<4x32xf32>
    %279 = tpu.matmul %261, %278, %cst_131 {dimension_numbers = #tpu.dot_dimension_numbers<[1], [0], [0], [1], [0, 0, 1, 1], [], []>} : vector<4x64xf32>, vector<64x32xf32>, vector<4x32xf32> -> vector<4x32xf32>
    %c0_132 = arith.constant 0 : index
    %c0_133 = arith.constant 0 : index
    %280 = vector.load %arg10[%c0_132, %c0_133] : memref<1x32xf32, #tpu.memory_space<vmem>>, vector<1x32xf32>
    %281 = vector.broadcast %280 : vector<1x32xf32> to vector<4x32xf32>
    %282 = arith.addf %279, %281 : vector<4x32xf32>
    %283 = vector.shape_cast %282 : vector<4x32xf32> to vector<4x1x32xf32>
    %284 = vector.broadcast %283 : vector<4x1x32xf32> to vector<4x4x32xf32>
    %285 = arith.addf %4, %284 : vector<4x4x32xf32>
    %cst_134 = arith.constant 0.000000e+00 : f32
    %286 = vector.broadcast %cst_134 : f32 to vector<4x4x32xf32>
    %287 = arith.maximumf %285, %286 : vector<4x4x32xf32>
    %c0_135 = arith.constant 0 : index
    %c0_136 = arith.constant 0 : index
    %288 = vector.load %arg11[%c0_135, %c0_136] : memref<1x32xf32, #tpu.memory_space<vmem>>, vector<1x32xf32>
    %289 = vector.shape_cast %288 : vector<1x32xf32> to vector<1x1x32xf32>
    %290 = vector.broadcast %289 : vector<1x1x32xf32> to vector<4x4x32xf32>
    %291 = arith.mulf %287, %290 : vector<4x4x32xf32>
    %cst_137 = arith.constant dense<0.000000e+00> : vector<4x4xf32>
    %292 = vector.multi_reduction <add>, %291, %cst_137 [2] : vector<4x4x32xf32> to vector<4x4xf32>
    %c0_138 = arith.constant 0 : index
    %c0_139 = arith.constant 0 : index
    %293 = vector.load %arg12[%c0_138, %c0_139] : memref<1x1xf32, #tpu.memory_space<vmem>>, vector<1x1xf32>
    %294 = vector.broadcast %293 : vector<1x1xf32> to vector<4x4xf32>
    %295 = arith.addf %292, %294 : vector<4x4xf32>
    %cst_140 = arith.constant dense<0xFF800000> : vector<4xf32>
    %296 = vector.multi_reduction <maximumf>, %295, %cst_140 [1] : vector<4x4xf32> to vector<4xf32>
    %297 = vector.shape_cast %296 : vector<4xf32> to vector<4x1xf32>
    %298 = vector.broadcast %297 : vector<4x1xf32> to vector<4x4xf32>
    %299 = arith.subf %295, %298 : vector<4x4xf32>
    %300 = math.exp %299 : vector<4x4xf32>
    %cst_141 = arith.constant dense<0.000000e+00> : vector<4xf32>
    %301 = vector.multi_reduction <add>, %300, %cst_141 [1] : vector<4x4xf32> to vector<4xf32>
    %302 = vector.shape_cast %301 : vector<4xf32> to vector<4x1xf32>
    %303 = tpu.reciprocal %302 {approx = true} : vector<4x1xf32> -> vector<4x1xf32>
    %304 = vector.broadcast %303 : vector<4x1xf32> to vector<4x4xf32>
    %305 = arith.mulf %300, %304 : vector<4x4xf32>
    %306 = vector.shape_cast %305 : vector<4x4xf32> to vector<4x1x4xf32>
    "tpu.trace_start"() <{level = 10 : i32, message = "bqp,bpe->bqe"}> : () -> ()
    %cst_142 = arith.constant dense<0.000000e+00> : vector<4x1x32xf32>
    %307 = tpu.matmul %306, %3, %cst_142 {dimension_numbers = #tpu.dot_dimension_numbers<[2], [1], [1], [2], [0, 0, 0, 1, 1, 2], [0], [0]>} : vector<4x1x4xf32>, vector<4x4x32xf32>, vector<4x1x32xf32> -> vector<4x1x32xf32>
    "tpu.trace_stop"() : () -> ()
    %308 = vector.shape_cast %307 : vector<4x1x32xf32> to vector<4x32xf32>
    %c0_143 = arith.constant 0 : index
    %c0_144 = arith.constant 0 : index
    %309 = vector.load %arg13[%c0_143, %c0_144] : memref<64x32xf32, #tpu.memory_space<vmem>>, vector<64x32xf32>
    %cst_145 = arith.constant dense<0.000000e+00> : vector<4x32xf32>
    %310 = tpu.matmul %261, %309, %cst_145 {dimension_numbers = #tpu.dot_dimension_numbers<[1], [0], [0], [1], [0, 0, 1, 1], [], []>} : vector<4x64xf32>, vector<64x32xf32>, vector<4x32xf32> -> vector<4x32xf32>
    %c0_146 = arith.constant 0 : index
    %c0_147 = arith.constant 0 : index
    %311 = vector.load %arg14[%c0_146, %c0_147] : memref<1x32xf32, #tpu.memory_space<vmem>>, vector<1x32xf32>
    %312 = vector.broadcast %311 : vector<1x32xf32> to vector<4x32xf32>
    %313 = arith.addf %310, %312 : vector<4x32xf32>
    %314 = arith.negf %313 : vector<4x32xf32>
    %315 = math.exp %314 : vector<4x32xf32>
    %cst_148 = arith.constant 1.000000e+00 : f32
    %316 = vector.broadcast %cst_148 : f32 to vector<4x32xf32>
    %317 = arith.addf %316, %315 : vector<4x32xf32>
    %318 = arith.divf %316, %317 : vector<4x32xf32>
    %319 = arith.mulf %318, %308 : vector<4x32xf32>
    %c3 = arith.constant 3 : index
    %c0_149 = arith.constant 0 : index
    %c0_150 = arith.constant 0 : index
    %320 = vector.load %arg8[%c3, %c0_149, %c0_150] : memref<4x4x32xf32, #tpu.memory_space<vmem>>, vector<1x4x32xf32>
    %321 = vector.shape_cast %320 : vector<1x4x32xf32> to vector<4x32xf32>
    %322 = tpu.concatenate %321, %319, %261 in 1 : vector<4x32xf32>, vector<4x32xf32>, vector<4x64xf32> -> vector<4x128xf32>
    %c0_151 = arith.constant 0 : index
    %c0_152 = arith.constant 0 : index
    %323 = vector.load %arg15[%c0_151, %c0_152] : memref<128x256xf32, #tpu.memory_space<vmem>>, vector<128x256xf32>
    %cst_153 = arith.constant dense<0.000000e+00> : vector<4x256xf32>
    %324 = tpu.matmul %322, %323, %cst_153 {dimension_numbers = #tpu.dot_dimension_numbers<[1], [0], [0], [1], [0, 0, 1, 1], [], []>} : vector<4x128xf32>, vector<128x256xf32>, vector<4x256xf32> -> vector<4x256xf32>
    %325 = arith.addf %324, %5 : vector<4x256xf32>
    %326 = vector.extract_strided_slice %325 {offsets = [0, 0], sizes = [4, 64], strides = [1, 1]} : vector<4x256xf32> to vector<4x64xf32>
    %327 = arith.negf %326 : vector<4x64xf32>
    %328 = math.exp %327 : vector<4x64xf32>
    %cst_154 = arith.constant 1.000000e+00 : f32
    %329 = vector.broadcast %cst_154 : f32 to vector<4x64xf32>
    %330 = arith.addf %329, %328 : vector<4x64xf32>
    %331 = arith.divf %329, %330 : vector<4x64xf32>
    %332 = vector.extract_strided_slice %325 {offsets = [0, 64], sizes = [4, 64], strides = [1, 1]} : vector<4x256xf32> to vector<4x64xf32>
    %333 = arith.negf %332 : vector<4x64xf32>
    %334 = math.exp %333 : vector<4x64xf32>
    %cst_155 = arith.constant 1.000000e+00 : f32
    %335 = vector.broadcast %cst_155 : f32 to vector<4x64xf32>
    %336 = arith.addf %335, %334 : vector<4x64xf32>
    %337 = arith.divf %335, %336 : vector<4x64xf32>
    %338 = vector.extract_strided_slice %325 {offsets = [0, 128], sizes = [4, 64], strides = [1, 1]} : vector<4x256xf32> to vector<4x64xf32>
    %339 = math.tanh %338 : vector<4x64xf32>
    %340 = vector.extract_strided_slice %325 {offsets = [0, 192], sizes = [4, 64], strides = [1, 1]} : vector<4x256xf32> to vector<4x64xf32>
    %341 = arith.negf %340 : vector<4x64xf32>
    %342 = math.exp %341 : vector<4x64xf32>
    %cst_156 = arith.constant 1.000000e+00 : f32
    %343 = vector.broadcast %cst_156 : f32 to vector<4x64xf32>
    %344 = arith.addf %343, %342 : vector<4x64xf32>
    %345 = arith.divf %343, %344 : vector<4x64xf32>
    %346 = arith.mulf %337, %259 : vector<4x64xf32>
    %347 = arith.mulf %331, %339 : vector<4x64xf32>
    %348 = arith.addf %346, %347 : vector<4x64xf32>
    %349 = math.tanh %348 : vector<4x64xf32>
    %350 = arith.mulf %345, %349 : vector<4x64xf32>
    %c0_157 = arith.constant 0 : index
    %c0_158 = arith.constant 0 : index
    %351 = vector.load %arg16[%c0_157, %c0_158] : memref<64x128xf32, #tpu.memory_space<vmem>>, vector<64x128xf32>
    %cst_159 = arith.constant dense<0.000000e+00> : vector<4x128xf32>
    %352 = tpu.matmul %350, %351, %cst_159 {dimension_numbers = #tpu.dot_dimension_numbers<[1], [0], [0], [1], [0, 0, 1, 1], [], []>} : vector<4x64xf32>, vector<64x128xf32>, vector<4x128xf32> -> vector<4x128xf32>
    %c0_160 = arith.constant 0 : index
    %c0_161 = arith.constant 0 : index
    %353 = vector.load %arg17[%c0_160, %c0_161] : memref<1x128xf32, #tpu.memory_space<vmem>>, vector<1x128xf32>
    %354 = vector.broadcast %353 : vector<1x128xf32> to vector<4x128xf32>
    %355 = arith.addf %352, %354 : vector<4x128xf32>
    %356 = vector.broadcast %277 : i32 to vector<4x1xi32>
    %357 = arith.cmpi sgt, %6, %356 : vector<4x1xi32>
    %cst_162 = arith.constant 0.000000e+00 : f32
    %358 = vector.shape_cast %357 : vector<4x1xi1> to vector<4x1xi1>
    %359 = vector.broadcast %358 : vector<4x1xi1> to vector<4x128xi1>
    %360 = vector.broadcast %cst_162 : f32 to vector<4x128xf32>
    %361 = arith.select %359, %355, %360 : vector<4x128xi1>, vector<4x128xf32>
    %c3_163 = arith.constant 3 : index
    %c0_164 = arith.constant 0 : index
    %c0_165 = arith.constant 0 : index
    %362 = vector.load %arg18[%c3_163, %c0_164, %c0_165] : memref<4x4x128xf32, #tpu.memory_space<vmem>>, vector<1x4x128xf32>
    %363 = vector.shape_cast %362 : vector<1x4x128xf32> to vector<4x128xf32>
    %364 = vector.shape_cast %361 : vector<4x128xf32> to vector<1x4x128xf32>
    tpu.vector_store %arg18[%c3_163, %c0_164, %c0_165], %364 {strides = array<i32>} : memref<4x4x128xf32, #tpu.memory_space<vmem>>, vector<1x4x128xf32>,
    %c0_166 = arith.constant 0 : index
    %c0_167 = arith.constant 0 : index
    %365 = vector.load %arg19[%c0_166, %c0_167] : memref<4x64xf32, #tpu.memory_space<vmem>>, vector<4x64xf32>
    tpu.vector_store %arg19[%c0_166, %c0_167], %350 {strides = array<i32>} : memref<4x64xf32, #tpu.memory_space<vmem>>, vector<4x64xf32>,
    %c0_168 = arith.constant 0 : index
    %c0_169 = arith.constant 0 : index
    %366 = vector.load %arg20[%c0_168, %c0_169] : memref<4x64xf32, #tpu.memory_space<vmem>>, vector<4x64xf32>
    tpu.vector_store %arg20[%c0_168, %c0_169], %348 {strides = array<i32>} : memref<4x64xf32, #tpu.memory_space<vmem>>, vector<4x64xf32>,
    return
  }
  func.func @transform_0(%arg0: i32, %arg1: i32) -> (i32, i32) {
    %c0_i32 = arith.constant 0 : i32
    %c0_i32_0 = arith.constant 0 : i32
    return %arg0, %c0_i32 : i32, i32
  }
  func.func @transform_1(%arg0: i32, %arg1: i32) -> (i32, i32, i32) {
    %c0_i32 = arith.constant 0 : i32
    %c0_i32_0 = arith.constant 0 : i32
    %c0_i32_1 = arith.constant 0 : i32
    return %arg0, %c0_i32, %c0_i32_0 : i32, i32, i32
  }
  func.func @transform_2(%arg0: i32, %arg1: i32) -> (i32, i32, i32) {
    %c0_i32 = arith.constant 0 : i32
    %c0_i32_0 = arith.constant 0 : i32
    %c0_i32_1 = arith.constant 0 : i32
    return %arg0, %c0_i32, %c0_i32_0 : i32, i32, i32
  }
  func.func @transform_3(%arg0: i32, %arg1: i32) -> (i32, i32) {
    %c0_i32 = arith.constant 0 : i32
    %c0_i32_0 = arith.constant 0 : i32
    return %arg0, %c0_i32 : i32, i32
  }
  func.func @transform_4(%arg0: i32, %arg1: i32) -> (i32, i32) {
    %c0_i32 = arith.constant 0 : i32
    %c0_i32_0 = arith.constant 0 : i32
    return %arg0, %c0_i32 : i32, i32
  }
  func.func @transform_5(%arg0: i32, %arg1: i32) -> (i32, i32) {
    %c0_i32 = arith.constant 0 : i32
    %c0_i32_0 = arith.constant 0 : i32
    return %arg0, %c0_i32 : i32, i32
  }
  func.func @transform_6(%arg0: i32, %arg1: i32) -> (i32, i32, i32) {
    %c0_i32 = arith.constant 0 : i32
    %c0_i32_0 = arith.constant 0 : i32
    return %arg1, %arg0, %c0_i32 : i32, i32, i32
  }
  func.func @transform_7(%arg0: i32, %arg1: i32) -> (i32, i32) {
    %c0_i32 = arith.constant 0 : i32
    %c0_i32_0 = arith.constant 0 : i32
    %c0_i32_1 = arith.constant 0 : i32
    return %c0_i32, %c0_i32_0 : i32, i32
  }
  func.func @transform_8(%arg0: i32, %arg1: i32) -> (i32, i32) {
    %c0_i32 = arith.constant 0 : i32
    %c0_i32_0 = arith.constant 0 : i32
    %c0_i32_1 = arith.constant 0 : i32
    return %c0_i32, %c0_i32_0 : i32, i32
  }
  func.func @transform_9(%arg0: i32, %arg1: i32) -> (i32, i32) {
    %c0_i32 = arith.constant 0 : i32
    %c0_i32_0 = arith.constant 0 : i32
    %c0_i32_1 = arith.constant 0 : i32
    return %c0_i32, %c0_i32_0 : i32, i32
  }
  func.func @transform_10(%arg0: i32, %arg1: i32) -> (i32, i32) {
    %c0_i32 = arith.constant 0 : i32
    %c0_i32_0 = arith.constant 0 : i32
    %c0_i32_1 = arith.constant 0 : i32
    return %c0_i32, %c0_i32_0 : i32, i32
  }
  func.func @transform_11(%arg0: i32, %arg1: i32) -> (i32, i32) {
    %c0_i32 = arith.constant 0 : i32
    %c0_i32_0 = arith.constant 0 : i32
    %c0_i32_1 = arith.constant 0 : i32
    return %c0_i32, %c0_i32_0 : i32, i32
  }
  func.func @transform_12(%arg0: i32, %arg1: i32) -> (i32, i32) {
    %c0_i32 = arith.constant 0 : i32
    %c0_i32_0 = arith.constant 0 : i32
    %c0_i32_1 = arith.constant 0 : i32
    return %c0_i32, %c0_i32_0 : i32, i32
  }
  func.func @transform_13(%arg0: i32, %arg1: i32) -> (i32, i32) {
    %c0_i32 = arith.constant 0 : i32
    %c0_i32_0 = arith.constant 0 : i32
    %c0_i32_1 = arith.constant 0 : i32
    return %c0_i32, %c0_i32_0 : i32, i32
  }
  func.func @transform_14(%arg0: i32, %arg1: i32) -> (i32, i32) {
    %c0_i32 = arith.constant 0 : i32
    %c0_i32_0 = arith.constant 0 : i32
    %c0_i32_1 = arith.constant 0 : i32
    return %c0_i32, %c0_i32_0 : i32, i32
  }
  func.func @transform_15(%arg0: i32, %arg1: i32) -> (i32, i32) {
    %c0_i32 = arith.constant 0 : i32
    %c0_i32_0 = arith.constant 0 : i32
    %c0_i32_1 = arith.constant 0 : i32
    return %c0_i32, %c0_i32_0 : i32, i32
  }
  func.func @transform_16(%arg0: i32, %arg1: i32) -> (i32, i32, i32) {
    %c0_i32 = arith.constant 0 : i32
    %c0_i32_0 = arith.constant 0 : i32
    return %arg1, %arg0, %c0_i32 : i32, i32, i32
  }
}

module attributes {stable_mosaic.version = 11 : i64} {
  func.func @kernel(%arg0: i32, %arg1: i32, %arg2: memref<4x1xi32, #tpu.memory_space<vmem>>, %arg3: memref<4x4x32xf32, #tpu.memory_space<vmem>>, %arg4: memref<4x4x32xf32, #tpu.memory_space<vmem>>, %arg5: memref<4x256xf32, #tpu.memory_space<vmem>>, %arg6: memref<4x64xf32, #tpu.memory_space<vmem>>, %arg7: memref<4x64xf32, #tpu.memory_space<vmem>>, %arg8: memref<4x4x32xf32, #tpu.memory_space<vmem>>, %arg9: memref<64x32xf32, #tpu.memory_space<vmem>>, %arg10: memref<1x32xf32, #tpu.memory_space<vmem>>, %arg11: memref<1x32xf32, #tpu.memory_space<vmem>>, %arg12: memref<1x1xf32, #tpu.memory_space<vmem>>, %arg13: memref<64x32xf32, #tpu.memory_space<vmem>>, %arg14: memref<1x32xf32, #tpu.memory_space<vmem>>, %arg15: memref<128x256xf32, #tpu.memory_space<vmem>>, %arg16: memref<64x128xf32, #tpu.memory_space<vmem>>, %arg17: memref<1x128xf32, #tpu.memory_space<vmem>>, %arg18: memref<4x4x128xf32, #tpu.memory_space<vmem>>, %arg19: memref<4x64xf32, #tpu.memory_space<vmem>>, %arg20: memref<4x64xf32, #tpu.memory_space<vmem>>) attributes {dimension_semantics = [#tpu.dimension_semantics<parallel>, #tpu.dimension_semantics<arbitrary>], iteration_bounds = array<i64: 1, 2>, scalar_prefetch = 0 : i64, scratch_operands = 2 : i64, tpu.core_type = #tpu.core_type<tc>, window_params = [{transform_indices = @transform_0, window_bounds = array<i64: 4, 1>}, {transform_indices = @transform_1, window_bounds = array<i64: 4, 4, 32>}, {transform_indices = @transform_2, window_bounds = array<i64: 4, 4, 32>}, {transform_indices = @transform_3, window_bounds = array<i64: 4, 256>}, {transform_indices = @transform_4, window_bounds = array<i64: 4, 64>}, {transform_indices = @transform_5, window_bounds = array<i64: 4, 64>}, {transform_indices = @transform_6, window_bounds = array<i64: 4, 4, 32>}, {pipeline_mode = #tpu.pipeline_mode<synchronous>, transform_indices = @transform_7, window_bounds = array<i64: 64, 32>}, {pipeline_mode = #tpu.pipeline_mode<synchronous>, transform_indices = @transform_8, window_bounds = array<i64: 1, 32>}, {pipeline_mode = #tpu.pipeline_mode<synchronous>, transform_indices = @transform_9, window_bounds = array<i64: 1, 32>}, {pipeline_mode = #tpu.pipeline_mode<synchronous>, transform_indices = @transform_10, window_bounds = array<i64: 1, 1>}, {pipeline_mode = #tpu.pipeline_mode<synchronous>, transform_indices = @transform_11, window_bounds = array<i64: 64, 32>}, {pipeline_mode = #tpu.pipeline_mode<synchronous>, transform_indices = @transform_12, window_bounds = array<i64: 1, 32>}, {pipeline_mode = #tpu.pipeline_mode<synchronous>, transform_indices = @transform_13, window_bounds = array<i64: 128, 256>}, {pipeline_mode = #tpu.pipeline_mode<synchronous>, transform_indices = @transform_14, window_bounds = array<i64: 64, 128>}, {pipeline_mode = #tpu.pipeline_mode<synchronous>, transform_indices = @transform_15, window_bounds = array<i64: 1, 128>}, {transform_indices = @transform_16, window_bounds = array<i64: 4, 4, 128>}]} {
    %c0_i32 = arith.constant 0 : i32
    %0 = arith.cmpi eq, %arg1, %c0_i32 : i32
    %1 = arith.extui %0 : i1 to i32
    %c0_i32_0 = arith.constant 0 : i32
    %2 = arith.cmpi ne, %1, %c0_i32_0 : i32
    scf.if %2 {
      %c0_170 = arith.constant 0 : index
      %c0_171 = arith.constant 0 : index
      %367 = vector.load %arg6[%c0_170, %c0_171] : memref<4x64xf32, #tpu.memory_space<vmem>>, vector<4x64xf32>
      %c0_172 = arith.constant 0 : index
      %c0_173 = arith.constant 0 : index
      %368 = vector.load %arg19[%c0_172, %c0_173] : memref<4x64xf32, #tpu.memory_space<vmem>>, vector<4x64xf32>
      tpu.vector_store %arg19[%c0_172, %c0_173], %367 {strides = array<i32>} : memref<4x64xf32, #tpu.memory_space<vmem>>, vector<4x64xf32>,
      %c0_174 = arith.constant 0 : index
      %c0_175 = arith.constant 0 : index
      %369 = vector.load %arg7[%c0_174, %c0_175] : memref<4x64xf32, #tpu.memory_space<vmem>>, vector<4x64xf32>
      %c0_176 = arith.constant 0 : index
      %c0_177 = arith.constant 0 : index
      %370 = vector.load %arg20[%c0_176, %c0_177] : memref<4x64xf32, #tpu.memory_space<vmem>>, vector<4x64xf32>
      tpu.vector_store %arg20[%c0_176, %c0_177], %369 {strides = array<i32>} : memref<4x64xf32, #tpu.memory_space<vmem>>, vector<4x64xf32>,
    } else {
    }
    %c0 = arith.constant 0 : index
    %c0_1 = arith.constant 0 : index
    %c0_2 = arith.constant 0 : index
    %3 = vector.load %arg3[%c0, %c0_1, %c0_2] : memref<4x4x32xf32, #tpu.memory_space<vmem>>, vector<4x4x32xf32>
    %c0_3 = arith.constant 0 : index
    %c0_4 = arith.constant 0 : index
    %c0_5 = arith.constant 0 : index
    %4 = vector.load %arg4[%c0_3, %c0_4, %c0_5] : memref<4x4x32xf32, #tpu.memory_space<vmem>>, vector<4x4x32xf32>
    %c0_6 = arith.constant 0 : index
    %c0_7 = arith.constant 0 : index
    %5 = vector.load %arg5[%c0_6, %c0_7] : memref<4x256xf32, #tpu.memory_space<vmem>>, vector<4x256xf32>
    %c0_8 = arith.constant 0 : index
    %c0_9 = arith.constant 0 : index
    %6 = vector.load %arg2[%c0_8, %c0_9] : memref<4x1xi32, #tpu.memory_space<vmem>>, vector<4x1xi32>
    %c0_10 = arith.constant 0 : index
    %c0_11 = arith.constant 0 : index
    %7 = vector.load %arg19[%c0_10, %c0_11] : memref<4x64xf32, #tpu.memory_space<vmem>>, vector<4x64xf32>
    %c0_12 = arith.constant 0 : index
    %c0_13 = arith.constant 0 : index
    %8 = vector.load %arg20[%c0_12, %c0_13] : memref<4x64xf32, #tpu.memory_space<vmem>>, vector<4x64xf32>
    %c4_i32 = arith.constant 4 : i32
    %9 = arith.muli %arg1, %c4_i32 : i32
    %c0_i32_14 = arith.constant 0 : i32
    %10 = arith.addi %9, %c0_i32_14 : i32
    %c0_15 = arith.constant 0 : index
    %c0_16 = arith.constant 0 : index
    %11 = vector.load %arg9[%c0_15, %c0_16] : memref<64x32xf32, #tpu.memory_space<vmem>>, vector<64x32xf32>
    %cst = arith.constant dense<0.000000e+00> : vector<4x32xf32>
    %12 = tpu.matmul %7, %11, %cst {dimension_numbers = #tpu.dot_dimension_numbers<[1], [0], [0], [1], [0, 0, 1, 1], [], []>} : vector<4x64xf32>, vector<64x32xf32>, vector<4x32xf32> -> vector<4x32xf32>
    %c0_17 = arith.constant 0 : index
    %c0_18 = arith.constant 0 : index
    %13 = vector.load %arg10[%c0_17, %c0_18] : memref<1x32xf32, #tpu.memory_space<vmem>>, vector<1x32xf32>
    %14 = vector.broadcast %13 : vector<1x32xf32> to vector<4x32xf32>
    %15 = arith.addf %12, %14 : vector<4x32xf32>
    %16 = vector.shape_cast %15 : vector<4x32xf32> to vector<4x1x32xf32>
    %17 = vector.broadcast %16 : vector<4x1x32xf32> to vector<4x4x32xf32>
    %18 = arith.addf %4, %17 : vector<4x4x32xf32>
    %cst_19 = arith.constant 0.000000e+00 : f32
    %19 = vector.broadcast %cst_19 : f32 to vector<4x4x32xf32>
    %20 = arith.maximumf %18, %19 : vector<4x4x32xf32>
    %c0_20 = arith.constant 0 : index
    %c0_21 = arith.constant 0 : index
    %21 = vector.load %arg11[%c0_20, %c0_21] : memref<1x32xf32, #tpu.memory_space<vmem>>, vector<1x32xf32>
    %22 = vector.shape_cast %21 : vector<1x32xf32> to vector<1x1x32xf32>
    %23 = vector.broadcast %22 : vector<1x1x32xf32> to vector<4x4x32xf32>
    %24 = arith.mulf %20, %23 : vector<4x4x32xf32>
    %cst_22 = arith.constant dense<0.000000e+00> : vector<4x4xf32>
    %25 = vector.multi_reduction <add>, %24, %cst_22 [2] : vector<4x4x32xf32> to vector<4x4xf32>
    %c0_23 = arith.constant 0 : index
    %c0_24 = arith.constant 0 : index
    %26 = vector.load %arg12[%c0_23, %c0_24] : memref<1x1xf32, #tpu.memory_space<vmem>>, vector<1x1xf32>
    %27 = vector.broadcast %26 : vector<1x1xf32> to vector<4x4xf32>
    %28 = arith.addf %25, %27 : vector<4x4xf32>
    %cst_25 = arith.constant dense<0xFF800000> : vector<4xf32>
    %29 = vector.multi_reduction <maximumf>, %28, %cst_25 [1] : vector<4x4xf32> to vector<4xf32>
    %30 = vector.shape_cast %29 : vector<4xf32> to vector<4x1xf32>
    %31 = vector.broadcast %30 : vector<4x1xf32> to vector<4x4xf32>
    %32 = arith.subf %28, %31 : vector<4x4xf32>
    %33 = math.exp %32 : vector<4x4xf32>
    %cst_26 = arith.constant dense<0.000000e+00> : vector<4xf32>
    %34 = vector.multi_reduction <add>, %33, %cst_26 [1] : vector<4x4xf32> to vector<4xf32>
    %35 = vector.shape_cast %34 : vector<4xf32> to vector<4x1xf32>
    %36 = tpu.reciprocal %35 {approx = true} : vector<4x1xf32> -> vector<4x1xf32>
    %37 = vector.broadcast %36 : vector<4x1xf32> to vector<4x4xf32>
    %38 = arith.mulf %33, %37 : vector<4x4xf32>
    %39 = vector.shape_cast %38 : vector<4x4xf32> to vector<4x1x4xf32>
    "tpu.trace_start"() <{level = 10 : i32, message = "bqp,bpe->bqe"}> : () -> ()
    %cst_27 = arith.constant dense<0.000000e+00> : vector<4x1x32xf32>
    %40 = tpu.matmul %39, %3, %cst_27 {dimension_numbers = #tpu.dot_dimension_numbers<[2], [1], [1], [2], [0, 0, 0, 1, 1, 2], [0], [0]>} : vector<4x1x4xf32>, vector<4x4x32xf32>, vector<4x1x32xf32> -> vector<4x1x32xf32>
    "tpu.trace_stop"() : () -> ()
    %41 = vector.shape_cast %40 : vector<4x1x32xf32> to vector<4x32xf32>
    %c0_28 = arith.constant 0 : index
    %c0_29 = arith.constant 0 : index
    %42 = vector.load %arg13[%c0_28, %c0_29] : memref<64x32xf32, #tpu.memory_space<vmem>>, vector<64x32xf32>
    %cst_30 = arith.constant dense<0.000000e+00> : vector<4x32xf32>
    %43 = tpu.matmul %7, %42, %cst_30 {dimension_numbers = #tpu.dot_dimension_numbers<[1], [0], [0], [1], [0, 0, 1, 1], [], []>} : vector<4x64xf32>, vector<64x32xf32>, vector<4x32xf32> -> vector<4x32xf32>
    %c0_31 = arith.constant 0 : index
    %c0_32 = arith.constant 0 : index
    %44 = vector.load %arg14[%c0_31, %c0_32] : memref<1x32xf32, #tpu.memory_space<vmem>>, vector<1x32xf32>
    %45 = vector.broadcast %44 : vector<1x32xf32> to vector<4x32xf32>
    %46 = arith.addf %43, %45 : vector<4x32xf32>
    %47 = arith.negf %46 : vector<4x32xf32>
    %48 = math.exp %47 : vector<4x32xf32>
    %cst_33 = arith.constant 1.000000e+00 : f32
    %49 = vector.broadcast %cst_33 : f32 to vector<4x32xf32>
    %50 = arith.addf %49, %48 : vector<4x32xf32>
    %51 = arith.divf %49, %50 : vector<4x32xf32>
    %52 = arith.mulf %51, %41 : vector<4x32xf32>
    %c0_34 = arith.constant 0 : index
    %c0_35 = arith.constant 0 : index
    %c0_36 = arith.constant 0 : index
    %53 = vector.load %arg8[%c0_34, %c0_35, %c0_36] : memref<4x4x32xf32, #tpu.memory_space<vmem>>, vector<1x4x32xf32>
    %54 = vector.shape_cast %53 : vector<1x4x32xf32> to vector<4x32xf32>
    %55 = tpu.concatenate %54, %52, %7 in 1 : vector<4x32xf32>, vector<4x32xf32>, vector<4x64xf32> -> vector<4x128xf32>
    %c0_37 = arith.constant 0 : index
    %c0_38 = arith.constant 0 : index
    %56 = vector.load %arg15[%c0_37, %c0_38] : memref<128x256xf32, #tpu.memory_space<vmem>>, vector<128x256xf32>
    %cst_39 = arith.constant dense<0.000000e+00> : vector<4x256xf32>
    %57 = tpu.matmul %55, %56, %cst_39 {dimension_numbers = #tpu.dot_dimension_numbers<[1], [0], [0], [1], [0, 0, 1, 1], [], []>} : vector<4x128xf32>, vector<128x256xf32>, vector<4x256xf32> -> vector<4x256xf32>
    %58 = arith.addf %57, %5 : vector<4x256xf32>
    %59 = vector.extract_strided_slice %58 {offsets = [0, 0], sizes = [4, 64], strides = [1, 1]} : vector<4x256xf32> to vector<4x64xf32>
    %60 = arith.negf %59 : vector<4x64xf32>
    %61 = math.exp %60 : vector<4x64xf32>
    %cst_40 = arith.constant 1.000000e+00 : f32
    %62 = vector.broadcast %cst_40 : f32 to vector<4x64xf32>
    %63 = arith.addf %62, %61 : vector<4x64xf32>
    %64 = arith.divf %62, %63 : vector<4x64xf32>
    %65 = vector.extract_strided_slice %58 {offsets = [0, 64], sizes = [4, 64], strides = [1, 1]} : vector<4x256xf32> to vector<4x64xf32>
    %66 = arith.negf %65 : vector<4x64xf32>
    %67 = math.exp %66 : vector<4x64xf32>
    %cst_41 = arith.constant 1.000000e+00 : f32
    %68 = vector.broadcast %cst_41 : f32 to vector<4x64xf32>
    %69 = arith.addf %68, %67 : vector<4x64xf32>
    %70 = arith.divf %68, %69 : vector<4x64xf32>
    %71 = vector.extract_strided_slice %58 {offsets = [0, 128], sizes = [4, 64], strides = [1, 1]} : vector<4x256xf32> to vector<4x64xf32>
    %72 = math.tanh %71 : vector<4x64xf32>
    %73 = vector.extract_strided_slice %58 {offsets = [0, 192], sizes = [4, 64], strides = [1, 1]} : vector<4x256xf32> to vector<4x64xf32>
    %74 = arith.negf %73 : vector<4x64xf32>
    %75 = math.exp %74 : vector<4x64xf32>
    %cst_42 = arith.constant 1.000000e+00 : f32
    %76 = vector.broadcast %cst_42 : f32 to vector<4x64xf32>
    %77 = arith.addf %76, %75 : vector<4x64xf32>
    %78 = arith.divf %76, %77 : vector<4x64xf32>
    %79 = arith.mulf %70, %8 : vector<4x64xf32>
    %80 = arith.mulf %64, %72 : vector<4x64xf32>
    %81 = arith.addf %79, %80 : vector<4x64xf32>
    %82 = math.tanh %81 : vector<4x64xf32>
    %83 = arith.mulf %78, %82 : vector<4x64xf32>
    %c0_43 = arith.constant 0 : index
    %c0_44 = arith.constant 0 : index
    %84 = vector.load %arg16[%c0_43, %c0_44] : memref<64x128xf32, #tpu.memory_space<vmem>>, vector<64x128xf32>
    %cst_45 = arith.constant dense<0.000000e+00> : vector<4x128xf32>
    %85 = tpu.matmul %83, %84, %cst_45 {dimension_numbers = #tpu.dot_dimension_numbers<[1], [0], [0], [1], [0, 0, 1, 1], [], []>} : vector<4x64xf32>, vector<64x128xf32>, vector<4x128xf32> -> vector<4x128xf32>
    %c0_46 = arith.constant 0 : index
    %c0_47 = arith.constant 0 : index
    %86 = vector.load %arg17[%c0_46, %c0_47] : memref<1x128xf32, #tpu.memory_space<vmem>>, vector<1x128xf32>
    %87 = vector.broadcast %86 : vector<1x128xf32> to vector<4x128xf32>
    %88 = arith.addf %85, %87 : vector<4x128xf32>
    %89 = vector.broadcast %10 : i32 to vector<4x1xi32>
    %90 = arith.cmpi sgt, %6, %89 : vector<4x1xi32>
    %cst_48 = arith.constant 0.000000e+00 : f32
    %91 = vector.shape_cast %90 : vector<4x1xi1> to vector<4x1xi1>
    %92 = vector.broadcast %91 : vector<4x1xi1> to vector<4x128xi1>
    %93 = vector.broadcast %cst_48 : f32 to vector<4x128xf32>
    %94 = arith.select %92, %88, %93 : vector<4x128xi1>, vector<4x128xf32>
    %c0_49 = arith.constant 0 : index
    %c0_50 = arith.constant 0 : index
    %c0_51 = arith.constant 0 : index
    %95 = vector.load %arg18[%c0_49, %c0_50, %c0_51] : memref<4x4x128xf32, #tpu.memory_space<vmem>>, vector<1x4x128xf32>
    %96 = vector.shape_cast %95 : vector<1x4x128xf32> to vector<4x128xf32>
    %97 = vector.shape_cast %94 : vector<4x128xf32> to vector<1x4x128xf32>
    tpu.vector_store %arg18[%c0_49, %c0_50, %c0_51], %97 {strides = array<i32>} : memref<4x4x128xf32, #tpu.memory_space<vmem>>, vector<1x4x128xf32>,
    %c4_i32_52 = arith.constant 4 : i32
    %98 = arith.muli %arg1, %c4_i32_52 : i32
    %c1_i32 = arith.constant 1 : i32
    %99 = arith.addi %98, %c1_i32 : i32
    %c0_53 = arith.constant 0 : index
    %c0_54 = arith.constant 0 : index
    %100 = vector.load %arg9[%c0_53, %c0_54] : memref<64x32xf32, #tpu.memory_space<vmem>>, vector<64x32xf32>
    %cst_55 = arith.constant dense<0.000000e+00> : vector<4x32xf32>
    %101 = tpu.matmul %83, %100, %cst_55 {dimension_numbers = #tpu.dot_dimension_numbers<[1], [0], [0], [1], [0, 0, 1, 1], [], []>} : vector<4x64xf32>, vector<64x32xf32>, vector<4x32xf32> -> vector<4x32xf32>
    %c0_56 = arith.constant 0 : index
    %c0_57 = arith.constant 0 : index
    %102 = vector.load %arg10[%c0_56, %c0_57] : memref<1x32xf32, #tpu.memory_space<vmem>>, vector<1x32xf32>
    %103 = vector.broadcast %102 : vector<1x32xf32> to vector<4x32xf32>
    %104 = arith.addf %101, %103 : vector<4x32xf32>
    %105 = vector.shape_cast %104 : vector<4x32xf32> to vector<4x1x32xf32>
    %106 = vector.broadcast %105 : vector<4x1x32xf32> to vector<4x4x32xf32>
    %107 = arith.addf %4, %106 : vector<4x4x32xf32>
    %cst_58 = arith.constant 0.000000e+00 : f32
    %108 = vector.broadcast %cst_58 : f32 to vector<4x4x32xf32>
    %109 = arith.maximumf %107, %108 : vector<4x4x32xf32>
    %c0_59 = arith.constant 0 : index
    %c0_60 = arith.constant 0 : index
    %110 = vector.load %arg11[%c0_59, %c0_60] : memref<1x32xf32, #tpu.memory_space<vmem>>, vector<1x32xf32>
    %111 = vector.shape_cast %110 : vector<1x32xf32> to vector<1x1x32xf32>
    %112 = vector.broadcast %111 : vector<1x1x32xf32> to vector<4x4x32xf32>
    %113 = arith.mulf %109, %112 : vector<4x4x32xf32>
    %cst_61 = arith.constant dense<0.000000e+00> : vector<4x4xf32>
    %114 = vector.multi_reduction <add>, %113, %cst_61 [2] : vector<4x4x32xf32> to vector<4x4xf32>
    %c0_62 = arith.constant 0 : index
    %c0_63 = arith.constant 0 : index
    %115 = vector.load %arg12[%c0_62, %c0_63] : memref<1x1xf32, #tpu.memory_space<vmem>>, vector<1x1xf32>
    %116 = vector.broadcast %115 : vector<1x1xf32> to vector<4x4xf32>
    %117 = arith.addf %114, %116 : vector<4x4xf32>
    %cst_64 = arith.constant dense<0xFF800000> : vector<4xf32>
    %118 = vector.multi_reduction <maximumf>, %117, %cst_64 [1] : vector<4x4xf32> to vector<4xf32>
    %119 = vector.shape_cast %118 : vector<4xf32> to vector<4x1xf32>
    %120 = vector.broadcast %119 : vector<4x1xf32> to vector<4x4xf32>
    %121 = arith.subf %117, %120 : vector<4x4xf32>
    %122 = math.exp %121 : vector<4x4xf32>
    %cst_65 = arith.constant dense<0.000000e+00> : vector<4xf32>
    %123 = vector.multi_reduction <add>, %122, %cst_65 [1] : vector<4x4xf32> to vector<4xf32>
    %124 = vector.shape_cast %123 : vector<4xf32> to vector<4x1xf32>
    %125 = tpu.reciprocal %124 {approx = true} : vector<4x1xf32> -> vector<4x1xf32>
    %126 = vector.broadcast %125 : vector<4x1xf32> to vector<4x4xf32>
    %127 = arith.mulf %122, %126 : vector<4x4xf32>
    %128 = vector.shape_cast %127 : vector<4x4xf32> to vector<4x1x4xf32>
    "tpu.trace_start"() <{level = 10 : i32, message = "bqp,bpe->bqe"}> : () -> ()
    %cst_66 = arith.constant dense<0.000000e+00> : vector<4x1x32xf32>
    %129 = tpu.matmul %128, %3, %cst_66 {dimension_numbers = #tpu.dot_dimension_numbers<[2], [1], [1], [2], [0, 0, 0, 1, 1, 2], [0], [0]>} : vector<4x1x4xf32>, vector<4x4x32xf32>, vector<4x1x32xf32> -> vector<4x1x32xf32>
    "tpu.trace_stop"() : () -> ()
    %130 = vector.shape_cast %129 : vector<4x1x32xf32> to vector<4x32xf32>
    %c0_67 = arith.constant 0 : index
    %c0_68 = arith.constant 0 : index
    %131 = vector.load %arg13[%c0_67, %c0_68] : memref<64x32xf32, #tpu.memory_space<vmem>>, vector<64x32xf32>
    %cst_69 = arith.constant dense<0.000000e+00> : vector<4x32xf32>
    %132 = tpu.matmul %83, %131, %cst_69 {dimension_numbers = #tpu.dot_dimension_numbers<[1], [0], [0], [1], [0, 0, 1, 1], [], []>} : vector<4x64xf32>, vector<64x32xf32>, vector<4x32xf32> -> vector<4x32xf32>
    %c0_70 = arith.constant 0 : index
    %c0_71 = arith.constant 0 : index
    %133 = vector.load %arg14[%c0_70, %c0_71] : memref<1x32xf32, #tpu.memory_space<vmem>>, vector<1x32xf32>
    %134 = vector.broadcast %133 : vector<1x32xf32> to vector<4x32xf32>
    %135 = arith.addf %132, %134 : vector<4x32xf32>
    %136 = arith.negf %135 : vector<4x32xf32>
    %137 = math.exp %136 : vector<4x32xf32>
    %cst_72 = arith.constant 1.000000e+00 : f32
    %138 = vector.broadcast %cst_72 : f32 to vector<4x32xf32>
    %139 = arith.addf %138, %137 : vector<4x32xf32>
    %140 = arith.divf %138, %139 : vector<4x32xf32>
    %141 = arith.mulf %140, %130 : vector<4x32xf32>
    %c1 = arith.constant 1 : index
    %c0_73 = arith.constant 0 : index
    %c0_74 = arith.constant 0 : index
    %142 = vector.load %arg8[%c1, %c0_73, %c0_74] : memref<4x4x32xf32, #tpu.memory_space<vmem>>, vector<1x4x32xf32>
    %143 = vector.shape_cast %142 : vector<1x4x32xf32> to vector<4x32xf32>
    %144 = tpu.concatenate %143, %141, %83 in 1 : vector<4x32xf32>, vector<4x32xf32>, vector<4x64xf32> -> vector<4x128xf32>
    %c0_75 = arith.constant 0 : index
    %c0_76 = arith.constant 0 : index
    %145 = vector.load %arg15[%c0_75, %c0_76] : memref<128x256xf32, #tpu.memory_space<vmem>>, vector<128x256xf32>
    %cst_77 = arith.constant dense<0.000000e+00> : vector<4x256xf32>
    %146 = tpu.matmul %144, %145, %cst_77 {dimension_numbers = #tpu.dot_dimension_numbers<[1], [0], [0], [1], [0, 0, 1, 1], [], []>} : vector<4x128xf32>, vector<128x256xf32>, vector<4x256xf32> -> vector<4x256xf32>
    %147 = arith.addf %146, %5 : vector<4x256xf32>
    %148 = vector.extract_strided_slice %147 {offsets = [0, 0], sizes = [4, 64], strides = [1, 1]} : vector<4x256xf32> to vector<4x64xf32>
    %149 = arith.negf %148 : vector<4x64xf32>
    %150 = math.exp %149 : vector<4x64xf32>
    %cst_78 = arith.constant 1.000000e+00 : f32
    %151 = vector.broadcast %cst_78 : f32 to vector<4x64xf32>
    %152 = arith.addf %151, %150 : vector<4x64xf32>
    %153 = arith.divf %151, %152 : vector<4x64xf32>
    %154 = vector.extract_strided_slice %147 {offsets = [0, 64], sizes = [4, 64], strides = [1, 1]} : vector<4x256xf32> to vector<4x64xf32>
    %155 = arith.negf %154 : vector<4x64xf32>
    %156 = math.exp %155 : vector<4x64xf32>
    %cst_79 = arith.constant 1.000000e+00 : f32
    %157 = vector.broadcast %cst_79 : f32 to vector<4x64xf32>
    %158 = arith.addf %157, %156 : vector<4x64xf32>
    %159 = arith.divf %157, %158 : vector<4x64xf32>
    %160 = vector.extract_strided_slice %147 {offsets = [0, 128], sizes = [4, 64], strides = [1, 1]} : vector<4x256xf32> to vector<4x64xf32>
    %161 = math.tanh %160 : vector<4x64xf32>
    %162 = vector.extract_strided_slice %147 {offsets = [0, 192], sizes = [4, 64], strides = [1, 1]} : vector<4x256xf32> to vector<4x64xf32>
    %163 = arith.negf %162 : vector<4x64xf32>
    %164 = math.exp %163 : vector<4x64xf32>
    %cst_80 = arith.constant 1.000000e+00 : f32
    %165 = vector.broadcast %cst_80 : f32 to vector<4x64xf32>
    %166 = arith.addf %165, %164 : vector<4x64xf32>
    %167 = arith.divf %165, %166 : vector<4x64xf32>
    %168 = arith.mulf %159, %81 : vector<4x64xf32>
    %169 = arith.mulf %153, %161 : vector<4x64xf32>
    %170 = arith.addf %168, %169 : vector<4x64xf32>
    %171 = math.tanh %170 : vector<4x64xf32>
    %172 = arith.mulf %167, %171 : vector<4x64xf32>
    %c0_81 = arith.constant 0 : index
    %c0_82 = arith.constant 0 : index
    %173 = vector.load %arg16[%c0_81, %c0_82] : memref<64x128xf32, #tpu.memory_space<vmem>>, vector<64x128xf32>
    %cst_83 = arith.constant dense<0.000000e+00> : vector<4x128xf32>
    %174 = tpu.matmul %172, %173, %cst_83 {dimension_numbers = #tpu.dot_dimension_numbers<[1], [0], [0], [1], [0, 0, 1, 1], [], []>} : vector<4x64xf32>, vector<64x128xf32>, vector<4x128xf32> -> vector<4x128xf32>
    %c0_84 = arith.constant 0 : index
    %c0_85 = arith.constant 0 : index
    %175 = vector.load %arg17[%c0_84, %c0_85] : memref<1x128xf32, #tpu.memory_space<vmem>>, vector<1x128xf32>
    %176 = vector.broadcast %175 : vector<1x128xf32> to vector<4x128xf32>
    %177 = arith.addf %174, %176 : vector<4x128xf32>
    %178 = vector.broadcast %99 : i32 to vector<4x1xi32>
    %179 = arith.cmpi sgt, %6, %178 : vector<4x1xi32>
    %cst_86 = arith.constant 0.000000e+00 : f32
    %180 = vector.shape_cast %179 : vector<4x1xi1> to vector<4x1xi1>
    %181 = vector.broadcast %180 : vector<4x1xi1> to vector<4x128xi1>
    %182 = vector.broadcast %cst_86 : f32 to vector<4x128xf32>
    %183 = arith.select %181, %177, %182 : vector<4x128xi1>, vector<4x128xf32>
    %c1_87 = arith.constant 1 : index
    %c0_88 = arith.constant 0 : index
    %c0_89 = arith.constant 0 : index
    %184 = vector.load %arg18[%c1_87, %c0_88, %c0_89] : memref<4x4x128xf32, #tpu.memory_space<vmem>>, vector<1x4x128xf32>
    %185 = vector.shape_cast %184 : vector<1x4x128xf32> to vector<4x128xf32>
    %186 = vector.shape_cast %183 : vector<4x128xf32> to vector<1x4x128xf32>
    tpu.vector_store %arg18[%c1_87, %c0_88, %c0_89], %186 {strides = array<i32>} : memref<4x4x128xf32, #tpu.memory_space<vmem>>, vector<1x4x128xf32>,
    %c4_i32_90 = arith.constant 4 : i32
    %187 = arith.muli %arg1, %c4_i32_90 : i32
    %c2_i32 = arith.constant 2 : i32
    %188 = arith.addi %187, %c2_i32 : i32
    %c0_91 = arith.constant 0 : index
    %c0_92 = arith.constant 0 : index
    %189 = vector.load %arg9[%c0_91, %c0_92] : memref<64x32xf32, #tpu.memory_space<vmem>>, vector<64x32xf32>
    %cst_93 = arith.constant dense<0.000000e+00> : vector<4x32xf32>
    %190 = tpu.matmul %172, %189, %cst_93 {dimension_numbers = #tpu.dot_dimension_numbers<[1], [0], [0], [1], [0, 0, 1, 1], [], []>} : vector<4x64xf32>, vector<64x32xf32>, vector<4x32xf32> -> vector<4x32xf32>
    %c0_94 = arith.constant 0 : index
    %c0_95 = arith.constant 0 : index
    %191 = vector.load %arg10[%c0_94, %c0_95] : memref<1x32xf32, #tpu.memory_space<vmem>>, vector<1x32xf32>
    %192 = vector.broadcast %191 : vector<1x32xf32> to vector<4x32xf32>
    %193 = arith.addf %190, %192 : vector<4x32xf32>
    %194 = vector.shape_cast %193 : vector<4x32xf32> to vector<4x1x32xf32>
    %195 = vector.broadcast %194 : vector<4x1x32xf32> to vector<4x4x32xf32>
    %196 = arith.addf %4, %195 : vector<4x4x32xf32>
    %cst_96 = arith.constant 0.000000e+00 : f32
    %197 = vector.broadcast %cst_96 : f32 to vector<4x4x32xf32>
    %198 = arith.maximumf %196, %197 : vector<4x4x32xf32>
    %c0_97 = arith.constant 0 : index
    %c0_98 = arith.constant 0 : index
    %199 = vector.load %arg11[%c0_97, %c0_98] : memref<1x32xf32, #tpu.memory_space<vmem>>, vector<1x32xf32>
    %200 = vector.shape_cast %199 : vector<1x32xf32> to vector<1x1x32xf32>
    %201 = vector.broadcast %200 : vector<1x1x32xf32> to vector<4x4x32xf32>
    %202 = arith.mulf %198, %201 : vector<4x4x32xf32>
    %cst_99 = arith.constant dense<0.000000e+00> : vector<4x4xf32>
    %203 = vector.multi_reduction <add>, %202, %cst_99 [2] : vector<4x4x32xf32> to vector<4x4xf32>
    %c0_100 = arith.constant 0 : index
    %c0_101 = arith.constant 0 : index
    %204 = vector.load %arg12[%c0_100, %c0_101] : memref<1x1xf32, #tpu.memory_space<vmem>>, vector<1x1xf32>
    %205 = vector.broadcast %204 : vector<1x1xf32> to vector<4x4xf32>
    %206 = arith.addf %203, %205 : vector<4x4xf32>
    %cst_102 = arith.constant dense<0xFF800000> : vector<4xf32>
    %207 = vector.multi_reduction <maximumf>, %206, %cst_102 [1] : vector<4x4xf32> to vector<4xf32>
    %208 = vector.shape_cast %207 : vector<4xf32> to vector<4x1xf32>
    %209 = vector.broadcast %208 : vector<4x1xf32> to vector<4x4xf32>
    %210 = arith.subf %206, %209 : vector<4x4xf32>
    %211 = math.exp %210 : vector<4x4xf32>
    %cst_103 = arith.constant dense<0.000000e+00> : vector<4xf32>
    %212 = vector.multi_reduction <add>, %211, %cst_103 [1] : vector<4x4xf32> to vector<4xf32>
    %213 = vector.shape_cast %212 : vector<4xf32> to vector<4x1xf32>
    %214 = tpu.reciprocal %213 {approx = true} : vector<4x1xf32> -> vector<4x1xf32>
    %215 = vector.broadcast %214 : vector<4x1xf32> to vector<4x4xf32>
    %216 = arith.mulf %211, %215 : vector<4x4xf32>
    %217 = vector.shape_cast %216 : vector<4x4xf32> to vector<4x1x4xf32>
    "tpu.trace_start"() <{level = 10 : i32, message = "bqp,bpe->bqe"}> : () -> ()
    %cst_104 = arith.constant dense<0.000000e+00> : vector<4x1x32xf32>
    %218 = tpu.matmul %217, %3, %cst_104 {dimension_numbers = #tpu.dot_dimension_numbers<[2], [1], [1], [2], [0, 0, 0, 1, 1, 2], [0], [0]>} : vector<4x1x4xf32>, vector<4x4x32xf32>, vector<4x1x32xf32> -> vector<4x1x32xf32>
    "tpu.trace_stop"() : () -> ()
    %219 = vector.shape_cast %218 : vector<4x1x32xf32> to vector<4x32xf32>
    %c0_105 = arith.constant 0 : index
    %c0_106 = arith.constant 0 : index
    %220 = vector.load %arg13[%c0_105, %c0_106] : memref<64x32xf32, #tpu.memory_space<vmem>>, vector<64x32xf32>
    %cst_107 = arith.constant dense<0.000000e+00> : vector<4x32xf32>
    %221 = tpu.matmul %172, %220, %cst_107 {dimension_numbers = #tpu.dot_dimension_numbers<[1], [0], [0], [1], [0, 0, 1, 1], [], []>} : vector<4x64xf32>, vector<64x32xf32>, vector<4x32xf32> -> vector<4x32xf32>
    %c0_108 = arith.constant 0 : index
    %c0_109 = arith.constant 0 : index
    %222 = vector.load %arg14[%c0_108, %c0_109] : memref<1x32xf32, #tpu.memory_space<vmem>>, vector<1x32xf32>
    %223 = vector.broadcast %222 : vector<1x32xf32> to vector<4x32xf32>
    %224 = arith.addf %221, %223 : vector<4x32xf32>
    %225 = arith.negf %224 : vector<4x32xf32>
    %226 = math.exp %225 : vector<4x32xf32>
    %cst_110 = arith.constant 1.000000e+00 : f32
    %227 = vector.broadcast %cst_110 : f32 to vector<4x32xf32>
    %228 = arith.addf %227, %226 : vector<4x32xf32>
    %229 = arith.divf %227, %228 : vector<4x32xf32>
    %230 = arith.mulf %229, %219 : vector<4x32xf32>
    %c2 = arith.constant 2 : index
    %c0_111 = arith.constant 0 : index
    %c0_112 = arith.constant 0 : index
    %231 = vector.load %arg8[%c2, %c0_111, %c0_112] : memref<4x4x32xf32, #tpu.memory_space<vmem>>, vector<1x4x32xf32>
    %232 = vector.shape_cast %231 : vector<1x4x32xf32> to vector<4x32xf32>
    %233 = tpu.concatenate %232, %230, %172 in 1 : vector<4x32xf32>, vector<4x32xf32>, vector<4x64xf32> -> vector<4x128xf32>
    %c0_113 = arith.constant 0 : index
    %c0_114 = arith.constant 0 : index
    %234 = vector.load %arg15[%c0_113, %c0_114] : memref<128x256xf32, #tpu.memory_space<vmem>>, vector<128x256xf32>
    %cst_115 = arith.constant dense<0.000000e+00> : vector<4x256xf32>
    %235 = tpu.matmul %233, %234, %cst_115 {dimension_numbers = #tpu.dot_dimension_numbers<[1], [0], [0], [1], [0, 0, 1, 1], [], []>} : vector<4x128xf32>, vector<128x256xf32>, vector<4x256xf32> -> vector<4x256xf32>
    %236 = arith.addf %235, %5 : vector<4x256xf32>
    %237 = vector.extract_strided_slice %236 {offsets = [0, 0], sizes = [4, 64], strides = [1, 1]} : vector<4x256xf32> to vector<4x64xf32>
    %238 = arith.negf %237 : vector<4x64xf32>
    %239 = math.exp %238 : vector<4x64xf32>
    %cst_116 = arith.constant 1.000000e+00 : f32
    %240 = vector.broadcast %cst_116 : f32 to vector<4x64xf32>
    %241 = arith.addf %240, %239 : vector<4x64xf32>
    %242 = arith.divf %240, %241 : vector<4x64xf32>
    %243 = vector.extract_strided_slice %236 {offsets = [0, 64], sizes = [4, 64], strides = [1, 1]} : vector<4x256xf32> to vector<4x64xf32>
    %244 = arith.negf %243 : vector<4x64xf32>
    %245 = math.exp %244 : vector<4x64xf32>
    %cst_117 = arith.constant 1.000000e+00 : f32
    %246 = vector.broadcast %cst_117 : f32 to vector<4x64xf32>
    %247 = arith.addf %246, %245 : vector<4x64xf32>
    %248 = arith.divf %246, %247 : vector<4x64xf32>
    %249 = vector.extract_strided_slice %236 {offsets = [0, 128], sizes = [4, 64], strides = [1, 1]} : vector<4x256xf32> to vector<4x64xf32>
    %250 = math.tanh %249 : vector<4x64xf32>
    %251 = vector.extract_strided_slice %236 {offsets = [0, 192], sizes = [4, 64], strides = [1, 1]} : vector<4x256xf32> to vector<4x64xf32>
    %252 = arith.negf %251 : vector<4x64xf32>
    %253 = math.exp %252 : vector<4x64xf32>
    %cst_118 = arith.constant 1.000000e+00 : f32
    %254 = vector.broadcast %cst_118 : f32 to vector<4x64xf32>
    %255 = arith.addf %254, %253 : vector<4x64xf32>
    %256 = arith.divf %254, %255 : vector<4x64xf32>
    %257 = arith.mulf %248, %170 : vector<4x64xf32>
    %258 = arith.mulf %242, %250 : vector<4x64xf32>
    %259 = arith.addf %257, %258 : vector<4x64xf32>
    %260 = math.tanh %259 : vector<4x64xf32>
    %261 = arith.mulf %256, %260 : vector<4x64xf32>
    %c0_119 = arith.constant 0 : index
    %c0_120 = arith.constant 0 : index
    %262 = vector.load %arg16[%c0_119, %c0_120] : memref<64x128xf32, #tpu.memory_space<vmem>>, vector<64x128xf32>
    %cst_121 = arith.constant dense<0.000000e+00> : vector<4x128xf32>
    %263 = tpu.matmul %261, %262, %cst_121 {dimension_numbers = #tpu.dot_dimension_numbers<[1], [0], [0], [1], [0, 0, 1, 1], [], []>} : vector<4x64xf32>, vector<64x128xf32>, vector<4x128xf32> -> vector<4x128xf32>
    %c0_122 = arith.constant 0 : index
    %c0_123 = arith.constant 0 : index
    %264 = vector.load %arg17[%c0_122, %c0_123] : memref<1x128xf32, #tpu.memory_space<vmem>>, vector<1x128xf32>
    %265 = vector.broadcast %264 : vector<1x128xf32> to vector<4x128xf32>
    %266 = arith.addf %263, %265 : vector<4x128xf32>
    %267 = vector.broadcast %188 : i32 to vector<4x1xi32>
    %268 = arith.cmpi sgt, %6, %267 : vector<4x1xi32>
    %cst_124 = arith.constant 0.000000e+00 : f32
    %269 = vector.shape_cast %268 : vector<4x1xi1> to vector<4x1xi1>
    %270 = vector.broadcast %269 : vector<4x1xi1> to vector<4x128xi1>
    %271 = vector.broadcast %cst_124 : f32 to vector<4x128xf32>
    %272 = arith.select %270, %266, %271 : vector<4x128xi1>, vector<4x128xf32>
    %c2_125 = arith.constant 2 : index
    %c0_126 = arith.constant 0 : index
    %c0_127 = arith.constant 0 : index
    %273 = vector.load %arg18[%c2_125, %c0_126, %c0_127] : memref<4x4x128xf32, #tpu.memory_space<vmem>>, vector<1x4x128xf32>
    %274 = vector.shape_cast %273 : vector<1x4x128xf32> to vector<4x128xf32>
    %275 = vector.shape_cast %272 : vector<4x128xf32> to vector<1x4x128xf32>
    tpu.vector_store %arg18[%c2_125, %c0_126, %c0_127], %275 {strides = array<i32>} : memref<4x4x128xf32, #tpu.memory_space<vmem>>, vector<1x4x128xf32>,
    %c4_i32_128 = arith.constant 4 : i32
    %276 = arith.muli %arg1, %c4_i32_128 : i32
    %c3_i32 = arith.constant 3 : i32
    %277 = arith.addi %276, %c3_i32 : i32
    %c0_129 = arith.constant 0 : index
    %c0_130 = arith.constant 0 : index
    %278 = vector.load %arg9[%c0_129, %c0_130] : memref<64x32xf32, #tpu.memory_space<vmem>>, vector<64x32xf32>
    %cst_131 = arith.constant dense<0.000000e+00> : vector<4x32xf32>
    %279 = tpu.matmul %261, %278, %cst_131 {dimension_numbers = #tpu.dot_dimension_numbers<[1], [0], [0], [1], [0, 0, 1, 1], [], []>} : vector<4x64xf32>, vector<64x32xf32>, vector<4x32xf32> -> vector<4x32xf32>
    %c0_132 = arith.constant 0 : index
    %c0_133 = arith.constant 0 : index
    %280 = vector.load %arg10[%c0_132, %c0_133] : memref<1x32xf32, #tpu.memory_space<vmem>>, vector<1x32xf32>
    %281 = vector.broadcast %280 : vector<1x32xf32> to vector<4x32xf32>
    %282 = arith.addf %279, %281 : vector<4x32xf32>
    %283 = vector.shape_cast %282 : vector<4x32xf32> to vector<4x1x32xf32>
    %284 = vector.broadcast %283 : vector<4x1x32xf32> to vector<4x4x32xf32>
    %285 = arith.addf %4, %284 : vector<4x4x32xf32>
    %cst_134 = arith.constant 0.000000e+00 : f32
    %286 = vector.broadcast %cst_134 : f32 to vector<4x4x32xf32>
    %287 = arith.maximumf %285, %286 : vector<4x4x32xf32>
    %c0_135 = arith.constant 0 : index
    %c0_136 = arith.constant 0 : index
    %288 = vector.load %arg11[%c0_135, %c0_136] : memref<1x32xf32, #tpu.memory_space<vmem>>, vector<1x32xf32>
    %289 = vector.shape_cast %288 : vector<1x32xf32> to vector<1x1x32xf32>
    %290 = vector.broadcast %289 : vector<1x1x32xf32> to vector<4x4x32xf32>
    %291 = arith.mulf %287, %290 : vector<4x4x32xf32>
    %cst_137 = arith.constant dense<0.000000e+00> : vector<4x4xf32>
    %292 = vector.multi_reduction <add>, %291, %cst_137 [2] : vector<4x4x32xf32> to vector<4x4xf32>
    %c0_138 = arith.constant 0 : index
    %c0_139 = arith.constant 0 : index
    %293 = vector.load %arg12[%c0_138, %c0_139] : memref<1x1xf32, #tpu.memory_space<vmem>>, vector<1x1xf32>
    %294 = vector.broadcast %293 : vector<1x1xf32> to vector<4x4xf32>
    %295 = arith.addf %292, %294 : vector<4x4xf32>
    %cst_140 = arith.constant dense<0xFF800000> : vector<4xf32>
    %296 = vector.multi_reduction <maximumf>, %295, %cst_140 [1] : vector<4x4xf32> to vector<4xf32>
    %297 = vector.shape_cast %296 : vector<4xf32> to vector<4x1xf32>
    %298 = vector.broadcast %297 : vector<4x1xf32> to vector<4x4xf32>
    %299 = arith.subf %295, %298 : vector<4x4xf32>
    %300 = math.exp %299 : vector<4x4xf32>
    %cst_141 = arith.constant dense<0.000000e+00> : vector<4xf32>
    %301 = vector.multi_reduction <add>, %300, %cst_141 [1] : vector<4x4xf32> to vector<4xf32>
    %302 = vector.shape_cast %301 : vector<4xf32> to vector<4x1xf32>
    %303 = tpu.reciprocal %302 {approx = true} : vector<4x1xf32> -> vector<4x1xf32>
    %304 = vector.broadcast %303 : vector<4x1xf32> to vector<4x4xf32>
    %305 = arith.mulf %300, %304 : vector<4x4xf32>
    %306 = vector.shape_cast %305 : vector<4x4xf32> to vector<4x1x4xf32>
    "tpu.trace_start"() <{level = 10 : i32, message = "bqp,bpe->bqe"}> : () -> ()
    %cst_142 = arith.constant dense<0.000000e+00> : vector<4x1x32xf32>
    %307 = tpu.matmul %306, %3, %cst_142 {dimension_numbers = #tpu.dot_dimension_numbers<[2], [1], [1], [2], [0, 0, 0, 1, 1, 2], [0], [0]>} : vector<4x1x4xf32>, vector<4x4x32xf32>, vector<4x1x32xf32> -> vector<4x1x32xf32>
    "tpu.trace_stop"() : () -> ()
    %308 = vector.shape_cast %307 : vector<4x1x32xf32> to vector<4x32xf32>
    %c0_143 = arith.constant 0 : index
    %c0_144 = arith.constant 0 : index
    %309 = vector.load %arg13[%c0_143, %c0_144] : memref<64x32xf32, #tpu.memory_space<vmem>>, vector<64x32xf32>
    %cst_145 = arith.constant dense<0.000000e+00> : vector<4x32xf32>
    %310 = tpu.matmul %261, %309, %cst_145 {dimension_numbers = #tpu.dot_dimension_numbers<[1], [0], [0], [1], [0, 0, 1, 1], [], []>} : vector<4x64xf32>, vector<64x32xf32>, vector<4x32xf32> -> vector<4x32xf32>
    %c0_146 = arith.constant 0 : index
    %c0_147 = arith.constant 0 : index
    %311 = vector.load %arg14[%c0_146, %c0_147] : memref<1x32xf32, #tpu.memory_space<vmem>>, vector<1x32xf32>
    %312 = vector.broadcast %311 : vector<1x32xf32> to vector<4x32xf32>
    %313 = arith.addf %310, %312 : vector<4x32xf32>
    %314 = arith.negf %313 : vector<4x32xf32>
    %315 = math.exp %314 : vector<4x32xf32>
    %cst_148 = arith.constant 1.000000e+00 : f32
    %316 = vector.broadcast %cst_148 : f32 to vector<4x32xf32>
    %317 = arith.addf %316, %315 : vector<4x32xf32>
    %318 = arith.divf %316, %317 : vector<4x32xf32>
    %319 = arith.mulf %318, %308 : vector<4x32xf32>
    %c3 = arith.constant 3 : index
    %c0_149 = arith.constant 0 : index
    %c0_150 = arith.constant 0 : index
    %320 = vector.load %arg8[%c3, %c0_149, %c0_150] : memref<4x4x32xf32, #tpu.memory_space<vmem>>, vector<1x4x32xf32>
    %321 = vector.shape_cast %320 : vector<1x4x32xf32> to vector<4x32xf32>
    %322 = tpu.concatenate %321, %319, %261 in 1 : vector<4x32xf32>, vector<4x32xf32>, vector<4x64xf32> -> vector<4x128xf32>
    %c0_151 = arith.constant 0 : index
    %c0_152 = arith.constant 0 : index
    %323 = vector.load %arg15[%c0_151, %c0_152] : memref<128x256xf32, #tpu.memory_space<vmem>>, vector<128x256xf32>
    %cst_153 = arith.constant dense<0.000000e+00> : vector<4x256xf32>
    %324 = tpu.matmul %322, %323, %cst_153 {dimension_numbers = #tpu.dot_dimension_numbers<[1], [0], [0], [1], [0, 0, 1, 1], [], []>} : vector<4x128xf32>, vector<128x256xf32>, vector<4x256xf32> -> vector<4x256xf32>
    %325 = arith.addf %324, %5 : vector<4x256xf32>
    %326 = vector.extract_strided_slice %325 {offsets = [0, 0], sizes = [4, 64], strides = [1, 1]} : vector<4x256xf32> to vector<4x64xf32>
    %327 = arith.negf %326 : vector<4x64xf32>
    %328 = math.exp %327 : vector<4x64xf32>
    %cst_154 = arith.constant 1.000000e+00 : f32
    %329 = vector.broadcast %cst_154 : f32 to vector<4x64xf32>
    %330 = arith.addf %329, %328 : vector<4x64xf32>
    %331 = arith.divf %329, %330 : vector<4x64xf32>
    %332 = vector.extract_strided_slice %325 {offsets = [0, 64], sizes = [4, 64], strides = [1, 1]} : vector<4x256xf32> to vector<4x64xf32>
    %333 = arith.negf %332 : vector<4x64xf32>
    %334 = math.exp %333 : vector<4x64xf32>
    %cst_155 = arith.constant 1.000000e+00 : f32
    %335 = vector.broadcast %cst_155 : f32 to vector<4x64xf32>
    %336 = arith.addf %335, %334 : vector<4x64xf32>
    %337 = arith.divf %335, %336 : vector<4x64xf32>
    %338 = vector.extract_strided_slice %325 {offsets = [0, 128], sizes = [4, 64], strides = [1, 1]} : vector<4x256xf32> to vector<4x64xf32>
    %339 = math.tanh %338 : vector<4x64xf32>
    %340 = vector.extract_strided_slice %325 {offsets = [0, 192], sizes = [4, 64], strides = [1, 1]} : vector<4x256xf32> to vector<4x64xf32>
    %341 = arith.negf %340 : vector<4x64xf32>
    %342 = math.exp %341 : vector<4x64xf32>
    %cst_156 = arith.constant 1.000000e+00 : f32
    %343 = vector.broadcast %cst_156 : f32 to vector<4x64xf32>
    %344 = arith.addf %343, %342 : vector<4x64xf32>
    %345 = arith.divf %343, %344 : vector<4x64xf32>
    %346 = arith.mulf %337, %259 : vector<4x64xf32>
    %347 = arith.mulf %331, %339 : vector<4x64xf32>
    %348 = arith.addf %346, %347 : vector<4x64xf32>
    %349 = math.tanh %348 : vector<4x64xf32>
    %350 = arith.mulf %345, %349 : vector<4x64xf32>
    %c0_157 = arith.constant 0 : index
    %c0_158 = arith.constant 0 : index
    %351 = vector.load %arg16[%c0_157, %c0_158] : memref<64x128xf32, #tpu.memory_space<vmem>>, vector<64x128xf32>
    %cst_159 = arith.constant dense<0.000000e+00> : vector<4x128xf32>
    %352 = tpu.matmul %350, %351, %cst_159 {dimension_numbers = #tpu.dot_dimension_numbers<[1], [0], [0], [1], [0, 0, 1, 1], [], []>} : vector<4x64xf32>, vector<64x128xf32>, vector<4x128xf32> -> vector<4x128xf32>
    %c0_160 = arith.constant 0 : index
    %c0_161 = arith.constant 0 : index
    %353 = vector.load %arg17[%c0_160, %c0_161] : memref<1x128xf32, #tpu.memory_space<vmem>>, vector<1x128xf32>
    %354 = vector.broadcast %353 : vector<1x128xf32> to vector<4x128xf32>
    %355 = arith.addf %352, %354 : vector<4x128xf32>
    %356 = vector.broadcast %277 : i32 to vector<4x1xi32>
    %357 = arith.cmpi sgt, %6, %356 : vector<4x1xi32>
    %cst_162 = arith.constant 0.000000e+00 : f32
    %358 = vector.shape_cast %357 : vector<4x1xi1> to vector<4x1xi1>
    %359 = vector.broadcast %358 : vector<4x1xi1> to vector<4x128xi1>
    %360 = vector.broadcast %cst_162 : f32 to vector<4x128xf32>
    %361 = arith.select %359, %355, %360 : vector<4x128xi1>, vector<4x128xf32>
    %c3_163 = arith.constant 3 : index
    %c0_164 = arith.constant 0 : index
    %c0_165 = arith.constant 0 : index
    %362 = vector.load %arg18[%c3_163, %c0_164, %c0_165] : memref<4x4x128xf32, #tpu.memory_space<vmem>>, vector<1x4x128xf32>
    %363 = vector.shape_cast %362 : vector<1x4x128xf32> to vector<4x128xf32>
    %364 = vector.shape_cast %361 : vector<4x128xf32> to vector<1x4x128xf32>
    tpu.vector_store %arg18[%c3_163, %c0_164, %c0_165], %364 {strides = array<i32>} : memref<4x4x128xf32, #tpu.memory_space<vmem>>, vector<1x4x128xf32>,
    %c0_166 = arith.constant 0 : index
    %c0_167 = arith.constant 0 : index
    %365 = vector.load %arg19[%c0_166, %c0_167] : memref<4x64xf32, #tpu.memory_space<vmem>>, vector<4x64xf32>
    tpu.vector_store %arg19[%c0_166, %c0_167], %350 {strides = array<i32>} : memref<4x64xf32, #tpu.memory_space<vmem>>, vector<4x64xf32>,
    %c0_168 = arith.constant 0 : index
    %c0_169 = arith.constant 0 : index
    %366 = vector.load %arg20[%c0_168, %c0_169] : memref<4x64xf32, #tpu.memory_space<vmem>>, vector<4x64xf32>
    tpu.vector_store %arg20[%c0_168, %c0_169], %348 {strides = array<i32>} : memref<4x64xf32, #tpu.memory_space<vmem>>, vector<4x64xf32>,
    return
  }
  func.func @transform_0(%arg0: i32, %arg1: i32) -> (i32, i32) {
    %c0_i32 = arith.constant 0 : i32
    %c0_i32_0 = arith.constant 0 : i32
    return %arg0, %c0_i32 : i32, i32
  }
  func.func @transform_1(%arg0: i32, %arg1: i32) -> (i32, i32, i32) {
    %c0_i32 = arith.constant 0 : i32
    %c0_i32_0 = arith.constant 0 : i32
    %c0_i32_1 = arith.constant 0 : i32
    return %arg0, %c0_i32, %c0_i32_0 : i32, i32, i32
  }
  func.func @transform_2(%arg0: i32, %arg1: i32) -> (i32, i32, i32) {
    %c0_i32 = arith.constant 0 : i32
    %c0_i32_0 = arith.constant 0 : i32
    %c0_i32_1 = arith.constant 0 : i32
    return %arg0, %c0_i32, %c0_i32_0 : i32, i32, i32
  }
  func.func @transform_3(%arg0: i32, %arg1: i32) -> (i32, i32) {
    %c0_i32 = arith.constant 0 : i32
    %c0_i32_0 = arith.constant 0 : i32
    return %arg0, %c0_i32 : i32, i32
  }
  func.func @transform_4(%arg0: i32, %arg1: i32) -> (i32, i32) {
    %c0_i32 = arith.constant 0 : i32
    %c0_i32_0 = arith.constant 0 : i32
    return %arg0, %c0_i32 : i32, i32
  }
  func.func @transform_5(%arg0: i32, %arg1: i32) -> (i32, i32) {
    %c0_i32 = arith.constant 0 : i32
    %c0_i32_0 = arith.constant 0 : i32
    return %arg0, %c0_i32 : i32, i32
  }
  func.func @transform_6(%arg0: i32, %arg1: i32) -> (i32, i32, i32) {
    %c0_i32 = arith.constant 0 : i32
    %c0_i32_0 = arith.constant 0 : i32
    return %arg1, %arg0, %c0_i32 : i32, i32, i32
  }
  func.func @transform_7(%arg0: i32, %arg1: i32) -> (i32, i32) {
    %c0_i32 = arith.constant 0 : i32
    %c0_i32_0 = arith.constant 0 : i32
    %c0_i32_1 = arith.constant 0 : i32
    return %c0_i32, %c0_i32_0 : i32, i32
  }
  func.func @transform_8(%arg0: i32, %arg1: i32) -> (i32, i32) {
    %c0_i32 = arith.constant 0 : i32
    %c0_i32_0 = arith.constant 0 : i32
    %c0_i32_1 = arith.constant 0 : i32
    return %c0_i32, %c0_i32_0 : i32, i32
  }
  func.func @transform_9(%arg0: i32, %arg1: i32) -> (i32, i32) {
    %c0_i32 = arith.constant 0 : i32
    %c0_i32_0 = arith.constant 0 : i32
    %c0_i32_1 = arith.constant 0 : i32
    return %c0_i32, %c0_i32_0 : i32, i32
  }
  func.func @transform_10(%arg0: i32, %arg1: i32) -> (i32, i32) {
    %c0_i32 = arith.constant 0 : i32
    %c0_i32_0 = arith.constant 0 : i32
    %c0_i32_1 = arith.constant 0 : i32
    return %c0_i32, %c0_i32_0 : i32, i32
  }
  func.func @transform_11(%arg0: i32, %arg1: i32) -> (i32, i32) {
    %c0_i32 = arith.constant 0 : i32
    %c0_i32_0 = arith.constant 0 : i32
    %c0_i32_1 = arith.constant 0 : i32
    return %c0_i32, %c0_i32_0 : i32, i32
  }
  func.func @transform_12(%arg0: i32, %arg1: i32) -> (i32, i32) {
    %c0_i32 = arith.constant 0 : i32
    %c0_i32_0 = arith.constant 0 : i32
    %c0_i32_1 = arith.constant 0 : i32
    return %c0_i32, %c0_i32_0 : i32, i32
  }
  func.func @transform_13(%arg0: i32, %arg1: i32) -> (i32, i32) {
    %c0_i32 = arith.constant 0 : i32
    %c0_i32_0 = arith.constant 0 : i32
    %c0_i32_1 = arith.constant 0 : i32
    return %c0_i32, %c0_i32_0 : i32, i32
  }
  func.func @transform_14(%arg0: i32, %arg1: i32) -> (i32, i32) {
    %c0_i32 = arith.constant 0 : i32
    %c0_i32_0 = arith.constant 0 : i32
    %c0_i32_1 = arith.constant 0 : i32
    return %c0_i32, %c0_i32_0 : i32, i32
  }
  func.func @transform_15(%arg0: i32, %arg1: i32) -> (i32, i32) {
    %c0_i32 = arith.constant 0 : i32
    %c0_i32_0 = arith.constant 0 : i32
    %c0_i32_1 = arith.constant 0 : i32
    return %c0_i32, %c0_i32_0 : i32, i32
  }
  func.func @transform_16(%arg0: i32, %arg1: i32) -> (i32, i32, i32) {
    %c0_i32 = arith.constant 0 : i32
    %c0_i32_0 = arith.constant 0 : i32
    return %arg1, %arg0, %c0_i32 : i32, i32, i32
  }
}

</mosaic_0001>

<llo_original>
// kernel: tpu_custom_call.1
$region0: #{tpu_custom_call.1}
  #allocation0 [shape = 'u32[]', space=smem, size = 0x4, offset = 0x4, fixed_abs, tag = 'smem constant byte address 0x4 - core index']
  #allocation1 [shape = 'u32[72,128]{1,0:T(1,128)}', space=vmem, size = 0x9000, scoped, tag = 'internal scratch']
  #allocation2 [shape = 'f32[4,64]{1,0:T(4,128)}', space=vmem, size = 0x800, scoped, tag = 'scratch operand']
  #allocation3 [shape = 'f32[4,64]{1,0:T(4,128)}', space=vmem, size = 0x800, scoped, tag = 'scratch operand']
  #allocation4 [shape = 'f32[1,1]{1,0:T(1,128)S(1)}', space=vmem, size = 0x200, scoped, tag = 'scoped memory for tpu_custom_call.1']
  %s0 = inlined_call_operand.vmem [shape: s32[4,1], index: 0, kind: input, shape index: {}]
  %s1 = inlined_call_operand.vmem [shape: f32[4,4,32], index: 1, kind: input, shape index: {}]
  %s2 = inlined_call_operand.vmem [shape: f32[4,4,32], index: 2, kind: input, shape index: {}]
  %s3 = inlined_call_operand.vmem [shape: f32[4,256], index: 3, kind: input, shape index: {}]
  %s4 = inlined_call_operand.vmem [shape: f32[4,64], index: 4, kind: input, shape index: {}]
  %s5 = inlined_call_operand.vmem [shape: f32[4,64], index: 5, kind: input, shape index: {}]
  %s6 = inlined_call_operand.vmem [shape: f32[8,4,32], index: 6, kind: input, shape index: {}]
  %s7 = inlined_call_operand.vmem [shape: f32[64,32], index: 7, kind: input, shape index: {}]
  %s8 = inlined_call_operand.vmem [shape: f32[1,32], index: 8, kind: input, shape index: {}]
  %s9 = inlined_call_operand.vmem [shape: f32[1,32], index: 9, kind: input, shape index: {}]
  %s10 = inlined_call_operand.<no memory space> [shape: f32[1,1], index: 10, kind: input, shape index: {}]
  %s11 = inlined_call_operand.vmem [shape: f32[64,32], index: 11, kind: input, shape index: {}]
  %s12 = inlined_call_operand.vmem [shape: f32[1,32], index: 12, kind: input, shape index: {}]
  %s13 = inlined_call_operand.hbm [shape: f32[128,256], index: 13, kind: input, shape index: {}]
  %s14 = inlined_call_operand.vmem [shape: f32[64,128], index: 14, kind: input, shape index: {}]
  %s15 = inlined_call_operand.vmem [shape: f32[1,128], index: 15, kind: input, shape index: {}]
  %s16 = inlined_call_operand.hbm [shape: f32[8,4,128], index: 16, kind: output, shape index: {}]
  %s17 = sld [smem:[#allocation0]]
  $region105: #{tpu_custom_call.1} parent=0
    _
  %s19 = ssub.s32 1, %s17
  %s20 = scalar_select 0, %s19, %s17
  %v21 = vstv %s10
  %22 = vst [vmem:[#allocation4] sm:$0x1] %v21
  $region1: #{tpu_custom_call.1} parent=0
    #allocation5 [shape = 'u8[131072]{0}', space=vmem, size = 0x20000, scoped, tag = 'input window, operand 13, single buffered']
    #allocation6 [shape = 's32[2]{0}', space=sflag, size = 0x8, scoped, tag = 'scoped memory for tpu_custom_call.1']
    #allocation7 [shape = 's32[2]{0}', space=sflag, size = 0x8, scoped, tag = 'scoped memory for tpu_custom_call.1']
    #allocation8 [shape = 'u8[16384]{0}', space=vmem, size = 0x4000, scoped, tag = 'output window, operand 0']
    %23 = vsyncpa [#allocation6], 0
    %24 = vsyncpa [#allocation7], 0
    %s25 = scalar_lea.sflag [#allocation7], 1
    %26 = vsyncpa %s25, 0
    loop: start=0, step=1, limit=4
    $region2: #{tpu_custom_call.1} parent=1 // loop_pre_header
      _
    $region3: #{tpu_custom_call.1} parent=1 // loop_header
      %s28 = sphi 0, %s32
      %p29 = scmp.ge.s32.totalorder %s28, 4
      %s35 = sphi 0, %s47
      %s36 = sphi 0, %s43
      %s37 = sphi 0, %s35
      %s38 = sphi 0, %s36
      %s39 = sphi 0, %s37
      %s40 = sphi 0, %s38
      %s50 = sphi 0, %s52
      %s53 = sphi 0, %s50
      %s54 = sphi 0, %s53
      %s70 = sphi 0, %s54
      %s76 = sphi 0, %s78
      %s79 = sphi 0, %s76
      %s80 = sphi 0, %s79
      %s96 = sphi 0, %s80
      %s102 = sphi 0, %s104
      %s105 = sphi 0, %s102
      %s106 = sphi 0, %s105
      %s122 = sphi 0, %s106
      %s128 = sphi 0, %s130
      %s131 = sphi 0, %s128
      %s132 = sphi 0, %s131
      %s148 = sphi 0, %s132
      %s154 = sphi 0, %s156
      %s157 = sphi 0, %s154
      %s158 = sphi 0, %s157
      %s174 = sphi 0, %s158
      %s180 = sphi 0, %s182
      %s183 = sphi 0, %s180
      %s184 = sphi 0, %s183
      %s200 = sphi 0, %s184
      %s208 = sphi 0, %s210
      %s211 = sphi 0, %s208
      %s212 = sphi 0, %s211
      %s228 = sphi 0, %s212
      %s232 = sphi 0, %s232
      %s234 = sphi 0, %s232
      %s235 = sphi 0, %s234
      %s249 = sphi 0, %s235
      %s253 = sphi 0, %s253
      %s255 = sphi 0, %s253
      %s256 = sphi 0, %s255
      %s270 = sphi 0, %s256
      %s274 = sphi 0, %s274
      %s276 = sphi 0, %s274
      %s277 = sphi 0, %s276
      %s291 = sphi 0, %s277
      %s295 = sphi 0, %s295
      %s297 = sphi 0, %s295
      %s298 = sphi 0, %s297
      %s312 = sphi 0, %s298
      %s316 = sphi 0, %s316
      %s318 = sphi 0, %s316
      %s319 = sphi 0, %s318
      %s333 = sphi 0, %s319
      %s337 = sphi 0, %s337
      %s339 = sphi 0, %s337
      %s340 = sphi 0, %s339
      %s354 = sphi 0, %s340
      %s358 = sphi 0, %s358
      %s360 = sphi 0, %s358
      %s361 = sphi 0, %s360
      %s375 = sphi 0, %s361
      %s379 = sphi 0, %s379
      %s381 = sphi 0, %s379
      %s382 = sphi 0, %s381
      %s396 = sphi 0, %s382
      %s400 = sphi 0, %s400
      %s402 = sphi 0, %s400
      %s403 = sphi 0, %s402
      %s417 = sphi 0, %s403
      %s425 = sphi 0, %s427
      %s428 = sphi 0, %s425
      %s429 = sphi 0, %s428
      %s445 = sphi 0, %s429
    $region4: #{tpu_custom_call.1} parent=1 // loop_header_branch
      %31 = sbr.rel (%p29) target = $region8
    $region5: #{tpu_custom_call.1} parent=1 // loop_body
      %s33 = ssub.s32 %s28, 1
      %s34 = ssub.s32 %s28, 2
      %s41 = sadd.s32 1, %s36
      %p42 = scmp.ge.s32.totalorder %s41, 2
      %s43 = scalar_select %p42, 0, %s41
      %s44 = sadd.s32 1, %s35
      %s45 = scalar_select %p42, %s44, %s35
      %p46 = scmp.ge.s32.totalorder %s45, 1
      %s47 = scalar_select %p46, 0, %s45
      %s48 = ssub.s32 %s35, %s47
      %p49 = scmp.eq.s32.totalorder %s48, 0
      %s51 = sadd.s32 %s50, 1
      %s52 = scalar_select %p49, %s50, %s51
      %p55 = pneg %p49
      %p56 = scmp.eq.s32.totalorder %s28, 1
      %p57 = por %p55, %p56
      %p58 = scmp.ne.s32.totalorder %s50, %s53
      %p59 = scmp.eq.s32.totalorder %s28, 0
      %p60 = por %p58, %p59
      %p61 = scmp.ne.s32.totalorder %s50, %s53
      %p62 = scmp.eq.s32.totalorder %s33, 1
      %p63 = por %p61, %p62
      %p64 = scmp.ne.s32.totalorder %s53, %s54
      %p65 = scmp.eq.s32.totalorder %s33, 0
      %p66 = por %p64, %p65
      %p67 = scmp.ne.s32.totalorder %s53, %s54
      %p68 = scmp.eq.s32.totalorder %s34, 1
      %p69 = por %p67, %p68
      %p71 = scmp.ne.s32.totalorder %s54, %s70
      %p72 = scmp.eq.s32.totalorder %s34, 0
      %p73 = por %p71, %p72
      %s74 = ssub.s32 %s35, %s47
      %p75 = scmp.eq.s32.totalorder %s74, 0
      %s77 = sadd.s32 %s76, 1
      %s78 = scalar_select %p75, %s76, %s77
      %p81 = pneg %p75
      %p82 = scmp.eq.s32.totalorder %s28, 1
      %p83 = por %p81, %p82
      %p84 = scmp.ne.s32.totalorder %s76, %s79
      %p85 = scmp.eq.s32.totalorder %s28, 0
      %p86 = por %p84, %p85
      %p87 = scmp.ne.s32.totalorder %s76, %s79
      %p88 = scmp.eq.s32.totalorder %s33, 1
      %p89 = por %p87, %p88
      %p90 = scmp.ne.s32.totalorder %s79, %s80
      %p91 = scmp.eq.s32.totalorder %s33, 0
      %p92 = por %p90, %p91
      %p93 = scmp.ne.s32.totalorder %s79, %s80
      %p94 = scmp.eq.s32.totalorder %s34, 1
      %p95 = por %p93, %p94
      %p97 = scmp.ne.s32.totalorder %s80, %s96
      %p98 = scmp.eq.s32.totalorder %s34, 0
      %p99 = por %p97, %p98
      %s100 = ssub.s32 %s35, %s47
      %p101 = scmp.eq.s32.totalorder %s100, 0
      %s103 = sadd.s32 %s102, 1
      %s104 = scalar_select %p101, %s102, %s103
      %p107 = pneg %p101
      %p108 = scmp.eq.s32.totalorder %s28, 1
      %p109 = por %p107, %p108
      %p110 = scmp.ne.s32.totalorder %s102, %s105
      %p111 = scmp.eq.s32.totalorder %s28, 0
      %p112 = por %p110, %p111
      %p113 = scmp.ne.s32.totalorder %s102, %s105
      %p114 = scmp.eq.s32.totalorder %s33, 1
      %p115 = por %p113, %p114
      %p116 = scmp.ne.s32.totalorder %s105, %s106
      %p117 = scmp.eq.s32.totalorder %s33, 0
      %p118 = por %p116, %p117
      %p119 = scmp.ne.s32.totalorder %s105, %s106
      %p120 = scmp.eq.s32.totalorder %s34, 1
      %p121 = por %p119, %p120
      %p123 = scmp.ne.s32.totalorder %s106, %s122
      %p124 = scmp.eq.s32.totalorder %s34, 0
      %p125 = por %p123, %p124
      %s126 = ssub.s32 %s35, %s47
      %p127 = scmp.eq.s32.totalorder %s126, 0
      %s129 = sadd.s32 %s128, 1
      %s130 = scalar_select %p127, %s128, %s129
      %p133 = pneg %p127
      %p134 = scmp.eq.s32.totalorder %s28, 1
      %p135 = por %p133, %p134
      %p136 = scmp.ne.s32.totalorder %s128, %s131
      %p137 = scmp.eq.s32.totalorder %s28, 0
      %p138 = por %p136, %p137
      %p139 = scmp.ne.s32.totalorder %s128, %s131
      %p140 = scmp.eq.s32.totalorder %s33, 1
      %p141 = por %p139, %p140
      %p142 = scmp.ne.s32.totalorder %s131, %s132
      %p143 = scmp.eq.s32.totalorder %s33, 0
      %p144 = por %p142, %p143
      %p145 = scmp.ne.s32.totalorder %s131, %s132
      %p146 = scmp.eq.s32.totalorder %s34, 1
      %p147 = por %p145, %p146
      %p149 = scmp.ne.s32.totalorder %s132, %s148
      %p150 = scmp.eq.s32.totalorder %s34, 0
      %p151 = por %p149, %p150
      %s152 = ssub.s32 %s35, %s47
      %p153 = scmp.eq.s32.totalorder %s152, 0
      %s155 = sadd.s32 %s154, 1
      %s156 = scalar_select %p153, %s154, %s155
      %p159 = pneg %p153
      %p160 = scmp.eq.s32.totalorder %s28, 1
      %p161 = por %p159, %p160
      %p162 = scmp.ne.s32.totalorder %s154, %s157
      %p163 = scmp.eq.s32.totalorder %s28, 0
      %p164 = por %p162, %p163
      %p165 = scmp.ne.s32.totalorder %s154, %s157
      %p166 = scmp.eq.s32.totalorder %s33, 1
      %p167 = por %p165, %p166
      %p168 = scmp.ne.s32.totalorder %s157, %s158
      %p169 = scmp.eq.s32.totalorder %s33, 0
      %p170 = por %p168, %p169
      %p171 = scmp.ne.s32.totalorder %s157, %s158
      %p172 = scmp.eq.s32.totalorder %s34, 1
      %p173 = por %p171, %p172
      %p175 = scmp.ne.s32.totalorder %s158, %s174
      %p176 = scmp.eq.s32.totalorder %s34, 0
      %p177 = por %p175, %p176
      %s178 = ssub.s32 %s35, %s47
      %p179 = scmp.eq.s32.totalorder %s178, 0
      %s181 = sadd.s32 %s180, 1
      %s182 = scalar_select %p179, %s180, %s181
      %p185 = pneg %p179
      %p186 = scmp.eq.s32.totalorder %s28, 1
      %p187 = por %p185, %p186
      %p188 = scmp.ne.s32.totalorder %s180, %s183
      %p189 = scmp.eq.s32.totalorder %s28, 0
      %p190 = por %p188, %p189
      %p191 = scmp.ne.s32.totalorder %s180, %s183
      %p192 = scmp.eq.s32.totalorder %s33, 1
      %p193 = por %p191, %p192
      %p194 = scmp.ne.s32.totalorder %s183, %s184
      %p195 = scmp.eq.s32.totalorder %s33, 0
      %p196 = por %p194, %p195
      %p197 = scmp.ne.s32.totalorder %s183, %s184
      %p198 = scmp.eq.s32.totalorder %s34, 1
      %p199 = por %p197, %p198
      %p201 = scmp.ne.s32.totalorder %s184, %s200
      %p202 = scmp.eq.s32.totalorder %s34, 0
      %p203 = por %p201, %p202
      %s204 = ssub.s32 %s36, %s43
      %s205 = ssub.s32 %s35, %s47
      %s206 = sor.u32 %s204, %s205
      %p207 = scmp.eq.s32.totalorder %s206, 0
      %s209 = sadd.s32 %s208, 1
      %s210 = scalar_select %p207, %s208, %s209
      %p213 = pneg %p207
      %p214 = scmp.eq.s32.totalorder %s28, 1
      %p215 = por %p213, %p214
      %p216 = scmp.ne.s32.totalorder %s208, %s211
      %p217 = scmp.eq.s32.totalorder %s28, 0
      %p218 = por %p216, %p217
      %p219 = scmp.ne.s32.totalorder %s208, %s211
      %p220 = scmp.eq.s32.totalorder %s33, 1
      %p221 = por %p219, %p220
      %p222 = scmp.ne.s32.totalorder %s211, %s212
      %p223 = scmp.eq.s32.totalorder %s33, 0
      %p224 = por %p222, %p223
      %p225 = scmp.ne.s32.totalorder %s211, %s212
      %p226 = scmp.eq.s32.totalorder %s34, 1
      %p227 = por %p225, %p226
      %p229 = scmp.ne.s32.totalorder %s212, %s228
      %p230 = scmp.eq.s32.totalorder %s34, 0
      %p231 = por %p229, %p230
      %s233 = sadd.s32 %s232, 1
      %p236 = scmp.eq.s32.totalorder %s28, 1
      %p237 = scmp.ne.s32.totalorder %s232, %s234
      %p238 = scmp.eq.s32.totalorder %s28, 0
      %p239 = por %p237, %p238
      %p240 = scmp.ne.s32.totalorder %s232, %s234
      %p241 = scmp.eq.s32.totalorder %s33, 1
      %p242 = por %p240, %p241
      %p243 = scmp.ne.s32.totalorder %s234, %s235
      %p244 = scmp.eq.s32.totalorder %s33, 0
      %p245 = por %p243, %p244
      %p246 = scmp.ne.s32.totalorder %s234, %s235
      %p247 = scmp.eq.s32.totalorder %s34, 1
      %p248 = por %p246, %p247
      %p250 = scmp.ne.s32.totalorder %s235, %s249
      %p251 = scmp.eq.s32.totalorder %s34, 0
      %p252 = por %p250, %p251
      %s254 = sadd.s32 %s253, 1
      %p257 = scmp.eq.s32.totalorder %s28, 1
      %p258 = scmp.ne.s32.totalorder %s253, %s255
      %p259 = scmp.eq.s32.totalorder %s28, 0
      %p260 = por %p258, %p259
      %p261 = scmp.ne.s32.totalorder %s253, %s255
      %p262 = scmp.eq.s32.totalorder %s33, 1
      %p263 = por %p261, %p262
      %p264 = scmp.ne.s32.totalorder %s255, %s256
      %p265 = scmp.eq.s32.totalorder %s33, 0
      %p266 = por %p264, %p265
      %p267 = scmp.ne.s32.totalorder %s255, %s256
      %p268 = scmp.eq.s32.totalorder %s34, 1
      %p269 = por %p267, %p268
      %p271 = scmp.ne.s32.totalorder %s256, %s270
      %p272 = scmp.eq.s32.totalorder %s34, 0
      %p273 = por %p271, %p272
      %s275 = sadd.s32 %s274, 1
      %p278 = scmp.eq.s32.totalorder %s28, 1
      %p279 = scmp.ne.s32.totalorder %s274, %s276
      %p280 = scmp.eq.s32.totalorder %s28, 0
      %p281 = por %p279, %p280
      %p282 = scmp.ne.s32.totalorder %s274, %s276
      %p283 = scmp.eq.s32.totalorder %s33, 1
      %p284 = por %p282, %p283
      %p285 = scmp.ne.s32.totalorder %s276, %s277
      %p286 = scmp.eq.s32.totalorder %s33, 0
      %p287 = por %p285, %p286
      %p288 = scmp.ne.s32.totalorder %s276, %s277
      %p289 = scmp.eq.s32.totalorder %s34, 1
      %p290 = por %p288, %p289
      %p292 = scmp.ne.s32.totalorder %s277, %s291
      %p293 = scmp.eq.s32.totalorder %s34, 0
      %p294 = por %p292, %p293
      %s296 = sadd.s32 %s295, 1
      %p299 = scmp.eq.s32.totalorder %s28, 1
      %p300 = scmp.ne.s32.totalorder %s295, %s297
      %p301 = scmp.eq.s32.totalorder %s28, 0
      %p302 = por %p300, %p301
      %p303 = scmp.ne.s32.totalorder %s295, %s297
      %p304 = scmp.eq.s32.totalorder %s33, 1
      %p305 = por %p303, %p304
      %p306 = scmp.ne.s32.totalorder %s297, %s298
      %p307 = scmp.eq.s32.totalorder %s33, 0
      %p308 = por %p306, %p307
      %p309 = scmp.ne.s32.totalorder %s297, %s298
      %p310 = scmp.eq.s32.totalorder %s34, 1
      %p311 = por %p309, %p310
      %p313 = scmp.ne.s32.totalorder %s298, %s312
      %p314 = scmp.eq.s32.totalorder %s34, 0
      %p315 = por %p313, %p314
      %s317 = sadd.s32 %s316, 1
      %p320 = scmp.eq.s32.totalorder %s28, 1
      %p321 = scmp.ne.s32.totalorder %s316, %s318
      %p322 = scmp.eq.s32.totalorder %s28, 0
      %p323 = por %p321, %p322
      %p324 = scmp.ne.s32.totalorder %s316, %s318
      %p325 = scmp.eq.s32.totalorder %s33, 1
      %p326 = por %p324, %p325
      %p327 = scmp.ne.s32.totalorder %s318, %s319
      %p328 = scmp.eq.s32.totalorder %s33, 0
      %p329 = por %p327, %p328
      %p330 = scmp.ne.s32.totalorder %s318, %s319
      %p331 = scmp.eq.s32.totalorder %s34, 1
      %p332 = por %p330, %p331
      %p334 = scmp.ne.s32.totalorder %s319, %s333
      %p335 = scmp.eq.s32.totalorder %s34, 0
      %p336 = por %p334, %p335
      %s338 = sadd.s32 %s337, 1
      %p341 = scmp.eq.s32.totalorder %s28, 1
      %p342 = scmp.ne.s32.totalorder %s337, %s339
      %p343 = scmp.eq.s32.totalorder %s28, 0
      %p344 = por %p342, %p343
      %p345 = scmp.ne.s32.totalorder %s337, %s339
      %p346 = scmp.eq.s32.totalorder %s33, 1
      %p347 = por %p345, %p346
      %p348 = scmp.ne.s32.totalorder %s339, %s340
      %p349 = scmp.eq.s32.totalorder %s33, 0
      %p350 = por %p348, %p349
      %p351 = scmp.ne.s32.totalorder %s339, %s340
      %p352 = scmp.eq.s32.totalorder %s34, 1
      %p353 = por %p351, %p352
      %p355 = scmp.ne.s32.totalorder %s340, %s354
      %p356 = scmp.eq.s32.totalorder %s34, 0
      %p357 = por %p355, %p356
      %s359 = sadd.s32 %s358, 1
      %p362 = scmp.eq.s32.totalorder %s28, 1
      %p363 = scmp.ne.s32.totalorder %s358, %s360
      %p364 = scmp.eq.s32.totalorder %s28, 0
      %p365 = por %p363, %p364
      %p366 = scmp.ne.s32.totalorder %s358, %s360
      %p367 = scmp.eq.s32.totalorder %s33, 1
      %p368 = por %p366, %p367
      %p369 = scmp.ne.s32.totalorder %s360, %s361
      %p370 = scmp.eq.s32.totalorder %s33, 0
      %p371 = por %p369, %p370
      %p372 = scmp.ne.s32.totalorder %s360, %s361
      %p373 = scmp.eq.s32.totalorder %s34, 1
      %p374 = por %p372, %p373
      %p376 = scmp.ne.s32.totalorder %s361, %s375
      %p377 = scmp.eq.s32.totalorder %s34, 0
      %p378 = por %p376, %p377
      %s380 = sadd.s32 %s379, 1
      %p383 = scmp.eq.s32.totalorder %s28, 1
      %p384 = scmp.ne.s32.totalorder %s379, %s381
      %p385 = scmp.eq.s32.totalorder %s28, 0
      %p386 = por %p384, %p385
      %p387 = scmp.ne.s32.totalorder %s379, %s381
      %p388 = scmp.eq.s32.totalorder %s33, 1
      %p389 = por %p387, %p388
      %p390 = scmp.ne.s32.totalorder %s381, %s382
      %p391 = scmp.eq.s32.totalorder %s33, 0
      %p392 = por %p390, %p391
      %p393 = scmp.ne.s32.totalorder %s381, %s382
      %p394 = scmp.eq.s32.totalorder %s34, 1
      %p395 = por %p393, %p394
      %p397 = scmp.ne.s32.totalorder %s382, %s396
      %p398 = scmp.eq.s32.totalorder %s34, 0
      %p399 = por %p397, %p398
      %s401 = sadd.s32 %s400, 1
      %p404 = scmp.eq.s32.totalorder %s28, 1
      %p405 = scmp.ne.s32.totalorder %s400, %s402
      %p406 = scmp.eq.s32.totalorder %s28, 0
      %p407 = por %p405, %p406
      %p408 = scmp.ne.s32.totalorder %s400, %s402
      %p409 = scmp.eq.s32.totalorder %s33, 1
      %p410 = por %p408, %p409
      %p411 = scmp.ne.s32.totalorder %s402, %s403
      %p412 = scmp.eq.s32.totalorder %s33, 0
      %p413 = por %p411, %p412
      %p414 = scmp.ne.s32.totalorder %s402, %s403
      %p415 = scmp.eq.s32.totalorder %s34, 1
      %p416 = por %p414, %p415
      %p418 = scmp.ne.s32.totalorder %s403, %s417
      %p419 = scmp.eq.s32.totalorder %s34, 0
      %p420 = por %p418, %p419
      %s421 = ssub.s32 %s36, %s43
      %s422 = ssub.s32 %s35, %s47
      %s423 = sor.u32 %s421, %s422
      %p424 = scmp.eq.s32.totalorder %s423, 0
      %s426 = sadd.s32 %s425, 1
      %s427 = scalar_select %p424, %s425, %s426
      %p430 = pneg %p424
      %p431 = scmp.eq.s32.totalorder %s28, 1
      %p432 = por %p430, %p431
      %p433 = scmp.ne.s32.totalorder %s425, %s428
      %p434 = scmp.eq.s32.totalorder %s28, 0
      %p435 = por %p433, %p434
      %p436 = scmp.ne.s32.totalorder %s425, %s428
      %p437 = scmp.eq.s32.totalorder %s33, 1
      %p438 = por %p436, %p437
      %p439 = scmp.ne.s32.totalorder %s428, %s429
      %p440 = scmp.eq.s32.totalorder %s33, 0
      %p441 = por %p439, %p440
      %p442 = scmp.ne.s32.totalorder %s428, %s429
      %p443 = scmp.eq.s32.totalorder %s34, 1
      %p444 = por %p442, %p443
      %p446 = scmp.ne.s32.totalorder %s429, %s445
      %p447 = scmp.eq.s32.totalorder %s34, 0
      %p448 = por %p446, %p447
      %p449 = scmp.le.s32.totalorder 1, %s28
      %p450 = scmp.lt.s32.totalorder %s28, 3
      %p451 = pnand %p449, %p450
      %p452 = pneg %p451
      // Predicated region
      $region9: #{tpu_custom_call.1} parent=5 // pred_check
        _
      $region10: #{tpu_custom_call.1} parent=5 // pred_check_branch
        %454 = sbr.rel (%p451) target = $region12
      $region11: #{tpu_custom_call.1} parent=5 // pred_region
        %s455 = ssub.s32 %s28, 1
        // Predicated region
        $region13: #{tpu_custom_call.1} parent=11 // pred_check
          %p456 = pneg %p66
        $region14: #{tpu_custom_call.1} parent=11 // pred_check_branch
          %458 = sbr.rel (%p456) target = $region16
        $region15: #{tpu_custom_call.1} parent=11 // pred_region
          %p459 = scmp.lt.s32.totalorder %s37, 0
          %s460 = scalar_select %p459, %s37, 0
          %s461 = smul.addr %s460, 4
          %s462 = scalar_lea.vmem %s0, %s461
        $region16: #{tpu_custom_call.1} parent=11 // pred_fallthru
          _
        // Predicated region
        $region17: #{tpu_custom_call.1} parent=11 // pred_check
          %p463 = pneg %p92
        $region18: #{tpu_custom_call.1} parent=11 // pred_check_branch
          %465 = sbr.rel (%p463) target = $region20
        $region19: #{tpu_custom_call.1} parent=11 // pred_region
          %s466 = smul.u32 4, %s37
          %p467 = scmp.lt.s32.totalorder %s466, 3
          %s468 = scalar_select %p467, %s466, 3
          %s469 = smul.addr %s468, 4
          %s470 = scalar_lea.vmem %s1, %s469
          %s471 = smul.u32 4, %s37
        $region20: #{tpu_custom_call.1} parent=11 // pred_fallthru
          _
        // Predicated region
        $region21: #{tpu_custom_call.1} parent=11 // pred_check
          %p472 = pneg %p118
        $region22: #{tpu_custom_call.1} parent=11 // pred_check_branch
          %474 = sbr.rel (%p472) target = $region24
        $region23: #{tpu_custom_call.1} parent=11 // pred_region
          %s475 = smul.u32 4, %s37
          %p476 = scmp.lt.s32.totalorder %s475, 3
          %s477 = scalar_select %p476, %s475, 3
          %s478 = smul.addr %s477, 4
          %s479 = scalar_lea.vmem %s2, %s478
          %s480 = smul.u32 4, %s37
        $region24: #{tpu_custom_call.1} parent=11 // pred_fallthru
          _
        // Predicated region
        $region25: #{tpu_custom_call.1} parent=11 // pred_check
          %p481 = pneg %p144
        $region26: #{tpu_custom_call.1} parent=11 // pred_check_branch
          %483 = sbr.rel (%p481) target = $region28
        $region27: #{tpu_custom_call.1} parent=11 // pred_region
          %p484 = scmp.lt.s32.totalorder %s37, 0
          %s485 = scalar_select %p484, %s37, 0
          %s486 = smul.addr %s485, 2
          %s487 = smul.addr %s486, 4
          %s488 = scalar_lea.vmem %s3, %s487
        $region28: #{tpu_custom_call.1} parent=11 // pred_fallthru
          _
        // Predicated region
        $region29: #{tpu_custom_call.1} parent=11 // pred_check
          %p489 = pneg %p170
        $region30: #{tpu_custom_call.1} parent=11 // pred_check_branch
          %491 = sbr.rel (%p489) target = $region32
        $region31: #{tpu_custom_call.1} parent=11 // pred_region
          %p492 = scmp.lt.s32.totalorder %s37, 0
          %s493 = scalar_select %p492, %s37, 0
          %s494 = smul.addr %s493, 4
          %s495 = scalar_lea.vmem %s4, %s494
        $region32: #{tpu_custom_call.1} parent=11 // pred_fallthru
          _
        // Predicated region
        $region33: #{tpu_custom_call.1} parent=11 // pred_check
          %p496 = pneg %p196
        $region34: #{tpu_custom_call.1} parent=11 // pred_check_branch
          %498 = sbr.rel (%p496) target = $region36
        $region35: #{tpu_custom_call.1} parent=11 // pred_region
          %p499 = scmp.lt.s32.totalorder %s37, 0
          %s500 = scalar_select %p499, %s37, 0
          %s501 = smul.addr %s500, 4
          %s502 = scalar_lea.vmem %s5, %s501
        $region36: #{tpu_custom_call.1} parent=11 // pred_fallthru
          _
        // Predicated region
        $region37: #{tpu_custom_call.1} parent=11 // pred_check
          %p503 = pneg %p245
        $region38: #{tpu_custom_call.1} parent=11 // pred_check_branch
          %505 = sbr.rel (%p503) target = $region40
        $region39: #{tpu_custom_call.1} parent=11 // pred_region
          _
        $region40: #{tpu_custom_call.1} parent=11 // pred_fallthru
          _
        // Predicated region
        $region41: #{tpu_custom_call.1} parent=11 // pred_check
          %p506 = pneg %p266
        $region42: #{tpu_custom_call.1} parent=11 // pred_check_branch
          %508 = sbr.rel (%p506) target = $region44
        $region43: #{tpu_custom_call.1} parent=11 // pred_region
          _
        $region44: #{tpu_custom_call.1} parent=11 // pred_fallthru
          _
        // Predicated region
        $region45: #{tpu_custom_call.1} parent=11 // pred_check
          %p509 = pneg %p287
        $region46: #{tpu_custom_call.1} parent=11 // pred_check_branch
          %511 = sbr.rel (%p509) target = $region48
        $region47: #{tpu_custom_call.1} parent=11 // pred_region
          _
        $region48: #{tpu_custom_call.1} parent=11 // pred_fallthru
          _
        // Predicated region
        $region49: #{tpu_custom_call.1} parent=11 // pred_check
          %p512 = pneg %p308
        $region50: #{tpu_custom_call.1} parent=11 // pred_check_branch
          %514 = sbr.rel (%p512) target = $region52
        $region51: #{tpu_custom_call.1} parent=11 // pred_region
          _
        $region52: #{tpu_custom_call.1} parent=11 // pred_fallthru
          _
        // Predicated region
        $region53: #{tpu_custom_call.1} parent=11 // pred_check
          %p515 = pneg %p329
        $region54: #{tpu_custom_call.1} parent=11 // pred_check_branch
          %517 = sbr.rel (%p515) target = $region56
        $region55: #{tpu_custom_call.1} parent=11 // pred_region
          _
        $region56: #{tpu_custom_call.1} parent=11 // pred_fallthru
          _
        // Predicated region
        $region57: #{tpu_custom_call.1} parent=11 // pred_check
          %p518 = pneg %p350
        $region58: #{tpu_custom_call.1} parent=11 // pred_check_branch
          %520 = sbr.rel (%p518) target = $region60
        $region59: #{tpu_custom_call.1} parent=11 // pred_region
          _
        $region60: #{tpu_custom_call.1} parent=11 // pred_fallthru
          _
        // Predicated region
        $region61: #{tpu_custom_call.1} parent=11 // pred_check
          %p521 = pneg %p371
        $region62: #{tpu_custom_call.1} parent=11 // pred_check_branch
          %523 = sbr.rel (%p521) target = $region64
        $region63: #{tpu_custom_call.1} parent=11 // pred_region
          %525 = vsyncadd [#allocation6], 0
          %s526 = sshll.u32 %s13, 4
          %s527 = int_to_ptr.hbm [resolvable:$true] %s526
          %s528 = sshll.u32 [#allocation5], 4
          %s529 = int_to_ptr.vmem [resolvable:$true] %s528
          %534 = dma.hbm_to_vmem [thread:$0]  %s527, 4096, %s529, [#allocation6], 256, 256, 16
        $region64: #{tpu_custom_call.1} parent=11 // pred_fallthru
          _
        // Predicated region
        $region65: #{tpu_custom_call.1} parent=11 // pred_check
          %p535 = pneg %p392
        $region66: #{tpu_custom_call.1} parent=11 // pred_check_branch
          %537 = sbr.rel (%p535) target = $region68
        $region67: #{tpu_custom_call.1} parent=11 // pred_region
          _
        $region68: #{tpu_custom_call.1} parent=11 // pred_fallthru
          _
        // Predicated region
        $region69: #{tpu_custom_call.1} parent=11 // pred_check
          %p538 = pneg %p413
        $region70: #{tpu_custom_call.1} parent=11 // pred_check_branch
          %540 = sbr.rel (%p538) target = $region72
        $region71: #{tpu_custom_call.1} parent=11 // pred_region
          _
        $region72: #{tpu_custom_call.1} parent=11 // pred_fallthru
          _
      $region12: #{tpu_custom_call.1} parent=5 // pred_fallthru
        _
      %p541 = scmp.lt.s32.totalorder %s28, 2
      // Predicated region
      $region73: #{tpu_custom_call.1} parent=5 // pred_check
        %p542 = pneg %p541
      $region74: #{tpu_custom_call.1} parent=5 // pred_check_branch
        %544 = sbr.rel (%p542) target = $region76
      $region75: #{tpu_custom_call.1} parent=5 // pred_region
        // Predicated region
        $region77: #{tpu_custom_call.1} parent=75 // pred_check
          %p545 = pneg %p218
        $region78: #{tpu_custom_call.1} parent=75 // pred_check_branch
          %547 = sbr.rel (%p545) target = $region80
        $region79: #{tpu_custom_call.1} parent=75 // pred_region
          %s548 = smul.u32 4, %s36
          %p549 = scmp.lt.s32.totalorder %s548, 7
          %s550 = scalar_select %p549, %s548, 7
          %p551 = scmp.lt.s32.totalorder %s35, 0
          %s552 = scalar_select %p551, %s35, 0
          %s553 = sadd.s32 %s552, %s550
          %s554 = smul.addr %s553, 4
          %s555 = scalar_lea.vmem %s6, %s554
          %s556 = smul.u32 4, %s36
        $region80: #{tpu_custom_call.1} parent=75 // pred_fallthru
          _
      $region76: #{tpu_custom_call.1} parent=5 // pred_fallthru
        _
      %p557 = scmp.le.s32.totalorder 1, %s28
      %p558 = scmp.lt.s32.totalorder %s28, 3
      %p559 = pnand %p557, %p558
      %p560 = pneg %p559
      // Predicated region
      $region81: #{tpu_custom_call.1} parent=5 // pred_check
        _
      $region82: #{tpu_custom_call.1} parent=5 // pred_check_branch
        %562 = sbr.rel (%p559) target = $region84
      $region83: #{tpu_custom_call.1} parent=5 // pred_region
        %s563 = ssub.s32 %s28, 1
        // Predicated region
        $region85: #{tpu_custom_call.1} parent=83 // pred_check
          %p564 = pneg %p371
        $region86: #{tpu_custom_call.1} parent=83 // pred_check_branch
          %566 = sbr.rel (%p564) target = $region88
        $region87: #{tpu_custom_call.1} parent=83 // pred_region
          %568 = dma.done [#allocation6], 4096
        $region88: #{tpu_custom_call.1} parent=83 // pred_fallthru
          _
        %p569 = scmp.lt.s32.totalorder %s37, 0
        %s570 = scalar_select %p569, %s37, 0
        %s571 = smul.addr %s570, 4
        %s572 = scalar_lea.vmem %s0, %s571
        %p573 = pneg %p66
        %p574 = pneg %p63
        %s575 = smul.u32 4, %s37
        %p576 = scmp.lt.s32.totalorder %s575, 3
        %s577 = scalar_select %p576, %s575, 3
        %s578 = smul.addr %s577, 4
        %s579 = scalar_lea.vmem %s1, %s578
        %p580 = pneg %p92
        %p581 = pneg %p89
        %s582 = smul.u32 4, %s37
        %p583 = scmp.lt.s32.totalorder %s582, 3
        %s584 = scalar_select %p583, %s582, 3
        %s585 = smul.addr %s584, 4
        %s586 = scalar_lea.vmem %s2, %s585
        %p587 = pneg %p118
        %p588 = pneg %p115
        %p589 = scmp.lt.s32.totalorder %s37, 0
        %s590 = scalar_select %p589, %s37, 0
        %s591 = smul.addr %s590, 2
        %s592 = smul.addr %s591, 4
        %s593 = scalar_lea.vmem %s3, %s592
        %p594 = pneg %p144
        %p595 = pneg %p141
        %p596 = scmp.lt.s32.totalorder %s37, 0
        %s597 = scalar_select %p596, %s37, 0
        %s598 = smul.addr %s597, 4
        %s599 = scalar_lea.vmem %s4, %s598
        %p600 = pneg %p170
        %p601 = pneg %p167
        %p602 = scmp.lt.s32.totalorder %s37, 0
        %s603 = scalar_select %p602, %s37, 0
        %s604 = smul.addr %s603, 4
        %s605 = scalar_lea.vmem %s5, %s604
        %p606 = pneg %p196
        %p607 = pneg %p193
        %s608 = smul.u32 4, %s38
        %p609 = scmp.lt.s32.totalorder %s608, 7
        %s610 = scalar_select %p609, %s608, 7
        %p611 = scmp.lt.s32.totalorder %s37, 0
        %s612 = scalar_select %p611, %s37, 0
        %s613 = sadd.s32 %s612, %s610
        %s614 = smul.addr %s613, 4
        %s615 = scalar_lea.vmem %s6, %s614
        %p616 = pneg %p224
        %p617 = pneg %p221
        %p618 = pneg %p245
        %p619 = pneg %p242
        %p620 = pneg %p266
        %p621 = pneg %p263
        %p622 = pneg %p287
        %p623 = pneg %p284
        %p624 = pneg %p308
        %p625 = pneg %p305
        %p626 = pneg %p329
        %p627 = pneg %p326
        %p628 = pneg %p350
        %p629 = pneg %p347
        %p630 = pneg %p371
        %p631 = pneg %p368
        %p632 = pneg %p392
        %p633 = pneg %p389
        %p634 = pneg %p413
        %p635 = pneg %p410
        %p636 = pneg %p441
        %p637 = pneg %p438
        %s638 = sand.u32 %s428, 1
        %s639 = scalar_lea.sflag [#allocation7], %s638
        %s640 = sand.u32 %s428, 1
        %s641 = smul.addr %s640, 16
        %s642 = scalar_lea.vmem [#allocation8], %s641
        %p643 = scmp.lt.s32.totalorder %s37, 0
        %s644 = scalar_select %p643, %s37, 0
        %s645 = smul.addr %s644, 4
        %s646 = scalar_lea.vmem %s0, %s645
        %s647 = smul.u32 4, %s37
        %p648 = scmp.lt.s32.totalorder %s647, 3
        %s649 = scalar_select %p648, %s647, 3
        %s650 = smul.addr %s649, 4
        %s651 = scalar_lea.vmem %s1, %s650
        %s652 = smul.u32 4, %s37
        %s653 = smul.u32 4, %s37
        %p654 = scmp.lt.s32.totalorder %s653, 3
        %s655 = scalar_select %p654, %s653, 3
        %s656 = smul.addr %s655, 4
        %s657 = scalar_lea.vmem %s2, %s656
        %s658 = smul.u32 4, %s37
        %p659 = scmp.lt.s32.totalorder %s37, 0
        %s660 = scalar_select %p659, %s37, 0
        %s661 = smul.addr %s660, 2
        %s662 = smul.addr %s661, 4
        %s663 = scalar_lea.vmem %s3, %s662
        %p664 = scmp.lt.s32.totalorder %s37, 0
        %s665 = scalar_select %p664, %s37, 0
        %s666 = smul.addr %s665, 4
        %s667 = scalar_lea.vmem %s4, %s666
        %p668 = scmp.lt.s32.totalorder %s37, 0
        %s669 = scalar_select %p668, %s37, 0
        %s670 = smul.addr %s669, 4
        %s671 = scalar_lea.vmem %s5, %s670
        %s672 = smul.u32 4, %s38
        %p673 = scmp.lt.s32.totalorder %s672, 7
        %s674 = scalar_select %p673, %s672, 7
        %p675 = scmp.lt.s32.totalorder %s37, 0
        %s676 = scalar_select %p675, %s37, 0
        %s677 = sadd.s32 %s676, %s674
        %s678 = smul.addr %s677, 4
        %s679 = scalar_lea.vmem %s6, %s678
        %s680 = smul.u32 4, %s38
        %s681 = smul.u32 4, %s38
        %p682 = scmp.eq.s32.totalorder %s38, 0
        // Predicated region
        $region89: #{tpu_custom_call.1} parent=83 // pred_check
          %p683 = pneg %p682
        $region90: #{tpu_custom_call.1} parent=83 // pred_check_branch
          %685 = sbr.rel (%p683) target = $region92
        $region91: #{tpu_custom_call.1} parent=83 // pred_region
          %v686 = vld [vmem:[%s667] sm:$0xf]
          %vm687 = vcmask 519168
          %688 = vst.msk [vmem:[#allocation2] sm:$0xf] %vm687, %v686
          %v689 = vld [vmem:[%s671] sm:$0xf]
          %690 = vst.msk [vmem:[#allocation3] sm:$0xf] %vm687, %v689
        $region92: #{tpu_custom_call.1} parent=83 // pred_fallthru
          _
        %v691 = vld [vmem:[%s651] sm:$0xf]
        %v692 = vld [vmem:[%s651 + $0x4] sm:$0xf]
        %v693 = vld [vmem:[%s651 + $0x8] sm:$0xf]
        %v694 = vld [vmem:[%s651 + $0xc] sm:$0xf]
        %v695 = vld [vmem:[%s657] sm:$0xf]
        %v696 = vld [vmem:[%s657 + $0x4] sm:$0xf]
        %v697 = vld [vmem:[%s657 + $0x8] sm:$0xf]
        %v698 = vld [vmem:[%s657 + $0xc] sm:$0xf]
        %v699 = vld [vmem:[%s663] sm:$0xff]
        %v700 = vld [vmem:[%s646] sm:$0xf]
        %v701 = vld [vmem:[#allocation2] sm:$0xf]
        %v702 = vld [vmem:[#allocation3] sm:$0xf]
        %s703 = smul.u32 %s38, 4
        %v704 = vld [vmem:[%s7] sm:$0xff]
        %v705 = vld [vmem:[%s7 + $0x8] sm:$0xff]
        %v706 = vld [vmem:[%s7 + $0x10] sm:$0xff]
        %v707 = vld [vmem:[%s7 + $0x18] sm:$0xff]
        %v708 = vld [vmem:[%s7 + $0x20] sm:$0xff]
        %v709 = vld [vmem:[%s7 + $0x28] sm:$0xff]
        %v710 = vld [vmem:[%s7 + $0x30] sm:$0xff]
        %v711 = vld [vmem:[%s7 + $0x38] sm:$0xff]
        %v712 = vld [vmem:[%s8] sm:$0x1]
        %v714 = vperm.slane %v712, 0
        %vm716 = vcmask 523264
        %v718 = vsel %vm716, %v701, 0
        %720 = vmatpush.msra.mxu0 0.0
        %721 = vmatpush.msra.mxu0 0.0
        %722 = vmatpush.msra.mxu0 0.0
        %723 = vmatpush.msra.mxu0 0.0
        %724 = vmatpush.msra.mxu0 0.0
        %725 = vmatpush.msra.mxu0 0.0
        %726 = vmatpush.msra.mxu0 0.0
        %727 = vmatpush.msra.mxu0 0.0
        %728 = vmatpush.msra.mxu0 %v711
        %729 = vmatpush.msra.mxu0 %v710
        %730 = vmatpush.msra.mxu0 %v709
        %731 = vmatpush.msra.mxu0 %v708
        %732 = vmatpush.msra.mxu0 %v707
        %733 = vmatpush.msra.mxu0 %v706
        %734 = vmatpush.msra.mxu0 %v705
        %735 = vmatpush.msra.mxu0 %v704
        %736 = vmatmul.f32.gmra.mxu0 %v718
        %v737 = vpop.f32.mrf.mxu0
        %v738 = vadd.f32 %v714, %v737
        %739 = vdwg.mxu0
        %v741 = vrot.slane %v738, 1
        %v742 = vrot.slane %v738, 2
        %v743 = vrot.slane %v738, 3
        %v744 = vperm.slane %v738, 0
        %v745 = vperm.slane %v741, 0
        %v746 = vperm.slane %v742, 0
        %v747 = vperm.slane %v743, 0
        %v752 = vadd.f32 %v695, %v744
        %v753 = vadd.f32 %v696, %v745
        %v754 = vadd.f32 %v697, %v746
        %v755 = vadd.f32 %v698, %v747
        %v756 = vmax.f32 %v752, 0.0
        %v757 = vmax.f32 %v753, 0.0
        %v758 = vmax.f32 %v754, 0.0
        %v759 = vmax.f32 %v755, 0.0
        %v760 = vld [vmem:[%s9] sm:$0x1]
        %v762 = vperm.slane %v760, 0
        %v764 = vmul.f32 %v756, %v762
        %v765 = vmul.f32 %v757, %v762
        %v766 = vmul.f32 %v758, %v762
        %v767 = vmul.f32 %v759, %v762
        %vm768 = vcmask 257024
        %v769 = vsel %vm768, %v764, 0.0
        %770 = vadd.xlane.f32.xlu0 %v769
        %v771 = vpop.xlane.xlu0 %770
        %v772 = vsel %vm768, %v765, 0.0
        %773 = vadd.xlane.f32.xlu0 %v772
        %v774 = vpop.xlane.xlu0 %773
        %v775 = vsel %vm768, %v766, 0.0
        %776 = vadd.xlane.f32.xlu0 %v775
        %v777 = vpop.xlane.xlu0 %776
        %v778 = vsel %vm768, %v767, 0.0
        %779 = vadd.xlane.f32.xlu0 %v778
        %v780 = vpop.xlane.xlu0 %779
        %v781 = vld [vmem:[#allocation4] sm:$0x1]
        %v783 = vperm.slane %v781, 0
        %784 = vset.pattern.permute.xlu0 0
        %785 = vperm.xlu0 %784, %v783
        %v786 = vpop.permute.xlu0 %785
        %v788 = vadd.f32 %v771, %v786
        %v789 = vadd.f32 %v774, %v786
        %v790 = vadd.f32 %v777, %v786
        %v791 = vadd.f32 %v780, %v786
        %v796 = vlaneseq
        %v797 = vand.u32 %v796, 127
        %v798 = vperm.slane %v788, %v797
        %v799 = vperm.slane %v789, %v797
        %v800 = vperm.slane %v790, %v797
        %v801 = vperm.slane %v791, %v797
        %vm802 = vcmask 1041409
        %v803 = vsel %vm802, %v799, %v798
        %vm804 = vcmask 1042434
        %v805 = vsel %vm804, %v800, %v803
        %vm806 = vcmask 1043459
        %v807 = vsel %vm806, %v801, %v805
        %vm809 = vcmask 27648
        %v810 = vsel %vm809, %v807, -inf
        %811 = vmax.xlane.f32.xlu0 %v810
        %v812 = vpop.xlane.xlu0 %811
        %v814 = vperm.slane %v812, 0
        %v815 = vperm.slane %v812, 1
        %v816 = vperm.slane %v812, 2
        %v817 = vperm.slane %v812, 3
        %v822 = vsub.f32 %v788, %v814
        %v823 = vsub.f32 %v789, %v815
        %v824 = vsub.f32 %v790, %v816
        %v825 = vsub.f32 %v791, %v817
        %v826 = vmul.f32 %v822, 1.442695
        %v827 = vpow.pop %v826
        %v828 = vmul.f32 %v823, 1.442695
        %v829 = vpow.pop %v828
        %v830 = vmul.f32 %v824, 1.442695
        %v831 = vpow.pop %v830
        %v832 = vmul.f32 %v825, 1.442695
        %v833 = vpow.pop %v832
        %838 = vset.pattern.permute.xlu0 0
        %839 = vperm.xlu0 %838, %v827
        %v840 = vpop.permute.xlu0 %839
        %841 = vset.pattern.permute.xlu0 0
        %842 = vperm.xlu0 %841, %v829
        %v843 = vpop.permute.xlu0 %842
        %844 = vset.pattern.permute.xlu0 0
        %845 = vperm.xlu0 %844, %v831
        %v846 = vpop.permute.xlu0 %845
        %847 = vset.pattern.permute.xlu0 0
        %848 = vperm.xlu0 %847, %v833
        %v849 = vpop.permute.xlu0 %848
        %v850 = vperm.slane %v840, %v797
        %v851 = vperm.slane %v843, %v797
        %v852 = vperm.slane %v846, %v797
        %v853 = vperm.slane %v849, %v797
        %v854 = vsel %vm802, %v851, %v850
        %v855 = vsel %vm804, %v852, %v854
        %v856 = vsel %vm806, %v853, %v855
        %v858 = vsel %vm809, %v856, 0.0
        %859 = vadd.xlane.f32.xlu0 %v858
        %v860 = vpop.xlane.xlu0 %859
        %v861 = vrcp.pop %v860
        %v863 = vperm.slane %v861, 0
        %v864 = vperm.slane %v861, 1
        %v865 = vperm.slane %v861, 2
        %v866 = vperm.slane %v861, 3
        %v871 = vmul.f32 %v827, %v863
        %v872 = vmul.f32 %v829, %v864
        %v873 = vmul.f32 %v831, %v865
        %v874 = vmul.f32 %v833, %v866
        %876 = vset.pattern.permute.xlu0 0
        %877 = vperm.xlu0 %876, %v871
        %v878 = vpop.permute.xlu0 %877
        %v879 = vperm.slane %v878, %v797
        %vm880 = vcmask 31744
        %v881 = vsel %vm880, %v879, 0
        %vm883 = vcmask 1043456
        %v885 = vsel %vm883, %v691, 0
        %887 = vmatpush.msra.mxu0 0.0
        %888 = vmatpush.msra.mxu0 0.0
        %889 = vmatpush.msra.mxu0 0.0
        %890 = vmatpush.msra.mxu0 0.0
        %891 = vmatpush.msra.mxu0 0.0
        %892 = vmatpush.msra.mxu0 0.0
        %893 = vmatpush.msra.mxu0 0.0
        %894 = vmatpush.msra.mxu0 0.0
        %895 = vmatpush.msra.mxu0 0.0
        %896 = vmatpush.msra.mxu0 0.0
        %897 = vmatpush.msra.mxu0 0.0
        %898 = vmatpush.msra.mxu0 0.0
        %899 = vmatpush.msra.mxu0 0.0
        %900 = vmatpush.msra.mxu0 0.0
        %901 = vmatpush.msra.mxu0 0.0
        %902 = vmatpush.msra.mxu0 %v885
        %903 = vmatmul.f32.gmra.mxu0 %v881
        %v904 = vpop.f32.mrf.mxu0
        %v905 = vadd.f32 0.0, %v904
        %906 = vdwg.mxu0
        %908 = vset.pattern.permute.xlu0 0
        %909 = vperm.xlu0 %908, %v872
        %v910 = vpop.permute.xlu0 %909
        %v911 = vperm.slane %v910, %v797
        %v912 = vsel %vm880, %v911, 0
        %v915 = vsel %vm883, %v692, 0
        %917 = vmatpush.msra.mxu0 0.0
        %918 = vmatpush.msra.mxu0 0.0
        %919 = vmatpush.msra.mxu0 0.0
        %920 = vmatpush.msra.mxu0 0.0
        %921 = vmatpush.msra.mxu0 0.0
        %922 = vmatpush.msra.mxu0 0.0
        %923 = vmatpush.msra.mxu0 0.0
        %924 = vmatpush.msra.mxu0 0.0
        %925 = vmatpush.msra.mxu0 0.0
        %926 = vmatpush.msra.mxu0 0.0
        %927 = vmatpush.msra.mxu0 0.0
        %928 = vmatpush.msra.mxu0 0.0
        %929 = vmatpush.msra.mxu0 0.0
        %930 = vmatpush.msra.mxu0 0.0
        %931 = vmatpush.msra.mxu0 0.0
        %932 = vmatpush.msra.mxu0 %v915
        %933 = vmatmul.f32.gmra.mxu0 %v912
        %v934 = vpop.f32.mrf.mxu0
        %v935 = vadd.f32 0.0, %v934
        %936 = vdwg.mxu0
        %938 = vset.pattern.permute.xlu0 0
        %939 = vperm.xlu0 %938, %v873
        %v940 = vpop.permute.xlu0 %939
        %v941 = vperm.slane %v940, %v797
        %v942 = vsel %vm880, %v941, 0
        %v945 = vsel %vm883, %v693, 0
        %947 = vmatpush.msra.mxu0 0.0
        %948 = vmatpush.msra.mxu0 0.0
        %949 = vmatpush.msra.mxu0 0.0
        %950 = vmatpush.msra.mxu0 0.0
        %951 = vmatpush.msra.mxu0 0.0
        %952 = vmatpush.msra.mxu0 0.0
        %953 = vmatpush.msra.mxu0 0.0
        %954 = vmatpush.msra.mxu0 0.0
        %955 = vmatpush.msra.mxu0 0.0
        %956 = vmatpush.msra.mxu0 0.0
        %957 = vmatpush.msra.mxu0 0.0
        %958 = vmatpush.msra.mxu0 0.0
        %959 = vmatpush.msra.mxu0 0.0
        %960 = vmatpush.msra.mxu0 0.0
        %961 = vmatpush.msra.mxu0 0.0
        %962 = vmatpush.msra.mxu0 %v945
        %963 = vmatmul.f32.gmra.mxu0 %v942
        %v964 = vpop.f32.mrf.mxu0
        %v965 = vadd.f32 0.0, %v964
        %966 = vdwg.mxu0
        %968 = vset.pattern.permute.xlu0 0
        %969 = vperm.xlu0 %968, %v874
        %v970 = vpop.permute.xlu0 %969
        %v971 = vperm.slane %v970, %v797
        %v972 = vsel %vm880, %v971, 0
        %v975 = vsel %vm883, %v694, 0
        %977 = vmatpush.msra.mxu0 0.0
        %978 = vmatpush.msra.mxu0 0.0
        %979 = vmatpush.msra.mxu0 0.0
        %980 = vmatpush.msra.mxu0 0.0
        %981 = vmatpush.msra.mxu0 0.0
        %982 = vmatpush.msra.mxu0 0.0
        %983 = vmatpush.msra.mxu0 0.0
        %984 = vmatpush.msra.mxu0 0.0
        %985 = vmatpush.msra.mxu0 0.0
        %986 = vmatpush.msra.mxu0 0.0
        %987 = vmatpush.msra.mxu0 0.0
        %988 = vmatpush.msra.mxu0 0.0
        %989 = vmatpush.msra.mxu0 0.0
        %990 = vmatpush.msra.mxu0 0.0
        %991 = vmatpush.msra.mxu0 0.0
        %992 = vmatpush.msra.mxu0 %v975
        %993 = vmatmul.f32.gmra.mxu0 %v972
        %v994 = vpop.f32.mrf.mxu0
        %v995 = vadd.f32 0.0, %v994
        %996 = vdwg.mxu0
        %v997 = vld [vmem:[%s11] sm:$0xff]
        %v998 = vld [vmem:[%s11 + $0x8] sm:$0xff]
        %v999 = vld [vmem:[%s11 + $0x10] sm:$0xff]
        %v1000 = vld [vmem:[%s11 + $0x18] sm:$0xff]
        %v1001 = vld [vmem:[%s11 + $0x20] sm:$0xff]
        %v1002 = vld [vmem:[%s11 + $0x28] sm:$0xff]
        %v1003 = vld [vmem:[%s11 + $0x30] sm:$0xff]
        %v1004 = vld [vmem:[%s11 + $0x38] sm:$0xff]
        %v1005 = vld [vmem:[%s12] sm:$0x1]
        %v1007 = vperm.slane %v1005, 0
        %1009 = vmatpush.msra.mxu0 0.0
        %1010 = vmatpush.msra.mxu0 0.0
        %1011 = vmatpush.msra.mxu0 0.0
        %1012 = vmatpush.msra.mxu0 0.0
        %1013 = vmatpush.msra.mxu0 0.0
        %1014 = vmatpush.msra.mxu0 0.0
        %1015 = vmatpush.msra.mxu0 0.0
        %1016 = vmatpush.msra.mxu0 0.0
        %1017 = vmatpush.msra.mxu0 %v1004
        %1018 = vmatpush.msra.mxu0 %v1003
        %1019 = vmatpush.msra.mxu0 %v1002
        %1020 = vmatpush.msra.mxu0 %v1001
        %1021 = vmatpush.msra.mxu0 %v1000
        %1022 = vmatpush.msra.mxu0 %v999
        %1023 = vmatpush.msra.mxu0 %v998
        %1024 = vmatpush.msra.mxu0 %v997
        %1025 = vmatmul.f32.gmra.mxu0 %v718
        %v1026 = vpop.f32.mrf.mxu0
        %v1027 = vadd.f32 %v1007, %v1026
        %1028 = vdwg.mxu0
        %v1029 = vxor.u32 %v1027, 2147483648
        %v1030 = vmul.f32 %v1029, 1.442695
        %v1031 = vpow.pop %v1030
        %v1032 = vadd.f32 %v1031, 1.0
        %v1033 = vrcp.pop %v1032
        %v1034 = vmul.f32 %v1032, %v1033
        %v1035 = vsub.f32 1.0, %v1034
        %v1036 = vmul.f32 %v1033, %v1035
        %v1037 = vadd.f32 %v1033, %v1036
        %vm1038 = vweird.f32 %v1032
        %vm1039 = vweird.f32 %v1033
        %vm1040 = vmor %vm1038, %vm1039
        %v1041 = vsel %vm1040, %v1033, %v1037
        %v1042 = vand.u32 2147483647, %v1032
        %vm1043 = vcmp.eq.f32.partialorder %v1042, 8.507059e+37
        %v1044 = vand.u32 %v1032, 2147483648
        %v1045 = vor.u32 1.1754944e-38, %v1044
        %v1046 = vsel %vm1043, %v1045, %v1041
        %v1047 = vmul.f32 1.0, %v1046
        %v1052 = vrot.slane %v935, 7
        %v1053 = vsel %vm802, %v1052, %v905
        %v1054 = vrot.slane %v965, 6
        %v1055 = vsel %vm804, %v1054, %v1053
        %v1056 = vrot.slane %v995, 5
        %v1057 = vsel %vm806, %v1056, %v1055
        %v1059 = vmul.f32 %v1047, %v1057
        %v1060 = vld [vmem:[%s679] sm:$0xf]
        %1062 = vrot.lane.b32.xlu0 %v1059, 32
        %v1063 = vpop.permute.xlu0 %1062
        %1065 = vrot.lane.b32.xlu0 %v701, 64
        %v1066 = vpop.permute.xlu0 %1065
        %vm1068 = vcmask 261120
        %v1069 = vsel %vm1068, %v1060, %v1063
        %v1070 = vsel %vm716, %v1069, %v1066
        %v1071 = vld [vmem:[#allocation5] sm:$0xff]
        %v1072 = vld [vmem:[#allocation5 + $0x8] sm:$0xff]
        %v1073 = vld [vmem:[#allocation5 + $0x10] sm:$0xff]
        %v1074 = vld [vmem:[#allocation5 + $0x18] sm:$0xff]
        %v1075 = vld [vmem:[#allocation5 + $0x20] sm:$0xff]
        %v1076 = vld [vmem:[#allocation5 + $0x28] sm:$0xff]
        %v1077 = vld [vmem:[#allocation5 + $0x30] sm:$0xff]
        %v1078 = vld [vmem:[#allocation5 + $0x38] sm:$0xff]
        %v1079 = vld [vmem:[#allocation5 + $0x40] sm:$0xff]
        %v1080 = vld [vmem:[#allocation5 + $0x48] sm:$0xff]
        %v1081 = vld [vmem:[#allocation5 + $0x50] sm:$0xff]
        %v1082 = vld [vmem:[#allocation5 + $0x58] sm:$0xff]
        %v1083 = vld [vmem:[#allocation5 + $0x60] sm:$0xff]
        %v1084 = vld [vmem:[#allocation5 + $0x68] sm:$0xff]
        %v1085 = vld [vmem:[#allocation5 + $0x70] sm:$0xff]
        %v1086 = vld [vmem:[#allocation5 + $0x78] sm:$0xff]
        %v1087 = vld [vmem:[#allocation5 + $0x80] sm:$0xff]
        %v1088 = vld [vmem:[#allocation5 + $0x88] sm:$0xff]
        %v1089 = vld [vmem:[#allocation5 + $0x90] sm:$0xff]
        %v1090 = vld [vmem:[#allocation5 + $0x98] sm:$0xff]
        %v1091 = vld [vmem:[#allocation5 + $0xa0] sm:$0xff]
        %v1092 = vld [vmem:[#allocation5 + $0xa8] sm:$0xff]
        %v1093 = vld [vmem:[#allocation5 + $0xb0] sm:$0xff]
        %v1094 = vld [vmem:[#allocation5 + $0xb8] sm:$0xff]
        %v1095 = vld [vmem:[#allocation5 + $0xc0] sm:$0xff]
        %v1096 = vld [vmem:[#allocation5 + $0xc8] sm:$0xff]
        %v1097 = vld [vmem:[#allocation5 + $0xd0] sm:$0xff]
        %v1098 = vld [vmem:[#allocation5 + $0xd8] sm:$0xff]
        %v1099 = vld [vmem:[#allocation5 + $0xe0] sm:$0xff]
        %v1100 = vld [vmem:[#allocation5 + $0xe8] sm:$0xff]
        %v1101 = vld [vmem:[#allocation5 + $0xf0] sm:$0xff]
        %v1102 = vld [vmem:[#allocation5 + $0xf8] sm:$0xff]
        %1104 = vst [vmem:[#allocation1] ss:$2 sm:$0xff] %v699
        %v1105 = vld.sshfl [vmem:[#allocation1] sm:$0xff pattern:$0x75316420]
        %v1106 = vld.sshfl [vmem:[#allocation1 + $0x8] sm:$0xff pattern:$0x75316420]
        %1109 = vmatpush.msra.mxu0 %v1101
        %1110 = vmatpush.msra.mxu0 %v1099
        %1111 = vmatpush.msra.mxu0 %v1097
        %1112 = vmatpush.msra.mxu0 %v1095
        %1113 = vmatpush.msra.mxu0 %v1093
        %1114 = vmatpush.msra.mxu0 %v1091
        %1115 = vmatpush.msra.mxu0 %v1089
        %1116 = vmatpush.msra.mxu0 %v1087
        %1117 = vmatpush.msra.mxu0 %v1085
        %1118 = vmatpush.msra.mxu0 %v1083
        %1119 = vmatpush.msra.mxu0 %v1081
        %1120 = vmatpush.msra.mxu0 %v1079
        %1121 = vmatpush.msra.mxu0 %v1077
        %1122 = vmatpush.msra.mxu0 %v1075
        %1123 = vmatpush.msra.mxu0 %v1073
        %1124 = vmatpush.msra.mxu0 %v1071
        %1125 = vmatmul.f32.gmra.mxu0 %v1070
        %v1126 = vpop.f32.mrf.mxu0
        %v1127 = vadd.f32 %v1105, %v1126
        %1128 = vdwg.mxu0
        %1129 = vmatpush.msra.mxu0 %v1102
        %1130 = vmatpush.msra.mxu0 %v1100
        %1131 = vmatpush.msra.mxu0 %v1098
        %1132 = vmatpush.msra.mxu0 %v1096
        %1133 = vmatpush.msra.mxu0 %v1094
        %1134 = vmatpush.msra.mxu0 %v1092
        %1135 = vmatpush.msra.mxu0 %v1090
        %1136 = vmatpush.msra.mxu0 %v1088
        %1137 = vmatpush.msra.mxu0 %v1086
        %1138 = vmatpush.msra.mxu0 %v1084
        %1139 = vmatpush.msra.mxu0 %v1082
        %1140 = vmatpush.msra.mxu0 %v1080
        %1141 = vmatpush.msra.mxu0 %v1078
        %1142 = vmatpush.msra.mxu0 %v1076
        %1143 = vmatpush.msra.mxu0 %v1074
        %1144 = vmatpush.msra.mxu0 %v1072
        %1145 = vmatmul.f32.gmra.mxu0 %v1070
        %v1146 = vpop.f32.mrf.mxu0
        %v1147 = vadd.f32 %v1106, %v1146
        %1148 = vdwg.mxu0
        %v1149 = vxor.u32 %v1127, 2147483648
        %v1150 = vmul.f32 %v1149, 1.442695
        %v1151 = vpow.pop %v1150
        %v1152 = vadd.f32 %v1151, 1.0
        %v1153 = vrcp.pop %v1152
        %v1154 = vmul.f32 %v1152, %v1153
        %v1155 = vsub.f32 1.0, %v1154
        %v1156 = vmul.f32 %v1153, %v1155
        %v1157 = vadd.f32 %v1153, %v1156
        %vm1158 = vweird.f32 %v1152
        %vm1159 = vweird.f32 %v1153
        %vm1160 = vmor %vm1158, %vm1159
        %v1161 = vsel %vm1160, %v1153, %v1157
        %v1162 = vand.u32 2147483647, %v1152
        %vm1163 = vcmp.eq.f32.partialorder %v1162, 8.507059e+37
        %v1164 = vand.u32 %v1152, 2147483648
        %v1165 = vor.u32 1.1754944e-38, %v1164
        %v1166 = vsel %vm1163, %v1165, %v1161
        %v1167 = vmul.f32 1.0, %v1166
        %v1168 = vtanh.pop %v1147
        %v1169 = vxor.u32 %v1147, 2147483648
        %v1170 = vmul.f32 %v1169, 1.442695
        %v1171 = vpow.pop %v1170
        %v1172 = vadd.f32 %v1171, 1.0
        %v1173 = vrcp.pop %v1172
        %v1174 = vmul.f32 %v1172, %v1173
        %v1175 = vsub.f32 1.0, %v1174
        %v1176 = vmul.f32 %v1173, %v1175
        %v1177 = vadd.f32 %v1173, %v1176
        %vm1178 = vweird.f32 %v1172
        %vm1179 = vweird.f32 %v1173
        %vm1180 = vmor %vm1178, %vm1179
        %v1181 = vsel %vm1180, %v1173, %v1177
        %v1182 = vand.u32 2147483647, %v1172
        %vm1183 = vcmp.eq.f32.partialorder %v1182, 8.507059e+37
        %v1184 = vand.u32 %v1172, 2147483648
        %v1185 = vor.u32 1.1754944e-38, %v1184
        %v1186 = vsel %vm1183, %v1185, %v1181
        %v1187 = vmul.f32 1.0, %v1186
        %1189 = vrot.lane.b32.xlu0 %v702, 64
        %v1190 = vpop.permute.xlu0 %1189
        %v1192 = vmul.f32 %v1167, %v1190
        %v1193 = vmul.f32 %v1167, %v1168
        %1195 = vrot.lane.b32.xlu0 %v1193, 64
        %v1196 = vpop.permute.xlu0 %1195
        %v1198 = vadd.f32 %v1192, %v1196
        %v1199 = vtanh.pop %v1198
        %v1200 = vmul.f32 %v1187, %v1199
        %v1201 = vld [vmem:[%s14] sm:$0xff]
        %v1202 = vld [vmem:[%s14 + $0x8] sm:$0xff]
        %v1203 = vld [vmem:[%s14 + $0x10] sm:$0xff]
        %v1204 = vld [vmem:[%s14 + $0x18] sm:$0xff]
        %v1205 = vld [vmem:[%s14 + $0x20] sm:$0xff]
        %v1206 = vld [vmem:[%s14 + $0x28] sm:$0xff]
        %v1207 = vld [vmem:[%s14 + $0x30] sm:$0xff]
        %v1208 = vld [vmem:[%s14 + $0x38] sm:$0xff]
        %v1209 = vld [vmem:[%s15] sm:$0x1]
        %v1211 = vperm.slane %v1209, 0
        %1214 = vrot.lane.b32.xlu0 %v1200, 64
        %v1215 = vpop.permute.xlu0 %1214
        %v1216 = vsel %vm716, %v1215, 0
        %1218 = vmatpush.msra.mxu0 0.0
        %1219 = vmatpush.msra.mxu0 0.0
        %1220 = vmatpush.msra.mxu0 0.0
        %1221 = vmatpush.msra.mxu0 0.0
        %1222 = vmatpush.msra.mxu0 0.0
        %1223 = vmatpush.msra.mxu0 0.0
        %1224 = vmatpush.msra.mxu0 0.0
        %1225 = vmatpush.msra.mxu0 0.0
        %1226 = vmatpush.msra.mxu0 %v1208
        %1227 = vmatpush.msra.mxu0 %v1207
        %1228 = vmatpush.msra.mxu0 %v1206
        %1229 = vmatpush.msra.mxu0 %v1205
        %1230 = vmatpush.msra.mxu0 %v1204
        %1231 = vmatpush.msra.mxu0 %v1203
        %1232 = vmatpush.msra.mxu0 %v1202
        %1233 = vmatpush.msra.mxu0 %v1201
        %1234 = vmatmul.f32.gmra.mxu0 %v1216
        %v1235 = vpop.f32.mrf.mxu0
        %v1236 = vadd.f32 %v1211, %v1235
        %1237 = vdwg.mxu0
        %v1238 = vstv %s703
        %vm1239 = vcmp.gt.s32.totalorder %v700, %v1238
        %v1240 = vsel %vm1239, 1, 0
        %1241 = vset.pattern.permute.xlu0 0
        %1242 = vperm.xlu0 %1241, %v1240
        %v1243 = vpop.permute.xlu0 %1242
        %vm1244 = vcmp.eq.s32.totalorder %v1243, 1
        %v1245 = vsel %vm1244, %v1236, 0.0
        %1246 = vst [vmem:[%s642] sm:$0xf] %v1245
        %s1247 = sadd.s32 %s703, 1
        %v1248 = vld [vmem:[%s7] sm:$0xff]
        %v1249 = vld [vmem:[%s7 + $0x8] sm:$0xff]
        %v1250 = vld [vmem:[%s7 + $0x10] sm:$0xff]
        %v1251 = vld [vmem:[%s7 + $0x18] sm:$0xff]
        %v1252 = vld [vmem:[%s7 + $0x20] sm:$0xff]
        %v1253 = vld [vmem:[%s7 + $0x28] sm:$0xff]
        %v1254 = vld [vmem:[%s7 + $0x30] sm:$0xff]
        %v1255 = vld [vmem:[%s7 + $0x38] sm:$0xff]
        %v1256 = vld [vmem:[%s8] sm:$0x1]
        %v1258 = vperm.slane %v1256, 0
        %1260 = vmatpush.msra.mxu0 0.0
        %1261 = vmatpush.msra.mxu0 0.0
        %1262 = vmatpush.msra.mxu0 0.0
        %1263 = vmatpush.msra.mxu0 0.0
        %1264 = vmatpush.msra.mxu0 0.0
        %1265 = vmatpush.msra.mxu0 0.0
        %1266 = vmatpush.msra.mxu0 0.0
        %1267 = vmatpush.msra.mxu0 0.0
        %1268 = vmatpush.msra.mxu0 %v1255
        %1269 = vmatpush.msra.mxu0 %v1254
        %1270 = vmatpush.msra.mxu0 %v1253
        %1271 = vmatpush.msra.mxu0 %v1252
        %1272 = vmatpush.msra.mxu0 %v1251
        %1273 = vmatpush.msra.mxu0 %v1250
        %1274 = vmatpush.msra.mxu0 %v1249
        %1275 = vmatpush.msra.mxu0 %v1248
        %1276 = vmatmul.f32.gmra.mxu0 %v1216
        %v1277 = vpop.f32.mrf.mxu0
        %v1278 = vadd.f32 %v1258, %v1277
        %1279 = vdwg.mxu0
        %v1281 = vrot.slane %v1278, 1
        %v1282 = vrot.slane %v1278, 2
        %v1283 = vrot.slane %v1278, 3
        %v1284 = vperm.slane %v1278, 0
        %v1285 = vperm.slane %v1281, 0
        %v1286 = vperm.slane %v1282, 0
        %v1287 = vperm.slane %v1283, 0
        %v1292 = vadd.f32 %v695, %v1284
        %v1293 = vadd.f32 %v696, %v1285
        %v1294 = vadd.f32 %v697, %v1286
        %v1295 = vadd.f32 %v698, %v1287
        %v1296 = vmax.f32 %v1292, 0.0
        %v1297 = vmax.f32 %v1293, 0.0
        %v1298 = vmax.f32 %v1294, 0.0
        %v1299 = vmax.f32 %v1295, 0.0
        %v1300 = vld [vmem:[%s9] sm:$0x1]
        %v1302 = vperm.slane %v1300, 0
        %v1304 = vmul.f32 %v1296, %v1302
        %v1305 = vmul.f32 %v1297, %v1302
        %v1306 = vmul.f32 %v1298, %v1302
        %v1307 = vmul.f32 %v1299, %v1302
        %v1308 = vsel %vm768, %v1304, 0.0
        %1309 = vadd.xlane.f32.xlu0 %v1308
        %v1310 = vpop.xlane.xlu0 %1309
        %v1311 = vsel %vm768, %v1305, 0.0
        %1312 = vadd.xlane.f32.xlu0 %v1311
        %v1313 = vpop.xlane.xlu0 %1312
        %v1314 = vsel %vm768, %v1306, 0.0
        %1315 = vadd.xlane.f32.xlu0 %v1314
        %v1316 = vpop.xlane.xlu0 %1315
        %v1317 = vsel %vm768, %v1307, 0.0
        %1318 = vadd.xlane.f32.xlu0 %v1317
        %v1319 = vpop.xlane.xlu0 %1318
        %v1320 = vld [vmem:[#allocation4] sm:$0x1]
        %v1322 = vperm.slane %v1320, 0
        %1323 = vset.pattern.permute.xlu0 0
        %1324 = vperm.xlu0 %1323, %v1322
        %v1325 = vpop.permute.xlu0 %1324
        %v1327 = vadd.f32 %v1310, %v1325
        %v1328 = vadd.f32 %v1313, %v1325
        %v1329 = vadd.f32 %v1316, %v1325
        %v1330 = vadd.f32 %v1319, %v1325
        %v1335 = vperm.slane %v1327, %v797
        %v1336 = vperm.slane %v1328, %v797
        %v1337 = vperm.slane %v1329, %v797
        %v1338 = vperm.slane %v1330, %v797
        %v1339 = vsel %vm802, %v1336, %v1335
        %v1340 = vsel %vm804, %v1337, %v1339
        %v1341 = vsel %vm806, %v1338, %v1340
        %v1343 = vsel %vm809, %v1341, -inf
        %1344 = vmax.xlane.f32.xlu0 %v1343
        %v1345 = vpop.xlane.xlu0 %1344
        %v1347 = vperm.slane %v1345, 0
        %v1348 = vperm.slane %v1345, 1
        %v1349 = vperm.slane %v1345, 2
        %v1350 = vperm.slane %v1345, 3
        %v1355 = vsub.f32 %v1327, %v1347
        %v1356 = vsub.f32 %v1328, %v1348
        %v1357 = vsub.f32 %v1329, %v1349
        %v1358 = vsub.f32 %v1330, %v1350
        %v1359 = vmul.f32 %v1355, 1.442695
        %v1360 = vpow.pop %v1359
        %v1361 = vmul.f32 %v1356, 1.442695
        %v1362 = vpow.pop %v1361
        %v1363 = vmul.f32 %v1357, 1.442695
        %v1364 = vpow.pop %v1363
        %v1365 = vmul.f32 %v1358, 1.442695
        %v1366 = vpow.pop %v1365
        %1371 = vset.pattern.permute.xlu0 0
        %1372 = vperm.xlu0 %1371, %v1360
        %v1373 = vpop.permute.xlu0 %1372
        %1374 = vset.pattern.permute.xlu0 0
        %1375 = vperm.xlu0 %1374, %v1362
        %v1376 = vpop.permute.xlu0 %1375
        %1377 = vset.pattern.permute.xlu0 0
        %1378 = vperm.xlu0 %1377, %v1364
        %v1379 = vpop.permute.xlu0 %1378
        %1380 = vset.pattern.permute.xlu0 0
        %1381 = vperm.xlu0 %1380, %v1366
        %v1382 = vpop.permute.xlu0 %1381
        %v1383 = vperm.slane %v1373, %v797
        %v1384 = vperm.slane %v1376, %v797
        %v1385 = vperm.slane %v1379, %v797
        %v1386 = vperm.slane %v1382, %v797
        %v1387 = vsel %vm802, %v1384, %v1383
        %v1388 = vsel %vm804, %v1385, %v1387
        %v1389 = vsel %vm806, %v1386, %v1388
        %v1391 = vsel %vm809, %v1389, 0.0
        %1392 = vadd.xlane.f32.xlu0 %v1391
        %v1393 = vpop.xlane.xlu0 %1392
        %v1394 = vrcp.pop %v1393
        %v1396 = vperm.slane %v1394, 0
        %v1397 = vperm.slane %v1394, 1
        %v1398 = vperm.slane %v1394, 2
        %v1399 = vperm.slane %v1394, 3
        %v1404 = vmul.f32 %v1360, %v1396
        %v1405 = vmul.f32 %v1362, %v1397
        %v1406 = vmul.f32 %v1364, %v1398
        %v1407 = vmul.f32 %v1366, %v1399
        %1409 = vset.pattern.permute.xlu0 0
        %1410 = vperm.xlu0 %1409, %v1404
        %v1411 = vpop.permute.xlu0 %1410
        %v1412 = vperm.slane %v1411, %v797
        %v1413 = vsel %vm880, %v1412, 0
        %1415 = vmatpush.msra.mxu0 0.0
        %1416 = vmatpush.msra.mxu0 0.0
        %1417 = vmatpush.msra.mxu0 0.0
        %1418 = vmatpush.msra.mxu0 0.0
        %1419 = vmatpush.msra.mxu0 0.0
        %1420 = vmatpush.msra.mxu0 0.0
        %1421 = vmatpush.msra.mxu0 0.0
        %1422 = vmatpush.msra.mxu0 0.0
        %1423 = vmatpush.msra.mxu0 0.0
        %1424 = vmatpush.msra.mxu0 0.0
        %1425 = vmatpush.msra.mxu0 0.0
        %1426 = vmatpush.msra.mxu0 0.0
        %1427 = vmatpush.msra.mxu0 0.0
        %1428 = vmatpush.msra.mxu0 0.0
        %1429 = vmatpush.msra.mxu0 0.0
        %1430 = vmatpush.msra.mxu0 %v885
        %1431 = vmatmul.f32.gmra.mxu0 %v1413
        %v1432 = vpop.f32.mrf.mxu0
        %v1433 = vadd.f32 0.0, %v1432
        %1434 = vdwg.mxu0
        %1436 = vset.pattern.permute.xlu0 0
        %1437 = vperm.xlu0 %1436, %v1405
        %v1438 = vpop.permute.xlu0 %1437
        %v1439 = vperm.slane %v1438, %v797
        %v1440 = vsel %vm880, %v1439, 0
        %1442 = vmatpush.msra.mxu0 0.0
        %1443 = vmatpush.msra.mxu0 0.0
        %1444 = vmatpush.msra.mxu0 0.0
        %1445 = vmatpush.msra.mxu0 0.0
        %1446 = vmatpush.msra.mxu0 0.0
        %1447 = vmatpush.msra.mxu0 0.0
        %1448 = vmatpush.msra.mxu0 0.0
        %1449 = vmatpush.msra.mxu0 0.0
        %1450 = vmatpush.msra.mxu0 0.0
        %1451 = vmatpush.msra.mxu0 0.0
        %1452 = vmatpush.msra.mxu0 0.0
        %1453 = vmatpush.msra.mxu0 0.0
        %1454 = vmatpush.msra.mxu0 0.0
        %1455 = vmatpush.msra.mxu0 0.0
        %1456 = vmatpush.msra.mxu0 0.0
        %1457 = vmatpush.msra.mxu0 %v915
        %1458 = vmatmul.f32.gmra.mxu0 %v1440
        %v1459 = vpop.f32.mrf.mxu0
        %v1460 = vadd.f32 0.0, %v1459
        %1461 = vdwg.mxu0
        %1463 = vset.pattern.permute.xlu0 0
        %1464 = vperm.xlu0 %1463, %v1406
        %v1465 = vpop.permute.xlu0 %1464
        %v1466 = vperm.slane %v1465, %v797
        %v1467 = vsel %vm880, %v1466, 0
        %1469 = vmatpush.msra.mxu0 0.0
        %1470 = vmatpush.msra.mxu0 0.0
        %1471 = vmatpush.msra.mxu0 0.0
        %1472 = vmatpush.msra.mxu0 0.0
        %1473 = vmatpush.msra.mxu0 0.0
        %1474 = vmatpush.msra.mxu0 0.0
        %1475 = vmatpush.msra.mxu0 0.0
        %1476 = vmatpush.msra.mxu0 0.0
        %1477 = vmatpush.msra.mxu0 0.0
        %1478 = vmatpush.msra.mxu0 0.0
        %1479 = vmatpush.msra.mxu0 0.0
        %1480 = vmatpush.msra.mxu0 0.0
        %1481 = vmatpush.msra.mxu0 0.0
        %1482 = vmatpush.msra.mxu0 0.0
        %1483 = vmatpush.msra.mxu0 0.0
        %1484 = vmatpush.msra.mxu0 %v945
        %1485 = vmatmul.f32.gmra.mxu0 %v1467
        %v1486 = vpop.f32.mrf.mxu0
        %v1487 = vadd.f32 0.0, %v1486
        %1488 = vdwg.mxu0
        %1490 = vset.pattern.permute.xlu0 0
        %1491 = vperm.xlu0 %1490, %v1407
        %v1492 = vpop.permute.xlu0 %1491
        %v1493 = vperm.slane %v1492, %v797
        %v1494 = vsel %vm880, %v1493, 0
        %1496 = vmatpush.msra.mxu0 0.0
        %1497 = vmatpush.msra.mxu0 0.0
        %1498 = vmatpush.msra.mxu0 0.0
        %1499 = vmatpush.msra.mxu0 0.0
        %1500 = vmatpush.msra.mxu0 0.0
        %1501 = vmatpush.msra.mxu0 0.0
        %1502 = vmatpush.msra.mxu0 0.0
        %1503 = vmatpush.msra.mxu0 0.0
        %1504 = vmatpush.msra.mxu0 0.0
        %1505 = vmatpush.msra.mxu0 0.0
        %1506 = vmatpush.msra.mxu0 0.0
        %1507 = vmatpush.msra.mxu0 0.0
        %1508 = vmatpush.msra.mxu0 0.0
        %1509 = vmatpush.msra.mxu0 0.0
        %1510 = vmatpush.msra.mxu0 0.0
        %1511 = vmatpush.msra.mxu0 %v975
        %1512 = vmatmul.f32.gmra.mxu0 %v1494
        %v1513 = vpop.f32.mrf.mxu0
        %v1514 = vadd.f32 0.0, %v1513
        %1515 = vdwg.mxu0
        %v1516 = vld [vmem:[%s11] sm:$0xff]
        %v1517 = vld [vmem:[%s11 + $0x8] sm:$0xff]
        %v1518 = vld [vmem:[%s11 + $0x10] sm:$0xff]
        %v1519 = vld [vmem:[%s11 + $0x18] sm:$0xff]
        %v1520 = vld [vmem:[%s11 + $0x20] sm:$0xff]
        %v1521 = vld [vmem:[%s11 + $0x28] sm:$0xff]
        %v1522 = vld [vmem:[%s11 + $0x30] sm:$0xff]
        %v1523 = vld [vmem:[%s11 + $0x38] sm:$0xff]
        %v1524 = vld [vmem:[%s12] sm:$0x1]
        %v1526 = vperm.slane %v1524, 0
        %1528 = vmatpush.msra.mxu0 0.0
        %1529 = vmatpush.msra.mxu0 0.0
        %1530 = vmatpush.msra.mxu0 0.0
        %1531 = vmatpush.msra.mxu0 0.0
        %1532 = vmatpush.msra.mxu0 0.0
        %1533 = vmatpush.msra.mxu0 0.0
        %1534 = vmatpush.msra.mxu0 0.0
        %1535 = vmatpush.msra.mxu0 0.0
        %1536 = vmatpush.msra.mxu0 %v1523
        %1537 = vmatpush.msra.mxu0 %v1522
        %1538 = vmatpush.msra.mxu0 %v1521
        %1539 = vmatpush.msra.mxu0 %v1520
        %1540 = vmatpush.msra.mxu0 %v1519
        %1541 = vmatpush.msra.mxu0 %v1518
        %1542 = vmatpush.msra.mxu0 %v1517
        %1543 = vmatpush.msra.mxu0 %v1516
        %1544 = vmatmul.f32.gmra.mxu0 %v1216
        %v1545 = vpop.f32.mrf.mxu0
        %v1546 = vadd.f32 %v1526, %v1545
        %1547 = vdwg.mxu0
        %v1548 = vxor.u32 %v1546, 2147483648
        %v1549 = vmul.f32 %v1548, 1.442695
        %v1550 = vpow.pop %v1549
        %v1551 = vadd.f32 %v1550, 1.0
        %v1552 = vrcp.pop %v1551
        %v1553 = vmul.f32 %v1551, %v1552
        %v1554 = vsub.f32 1.0, %v1553
        %v1555 = vmul.f32 %v1552, %v1554
        %v1556 = vadd.f32 %v1552, %v1555
        %vm1557 = vweird.f32 %v1551
        %vm1558 = vweird.f32 %v1552
        %vm1559 = vmor %vm1557, %vm1558
        %v1560 = vsel %vm1559, %v1552, %v1556
        %v1561 = vand.u32 2147483647, %v1551
        %vm1562 = vcmp.eq.f32.partialorder %v1561, 8.507059e+37
        %v1563 = vand.u32 %v1551, 2147483648
        %v1564 = vor.u32 1.1754944e-38, %v1563
        %v1565 = vsel %vm1562, %v1564, %v1560
        %v1566 = vmul.f32 1.0, %v1565
        %v1571 = vrot.slane %v1460, 7
        %v1572 = vsel %vm802, %v1571, %v1433
        %v1573 = vrot.slane %v1487, 6
        %v1574 = vsel %vm804, %v1573, %v1572
        %v1575 = vrot.slane %v1514, 5
        %v1576 = vsel %vm806, %v1575, %v1574
        %v1578 = vmul.f32 %v1566, %v1576
        %s1579 = scalar_lea.vmem %s679, 4
        %v1580 = vld [vmem:[%s1579] sm:$0xf]
        %1582 = vrot.lane.b32.xlu0 %v1578, 32
        %v1583 = vpop.permute.xlu0 %1582
        %v1585 = vsel %vm1068, %v1580, %v1583
        %v1586 = vsel %vm716, %v1585, %v1200
        %v1587 = vld [vmem:[#allocation5] sm:$0xff]
        %v1588 = vld [vmem:[#allocation5 + $0x8] sm:$0xff]
        %v1589 = vld [vmem:[#allocation5 + $0x10] sm:$0xff]
        %v1590 = vld [vmem:[#allocation5 + $0x18] sm:$0xff]
        %v1591 = vld [vmem:[#allocation5 + $0x20] sm:$0xff]
        %v1592 = vld [vmem:[#allocation5 + $0x28] sm:$0xff]
        %v1593 = vld [vmem:[#allocation5 + $0x30] sm:$0xff]
        %v1594 = vld [vmem:[#allocation5 + $0x38] sm:$0xff]
        %v1595 = vld [vmem:[#allocation5 + $0x40] sm:$0xff]
        %v1596 = vld [vmem:[#allocation5 + $0x48] sm:$0xff]
        %v1597 = vld [vmem:[#allocation5 + $0x50] sm:$0xff]
        %v1598 = vld [vmem:[#allocation5 + $0x58] sm:$0xff]
        %v1599 = vld [vmem:[#allocation5 + $0x60] sm:$0xff]
        %v1600 = vld [vmem:[#allocation5 + $0x68] sm:$0xff]
        %v1601 = vld [vmem:[#allocation5 + $0x70] sm:$0xff]
        %v1602 = vld [vmem:[#allocation5 + $0x78] sm:$0xff]
        %v1603 = vld [vmem:[#allocation5 + $0x80] sm:$0xff]
        %v1604 = vld [vmem:[#allocation5 + $0x88] sm:$0xff]
        %v1605 = vld [vmem:[#allocation5 + $0x90] sm:$0xff]
        %v1606 = vld [vmem:[#allocation5 + $0x98] sm:$0xff]
        %v1607 = vld [vmem:[#allocation5 + $0xa0] sm:$0xff]
        %v1608 = vld [vmem:[#allocation5 + $0xa8] sm:$0xff]
        %v1609 = vld [vmem:[#allocation5 + $0xb0] sm:$0xff]
        %v1610 = vld [vmem:[#allocation5 + $0xb8] sm:$0xff]
        %v1611 = vld [vmem:[#allocation5 + $0xc0] sm:$0xff]
        %v1612 = vld [vmem:[#allocation5 + $0xc8] sm:$0xff]
        %v1613 = vld [vmem:[#allocation5 + $0xd0] sm:$0xff]
        %v1614 = vld [vmem:[#allocation5 + $0xd8] sm:$0xff]
        %v1615 = vld [vmem:[#allocation5 + $0xe0] sm:$0xff]
        %v1616 = vld [vmem:[#allocation5 + $0xe8] sm:$0xff]
        %v1617 = vld [vmem:[#allocation5 + $0xf0] sm:$0xff]
        %v1618 = vld [vmem:[#allocation5 + $0xf8] sm:$0xff]
        %1619 = vst [vmem:[#allocation1] ss:$2 sm:$0xff] %v699
        %v1620 = vld.sshfl [vmem:[#allocation1] sm:$0xff pattern:$0x75316420]
        %v1621 = vld.sshfl [vmem:[#allocation1 + $0x8] sm:$0xff pattern:$0x75316420]
        %1624 = vmatpush.msra.mxu0 %v1617
        %1625 = vmatpush.msra.mxu0 %v1615
        %1626 = vmatpush.msra.mxu0 %v1613
        %1627 = vmatpush.msra.mxu0 %v1611
        %1628 = vmatpush.msra.mxu0 %v1609
        %1629 = vmatpush.msra.mxu0 %v1607
        %1630 = vmatpush.msra.mxu0 %v1605
        %1631 = vmatpush.msra.mxu0 %v1603
        %1632 = vmatpush.msra.mxu0 %v1601
        %1633 = vmatpush.msra.mxu0 %v1599
        %1634 = vmatpush.msra.mxu0 %v1597
        %1635 = vmatpush.msra.mxu0 %v1595
        %1636 = vmatpush.msra.mxu0 %v1593
        %1637 = vmatpush.msra.mxu0 %v1591
        %1638 = vmatpush.msra.mxu0 %v1589
        %1639 = vmatpush.msra.mxu0 %v1587
        %1640 = vmatmul.f32.gmra.mxu0 %v1586
        %v1641 = vpop.f32.mrf.mxu0
        %v1642 = vadd.f32 %v1620, %v1641
        %1643 = vdwg.mxu0
        %1644 = vmatpush.msra.mxu0 %v1618
        %1645 = vmatpush.msra.mxu0 %v1616
        %1646 = vmatpush.msra.mxu0 %v1614
        %1647 = vmatpush.msra.mxu0 %v1612
        %1648 = vmatpush.msra.mxu0 %v1610
        %1649 = vmatpush.msra.mxu0 %v1608
        %1650 = vmatpush.msra.mxu0 %v1606
        %1651 = vmatpush.msra.mxu0 %v1604
        %1652 = vmatpush.msra.mxu0 %v1602
        %1653 = vmatpush.msra.mxu0 %v1600
        %1654 = vmatpush.msra.mxu0 %v1598
        %1655 = vmatpush.msra.mxu0 %v1596
        %1656 = vmatpush.msra.mxu0 %v1594
        %1657 = vmatpush.msra.mxu0 %v1592
        %1658 = vmatpush.msra.mxu0 %v1590
        %1659 = vmatpush.msra.mxu0 %v1588
        %1660 = vmatmul.f32.gmra.mxu0 %v1586
        %v1661 = vpop.f32.mrf.mxu0
        %v1662 = vadd.f32 %v1621, %v1661
        %1663 = vdwg.mxu0
        %v1664 = vxor.u32 %v1642, 2147483648
        %v1665 = vmul.f32 %v1664, 1.442695
        %v1666 = vpow.pop %v1665
        %v1667 = vadd.f32 %v1666, 1.0
        %v1668 = vrcp.pop %v1667
        %v1669 = vmul.f32 %v1667, %v1668
        %v1670 = vsub.f32 1.0, %v1669
        %v1671 = vmul.f32 %v1668, %v1670
        %v1672 = vadd.f32 %v1668, %v1671
        %vm1673 = vweird.f32 %v1667
        %vm1674 = vweird.f32 %v1668
        %vm1675 = vmor %vm1673, %vm1674
        %v1676 = vsel %vm1675, %v1668, %v1672
        %v1677 = vand.u32 2147483647, %v1667
        %vm1678 = vcmp.eq.f32.partialorder %v1677, 8.507059e+37
        %v1679 = vand.u32 %v1667, 2147483648
        %v1680 = vor.u32 1.1754944e-38, %v1679
        %v1681 = vsel %vm1678, %v1680, %v1676
        %v1682 = vmul.f32 1.0, %v1681
        %v1683 = vtanh.pop %v1662
        %v1684 = vxor.u32 %v1662, 2147483648
        %v1685 = vmul.f32 %v1684, 1.442695
        %v1686 = vpow.pop %v1685
        %v1687 = vadd.f32 %v1686, 1.0
        %v1688 = vrcp.pop %v1687
        %v1689 = vmul.f32 %v1687, %v1688
        %v1690 = vsub.f32 1.0, %v1689
        %v1691 = vmul.f32 %v1688, %v1690
        %v1692 = vadd.f32 %v1688, %v1691
        %vm1693 = vweird.f32 %v1687
        %vm1694 = vweird.f32 %v1688
        %vm1695 = vmor %vm1693, %vm1694
        %v1696 = vsel %vm1695, %v1688, %v1692
        %v1697 = vand.u32 2147483647, %v1687
        %vm1698 = vcmp.eq.f32.partialorder %v1697, 8.507059e+37
        %v1699 = vand.u32 %v1687, 2147483648
        %v1700 = vor.u32 1.1754944e-38, %v1699
        %v1701 = vsel %vm1698, %v1700, %v1696
        %v1702 = vmul.f32 1.0, %v1701
        %v1703 = vmul.f32 %v1682, %v1198
        %v1704 = vmul.f32 %v1682, %v1683
        %1706 = vrot.lane.b32.xlu0 %v1704, 64
        %v1707 = vpop.permute.xlu0 %1706
        %v1709 = vadd.f32 %v1703, %v1707
        %v1710 = vtanh.pop %v1709
        %v1711 = vmul.f32 %v1702, %v1710
        %v1712 = vld [vmem:[%s14] sm:$0xff]
        %v1713 = vld [vmem:[%s14 + $0x8] sm:$0xff]
        %v1714 = vld [vmem:[%s14 + $0x10] sm:$0xff]
        %v1715 = vld [vmem:[%s14 + $0x18] sm:$0xff]
        %v1716 = vld [vmem:[%s14 + $0x20] sm:$0xff]
        %v1717 = vld [vmem:[%s14 + $0x28] sm:$0xff]
        %v1718 = vld [vmem:[%s14 + $0x30] sm:$0xff]
        %v1719 = vld [vmem:[%s14 + $0x38] sm:$0xff]
        %v1720 = vld [vmem:[%s15] sm:$0x1]
        %v1722 = vperm.slane %v1720, 0
        %1725 = vrot.lane.b32.xlu0 %v1711, 64
        %v1726 = vpop.permute.xlu0 %1725
        %v1727 = vsel %vm716, %v1726, 0
        %1729 = vmatpush.msra.mxu0 0.0
        %1730 = vmatpush.msra.mxu0 0.0
        %1731 = vmatpush.msra.mxu0 0.0
        %1732 = vmatpush.msra.mxu0 0.0
        %1733 = vmatpush.msra.mxu0 0.0
        %1734 = vmatpush.msra.mxu0 0.0
        %1735 = vmatpush.msra.mxu0 0.0
        %1736 = vmatpush.msra.mxu0 0.0
        %1737 = vmatpush.msra.mxu0 %v1719
        %1738 = vmatpush.msra.mxu0 %v1718
        %1739 = vmatpush.msra.mxu0 %v1717
        %1740 = vmatpush.msra.mxu0 %v1716
        %1741 = vmatpush.msra.mxu0 %v1715
        %1742 = vmatpush.msra.mxu0 %v1714
        %1743 = vmatpush.msra.mxu0 %v1713
        %1744 = vmatpush.msra.mxu0 %v1712
        %1745 = vmatmul.f32.gmra.mxu0 %v1727
        %v1746 = vpop.f32.mrf.mxu0
        %v1747 = vadd.f32 %v1722, %v1746
        %1748 = vdwg.mxu0
        %v1749 = vstv %s1247
        %vm1750 = vcmp.gt.s32.totalorder %v700, %v1749
        %v1751 = vsel %vm1750, 1, 0
        %1752 = vset.pattern.permute.xlu0 0
        %1753 = vperm.xlu0 %1752, %v1751
        %v1754 = vpop.permute.xlu0 %1753
        %vm1755 = vcmp.eq.s32.totalorder %v1754, 1
        %v1756 = vsel %vm1755, %v1747, 0.0
        %s1757 = scalar_lea.vmem %s642, 4 [#allocation8]
        %1758 = vst [vmem:[%s1757] sm:$0xf] %v1756
        %s1759 = sadd.s32 %s703, 2
        %v1760 = vld [vmem:[%s7] sm:$0xff]
        %v1761 = vld [vmem:[%s7 + $0x8] sm:$0xff]
        %v1762 = vld [vmem:[%s7 + $0x10] sm:$0xff]
        %v1763 = vld [vmem:[%s7 + $0x18] sm:$0xff]
        %v1764 = vld [vmem:[%s7 + $0x20] sm:$0xff]
        %v1765 = vld [vmem:[%s7 + $0x28] sm:$0xff]
        %v1766 = vld [vmem:[%s7 + $0x30] sm:$0xff]
        %v1767 = vld [vmem:[%s7 + $0x38] sm:$0xff]
        %v1768 = vld [vmem:[%s8] sm:$0x1]
        %v1770 = vperm.slane %v1768, 0
        %1772 = vmatpush.msra.mxu0 0.0
        %1773 = vmatpush.msra.mxu0 0.0
        %1774 = vmatpush.msra.mxu0 0.0
        %1775 = vmatpush.msra.mxu0 0.0
        %1776 = vmatpush.msra.mxu0 0.0
        %1777 = vmatpush.msra.mxu0 0.0
        %1778 = vmatpush.msra.mxu0 0.0
        %1779 = vmatpush.msra.mxu0 0.0
        %1780 = vmatpush.msra.mxu0 %v1767
        %1781 = vmatpush.msra.mxu0 %v1766
        %1782 = vmatpush.msra.mxu0 %v1765
        %1783 = vmatpush.msra.mxu0 %v1764
        %1784 = vmatpush.msra.mxu0 %v1763
        %1785 = vmatpush.msra.mxu0 %v1762
        %1786 = vmatpush.msra.mxu0 %v1761
        %1787 = vmatpush.msra.mxu0 %v1760
        %1788 = vmatmul.f32.gmra.mxu0 %v1727
        %v1789 = vpop.f32.mrf.mxu0
        %v1790 = vadd.f32 %v1770, %v1789
        %1791 = vdwg.mxu0
        %v1793 = vrot.slane %v1790, 1
        %v1794 = vrot.slane %v1790, 2
        %v1795 = vrot.slane %v1790, 3
        %v1796 = vperm.slane %v1790, 0
        %v1797 = vperm.slane %v1793, 0
        %v1798 = vperm.slane %v1794, 0
        %v1799 = vperm.slane %v1795, 0
        %v1804 = vadd.f32 %v695, %v1796
        %v1805 = vadd.f32 %v696, %v1797
        %v1806 = vadd.f32 %v697, %v1798
        %v1807 = vadd.f32 %v698, %v1799
        %v1808 = vmax.f32 %v1804, 0.0
        %v1809 = vmax.f32 %v1805, 0.0
        %v1810 = vmax.f32 %v1806, 0.0
        %v1811 = vmax.f32 %v1807, 0.0
        %v1812 = vld [vmem:[%s9] sm:$0x1]
        %v1814 = vperm.slane %v1812, 0
        %v1816 = vmul.f32 %v1808, %v1814
        %v1817 = vmul.f32 %v1809, %v1814
        %v1818 = vmul.f32 %v1810, %v1814
        %v1819 = vmul.f32 %v1811, %v1814
        %v1820 = vsel %vm768, %v1816, 0.0
        %1821 = vadd.xlane.f32.xlu0 %v1820
        %v1822 = vpop.xlane.xlu0 %1821
        %v1823 = vsel %vm768, %v1817, 0.0
        %1824 = vadd.xlane.f32.xlu0 %v1823
        %v1825 = vpop.xlane.xlu0 %1824
        %v1826 = vsel %vm768, %v1818, 0.0
        %1827 = vadd.xlane.f32.xlu0 %v1826
        %v1828 = vpop.xlane.xlu0 %1827
        %v1829 = vsel %vm768, %v1819, 0.0
        %1830 = vadd.xlane.f32.xlu0 %v1829
        %v1831 = vpop.xlane.xlu0 %1830
        %v1832 = vld [vmem:[#allocation4] sm:$0x1]
        %v1834 = vperm.slane %v1832, 0
        %1835 = vset.pattern.permute.xlu0 0
        %1836 = vperm.xlu0 %1835, %v1834
        %v1837 = vpop.permute.xlu0 %1836
        %v1839 = vadd.f32 %v1822, %v1837
        %v1840 = vadd.f32 %v1825, %v1837
        %v1841 = vadd.f32 %v1828, %v1837
        %v1842 = vadd.f32 %v1831, %v1837
        %v1847 = vperm.slane %v1839, %v797
        %v1848 = vperm.slane %v1840, %v797
        %v1849 = vperm.slane %v1841, %v797
        %v1850 = vperm.slane %v1842, %v797
        %v1851 = vsel %vm802, %v1848, %v1847
        %v1852 = vsel %vm804, %v1849, %v1851
        %v1853 = vsel %vm806, %v1850, %v1852
        %v1855 = vsel %vm809, %v1853, -inf
        %1856 = vmax.xlane.f32.xlu0 %v1855
        %v1857 = vpop.xlane.xlu0 %1856
        %v1859 = vperm.slane %v1857, 0
        %v1860 = vperm.slane %v1857, 1
        %v1861 = vperm.slane %v1857, 2
        %v1862 = vperm.slane %v1857, 3
        %v1867 = vsub.f32 %v1839, %v1859
        %v1868 = vsub.f32 %v1840, %v1860
        %v1869 = vsub.f32 %v1841, %v1861
        %v1870 = vsub.f32 %v1842, %v1862
        %v1871 = vmul.f32 %v1867, 1.442695
        %v1872 = vpow.pop %v1871
        %v1873 = vmul.f32 %v1868, 1.442695
        %v1874 = vpow.pop %v1873
        %v1875 = vmul.f32 %v1869, 1.442695
        %v1876 = vpow.pop %v1875
        %v1877 = vmul.f32 %v1870, 1.442695
        %v1878 = vpow.pop %v1877
        %1883 = vset.pattern.permute.xlu0 0
        %1884 = vperm.xlu0 %1883, %v1872
        %v1885 = vpop.permute.xlu0 %1884
        %1886 = vset.pattern.permute.xlu0 0
        %1887 = vperm.xlu0 %1886, %v1874
        %v1888 = vpop.permute.xlu0 %1887
        %1889 = vset.pattern.permute.xlu0 0
        %1890 = vperm.xlu0 %1889, %v1876
        %v1891 = vpop.permute.xlu0 %1890
        %1892 = vset.pattern.permute.xlu0 0
        %1893 = vperm.xlu0 %1892, %v1878
        %v1894 = vpop.permute.xlu0 %1893
        %v1895 = vperm.slane %v1885, %v797
        %v1896 = vperm.slane %v1888, %v797
        %v1897 = vperm.slane %v1891, %v797
        %v1898 = vperm.slane %v1894, %v797
        %v1899 = vsel %vm802, %v1896, %v1895
        %v1900 = vsel %vm804, %v1897, %v1899
        %v1901 = vsel %vm806, %v1898, %v1900
        %v1903 = vsel %vm809, %v1901, 0.0
        %1904 = vadd.xlane.f32.xlu0 %v1903
        %v1905 = vpop.xlane.xlu0 %1904
        %v1906 = vrcp.pop %v1905
        %v1908 = vperm.slane %v1906, 0
        %v1909 = vperm.slane %v1906, 1
        %v1910 = vperm.slane %v1906, 2
        %v1911 = vperm.slane %v1906, 3
        %v1916 = vmul.f32 %v1872, %v1908
        %v1917 = vmul.f32 %v1874, %v1909
        %v1918 = vmul.f32 %v1876, %v1910
        %v1919 = vmul.f32 %v1878, %v1911
        %1921 = vset.pattern.permute.xlu0 0
        %1922 = vperm.xlu0 %1921, %v1916
        %v1923 = vpop.permute.xlu0 %1922
        %v1924 = vperm.slane %v1923, %v797
        %v1925 = vsel %vm880, %v1924, 0
        %1927 = vmatpush.msra.mxu0 0.0
        %1928 = vmatpush.msra.mxu0 0.0
        %1929 = vmatpush.msra.mxu0 0.0
        %1930 = vmatpush.msra.mxu0 0.0
        %1931 = vmatpush.msra.mxu0 0.0
        %1932 = vmatpush.msra.mxu0 0.0
        %1933 = vmatpush.msra.mxu0 0.0
        %1934 = vmatpush.msra.mxu0 0.0
        %1935 = vmatpush.msra.mxu0 0.0
        %1936 = vmatpush.msra.mxu0 0.0
        %1937 = vmatpush.msra.mxu0 0.0
        %1938 = vmatpush.msra.mxu0 0.0
        %1939 = vmatpush.msra.mxu0 0.0
        %1940 = vmatpush.msra.mxu0 0.0
        %1941 = vmatpush.msra.mxu0 0.0
        %1942 = vmatpush.msra.mxu0 %v885
        %1943 = vmatmul.f32.gmra.mxu0 %v1925
        %v1944 = vpop.f32.mrf.mxu0
        %v1945 = vadd.f32 0.0, %v1944
        %1946 = vdwg.mxu0
        %1948 = vset.pattern.permute.xlu0 0
        %1949 = vperm.xlu0 %1948, %v1917
        %v1950 = vpop.permute.xlu0 %1949
        %v1951 = vperm.slane %v1950, %v797
        %v1952 = vsel %vm880, %v1951, 0
        %1954 = vmatpush.msra.mxu0 0.0
        %1955 = vmatpush.msra.mxu0 0.0
        %1956 = vmatpush.msra.mxu0 0.0
        %1957 = vmatpush.msra.mxu0 0.0
        %1958 = vmatpush.msra.mxu0 0.0
        %1959 = vmatpush.msra.mxu0 0.0
        %1960 = vmatpush.msra.mxu0 0.0
        %1961 = vmatpush.msra.mxu0 0.0
        %1962 = vmatpush.msra.mxu0 0.0
        %1963 = vmatpush.msra.mxu0 0.0
        %1964 = vmatpush.msra.mxu0 0.0
        %1965 = vmatpush.msra.mxu0 0.0
        %1966 = vmatpush.msra.mxu0 0.0
        %1967 = vmatpush.msra.mxu0 0.0
        %1968 = vmatpush.msra.mxu0 0.0
        %1969 = vmatpush.msra.mxu0 %v915
        %1970 = vmatmul.f32.gmra.mxu0 %v1952
        %v1971 = vpop.f32.mrf.mxu0
        %v1972 = vadd.f32 0.0, %v1971
        %1973 = vdwg.mxu0
        %1975 = vset.pattern.permute.xlu0 0
        %1976 = vperm.xlu0 %1975, %v1918
        %v1977 = vpop.permute.xlu0 %1976
        %v1978 = vperm.slane %v1977, %v797
        %v1979 = vsel %vm880, %v1978, 0
        %1981 = vmatpush.msra.mxu0 0.0
        %1982 = vmatpush.msra.mxu0 0.0
        %1983 = vmatpush.msra.mxu0 0.0
        %1984 = vmatpush.msra.mxu0 0.0
        %1985 = vmatpush.msra.mxu0 0.0
        %1986 = vmatpush.msra.mxu0 0.0
        %1987 = vmatpush.msra.mxu0 0.0
        %1988 = vmatpush.msra.mxu0 0.0
        %1989 = vmatpush.msra.mxu0 0.0
        %1990 = vmatpush.msra.mxu0 0.0
        %1991 = vmatpush.msra.mxu0 0.0
        %1992 = vmatpush.msra.mxu0 0.0
        %1993 = vmatpush.msra.mxu0 0.0
        %1994 = vmatpush.msra.mxu0 0.0
        %1995 = vmatpush.msra.mxu0 0.0
        %1996 = vmatpush.msra.mxu0 %v945
        %1997 = vmatmul.f32.gmra.mxu0 %v1979
        %v1998 = vpop.f32.mrf.mxu0
        %v1999 = vadd.f32 0.0, %v1998
        %2000 = vdwg.mxu0
        %2002 = vset.pattern.permute.xlu0 0
        %2003 = vperm.xlu0 %2002, %v1919
        %v2004 = vpop.permute.xlu0 %2003
        %v2005 = vperm.slane %v2004, %v797
        %v2006 = vsel %vm880, %v2005, 0
        %2008 = vmatpush.msra.mxu0 0.0
        %2009 = vmatpush.msra.mxu0 0.0
        %2010 = vmatpush.msra.mxu0 0.0
        %2011 = vmatpush.msra.mxu0 0.0
        %2012 = vmatpush.msra.mxu0 0.0
        %2013 = vmatpush.msra.mxu0 0.0
        %2014 = vmatpush.msra.mxu0 0.0
        %2015 = vmatpush.msra.mxu0 0.0
        %2016 = vmatpush.msra.mxu0 0.0
        %2017 = vmatpush.msra.mxu0 0.0
        %2018 = vmatpush.msra.mxu0 0.0
        %2019 = vmatpush.msra.mxu0 0.0
        %2020 = vmatpush.msra.mxu0 0.0
        %2021 = vmatpush.msra.mxu0 0.0
        %2022 = vmatpush.msra.mxu0 0.0
        %2023 = vmatpush.msra.mxu0 %v975
        %2024 = vmatmul.f32.gmra.mxu0 %v2006
        %v2025 = vpop.f32.mrf.mxu0
        %v2026 = vadd.f32 0.0, %v2025
        %2027 = vdwg.mxu0
        %v2028 = vld [vmem:[%s11] sm:$0xff]
        %v2029 = vld [vmem:[%s11 + $0x8] sm:$0xff]
        %v2030 = vld [vmem:[%s11 + $0x10] sm:$0xff]
        %v2031 = vld [vmem:[%s11 + $0x18] sm:$0xff]
        %v2032 = vld [vmem:[%s11 + $0x20] sm:$0xff]
        %v2033 = vld [vmem:[%s11 + $0x28] sm:$0xff]
        %v2034 = vld [vmem:[%s11 + $0x30] sm:$0xff]
        %v2035 = vld [vmem:[%s11 + $0x38] sm:$0xff]
        %v2036 = vld [vmem:[%s12] sm:$0x1]
        %v2038 = vperm.slane %v2036, 0
        %2040 = vmatpush.msra.mxu0 0.0
        %2041 = vmatpush.msra.mxu0 0.0
        %2042 = vmatpush.msra.mxu0 0.0
        %2043 = vmatpush.msra.mxu0 0.0
        %2044 = vmatpush.msra.mxu0 0.0
        %2045 = vmatpush.msra.mxu0 0.0
        %2046 = vmatpush.msra.mxu0 0.0
        %2047 = vmatpush.msra.mxu0 0.0
        %2048 = vmatpush.msra.mxu0 %v2035
        %2049 = vmatpush.msra.mxu0 %v2034
        %2050 = vmatpush.msra.mxu0 %v2033
        %2051 = vmatpush.msra.mxu0 %v2032
        %2052 = vmatpush.msra.mxu0 %v2031
        %2053 = vmatpush.msra.mxu0 %v2030
        %2054 = vmatpush.msra.mxu0 %v2029
        %2055 = vmatpush.msra.mxu0 %v2028
        %2056 = vmatmul.f32.gmra.mxu0 %v1727
        %v2057 = vpop.f32.mrf.mxu0
        %v2058 = vadd.f32 %v2038, %v2057
        %2059 = vdwg.mxu0
        %v2060 = vxor.u32 %v2058, 2147483648
        %v2061 = vmul.f32 %v2060, 1.442695
        %v2062 = vpow.pop %v2061
        %v2063 = vadd.f32 %v2062, 1.0
        %v2064 = vrcp.pop %v2063
        %v2065 = vmul.f32 %v2063, %v2064
        %v2066 = vsub.f32 1.0, %v2065
        %v2067 = vmul.f32 %v2064, %v2066
        %v2068 = vadd.f32 %v2064, %v2067
        %vm2069 = vweird.f32 %v2063
        %vm2070 = vweird.f32 %v2064
        %vm2071 = vmor %vm2069, %vm2070
        %v2072 = vsel %vm2071, %v2064, %v2068
        %v2073 = vand.u32 2147483647, %v2063
        %vm2074 = vcmp.eq.f32.partialorder %v2073, 8.507059e+37
        %v2075 = vand.u32 %v2063, 2147483648
        %v2076 = vor.u32 1.1754944e-38, %v2075
        %v2077 = vsel %vm2074, %v2076, %v2072
        %v2078 = vmul.f32 1.0, %v2077
        %v2083 = vrot.slane %v1972, 7
        %v2084 = vsel %vm802, %v2083, %v1945
        %v2085 = vrot.slane %v1999, 6
        %v2086 = vsel %vm804, %v2085, %v2084
        %v2087 = vrot.slane %v2026, 5
        %v2088 = vsel %vm806, %v2087, %v2086
        %v2090 = vmul.f32 %v2078, %v2088
        %s2091 = scalar_lea.vmem %s679, 8
        %v2092 = vld [vmem:[%s2091] sm:$0xf]
        %2094 = vrot.lane.b32.xlu0 %v2090, 32
        %v2095 = vpop.permute.xlu0 %2094
        %v2097 = vsel %vm1068, %v2092, %v2095
        %v2098 = vsel %vm716, %v2097, %v1711
        %v2099 = vld [vmem:[#allocation5] sm:$0xff]
        %v2100 = vld [vmem:[#allocation5 + $0x8] sm:$0xff]
        %v2101 = vld [vmem:[#allocation5 + $0x10] sm:$0xff]
        %v2102 = vld [vmem:[#allocation5 + $0x18] sm:$0xff]
        %v2103 = vld [vmem:[#allocation5 + $0x20] sm:$0xff]
        %v2104 = vld [vmem:[#allocation5 + $0x28] sm:$0xff]
        %v2105 = vld [vmem:[#allocation5 + $0x30] sm:$0xff]
        %v2106 = vld [vmem:[#allocation5 + $0x38] sm:$0xff]
        %v2107 = vld [vmem:[#allocation5 + $0x40] sm:$0xff]
        %v2108 = vld [vmem:[#allocation5 + $0x48] sm:$0xff]
        %v2109 = vld [vmem:[#allocation5 + $0x50] sm:$0xff]
        %v2110 = vld [vmem:[#allocation5 + $0x58] sm:$0xff]
        %v2111 = vld [vmem:[#allocation5 + $0x60] sm:$0xff]
        %v2112 = vld [vmem:[#allocation5 + $0x68] sm:$0xff]
        %v2113 = vld [vmem:[#allocation5 + $0x70] sm:$0xff]
        %v2114 = vld [vmem:[#allocation5 + $0x78] sm:$0xff]
        %v2115 = vld [vmem:[#allocation5 + $0x80] sm:$0xff]
        %v2116 = vld [vmem:[#allocation5 + $0x88] sm:$0xff]
        %v2117 = vld [vmem:[#allocation5 + $0x90] sm:$0xff]
        %v2118 = vld [vmem:[#allocation5 + $0x98] sm:$0xff]
        %v2119 = vld [vmem:[#allocation5 + $0xa0] sm:$0xff]
        %v2120 = vld [vmem:[#allocation5 + $0xa8] sm:$0xff]
        %v2121 = vld [vmem:[#allocation5 + $0xb0] sm:$0xff]
        %v2122 = vld [vmem:[#allocation5 + $0xb8] sm:$0xff]
        %v2123 = vld [vmem:[#allocation5 + $0xc0] sm:$0xff]
        %v2124 = vld [vmem:[#allocation5 + $0xc8] sm:$0xff]
        %v2125 = vld [vmem:[#allocation5 + $0xd0] sm:$0xff]
        %v2126 = vld [vmem:[#allocation5 + $0xd8] sm:$0xff]
        %v2127 = vld [vmem:[#allocation5 + $0xe0] sm:$0xff]
        %v2128 = vld [vmem:[#allocation5 + $0xe8] sm:$0xff]
        %v2129 = vld [vmem:[#allocation5 + $0xf0] sm:$0xff]
        %v2130 = vld [vmem:[#allocation5 + $0xf8] sm:$0xff]
        %2131 = vst [vmem:[#allocation1] ss:$2 sm:$0xff] %v699
        %v2132 = vld.sshfl [vmem:[#allocation1] sm:$0xff pattern:$0x75316420]
        %v2133 = vld.sshfl [vmem:[#allocation1 + $0x8] sm:$0xff pattern:$0x75316420]
        %2136 = vmatpush.msra.mxu0 %v2129
        %2137 = vmatpush.msra.mxu0 %v2127
        %2138 = vmatpush.msra.mxu0 %v2125
        %2139 = vmatpush.msra.mxu0 %v2123
        %2140 = vmatpush.msra.mxu0 %v2121
        %2141 = vmatpush.msra.mxu0 %v2119
        %2142 = vmatpush.msra.mxu0 %v2117
        %2143 = vmatpush.msra.mxu0 %v2115
        %2144 = vmatpush.msra.mxu0 %v2113
        %2145 = vmatpush.msra.mxu0 %v2111
        %2146 = vmatpush.msra.mxu0 %v2109
        %2147 = vmatpush.msra.mxu0 %v2107
        %2148 = vmatpush.msra.mxu0 %v2105
        %2149 = vmatpush.msra.mxu0 %v2103
        %2150 = vmatpush.msra.mxu0 %v2101
        %2151 = vmatpush.msra.mxu0 %v2099
        %2152 = vmatmul.f32.gmra.mxu0 %v2098
        %v2153 = vpop.f32.mrf.mxu0
        %v2154 = vadd.f32 %v2132, %v2153
        %2155 = vdwg.mxu0
        %2156 = vmatpush.msra.mxu0 %v2130
        %2157 = vmatpush.msra.mxu0 %v2128
        %2158 = vmatpush.msra.mxu0 %v2126
        %2159 = vmatpush.msra.mxu0 %v2124
        %2160 = vmatpush.msra.mxu0 %v2122
        %2161 = vmatpush.msra.mxu0 %v2120
        %2162 = vmatpush.msra.mxu0 %v2118
        %2163 = vmatpush.msra.mxu0 %v2116
        %2164 = vmatpush.msra.mxu0 %v2114
        %2165 = vmatpush.msra.mxu0 %v2112
        %2166 = vmatpush.msra.mxu0 %v2110
        %2167 = vmatpush.msra.mxu0 %v2108
        %2168 = vmatpush.msra.mxu0 %v2106
        %2169 = vmatpush.msra.mxu0 %v2104
        %2170 = vmatpush.msra.mxu0 %v2102
        %2171 = vmatpush.msra.mxu0 %v2100
        %2172 = vmatmul.f32.gmra.mxu0 %v2098
        %v2173 = vpop.f32.mrf.mxu0
        %v2174 = vadd.f32 %v2133, %v2173
        %2175 = vdwg.mxu0
        %v2176 = vxor.u32 %v2154, 2147483648
        %v2177 = vmul.f32 %v2176, 1.442695
        %v2178 = vpow.pop %v2177
        %v2179 = vadd.f32 %v2178, 1.0
        %v2180 = vrcp.pop %v2179
        %v2181 = vmul.f32 %v2179, %v2180
        %v2182 = vsub.f32 1.0, %v2181
        %v2183 = vmul.f32 %v2180, %v2182
        %v2184 = vadd.f32 %v2180, %v2183
        %vm2185 = vweird.f32 %v2179
        %vm2186 = vweird.f32 %v2180
        %vm2187 = vmor %vm2185, %vm2186
        %v2188 = vsel %vm2187, %v2180, %v2184
        %v2189 = vand.u32 2147483647, %v2179
        %vm2190 = vcmp.eq.f32.partialorder %v2189, 8.507059e+37
        %v2191 = vand.u32 %v2179, 2147483648
        %v2192 = vor.u32 1.1754944e-38, %v2191
        %v2193 = vsel %vm2190, %v2192, %v2188
        %v2194 = vmul.f32 1.0, %v2193
        %v2195 = vtanh.pop %v2174
        %v2196 = vxor.u32 %v2174, 2147483648
        %v2197 = vmul.f32 %v2196, 1.442695
        %v2198 = vpow.pop %v2197
        %v2199 = vadd.f32 %v2198, 1.0
        %v2200 = vrcp.pop %v2199
        %v2201 = vmul.f32 %v2199, %v2200
        %v2202 = vsub.f32 1.0, %v2201
        %v2203 = vmul.f32 %v2200, %v2202
        %v2204 = vadd.f32 %v2200, %v2203
        %vm2205 = vweird.f32 %v2199
        %vm2206 = vweird.f32 %v2200
        %vm2207 = vmor %vm2205, %vm2206
        %v2208 = vsel %vm2207, %v2200, %v2204
        %v2209 = vand.u32 2147483647, %v2199
        %vm2210 = vcmp.eq.f32.partialorder %v2209, 8.507059e+37
        %v2211 = vand.u32 %v2199, 2147483648
        %v2212 = vor.u32 1.1754944e-38, %v2211
        %v2213 = vsel %vm2210, %v2212, %v2208
        %v2214 = vmul.f32 1.0, %v2213
        %v2215 = vmul.f32 %v2194, %v1709
        %v2216 = vmul.f32 %v2194, %v2195
        %2218 = vrot.lane.b32.xlu0 %v2216, 64
        %v2219 = vpop.permute.xlu0 %2218
        %v2221 = vadd.f32 %v2215, %v2219
        %v2222 = vtanh.pop %v2221
        %v2223 = vmul.f32 %v2214, %v2222
        %v2224 = vld [vmem:[%s14] sm:$0xff]
        %v2225 = vld [vmem:[%s14 + $0x8] sm:$0xff]
        %v2226 = vld [vmem:[%s14 + $0x10] sm:$0xff]
        %v2227 = vld [vmem:[%s14 + $0x18] sm:$0xff]
        %v2228 = vld [vmem:[%s14 + $0x20] sm:$0xff]
        %v2229 = vld [vmem:[%s14 + $0x28] sm:$0xff]
        %v2230 = vld [vmem:[%s14 + $0x30] sm:$0xff]
        %v2231 = vld [vmem:[%s14 + $0x38] sm:$0xff]
        %v2232 = vld [vmem:[%s15] sm:$0x1]
        %v2234 = vperm.slane %v2232, 0
        %2237 = vrot.lane.b32.xlu0 %v2223, 64
        %v2238 = vpop.permute.xlu0 %2237
        %v2239 = vsel %vm716, %v2238, 0
        %2241 = vmatpush.msra.mxu0 0.0
        %2242 = vmatpush.msra.mxu0 0.0
        %2243 = vmatpush.msra.mxu0 0.0
        %2244 = vmatpush.msra.mxu0 0.0
        %2245 = vmatpush.msra.mxu0 0.0
        %2246 = vmatpush.msra.mxu0 0.0
        %2247 = vmatpush.msra.mxu0 0.0
        %2248 = vmatpush.msra.mxu0 0.0
        %2249 = vmatpush.msra.mxu0 %v2231
        %2250 = vmatpush.msra.mxu0 %v2230
        %2251 = vmatpush.msra.mxu0 %v2229
        %2252 = vmatpush.msra.mxu0 %v2228
        %2253 = vmatpush.msra.mxu0 %v2227
        %2254 = vmatpush.msra.mxu0 %v2226
        %2255 = vmatpush.msra.mxu0 %v2225
        %2256 = vmatpush.msra.mxu0 %v2224
        %2257 = vmatmul.f32.gmra.mxu0 %v2239
        %v2258 = vpop.f32.mrf.mxu0
        %v2259 = vadd.f32 %v2234, %v2258
        %2260 = vdwg.mxu0
        %v2261 = vstv %s1759
        %vm2262 = vcmp.gt.s32.totalorder %v700, %v2261
        %v2263 = vsel %vm2262, 1, 0
        %2264 = vset.pattern.permute.xlu0 0
        %2265 = vperm.xlu0 %2264, %v2263
        %v2266 = vpop.permute.xlu0 %2265
        %vm2267 = vcmp.eq.s32.totalorder %v2266, 1
        %v2268 = vsel %vm2267, %v2259, 0.0
        %s2269 = scalar_lea.vmem %s642, 8 [#allocation8]
        %2270 = vst [vmem:[%s2269] sm:$0xf] %v2268
        %s2271 = sadd.s32 %s703, 3
        %v2272 = vld [vmem:[%s7] sm:$0xff]
        %v2273 = vld [vmem:[%s7 + $0x8] sm:$0xff]
        %v2274 = vld [vmem:[%s7 + $0x10] sm:$0xff]
        %v2275 = vld [vmem:[%s7 + $0x18] sm:$0xff]
        %v2276 = vld [vmem:[%s7 + $0x20] sm:$0xff]
        %v2277 = vld [vmem:[%s7 + $0x28] sm:$0xff]
        %v2278 = vld [vmem:[%s7 + $0x30] sm:$0xff]
        %v2279 = vld [vmem:[%s7 + $0x38] sm:$0xff]
        %v2280 = vld [vmem:[%s8] sm:$0x1]
        %v2282 = vperm.slane %v2280, 0
        %2284 = vmatpush.msra.mxu0 0.0
        %2285 = vmatpush.msra.mxu0 0.0
        %2286 = vmatpush.msra.mxu0 0.0
        %2287 = vmatpush.msra.mxu0 0.0
        %2288 = vmatpush.msra.mxu0 0.0
        %2289 = vmatpush.msra.mxu0 0.0
        %2290 = vmatpush.msra.mxu0 0.0
        %2291 = vmatpush.msra.mxu0 0.0
        %2292 = vmatpush.msra.mxu0 %v2279
        %2293 = vmatpush.msra.mxu0 %v2278
        %2294 = vmatpush.msra.mxu0 %v2277
        %2295 = vmatpush.msra.mxu0 %v2276
        %2296 = vmatpush.msra.mxu0 %v2275
        %2297 = vmatpush.msra.mxu0 %v2274
        %2298 = vmatpush.msra.mxu0 %v2273
        %2299 = vmatpush.msra.mxu0 %v2272
        %2300 = vmatmul.f32.gmra.mxu0 %v2239
        %v2301 = vpop.f32.mrf.mxu0
        %v2302 = vadd.f32 %v2282, %v2301
        %2303 = vdwg.mxu0
        %v2305 = vrot.slane %v2302, 1
        %v2306 = vrot.slane %v2302, 2
        %v2307 = vrot.slane %v2302, 3
        %v2308 = vperm.slane %v2302, 0
        %v2309 = vperm.slane %v2305, 0
        %v2310 = vperm.slane %v2306, 0
        %v2311 = vperm.slane %v2307, 0
        %v2316 = vadd.f32 %v695, %v2308
        %v2317 = vadd.f32 %v696, %v2309
        %v2318 = vadd.f32 %v697, %v2310
        %v2319 = vadd.f32 %v698, %v2311
        %v2320 = vmax.f32 %v2316, 0.0
        %v2321 = vmax.f32 %v2317, 0.0
        %v2322 = vmax.f32 %v2318, 0.0
        %v2323 = vmax.f32 %v2319, 0.0
        %v2324 = vld [vmem:[%s9] sm:$0x1]
        %v2326 = vperm.slane %v2324, 0
        %v2328 = vmul.f32 %v2320, %v2326
        %v2329 = vmul.f32 %v2321, %v2326
        %v2330 = vmul.f32 %v2322, %v2326
        %v2331 = vmul.f32 %v2323, %v2326
        %v2332 = vsel %vm768, %v2328, 0.0
        %2333 = vadd.xlane.f32.xlu0 %v2332
        %v2334 = vpop.xlane.xlu0 %2333
        %v2335 = vsel %vm768, %v2329, 0.0
        %2336 = vadd.xlane.f32.xlu0 %v2335
        %v2337 = vpop.xlane.xlu0 %2336
        %v2338 = vsel %vm768, %v2330, 0.0
        %2339 = vadd.xlane.f32.xlu0 %v2338
        %v2340 = vpop.xlane.xlu0 %2339
        %v2341 = vsel %vm768, %v2331, 0.0
        %2342 = vadd.xlane.f32.xlu0 %v2341
        %v2343 = vpop.xlane.xlu0 %2342
        %v2344 = vld [vmem:[#allocation4] sm:$0x1]
        %v2346 = vperm.slane %v2344, 0
        %2347 = vset.pattern.permute.xlu0 0
        %2348 = vperm.xlu0 %2347, %v2346
        %v2349 = vpop.permute.xlu0 %2348
        %v2351 = vadd.f32 %v2334, %v2349
        %v2352 = vadd.f32 %v2337, %v2349
        %v2353 = vadd.f32 %v2340, %v2349
        %v2354 = vadd.f32 %v2343, %v2349
        %v2359 = vperm.slane %v2351, %v797
        %v2360 = vperm.slane %v2352, %v797
        %v2361 = vperm.slane %v2353, %v797
        %v2362 = vperm.slane %v2354, %v797
        %v2363 = vsel %vm802, %v2360, %v2359
        %v2364 = vsel %vm804, %v2361, %v2363
        %v2365 = vsel %vm806, %v2362, %v2364
        %v2367 = vsel %vm809, %v2365, -inf
        %2368 = vmax.xlane.f32.xlu0 %v2367
        %v2369 = vpop.xlane.xlu0 %2368
        %v2371 = vperm.slane %v2369, 0
        %v2372 = vperm.slane %v2369, 1
        %v2373 = vperm.slane %v2369, 2
        %v2374 = vperm.slane %v2369, 3
        %v2379 = vsub.f32 %v2351, %v2371
        %v2380 = vsub.f32 %v2352, %v2372
        %v2381 = vsub.f32 %v2353, %v2373
        %v2382 = vsub.f32 %v2354, %v2374
        %v2383 = vmul.f32 %v2379, 1.442695
        %v2384 = vpow.pop %v2383
        %v2385 = vmul.f32 %v2380, 1.442695
        %v2386 = vpow.pop %v2385
        %v2387 = vmul.f32 %v2381, 1.442695
        %v2388 = vpow.pop %v2387
        %v2389 = vmul.f32 %v2382, 1.442695
        %v2390 = vpow.pop %v2389
        %2395 = vset.pattern.permute.xlu0 0
        %2396 = vperm.xlu0 %2395, %v2384
        %v2397 = vpop.permute.xlu0 %2396
        %2398 = vset.pattern.permute.xlu0 0
        %2399 = vperm.xlu0 %2398, %v2386
        %v2400 = vpop.permute.xlu0 %2399
        %2401 = vset.pattern.permute.xlu0 0
        %2402 = vperm.xlu0 %2401, %v2388
        %v2403 = vpop.permute.xlu0 %2402
        %2404 = vset.pattern.permute.xlu0 0
        %2405 = vperm.xlu0 %2404, %v2390
        %v2406 = vpop.permute.xlu0 %2405
        %v2407 = vperm.slane %v2397, %v797
        %v2408 = vperm.slane %v2400, %v797
        %v2409 = vperm.slane %v2403, %v797
        %v2410 = vperm.slane %v2406, %v797
        %v2411 = vsel %vm802, %v2408, %v2407
        %v2412 = vsel %vm804, %v2409, %v2411
        %v2413 = vsel %vm806, %v2410, %v2412
        %v2415 = vsel %vm809, %v2413, 0.0
        %2416 = vadd.xlane.f32.xlu0 %v2415
        %v2417 = vpop.xlane.xlu0 %2416
        %v2418 = vrcp.pop %v2417
        %v2420 = vperm.slane %v2418, 0
        %v2421 = vperm.slane %v2418, 1
        %v2422 = vperm.slane %v2418, 2
        %v2423 = vperm.slane %v2418, 3
        %v2428 = vmul.f32 %v2384, %v2420
        %v2429 = vmul.f32 %v2386, %v2421
        %v2430 = vmul.f32 %v2388, %v2422
        %v2431 = vmul.f32 %v2390, %v2423
        %2433 = vset.pattern.permute.xlu0 0
        %2434 = vperm.xlu0 %2433, %v2428
        %v2435 = vpop.permute.xlu0 %2434
        %v2436 = vperm.slane %v2435, %v797
        %v2437 = vsel %vm880, %v2436, 0
        %2439 = vmatpush.msra.mxu0 0.0
        %2440 = vmatpush.msra.mxu0 0.0
        %2441 = vmatpush.msra.mxu0 0.0
        %2442 = vmatpush.msra.mxu0 0.0
        %2443 = vmatpush.msra.mxu0 0.0
        %2444 = vmatpush.msra.mxu0 0.0
        %2445 = vmatpush.msra.mxu0 0.0
        %2446 = vmatpush.msra.mxu0 0.0
        %2447 = vmatpush.msra.mxu0 0.0
        %2448 = vmatpush.msra.mxu0 0.0
        %2449 = vmatpush.msra.mxu0 0.0
        %2450 = vmatpush.msra.mxu0 0.0
        %2451 = vmatpush.msra.mxu0 0.0
        %2452 = vmatpush.msra.mxu0 0.0
        %2453 = vmatpush.msra.mxu0 0.0
        %2454 = vmatpush.msra.mxu0 %v885
        %2455 = vmatmul.f32.gmra.mxu0 %v2437
        %v2456 = vpop.f32.mrf.mxu0
        %v2457 = vadd.f32 0.0, %v2456
        %2458 = vdwg.mxu0
        %2460 = vset.pattern.permute.xlu0 0
        %2461 = vperm.xlu0 %2460, %v2429
        %v2462 = vpop.permute.xlu0 %2461
        %v2463 = vperm.slane %v2462, %v797
        %v2464 = vsel %vm880, %v2463, 0
        %2466 = vmatpush.msra.mxu0 0.0
        %2467 = vmatpush.msra.mxu0 0.0
        %2468 = vmatpush.msra.mxu0 0.0
        %2469 = vmatpush.msra.mxu0 0.0
        %2470 = vmatpush.msra.mxu0 0.0
        %2471 = vmatpush.msra.mxu0 0.0
        %2472 = vmatpush.msra.mxu0 0.0
        %2473 = vmatpush.msra.mxu0 0.0
        %2474 = vmatpush.msra.mxu0 0.0
        %2475 = vmatpush.msra.mxu0 0.0
        %2476 = vmatpush.msra.mxu0 0.0
        %2477 = vmatpush.msra.mxu0 0.0
        %2478 = vmatpush.msra.mxu0 0.0
        %2479 = vmatpush.msra.mxu0 0.0
        %2480 = vmatpush.msra.mxu0 0.0
        %2481 = vmatpush.msra.mxu0 %v915
        %2482 = vmatmul.f32.gmra.mxu0 %v2464
        %v2483 = vpop.f32.mrf.mxu0
        %v2484 = vadd.f32 0.0, %v2483
        %2485 = vdwg.mxu0
        %2487 = vset.pattern.permute.xlu0 0
        %2488 = vperm.xlu0 %2487, %v2430
        %v2489 = vpop.permute.xlu0 %2488
        %v2490 = vperm.slane %v2489, %v797
        %v2491 = vsel %vm880, %v2490, 0
        %2493 = vmatpush.msra.mxu0 0.0
        %2494 = vmatpush.msra.mxu0 0.0
        %2495 = vmatpush.msra.mxu0 0.0
        %2496 = vmatpush.msra.mxu0 0.0
        %2497 = vmatpush.msra.mxu0 0.0
        %2498 = vmatpush.msra.mxu0 0.0
        %2499 = vmatpush.msra.mxu0 0.0
        %2500 = vmatpush.msra.mxu0 0.0
        %2501 = vmatpush.msra.mxu0 0.0
        %2502 = vmatpush.msra.mxu0 0.0
        %2503 = vmatpush.msra.mxu0 0.0
        %2504 = vmatpush.msra.mxu0 0.0
        %2505 = vmatpush.msra.mxu0 0.0
        %2506 = vmatpush.msra.mxu0 0.0
        %2507 = vmatpush.msra.mxu0 0.0
        %2508 = vmatpush.msra.mxu0 %v945
        %2509 = vmatmul.f32.gmra.mxu0 %v2491
        %v2510 = vpop.f32.mrf.mxu0
        %v2511 = vadd.f32 0.0, %v2510
        %2512 = vdwg.mxu0
        %2514 = vset.pattern.permute.xlu0 0
        %2515 = vperm.xlu0 %2514, %v2431
        %v2516 = vpop.permute.xlu0 %2515
        %v2517 = vperm.slane %v2516, %v797
        %v2518 = vsel %vm880, %v2517, 0
        %2520 = vmatpush.msra.mxu0 0.0
        %2521 = vmatpush.msra.mxu0 0.0
        %2522 = vmatpush.msra.mxu0 0.0
        %2523 = vmatpush.msra.mxu0 0.0
        %2524 = vmatpush.msra.mxu0 0.0
        %2525 = vmatpush.msra.mxu0 0.0
        %2526 = vmatpush.msra.mxu0 0.0
        %2527 = vmatpush.msra.mxu0 0.0
        %2528 = vmatpush.msra.mxu0 0.0
        %2529 = vmatpush.msra.mxu0 0.0
        %2530 = vmatpush.msra.mxu0 0.0
        %2531 = vmatpush.msra.mxu0 0.0
        %2532 = vmatpush.msra.mxu0 0.0
        %2533 = vmatpush.msra.mxu0 0.0
        %2534 = vmatpush.msra.mxu0 0.0
        %2535 = vmatpush.msra.mxu0 %v975
        %2536 = vmatmul.f32.gmra.mxu0 %v2518
        %v2537 = vpop.f32.mrf.mxu0
        %v2538 = vadd.f32 0.0, %v2537
        %2539 = vdwg.mxu0
        %v2540 = vld [vmem:[%s11] sm:$0xff]
        %v2541 = vld [vmem:[%s11 + $0x8] sm:$0xff]
        %v2542 = vld [vmem:[%s11 + $0x10] sm:$0xff]
        %v2543 = vld [vmem:[%s11 + $0x18] sm:$0xff]
        %v2544 = vld [vmem:[%s11 + $0x20] sm:$0xff]
        %v2545 = vld [vmem:[%s11 + $0x28] sm:$0xff]
        %v2546 = vld [vmem:[%s11 + $0x30] sm:$0xff]
        %v2547 = vld [vmem:[%s11 + $0x38] sm:$0xff]
        %v2548 = vld [vmem:[%s12] sm:$0x1]
        %v2550 = vperm.slane %v2548, 0
        %2552 = vmatpush.msra.mxu0 0.0
        %2553 = vmatpush.msra.mxu0 0.0
        %2554 = vmatpush.msra.mxu0 0.0
        %2555 = vmatpush.msra.mxu0 0.0
        %2556 = vmatpush.msra.mxu0 0.0
        %2557 = vmatpush.msra.mxu0 0.0
        %2558 = vmatpush.msra.mxu0 0.0
        %2559 = vmatpush.msra.mxu0 0.0
        %2560 = vmatpush.msra.mxu0 %v2547
        %2561 = vmatpush.msra.mxu0 %v2546
        %2562 = vmatpush.msra.mxu0 %v2545
        %2563 = vmatpush.msra.mxu0 %v2544
        %2564 = vmatpush.msra.mxu0 %v2543
        %2565 = vmatpush.msra.mxu0 %v2542
        %2566 = vmatpush.msra.mxu0 %v2541
        %2567 = vmatpush.msra.mxu0 %v2540
        %2568 = vmatmul.f32.gmra.mxu0 %v2239
        %v2569 = vpop.f32.mrf.mxu0
        %v2570 = vadd.f32 %v2550, %v2569
        %2571 = vdwg.mxu0
        %v2572 = vxor.u32 %v2570, 2147483648
        %v2573 = vmul.f32 %v2572, 1.442695
        %v2574 = vpow.pop %v2573
        %v2575 = vadd.f32 %v2574, 1.0
        %v2576 = vrcp.pop %v2575
        %v2577 = vmul.f32 %v2575, %v2576
        %v2578 = vsub.f32 1.0, %v2577
        %v2579 = vmul.f32 %v2576, %v2578
        %v2580 = vadd.f32 %v2576, %v2579
        %vm2581 = vweird.f32 %v2575
        %vm2582 = vweird.f32 %v2576
        %vm2583 = vmor %vm2581, %vm2582
        %v2584 = vsel %vm2583, %v2576, %v2580
        %v2585 = vand.u32 2147483647, %v2575
        %vm2586 = vcmp.eq.f32.partialorder %v2585, 8.507059e+37
        %v2587 = vand.u32 %v2575, 2147483648
        %v2588 = vor.u32 1.1754944e-38, %v2587
        %v2589 = vsel %vm2586, %v2588, %v2584
        %v2590 = vmul.f32 1.0, %v2589
        %v2595 = vrot.slane %v2484, 7
        %v2596 = vsel %vm802, %v2595, %v2457
        %v2597 = vrot.slane %v2511, 6
        %v2598 = vsel %vm804, %v2597, %v2596
        %v2599 = vrot.slane %v2538, 5
        %v2600 = vsel %vm806, %v2599, %v2598
        %v2602 = vmul.f32 %v2590, %v2600
        %s2603 = scalar_lea.vmem %s679, 12
        %v2604 = vld [vmem:[%s2603] sm:$0xf]
        %2606 = vrot.lane.b32.xlu0 %v2602, 32
        %v2607 = vpop.permute.xlu0 %2606
        %v2609 = vsel %vm1068, %v2604, %v2607
        %v2610 = vsel %vm716, %v2609, %v2223
        %v2611 = vld [vmem:[#allocation5] sm:$0xff]
        %v2612 = vld [vmem:[#allocation5 + $0x8] sm:$0xff]
        %v2613 = vld [vmem:[#allocation5 + $0x10] sm:$0xff]
        %v2614 = vld [vmem:[#allocation5 + $0x18] sm:$0xff]
        %v2615 = vld [vmem:[#allocation5 + $0x20] sm:$0xff]
        %v2616 = vld [vmem:[#allocation5 + $0x28] sm:$0xff]
        %v2617 = vld [vmem:[#allocation5 + $0x30] sm:$0xff]
        %v2618 = vld [vmem:[#allocation5 + $0x38] sm:$0xff]
        %v2619 = vld [vmem:[#allocation5 + $0x40] sm:$0xff]
        %v2620 = vld [vmem:[#allocation5 + $0x48] sm:$0xff]
        %v2621 = vld [vmem:[#allocation5 + $0x50] sm:$0xff]
        %v2622 = vld [vmem:[#allocation5 + $0x58] sm:$0xff]
        %v2623 = vld [vmem:[#allocation5 + $0x60] sm:$0xff]
        %v2624 = vld [vmem:[#allocation5 + $0x68] sm:$0xff]
        %v2625 = vld [vmem:[#allocation5 + $0x70] sm:$0xff]
        %v2626 = vld [vmem:[#allocation5 + $0x78] sm:$0xff]
        %v2627 = vld [vmem:[#allocation5 + $0x80] sm:$0xff]
        %v2628 = vld [vmem:[#allocation5 + $0x88] sm:$0xff]
        %v2629 = vld [vmem:[#allocation5 + $0x90] sm:$0xff]
        %v2630 = vld [vmem:[#allocation5 + $0x98] sm:$0xff]
        %v2631 = vld [vmem:[#allocation5 + $0xa0] sm:$0xff]
        %v2632 = vld [vmem:[#allocation5 + $0xa8] sm:$0xff]
        %v2633 = vld [vmem:[#allocation5 + $0xb0] sm:$0xff]
        %v2634 = vld [vmem:[#allocation5 + $0xb8] sm:$0xff]
        %v2635 = vld [vmem:[#allocation5 + $0xc0] sm:$0xff]
        %v2636 = vld [vmem:[#allocation5 + $0xc8] sm:$0xff]
        %v2637 = vld [vmem:[#allocation5 + $0xd0] sm:$0xff]
        %v2638 = vld [vmem:[#allocation5 + $0xd8] sm:$0xff]
        %v2639 = vld [vmem:[#allocation5 + $0xe0] sm:$0xff]
        %v2640 = vld [vmem:[#allocation5 + $0xe8] sm:$0xff]
        %v2641 = vld [vmem:[#allocation5 + $0xf0] sm:$0xff]
        %v2642 = vld [vmem:[#allocation5 + $0xf8] sm:$0xff]
        %2643 = vst [vmem:[#allocation1] ss:$2 sm:$0xff] %v699
        %v2644 = vld.sshfl [vmem:[#allocation1] sm:$0xff pattern:$0x75316420]
        %v2645 = vld.sshfl [vmem:[#allocation1 + $0x8] sm:$0xff pattern:$0x75316420]
        %2648 = vmatpush.msra.mxu0 %v2641
        %2649 = vmatpush.msra.mxu0 %v2639
        %2650 = vmatpush.msra.mxu0 %v2637
        %2651 = vmatpush.msra.mxu0 %v2635
        %2652 = vmatpush.msra.mxu0 %v2633
        %2653 = vmatpush.msra.mxu0 %v2631
        %2654 = vmatpush.msra.mxu0 %v2629
        %2655 = vmatpush.msra.mxu0 %v2627
        %2656 = vmatpush.msra.mxu0 %v2625
        %2657 = vmatpush.msra.mxu0 %v2623
        %2658 = vmatpush.msra.mxu0 %v2621
        %2659 = vmatpush.msra.mxu0 %v2619
        %2660 = vmatpush.msra.mxu0 %v2617
        %2661 = vmatpush.msra.mxu0 %v2615
        %2662 = vmatpush.msra.mxu0 %v2613
        %2663 = vmatpush.msra.mxu0 %v2611
        %2664 = vmatmul.f32.gmra.mxu0 %v2610
        %v2665 = vpop.f32.mrf.mxu0
        %v2666 = vadd.f32 %v2644, %v2665
        %2667 = vdwg.mxu0
        %2668 = vmatpush.msra.mxu0 %v2642
        %2669 = vmatpush.msra.mxu0 %v2640
        %2670 = vmatpush.msra.mxu0 %v2638
        %2671 = vmatpush.msra.mxu0 %v2636
        %2672 = vmatpush.msra.mxu0 %v2634
        %2673 = vmatpush.msra.mxu0 %v2632
        %2674 = vmatpush.msra.mxu0 %v2630
        %2675 = vmatpush.msra.mxu0 %v2628
        %2676 = vmatpush.msra.mxu0 %v2626
        %2677 = vmatpush.msra.mxu0 %v2624
        %2678 = vmatpush.msra.mxu0 %v2622
        %2679 = vmatpush.msra.mxu0 %v2620
        %2680 = vmatpush.msra.mxu0 %v2618
        %2681 = vmatpush.msra.mxu0 %v2616
        %2682 = vmatpush.msra.mxu0 %v2614
        %2683 = vmatpush.msra.mxu0 %v2612
        %2684 = vmatmul.f32.gmra.mxu0 %v2610
        %v2685 = vpop.f32.mrf.mxu0
        %v2686 = vadd.f32 %v2645, %v2685
        %2687 = vdwg.mxu0
        %v2688 = vxor.u32 %v2666, 2147483648
        %v2689 = vmul.f32 %v2688, 1.442695
        %v2690 = vpow.pop %v2689
        %v2691 = vadd.f32 %v2690, 1.0
        %v2692 = vrcp.pop %v2691
        %v2693 = vmul.f32 %v2691, %v2692
        %v2694 = vsub.f32 1.0, %v2693
        %v2695 = vmul.f32 %v2692, %v2694
        %v2696 = vadd.f32 %v2692, %v2695
        %vm2697 = vweird.f32 %v2691
        %vm2698 = vweird.f32 %v2692
        %vm2699 = vmor %vm2697, %vm2698
        %v2700 = vsel %vm2699, %v2692, %v2696
        %v2701 = vand.u32 2147483647, %v2691
        %vm2702 = vcmp.eq.f32.partialorder %v2701, 8.507059e+37
        %v2703 = vand.u32 %v2691, 2147483648
        %v2704 = vor.u32 1.1754944e-38, %v2703
        %v2705 = vsel %vm2702, %v2704, %v2700
        %v2706 = vmul.f32 1.0, %v2705
        %v2707 = vtanh.pop %v2686
        %v2708 = vxor.u32 %v2686, 2147483648
        %v2709 = vmul.f32 %v2708, 1.442695
        %v2710 = vpow.pop %v2709
        %v2711 = vadd.f32 %v2710, 1.0
        %v2712 = vrcp.pop %v2711
        %v2713 = vmul.f32 %v2711, %v2712
        %v2714 = vsub.f32 1.0, %v2713
        %v2715 = vmul.f32 %v2712, %v2714
        %v2716 = vadd.f32 %v2712, %v2715
        %vm2717 = vweird.f32 %v2711
        %vm2718 = vweird.f32 %v2712
        %vm2719 = vmor %vm2717, %vm2718
        %v2720 = vsel %vm2719, %v2712, %v2716
        %v2721 = vand.u32 2147483647, %v2711
        %vm2722 = vcmp.eq.f32.partialorder %v2721, 8.507059e+37
        %v2723 = vand.u32 %v2711, 2147483648
        %v2724 = vor.u32 1.1754944e-38, %v2723
        %v2725 = vsel %vm2722, %v2724, %v2720
        %v2726 = vmul.f32 1.0, %v2725
        %v2727 = vmul.f32 %v2706, %v2221
        %v2728 = vmul.f32 %v2706, %v2707
        %2730 = vrot.lane.b32.xlu0 %v2728, 64
        %v2731 = vpop.permute.xlu0 %2730
        %v2733 = vadd.f32 %v2727, %v2731
        %v2734 = vtanh.pop %v2733
        %v2735 = vmul.f32 %v2726, %v2734
        %v2736 = vld [vmem:[%s14] sm:$0xff]
        %v2737 = vld [vmem:[%s14 + $0x8] sm:$0xff]
        %v2738 = vld [vmem:[%s14 + $0x10] sm:$0xff]
        %v2739 = vld [vmem:[%s14 + $0x18] sm:$0xff]
        %v2740 = vld [vmem:[%s14 + $0x20] sm:$0xff]
        %v2741 = vld [vmem:[%s14 + $0x28] sm:$0xff]
        %v2742 = vld [vmem:[%s14 + $0x30] sm:$0xff]
        %v2743 = vld [vmem:[%s14 + $0x38] sm:$0xff]
        %v2744 = vld [vmem:[%s15] sm:$0x1]
        %v2746 = vperm.slane %v2744, 0
        %2749 = vrot.lane.b32.xlu0 %v2735, 64
        %v2750 = vpop.permute.xlu0 %2749
        %v2751 = vsel %vm716, %v2750, 0
        %2753 = vmatpush.msra.mxu0 0.0
        %2754 = vmatpush.msra.mxu0 0.0
        %2755 = vmatpush.msra.mxu0 0.0
        %2756 = vmatpush.msra.mxu0 0.0
        %2757 = vmatpush.msra.mxu0 0.0
        %2758 = vmatpush.msra.mxu0 0.0
        %2759 = vmatpush.msra.mxu0 0.0
        %2760 = vmatpush.msra.mxu0 0.0
        %2761 = vmatpush.msra.mxu0 %v2743
        %2762 = vmatpush.msra.mxu0 %v2742
        %2763 = vmatpush.msra.mxu0 %v2741
        %2764 = vmatpush.msra.mxu0 %v2740
        %2765 = vmatpush.msra.mxu0 %v2739
        %2766 = vmatpush.msra.mxu0 %v2738
        %2767 = vmatpush.msra.mxu0 %v2737
        %2768 = vmatpush.msra.mxu0 %v2736
        %2769 = vmatmul.f32.gmra.mxu0 %v2751
        %v2770 = vpop.f32.mrf.mxu0
        %v2771 = vadd.f32 %v2746, %v2770
        %2772 = vdwg.mxu0
        %v2773 = vstv %s2271
        %vm2774 = vcmp.gt.s32.totalorder %v700, %v2773
        %v2775 = vsel %vm2774, 1, 0
        %2776 = vset.pattern.permute.xlu0 0
        %2777 = vperm.xlu0 %2776, %v2775
        %v2778 = vpop.permute.xlu0 %2777
        %vm2779 = vcmp.eq.s32.totalorder %v2778, 1
        %v2780 = vsel %vm2779, %v2771, 0.0
        %s2781 = scalar_lea.vmem %s642, 12 [#allocation8]
        %2782 = vst [vmem:[%s2781] sm:$0xf] %v2780
        %vm2784 = vcmask 519168
        %2785 = vst.msk [vmem:[#allocation2] sm:$0xf] %vm2784, %v2750
        %2787 = vrot.lane.b32.xlu0 %v2733, 64
        %v2788 = vpop.permute.xlu0 %2787
        %2790 = vst.msk [vmem:[#allocation3] sm:$0xf] %vm2784, %v2788
        %s2791 = sand.u32 %s428, 1
        %s2792 = scalar_lea.sflag [#allocation7], %s2791
        %s2793 = sand.u32 %s428, 1
        %s2794 = smul.addr %s2793, 16
        %s2795 = scalar_lea.vmem [#allocation8], %s2794
        // Predicated region
        $region93: #{tpu_custom_call.1} parent=83 // pred_check
          %p2796 = pneg %p438
        $region94: #{tpu_custom_call.1} parent=83 // pred_check_branch
          %2798 = sbr.rel (%p2796) target = $region96
        $region95: #{tpu_custom_call.1} parent=83 // pred_region
          %s2799 = smul.u32 4, %s38
          %2801 = vsyncadd %s2792, 0
          %s2802 = sadd.s32 %s37, %s2799
          %s2803 = smul.addr %s2802, 4
          %s2804 = scalar_lea.hbm %s16, %s2803
          %s2805 = sshll.u32 %s2795, 4
          %s2806 = int_to_ptr.vmem [resolvable:$true] %s2805
          %s2807 = sshll.u32 %s2804, 4
          %s2808 = int_to_ptr.hbm [resolvable:$true] %s2807
          %2813 = dma.vmem_to_hbm [thread:$0]  %s2806, 256, %s2808, %s2792, 64, 64, 4
        $region96: #{tpu_custom_call.1} parent=83 // pred_fallthru
          _
      $region84: #{tpu_custom_call.1} parent=5 // pred_fallthru
        _
      %p2814 = scmp.le.s32.totalorder 2, %s28
      // Predicated region
      $region97: #{tpu_custom_call.1} parent=5 // pred_check
        %p2815 = pneg %p2814
      $region98: #{tpu_custom_call.1} parent=5 // pred_check_branch
        %2817 = sbr.rel (%p2815) target = $region100
      $region99: #{tpu_custom_call.1} parent=5 // pred_region
        %s2818 = ssub.s32 %s28, 2
        // Predicated region
        $region101: #{tpu_custom_call.1} parent=99 // pred_check
          %p2819 = pneg %p444
        $region102: #{tpu_custom_call.1} parent=99 // pred_check_branch
          %2821 = sbr.rel (%p2819) target = $region104
        $region103: #{tpu_custom_call.1} parent=99 // pred_region
          %s2822 = sand.u32 %s429, 1
          %s2823 = scalar_lea.sflag [#allocation7], %s2822
          %s2824 = sand.u32 %s429, 1
          %s2825 = smul.addr %s2824, 16
          %s2826 = scalar_lea.vmem [#allocation8], %s2825
          %2828 = dma.done %s2823, 256
        $region104: #{tpu_custom_call.1} parent=99 // pred_fallthru
          _
      $region100: #{tpu_custom_call.1} parent=5 // pred_fallthru
        _
    $region6: #{tpu_custom_call.1} parent=1 // loop_footer
      %s32 = sadd.s32 1, %s28
    $region7: #{tpu_custom_call.1} parent=1 // loop_footer_branch
      %27 = sbr.rel target = $region3
    $region8: #{tpu_custom_call.1} parent=1 // loop_exit
      _
    %2829 = vsyncpa [#allocation6], 1
    %s2830 = scalar_lea.sflag [#allocation6], 1
    %2831 = vsyncpa %s2830, 1
    %2832 = vsyncpa [#allocation7], 1
    %s2833 = scalar_lea.sflag [#allocation7], 1
    %2834 = vsyncpa %s2833, 1

// kernel: tpu_custom_call.1
$region0: #{tpu_custom_call.1}
  #allocation0 [shape = 'u32[]', space=smem, size = 0x4, offset = 0x4, fixed_abs, tag = 'smem constant byte address 0x4 - core index']
  #allocation1 [shape = 'u32[72,128]{1,0:T(1,128)}', space=vmem, size = 0x9000, scoped, tag = 'internal scratch']
  #allocation2 [shape = 'f32[4,64]{1,0:T(4,128)}', space=vmem, size = 0x800, scoped, tag = 'scratch operand']
  #allocation3 [shape = 'f32[4,64]{1,0:T(4,128)}', space=vmem, size = 0x800, scoped, tag = 'scratch operand']
  #allocation4 [shape = 'f32[1,1]{1,0:T(1,128)S(1)}', space=vmem, size = 0x200, scoped, tag = 'scoped memory for tpu_custom_call.1']
  %s0 = inlined_call_operand.vmem [shape: s32[4,1], index: 0, kind: input, shape index: {}]
  %s1 = inlined_call_operand.vmem [shape: f32[4,4,32], index: 1, kind: input, shape index: {}]
  %s2 = inlined_call_operand.vmem [shape: f32[4,4,32], index: 2, kind: input, shape index: {}]
  %s3 = inlined_call_operand.vmem [shape: f32[4,256], index: 3, kind: input, shape index: {}]
  %s4 = inlined_call_operand.vmem [shape: f32[4,64], index: 4, kind: input, shape index: {}]
  %s5 = inlined_call_operand.vmem [shape: f32[4,64], index: 5, kind: input, shape index: {}]
  %s6 = inlined_call_operand.vmem [shape: f32[8,4,32], index: 6, kind: input, shape index: {}]
  %s7 = inlined_call_operand.vmem [shape: f32[64,32], index: 7, kind: input, shape index: {}]
  %s8 = inlined_call_operand.vmem [shape: f32[1,32], index: 8, kind: input, shape index: {}]
  %s9 = inlined_call_operand.vmem [shape: f32[1,32], index: 9, kind: input, shape index: {}]
  %s10 = inlined_call_operand.<no memory space> [shape: f32[1,1], index: 10, kind: input, shape index: {}]
  %s11 = inlined_call_operand.vmem [shape: f32[64,32], index: 11, kind: input, shape index: {}]
  %s12 = inlined_call_operand.vmem [shape: f32[1,32], index: 12, kind: input, shape index: {}]
  %s13 = inlined_call_operand.hbm [shape: f32[128,256], index: 13, kind: input, shape index: {}]
  %s14 = inlined_call_operand.vmem [shape: f32[64,128], index: 14, kind: input, shape index: {}]
  %s15 = inlined_call_operand.vmem [shape: f32[1,128], index: 15, kind: input, shape index: {}]
  %s16 = inlined_call_operand.hbm [shape: f32[8,4,128], index: 16, kind: output, shape index: {}]
  %s17 = sld [smem:[#allocation0]]
  $region105: #{tpu_custom_call.1} parent=0
    _
  %s19 = ssub.s32 1, %s17
  %s20 = scalar_select 0, %s19, %s17
  %v21 = vstv %s10
  %22 = vst [vmem:[#allocation4] sm:$0x1] %v21
  $region1: #{tpu_custom_call.1} parent=0
    #allocation5 [shape = 'u8[131072]{0}', space=vmem, size = 0x20000, scoped, tag = 'input window, operand 13, single buffered']
    #allocation6 [shape = 's32[2]{0}', space=sflag, size = 0x8, scoped, tag = 'scoped memory for tpu_custom_call.1']
    #allocation7 [shape = 's32[2]{0}', space=sflag, size = 0x8, scoped, tag = 'scoped memory for tpu_custom_call.1']
    #allocation8 [shape = 'u8[16384]{0}', space=vmem, size = 0x4000, scoped, tag = 'output window, operand 0']
    %23 = vsyncpa [#allocation6], 0
    %24 = vsyncpa [#allocation7], 0
    %s25 = scalar_lea.sflag [#allocation7], 1
    %26 = vsyncpa %s25, 0
    loop: start=0, step=1, limit=4
    $region2: #{tpu_custom_call.1} parent=1 // loop_pre_header
      _
    $region3: #{tpu_custom_call.1} parent=1 // loop_header
      %s28 = sphi 0, %s32
      %p29 = scmp.ge.s32.totalorder %s28, 4
      %s35 = sphi 0, %s47
      %s36 = sphi 0, %s43
      %s37 = sphi 0, %s35
      %s38 = sphi 0, %s36
      %s39 = sphi 0, %s37
      %s40 = sphi 0, %s38
      %s50 = sphi 0, %s52
      %s53 = sphi 0, %s50
      %s54 = sphi 0, %s53
      %s70 = sphi 0, %s54
      %s76 = sphi 0, %s78
      %s79 = sphi 0, %s76
      %s80 = sphi 0, %s79
      %s96 = sphi 0, %s80
      %s102 = sphi 0, %s104
      %s105 = sphi 0, %s102
      %s106 = sphi 0, %s105
      %s122 = sphi 0, %s106
      %s128 = sphi 0, %s130
      %s131 = sphi 0, %s128
      %s132 = sphi 0, %s131
      %s148 = sphi 0, %s132
      %s154 = sphi 0, %s156
      %s157 = sphi 0, %s154
      %s158 = sphi 0, %s157
      %s174 = sphi 0, %s158
      %s180 = sphi 0, %s182
      %s183 = sphi 0, %s180
      %s184 = sphi 0, %s183
      %s200 = sphi 0, %s184
      %s208 = sphi 0, %s210
      %s211 = sphi 0, %s208
      %s212 = sphi 0, %s211
      %s228 = sphi 0, %s212
      %s232 = sphi 0, %s232
      %s234 = sphi 0, %s232
      %s235 = sphi 0, %s234
      %s249 = sphi 0, %s235
      %s253 = sphi 0, %s253
      %s255 = sphi 0, %s253
      %s256 = sphi 0, %s255
      %s270 = sphi 0, %s256
      %s274 = sphi 0, %s274
      %s276 = sphi 0, %s274
      %s277 = sphi 0, %s276
      %s291 = sphi 0, %s277
      %s295 = sphi 0, %s295
      %s297 = sphi 0, %s295
      %s298 = sphi 0, %s297
      %s312 = sphi 0, %s298
      %s316 = sphi 0, %s316
      %s318 = sphi 0, %s316
      %s319 = sphi 0, %s318
      %s333 = sphi 0, %s319
      %s337 = sphi 0, %s337
      %s339 = sphi 0, %s337
      %s340 = sphi 0, %s339
      %s354 = sphi 0, %s340
      %s358 = sphi 0, %s358
      %s360 = sphi 0, %s358
      %s361 = sphi 0, %s360
      %s375 = sphi 0, %s361
      %s379 = sphi 0, %s379
      %s381 = sphi 0, %s379
      %s382 = sphi 0, %s381
      %s396 = sphi 0, %s382
      %s400 = sphi 0, %s400
      %s402 = sphi 0, %s400
      %s403 = sphi 0, %s402
      %s417 = sphi 0, %s403
      %s425 = sphi 0, %s427
      %s428 = sphi 0, %s425
      %s429 = sphi 0, %s428
      %s445 = sphi 0, %s429
    $region4: #{tpu_custom_call.1} parent=1 // loop_header_branch
      %31 = sbr.rel (%p29) target = $region8
    $region5: #{tpu_custom_call.1} parent=1 // loop_body
      %s33 = ssub.s32 %s28, 1
      %s34 = ssub.s32 %s28, 2
      %s41 = sadd.s32 1, %s36
      %p42 = scmp.ge.s32.totalorder %s41, 2
      %s43 = scalar_select %p42, 0, %s41
      %s44 = sadd.s32 1, %s35
      %s45 = scalar_select %p42, %s44, %s35
      %p46 = scmp.ge.s32.totalorder %s45, 1
      %s47 = scalar_select %p46, 0, %s45
      %s48 = ssub.s32 %s35, %s47
      %p49 = scmp.eq.s32.totalorder %s48, 0
      %s51 = sadd.s32 %s50, 1
      %s52 = scalar_select %p49, %s50, %s51
      %p55 = pneg %p49
      %p56 = scmp.eq.s32.totalorder %s28, 1
      %p57 = por %p55, %p56
      %p58 = scmp.ne.s32.totalorder %s50, %s53
      %p59 = scmp.eq.s32.totalorder %s28, 0
      %p60 = por %p58, %p59
      %p61 = scmp.ne.s32.totalorder %s50, %s53
      %p62 = scmp.eq.s32.totalorder %s33, 1
      %p63 = por %p61, %p62
      %p64 = scmp.ne.s32.totalorder %s53, %s54
      %p65 = scmp.eq.s32.totalorder %s33, 0
      %p66 = por %p64, %p65
      %p67 = scmp.ne.s32.totalorder %s53, %s54
      %p68 = scmp.eq.s32.totalorder %s34, 1
      %p69 = por %p67, %p68
      %p71 = scmp.ne.s32.totalorder %s54, %s70
      %p72 = scmp.eq.s32.totalorder %s34, 0
      %p73 = por %p71, %p72
      %s74 = ssub.s32 %s35, %s47
      %p75 = scmp.eq.s32.totalorder %s74, 0
      %s77 = sadd.s32 %s76, 1
      %s78 = scalar_select %p75, %s76, %s77
      %p81 = pneg %p75
      %p82 = scmp.eq.s32.totalorder %s28, 1
      %p83 = por %p81, %p82
      %p84 = scmp.ne.s32.totalorder %s76, %s79
      %p85 = scmp.eq.s32.totalorder %s28, 0
      %p86 = por %p84, %p85
      %p87 = scmp.ne.s32.totalorder %s76, %s79
      %p88 = scmp.eq.s32.totalorder %s33, 1
      %p89 = por %p87, %p88
      %p90 = scmp.ne.s32.totalorder %s79, %s80
      %p91 = scmp.eq.s32.totalorder %s33, 0
      %p92 = por %p90, %p91
      %p93 = scmp.ne.s32.totalorder %s79, %s80
      %p94 = scmp.eq.s32.totalorder %s34, 1
      %p95 = por %p93, %p94
      %p97 = scmp.ne.s32.totalorder %s80, %s96
      %p98 = scmp.eq.s32.totalorder %s34, 0
      %p99 = por %p97, %p98
      %s100 = ssub.s32 %s35, %s47
      %p101 = scmp.eq.s32.totalorder %s100, 0
      %s103 = sadd.s32 %s102, 1
      %s104 = scalar_select %p101, %s102, %s103
      %p107 = pneg %p101
      %p108 = scmp.eq.s32.totalorder %s28, 1
      %p109 = por %p107, %p108
      %p110 = scmp.ne.s32.totalorder %s102, %s105
      %p111 = scmp.eq.s32.totalorder %s28, 0
      %p112 = por %p110, %p111
      %p113 = scmp.ne.s32.totalorder %s102, %s105
      %p114 = scmp.eq.s32.totalorder %s33, 1
      %p115 = por %p113, %p114
      %p116 = scmp.ne.s32.totalorder %s105, %s106
      %p117 = scmp.eq.s32.totalorder %s33, 0
      %p118 = por %p116, %p117
      %p119 = scmp.ne.s32.totalorder %s105, %s106
      %p120 = scmp.eq.s32.totalorder %s34, 1
      %p121 = por %p119, %p120
      %p123 = scmp.ne.s32.totalorder %s106, %s122
      %p124 = scmp.eq.s32.totalorder %s34, 0
      %p125 = por %p123, %p124
      %s126 = ssub.s32 %s35, %s47
      %p127 = scmp.eq.s32.totalorder %s126, 0
      %s129 = sadd.s32 %s128, 1
      %s130 = scalar_select %p127, %s128, %s129
      %p133 = pneg %p127
      %p134 = scmp.eq.s32.totalorder %s28, 1
      %p135 = por %p133, %p134
      %p136 = scmp.ne.s32.totalorder %s128, %s131
      %p137 = scmp.eq.s32.totalorder %s28, 0
      %p138 = por %p136, %p137
      %p139 = scmp.ne.s32.totalorder %s128, %s131
      %p140 = scmp.eq.s32.totalorder %s33, 1
      %p141 = por %p139, %p140
      %p142 = scmp.ne.s32.totalorder %s131, %s132
      %p143 = scmp.eq.s32.totalorder %s33, 0
      %p144 = por %p142, %p143
      %p145 = scmp.ne.s32.totalorder %s131, %s132
      %p146 = scmp.eq.s32.totalorder %s34, 1
      %p147 = por %p145, %p146
      %p149 = scmp.ne.s32.totalorder %s132, %s148
      %p150 = scmp.eq.s32.totalorder %s34, 0
      %p151 = por %p149, %p150
      %s152 = ssub.s32 %s35, %s47
      %p153 = scmp.eq.s32.totalorder %s152, 0
      %s155 = sadd.s32 %s154, 1
      %s156 = scalar_select %p153, %s154, %s155
      %p159 = pneg %p153
      %p160 = scmp.eq.s32.totalorder %s28, 1
      %p161 = por %p159, %p160
      %p162 = scmp.ne.s32.totalorder %s154, %s157
      %p163 = scmp.eq.s32.totalorder %s28, 0
      %p164 = por %p162, %p163
      %p165 = scmp.ne.s32.totalorder %s154, %s157
      %p166 = scmp.eq.s32.totalorder %s33, 1
      %p167 = por %p165, %p166
      %p168 = scmp.ne.s32.totalorder %s157, %s158
      %p169 = scmp.eq.s32.totalorder %s33, 0
      %p170 = por %p168, %p169
      %p171 = scmp.ne.s32.totalorder %s157, %s158
      %p172 = scmp.eq.s32.totalorder %s34, 1
      %p173 = por %p171, %p172
      %p175 = scmp.ne.s32.totalorder %s158, %s174
      %p176 = scmp.eq.s32.totalorder %s34, 0
      %p177 = por %p175, %p176
      %s178 = ssub.s32 %s35, %s47
      %p179 = scmp.eq.s32.totalorder %s178, 0
      %s181 = sadd.s32 %s180, 1
      %s182 = scalar_select %p179, %s180, %s181
      %p185 = pneg %p179
      %p186 = scmp.eq.s32.totalorder %s28, 1
      %p187 = por %p185, %p186
      %p188 = scmp.ne.s32.totalorder %s180, %s183
      %p189 = scmp.eq.s32.totalorder %s28, 0
      %p190 = por %p188, %p189
      %p191 = scmp.ne.s32.totalorder %s180, %s183
      %p192 = scmp.eq.s32.totalorder %s33, 1
      %p193 = por %p191, %p192
      %p194 = scmp.ne.s32.totalorder %s183, %s184
      %p195 = scmp.eq.s32.totalorder %s33, 0
      %p196 = por %p194, %p195
      %p197 = scmp.ne.s32.totalorder %s183, %s184
      %p198 = scmp.eq.s32.totalorder %s34, 1
      %p199 = por %p197, %p198
      %p201 = scmp.ne.s32.totalorder %s184, %s200
      %p202 = scmp.eq.s32.totalorder %s34, 0
      %p203 = por %p201, %p202
      %s204 = ssub.s32 %s36, %s43
      %s205 = ssub.s32 %s35, %s47
      %s206 = sor.u32 %s204, %s205
      %p207 = scmp.eq.s32.totalorder %s206, 0
      %s209 = sadd.s32 %s208, 1
      %s210 = scalar_select %p207, %s208, %s209
      %p213 = pneg %p207
      %p214 = scmp.eq.s32.totalorder %s28, 1
      %p215 = por %p213, %p214
      %p216 = scmp.ne.s32.totalorder %s208, %s211
      %p217 = scmp.eq.s32.totalorder %s28, 0
      %p218 = por %p216, %p217
      %p219 = scmp.ne.s32.totalorder %s208, %s211
      %p220 = scmp.eq.s32.totalorder %s33, 1
      %p221 = por %p219, %p220
      %p222 = scmp.ne.s32.totalorder %s211, %s212
      %p223 = scmp.eq.s32.totalorder %s33, 0
      %p224 = por %p222, %p223
      %p225 = scmp.ne.s32.totalorder %s211, %s212
      %p226 = scmp.eq.s32.totalorder %s34, 1
      %p227 = por %p225, %p226
      %p229 = scmp.ne.s32.totalorder %s212, %s228
      %p230 = scmp.eq.s32.totalorder %s34, 0
      %p231 = por %p229, %p230
      %s233 = sadd.s32 %s232, 1
      %p236 = scmp.eq.s32.totalorder %s28, 1
      %p237 = scmp.ne.s32.totalorder %s232, %s234
      %p238 = scmp.eq.s32.totalorder %s28, 0
      %p239 = por %p237, %p238
      %p240 = scmp.ne.s32.totalorder %s232, %s234
      %p241 = scmp.eq.s32.totalorder %s33, 1
      %p242 = por %p240, %p241
      %p243 = scmp.ne.s32.totalorder %s234, %s235
      %p244 = scmp.eq.s32.totalorder %s33, 0
      %p245 = por %p243, %p244
      %p246 = scmp.ne.s32.totalorder %s234, %s235
      %p247 = scmp.eq.s32.totalorder %s34, 1
      %p248 = por %p246, %p247
      %p250 = scmp.ne.s32.totalorder %s235, %s249
      %p251 = scmp.eq.s32.totalorder %s34, 0
      %p252 = por %p250, %p251
      %s254 = sadd.s32 %s253, 1
      %p257 = scmp.eq.s32.totalorder %s28, 1
      %p258 = scmp.ne.s32.totalorder %s253, %s255
      %p259 = scmp.eq.s32.totalorder %s28, 0
      %p260 = por %p258, %p259
      %p261 = scmp.ne.s32.totalorder %s253, %s255
      %p262 = scmp.eq.s32.totalorder %s33, 1
      %p263 = por %p261, %p262
      %p264 = scmp.ne.s32.totalorder %s255, %s256
      %p265 = scmp.eq.s32.totalorder %s33, 0
      %p266 = por %p264, %p265
      %p267 = scmp.ne.s32.totalorder %s255, %s256
      %p268 = scmp.eq.s32.totalorder %s34, 1
      %p269 = por %p267, %p268
      %p271 = scmp.ne.s32.totalorder %s256, %s270
      %p272 = scmp.eq.s32.totalorder %s34, 0
      %p273 = por %p271, %p272
      %s275 = sadd.s32 %s274, 1
      %p278 = scmp.eq.s32.totalorder %s28, 1
      %p279 = scmp.ne.s32.totalorder %s274, %s276
      %p280 = scmp.eq.s32.totalorder %s28, 0
      %p281 = por %p279, %p280
      %p282 = scmp.ne.s32.totalorder %s274, %s276
      %p283 = scmp.eq.s32.totalorder %s33, 1
      %p284 = por %p282, %p283
      %p285 = scmp.ne.s32.totalorder %s276, %s277
      %p286 = scmp.eq.s32.totalorder %s33, 0
      %p287 = por %p285, %p286
      %p288 = scmp.ne.s32.totalorder %s276, %s277
      %p289 = scmp.eq.s32.totalorder %s34, 1
      %p290 = por %p288, %p289
      %p292 = scmp.ne.s32.totalorder %s277, %s291
      %p293 = scmp.eq.s32.totalorder %s34, 0
      %p294 = por %p292, %p293
      %s296 = sadd.s32 %s295, 1
      %p299 = scmp.eq.s32.totalorder %s28, 1
      %p300 = scmp.ne.s32.totalorder %s295, %s297
      %p301 = scmp.eq.s32.totalorder %s28, 0
      %p302 = por %p300, %p301
      %p303 = scmp.ne.s32.totalorder %s295, %s297
      %p304 = scmp.eq.s32.totalorder %s33, 1
      %p305 = por %p303, %p304
      %p306 = scmp.ne.s32.totalorder %s297, %s298
      %p307 = scmp.eq.s32.totalorder %s33, 0
      %p308 = por %p306, %p307
      %p309 = scmp.ne.s32.totalorder %s297, %s298
      %p310 = scmp.eq.s32.totalorder %s34, 1
      %p311 = por %p309, %p310
      %p313 = scmp.ne.s32.totalorder %s298, %s312
      %p314 = scmp.eq.s32.totalorder %s34, 0
      %p315 = por %p313, %p314
      %s317 = sadd.s32 %s316, 1
      %p320 = scmp.eq.s32.totalorder %s28, 1
      %p321 = scmp.ne.s32.totalorder %s316, %s318
      %p322 = scmp.eq.s32.totalorder %s28, 0
      %p323 = por %p321, %p322
      %p324 = scmp.ne.s32.totalorder %s316, %s318
      %p325 = scmp.eq.s32.totalorder %s33, 1
      %p326 = por %p324, %p325
      %p327 = scmp.ne.s32.totalorder %s318, %s319
      %p328 = scmp.eq.s32.totalorder %s33, 0
      %p329 = por %p327, %p328
      %p330 = scmp.ne.s32.totalorder %s318, %s319
      %p331 = scmp.eq.s32.totalorder %s34, 1
      %p332 = por %p330, %p331
      %p334 = scmp.ne.s32.totalorder %s319, %s333
      %p335 = scmp.eq.s32.totalorder %s34, 0
      %p336 = por %p334, %p335
      %s338 = sadd.s32 %s337, 1
      %p341 = scmp.eq.s32.totalorder %s28, 1
      %p342 = scmp.ne.s32.totalorder %s337, %s339
      %p343 = scmp.eq.s32.totalorder %s28, 0
      %p344 = por %p342, %p343
      %p345 = scmp.ne.s32.totalorder %s337, %s339
      %p346 = scmp.eq.s32.totalorder %s33, 1
      %p347 = por %p345, %p346
      %p348 = scmp.ne.s32.totalorder %s339, %s340
      %p349 = scmp.eq.s32.totalorder %s33, 0
      %p350 = por %p348, %p349
      %p351 = scmp.ne.s32.totalorder %s339, %s340
      %p352 = scmp.eq.s32.totalorder %s34, 1
      %p353 = por %p351, %p352
      %p355 = scmp.ne.s32.totalorder %s340, %s354
      %p356 = scmp.eq.s32.totalorder %s34, 0
      %p357 = por %p355, %p356
      %s359 = sadd.s32 %s358, 1
      %p362 = scmp.eq.s32.totalorder %s28, 1
      %p363 = scmp.ne.s32.totalorder %s358, %s360
      %p364 = scmp.eq.s32.totalorder %s28, 0
      %p365 = por %p363, %p364
      %p366 = scmp.ne.s32.totalorder %s358, %s360
      %p367 = scmp.eq.s32.totalorder %s33, 1
      %p368 = por %p366, %p367
      %p369 = scmp.ne.s32.totalorder %s360, %s361
      %p370 = scmp.eq.s32.totalorder %s33, 0
      %p371 = por %p369, %p370
      %p372 = scmp.ne.s32.totalorder %s360, %s361
      %p373 = scmp.eq.s32.totalorder %s34, 1
      %p374 = por %p372, %p373
      %p376 = scmp.ne.s32.totalorder %s361, %s375
      %p377 = scmp.eq.s32.totalorder %s34, 0
      %p378 = por %p376, %p377
      %s380 = sadd.s32 %s379, 1
      %p383 = scmp.eq.s32.totalorder %s28, 1
      %p384 = scmp.ne.s32.totalorder %s379, %s381
      %p385 = scmp.eq.s32.totalorder %s28, 0
      %p386 = por %p384, %p385
      %p387 = scmp.ne.s32.totalorder %s379, %s381
      %p388 = scmp.eq.s32.totalorder %s33, 1
      %p389 = por %p387, %p388
      %p390 = scmp.ne.s32.totalorder %s381, %s382
      %p391 = scmp.eq.s32.totalorder %s33, 0
      %p392 = por %p390, %p391
      %p393 = scmp.ne.s32.totalorder %s381, %s382
      %p394 = scmp.eq.s32.totalorder %s34, 1
      %p395 = por %p393, %p394
      %p397 = scmp.ne.s32.totalorder %s382, %s396
      %p398 = scmp.eq.s32.totalorder %s34, 0
      %p399 = por %p397, %p398
      %s401 = sadd.s32 %s400, 1
      %p404 = scmp.eq.s32.totalorder %s28, 1
      %p405 = scmp.ne.s32.totalorder %s400, %s402
      %p406 = scmp.eq.s32.totalorder %s28, 0
      %p407 = por %p405, %p406
      %p408 = scmp.ne.s32.totalorder %s400, %s402
      %p409 = scmp.eq.s32.totalorder %s33, 1
      %p410 = por %p408, %p409
      %p411 = scmp.ne.s32.totalorder %s402, %s403
      %p412 = scmp.eq.s32.totalorder %s33, 0
      %p413 = por %p411, %p412
      %p414 = scmp.ne.s32.totalorder %s402, %s403
      %p415 = scmp.eq.s32.totalorder %s34, 1
      %p416 = por %p414, %p415
      %p418 = scmp.ne.s32.totalorder %s403, %s417
      %p419 = scmp.eq.s32.totalorder %s34, 0
      %p420 = por %p418, %p419
      %s421 = ssub.s32 %s36, %s43
      %s422 = ssub.s32 %s35, %s47
      %s423 = sor.u32 %s421, %s422
      %p424 = scmp.eq.s32.totalorder %s423, 0
      %s426 = sadd.s32 %s425, 1
      %s427 = scalar_select %p424, %s425, %s426
      %p430 = pneg %p424
      %p431 = scmp.eq.s32.totalorder %s28, 1
      %p432 = por %p430, %p431
      %p433 = scmp.ne.s32.totalorder %s425, %s428
      %p434 = scmp.eq.s32.totalorder %s28, 0
      %p435 = por %p433, %p434
      %p436 = scmp.ne.s32.totalorder %s425, %s428
      %p437 = scmp.eq.s32.totalorder %s33, 1
      %p438 = por %p436, %p437
      %p439 = scmp.ne.s32.totalorder %s428, %s429
      %p440 = scmp.eq.s32.totalorder %s33, 0
      %p441 = por %p439, %p440
      %p442 = scmp.ne.s32.totalorder %s428, %s429
      %p443 = scmp.eq.s32.totalorder %s34, 1
      %p444 = por %p442, %p443
      %p446 = scmp.ne.s32.totalorder %s429, %s445
      %p447 = scmp.eq.s32.totalorder %s34, 0
      %p448 = por %p446, %p447
      %p449 = scmp.le.s32.totalorder 1, %s28
      %p450 = scmp.lt.s32.totalorder %s28, 3
      %p451 = pnand %p449, %p450
      %p452 = pneg %p451
      // Predicated region
      $region9: #{tpu_custom_call.1} parent=5 // pred_check
        _
      $region10: #{tpu_custom_call.1} parent=5 // pred_check_branch
        %454 = sbr.rel (%p451) target = $region12
      $region11: #{tpu_custom_call.1} parent=5 // pred_region
        %s455 = ssub.s32 %s28, 1
        // Predicated region
        $region13: #{tpu_custom_call.1} parent=11 // pred_check
          %p456 = pneg %p66
        $region14: #{tpu_custom_call.1} parent=11 // pred_check_branch
          %458 = sbr.rel (%p456) target = $region16
        $region15: #{tpu_custom_call.1} parent=11 // pred_region
          %p459 = scmp.lt.s32.totalorder %s37, 0
          %s460 = scalar_select %p459, %s37, 0
          %s461 = smul.addr %s460, 4
          %s462 = scalar_lea.vmem %s0, %s461
        $region16: #{tpu_custom_call.1} parent=11 // pred_fallthru
          _
        // Predicated region
        $region17: #{tpu_custom_call.1} parent=11 // pred_check
          %p463 = pneg %p92
        $region18: #{tpu_custom_call.1} parent=11 // pred_check_branch
          %465 = sbr.rel (%p463) target = $region20
        $region19: #{tpu_custom_call.1} parent=11 // pred_region
          %s466 = smul.u32 4, %s37
          %p467 = scmp.lt.s32.totalorder %s466, 3
          %s468 = scalar_select %p467, %s466, 3
          %s469 = smul.addr %s468, 4
          %s470 = scalar_lea.vmem %s1, %s469
          %s471 = smul.u32 4, %s37
        $region20: #{tpu_custom_call.1} parent=11 // pred_fallthru
          _
        // Predicated region
        $region21: #{tpu_custom_call.1} parent=11 // pred_check
          %p472 = pneg %p118
        $region22: #{tpu_custom_call.1} parent=11 // pred_check_branch
          %474 = sbr.rel (%p472) target = $region24
        $region23: #{tpu_custom_call.1} parent=11 // pred_region
          %s475 = smul.u32 4, %s37
          %p476 = scmp.lt.s32.totalorder %s475, 3
          %s477 = scalar_select %p476, %s475, 3
          %s478 = smul.addr %s477, 4
          %s479 = scalar_lea.vmem %s2, %s478
          %s480 = smul.u32 4, %s37
        $region24: #{tpu_custom_call.1} parent=11 // pred_fallthru
          _
        // Predicated region
        $region25: #{tpu_custom_call.1} parent=11 // pred_check
          %p481 = pneg %p144
        $region26: #{tpu_custom_call.1} parent=11 // pred_check_branch
          %483 = sbr.rel (%p481) target = $region28
        $region27: #{tpu_custom_call.1} parent=11 // pred_region
          %p484 = scmp.lt.s32.totalorder %s37, 0
          %s485 = scalar_select %p484, %s37, 0
          %s486 = smul.addr %s485, 2
          %s487 = smul.addr %s486, 4
          %s488 = scalar_lea.vmem %s3, %s487
        $region28: #{tpu_custom_call.1} parent=11 // pred_fallthru
          _
        // Predicated region
        $region29: #{tpu_custom_call.1} parent=11 // pred_check
          %p489 = pneg %p170
        $region30: #{tpu_custom_call.1} parent=11 // pred_check_branch
          %491 = sbr.rel (%p489) target = $region32
        $region31: #{tpu_custom_call.1} parent=11 // pred_region
          %p492 = scmp.lt.s32.totalorder %s37, 0
          %s493 = scalar_select %p492, %s37, 0
          %s494 = smul.addr %s493, 4
          %s495 = scalar_lea.vmem %s4, %s494
        $region32: #{tpu_custom_call.1} parent=11 // pred_fallthru
          _
        // Predicated region
        $region33: #{tpu_custom_call.1} parent=11 // pred_check
          %p496 = pneg %p196
        $region34: #{tpu_custom_call.1} parent=11 // pred_check_branch
          %498 = sbr.rel (%p496) target = $region36
        $region35: #{tpu_custom_call.1} parent=11 // pred_region
          %p499 = scmp.lt.s32.totalorder %s37, 0
          %s500 = scalar_select %p499, %s37, 0
          %s501 = smul.addr %s500, 4
          %s502 = scalar_lea.vmem %s5, %s501
        $region36: #{tpu_custom_call.1} parent=11 // pred_fallthru
          _
        // Predicated region
        $region37: #{tpu_custom_call.1} parent=11 // pred_check
          %p503 = pneg %p245
        $region38: #{tpu_custom_call.1} parent=11 // pred_check_branch
          %505 = sbr.rel (%p503) target = $region40
        $region39: #{tpu_custom_call.1} parent=11 // pred_region
          _
        $region40: #{tpu_custom_call.1} parent=11 // pred_fallthru
          _
        // Predicated region
        $region41: #{tpu_custom_call.1} parent=11 // pred_check
          %p506 = pneg %p266
        $region42: #{tpu_custom_call.1} parent=11 // pred_check_branch
          %508 = sbr.rel (%p506) target = $region44
        $region43: #{tpu_custom_call.1} parent=11 // pred_region
          _
        $region44: #{tpu_custom_call.1} parent=11 // pred_fallthru
          _
        // Predicated region
        $region45: #{tpu_custom_call.1} parent=11 // pred_check
          %p509 = pneg %p287
        $region46: #{tpu_custom_call.1} parent=11 // pred_check_branch
          %511 = sbr.rel (%p509) target = $region48
        $region47: #{tpu_custom_call.1} parent=11 // pred_region
          _
        $region48: #{tpu_custom_call.1} parent=11 // pred_fallthru
          _
        // Predicated region
        $region49: #{tpu_custom_call.1} parent=11 // pred_check
          %p512 = pneg %p308
        $region50: #{tpu_custom_call.1} parent=11 // pred_check_branch
          %514 = sbr.rel (%p512) target = $region52
        $region51: #{tpu_custom_call.1} parent=11 // pred_region
          _
        $region52: #{tpu_custom_call.1} parent=11 // pred_fallthru
          _
        // Predicated region
        $region53: #{tpu_custom_call.1} parent=11 // pred_check
          %p515 = pneg %p329
        $region54: #{tpu_custom_call.1} parent=11 // pred_check_branch
          %517 = sbr.rel (%p515) target = $region56
        $region55: #{tpu_custom_call.1} parent=11 // pred_region
          _
        $region56: #{tpu_custom_call.1} parent=11 // pred_fallthru
          _
        // Predicated region
        $region57: #{tpu_custom_call.1} parent=11 // pred_check
          %p518 = pneg %p350
        $region58: #{tpu_custom_call.1} parent=11 // pred_check_branch
          %520 = sbr.rel (%p518) target = $region60
        $region59: #{tpu_custom_call.1} parent=11 // pred_region
          _
        $region60: #{tpu_custom_call.1} parent=11 // pred_fallthru
          _
        // Predicated region
        $region61: #{tpu_custom_call.1} parent=11 // pred_check
          %p521 = pneg %p371
        $region62: #{tpu_custom_call.1} parent=11 // pred_check_branch
          %523 = sbr.rel (%p521) target = $region64
        $region63: #{tpu_custom_call.1} parent=11 // pred_region
          %525 = vsyncadd [#allocation6], 0
          %s526 = sshll.u32 %s13, 4
          %s527 = int_to_ptr.hbm [resolvable:$true] %s526
          %s528 = sshll.u32 [#allocation5], 4
          %s529 = int_to_ptr.vmem [resolvable:$true] %s528
          %534 = dma.hbm_to_vmem [thread:$0]  %s527, 4096, %s529, [#allocation6], 256, 256, 16
        $region64: #{tpu_custom_call.1} parent=11 // pred_fallthru
          _
        // Predicated region
        $region65: #{tpu_custom_call.1} parent=11 // pred_check
          %p535 = pneg %p392
        $region66: #{tpu_custom_call.1} parent=11 // pred_check_branch
          %537 = sbr.rel (%p535) target = $region68
        $region67: #{tpu_custom_call.1} parent=11 // pred_region
          _
        $region68: #{tpu_custom_call.1} parent=11 // pred_fallthru
          _
        // Predicated region
        $region69: #{tpu_custom_call.1} parent=11 // pred_check
          %p538 = pneg %p413
        $region70: #{tpu_custom_call.1} parent=11 // pred_check_branch
          %540 = sbr.rel (%p538) target = $region72
        $region71: #{tpu_custom_call.1} parent=11 // pred_region
          _
        $region72: #{tpu_custom_call.1} parent=11 // pred_fallthru
          _
      $region12: #{tpu_custom_call.1} parent=5 // pred_fallthru
        _
      %p541 = scmp.lt.s32.totalorder %s28, 2
      // Predicated region
      $region73: #{tpu_custom_call.1} parent=5 // pred_check
        %p542 = pneg %p541
      $region74: #{tpu_custom_call.1} parent=5 // pred_check_branch
        %544 = sbr.rel (%p542) target = $region76
      $region75: #{tpu_custom_call.1} parent=5 // pred_region
        // Predicated region
        $region77: #{tpu_custom_call.1} parent=75 // pred_check
          %p545 = pneg %p218
        $region78: #{tpu_custom_call.1} parent=75 // pred_check_branch
          %547 = sbr.rel (%p545) target = $region80
        $region79: #{tpu_custom_call.1} parent=75 // pred_region
          %s548 = smul.u32 4, %s36
          %p549 = scmp.lt.s32.totalorder %s548, 7
          %s550 = scalar_select %p549, %s548, 7
          %p551 = scmp.lt.s32.totalorder %s35, 0
          %s552 = scalar_select %p551, %s35, 0
          %s553 = sadd.s32 %s552, %s550
          %s554 = smul.addr %s553, 4
          %s555 = scalar_lea.vmem %s6, %s554
          %s556 = smul.u32 4, %s36
        $region80: #{tpu_custom_call.1} parent=75 // pred_fallthru
          _
      $region76: #{tpu_custom_call.1} parent=5 // pred_fallthru
        _
      %p557 = scmp.le.s32.totalorder 1, %s28
      %p558 = scmp.lt.s32.totalorder %s28, 3
      %p559 = pnand %p557, %p558
      %p560 = pneg %p559
      // Predicated region
      $region81: #{tpu_custom_call.1} parent=5 // pred_check
        _
      $region82: #{tpu_custom_call.1} parent=5 // pred_check_branch
        %562 = sbr.rel (%p559) target = $region84
      $region83: #{tpu_custom_call.1} parent=5 // pred_region
        %s563 = ssub.s32 %s28, 1
        // Predicated region
        $region85: #{tpu_custom_call.1} parent=83 // pred_check
          %p564 = pneg %p371
        $region86: #{tpu_custom_call.1} parent=83 // pred_check_branch
          %566 = sbr.rel (%p564) target = $region88
        $region87: #{tpu_custom_call.1} parent=83 // pred_region
          %568 = dma.done [#allocation6], 4096
        $region88: #{tpu_custom_call.1} parent=83 // pred_fallthru
          _
        %p569 = scmp.lt.s32.totalorder %s37, 0
        %s570 = scalar_select %p569, %s37, 0
        %s571 = smul.addr %s570, 4
        %s572 = scalar_lea.vmem %s0, %s571
        %p573 = pneg %p66
        %p574 = pneg %p63
        %s575 = smul.u32 4, %s37
        %p576 = scmp.lt.s32.totalorder %s575, 3
        %s577 = scalar_select %p576, %s575, 3
        %s578 = smul.addr %s577, 4
        %s579 = scalar_lea.vmem %s1, %s578
        %p580 = pneg %p92
        %p581 = pneg %p89
        %s582 = smul.u32 4, %s37
        %p583 = scmp.lt.s32.totalorder %s582, 3
        %s584 = scalar_select %p583, %s582, 3
        %s585 = smul.addr %s584, 4
        %s586 = scalar_lea.vmem %s2, %s585
        %p587 = pneg %p118
        %p588 = pneg %p115
        %p589 = scmp.lt.s32.totalorder %s37, 0
        %s590 = scalar_select %p589, %s37, 0
        %s591 = smul.addr %s590, 2
        %s592 = smul.addr %s591, 4
        %s593 = scalar_lea.vmem %s3, %s592
        %p594 = pneg %p144
        %p595 = pneg %p141
        %p596 = scmp.lt.s32.totalorder %s37, 0
        %s597 = scalar_select %p596, %s37, 0
        %s598 = smul.addr %s597, 4
        %s599 = scalar_lea.vmem %s4, %s598
        %p600 = pneg %p170
        %p601 = pneg %p167
        %p602 = scmp.lt.s32.totalorder %s37, 0
        %s603 = scalar_select %p602, %s37, 0
        %s604 = smul.addr %s603, 4
        %s605 = scalar_lea.vmem %s5, %s604
        %p606 = pneg %p196
        %p607 = pneg %p193
        %s608 = smul.u32 4, %s38
        %p609 = scmp.lt.s32.totalorder %s608, 7
        %s610 = scalar_select %p609, %s608, 7
        %p611 = scmp.lt.s32.totalorder %s37, 0
        %s612 = scalar_select %p611, %s37, 0
        %s613 = sadd.s32 %s612, %s610
        %s614 = smul.addr %s613, 4
        %s615 = scalar_lea.vmem %s6, %s614
        %p616 = pneg %p224
        %p617 = pneg %p221
        %p618 = pneg %p245
        %p619 = pneg %p242
        %p620 = pneg %p266
        %p621 = pneg %p263
        %p622 = pneg %p287
        %p623 = pneg %p284
        %p624 = pneg %p308
        %p625 = pneg %p305
        %p626 = pneg %p329
        %p627 = pneg %p326
        %p628 = pneg %p350
        %p629 = pneg %p347
        %p630 = pneg %p371
        %p631 = pneg %p368
        %p632 = pneg %p392
        %p633 = pneg %p389
        %p634 = pneg %p413
        %p635 = pneg %p410
        %p636 = pneg %p441
        %p637 = pneg %p438
        %s638 = sand.u32 %s428, 1
        %s639 = scalar_lea.sflag [#allocation7], %s638
        %s640 = sand.u32 %s428, 1
        %s641 = smul.addr %s640, 16
        %s642 = scalar_lea.vmem [#allocation8], %s641
        %p643 = scmp.lt.s32.totalorder %s37, 0
        %s644 = scalar_select %p643, %s37, 0
        %s645 = smul.addr %s644, 4
        %s646 = scalar_lea.vmem %s0, %s645
        %s647 = smul.u32 4, %s37
        %p648 = scmp.lt.s32.totalorder %s647, 3
        %s649 = scalar_select %p648, %s647, 3
        %s650 = smul.addr %s649, 4
        %s651 = scalar_lea.vmem %s1, %s650
        %s652 = smul.u32 4, %s37
        %s653 = smul.u32 4, %s37
        %p654 = scmp.lt.s32.totalorder %s653, 3
        %s655 = scalar_select %p654, %s653, 3
        %s656 = smul.addr %s655, 4
        %s657 = scalar_lea.vmem %s2, %s656
        %s658 = smul.u32 4, %s37
        %p659 = scmp.lt.s32.totalorder %s37, 0
        %s660 = scalar_select %p659, %s37, 0
        %s661 = smul.addr %s660, 2
        %s662 = smul.addr %s661, 4
        %s663 = scalar_lea.vmem %s3, %s662
        %p664 = scmp.lt.s32.totalorder %s37, 0
        %s665 = scalar_select %p664, %s37, 0
        %s666 = smul.addr %s665, 4
        %s667 = scalar_lea.vmem %s4, %s666
        %p668 = scmp.lt.s32.totalorder %s37, 0
        %s669 = scalar_select %p668, %s37, 0
        %s670 = smul.addr %s669, 4
        %s671 = scalar_lea.vmem %s5, %s670
        %s672 = smul.u32 4, %s38
        %p673 = scmp.lt.s32.totalorder %s672, 7
        %s674 = scalar_select %p673, %s672, 7
        %p675 = scmp.lt.s32.totalorder %s37, 0
        %s676 = scalar_select %p675, %s37, 0
        %s677 = sadd.s32 %s676, %s674
        %s678 = smul.addr %s677, 4
        %s679 = scalar_lea.vmem %s6, %s678
        %s680 = smul.u32 4, %s38
        %s681 = smul.u32 4, %s38
        %p682 = scmp.eq.s32.totalorder %s38, 0
        // Predicated region
        $region89: #{tpu_custom_call.1} parent=83 // pred_check
          %p683 = pneg %p682
        $region90: #{tpu_custom_call.1} parent=83 // pred_check_branch
          %685 = sbr.rel (%p683) target = $region92
        $region91: #{tpu_custom_call.1} parent=83 // pred_region
          %v686 = vld [vmem:[%s667] sm:$0xf]
          %vm687 = vcmask 519168
          %688 = vst.msk [vmem:[#allocation2] sm:$0xf] %vm687, %v686
          %v689 = vld [vmem:[%s671] sm:$0xf]
          %690 = vst.msk [vmem:[#allocation3] sm:$0xf] %vm687, %v689
        $region92: #{tpu_custom_call.1} parent=83 // pred_fallthru
          _
        %v691 = vld [vmem:[%s651] sm:$0xf]
        %v692 = vld [vmem:[%s651 + $0x4] sm:$0xf]
        %v693 = vld [vmem:[%s651 + $0x8] sm:$0xf]
        %v694 = vld [vmem:[%s651 + $0xc] sm:$0xf]
        %v695 = vld [vmem:[%s657] sm:$0xf]
        %v696 = vld [vmem:[%s657 + $0x4] sm:$0xf]
        %v697 = vld [vmem:[%s657 + $0x8] sm:$0xf]
        %v698 = vld [vmem:[%s657 + $0xc] sm:$0xf]
        %v699 = vld [vmem:[%s663] sm:$0xff]
        %v700 = vld [vmem:[%s646] sm:$0xf]
        %v701 = vld [vmem:[#allocation2] sm:$0xf]
        %v702 = vld [vmem:[#allocation3] sm:$0xf]
        %s703 = smul.u32 %s38, 4
        %v704 = vld [vmem:[%s7] sm:$0xff]
        %v705 = vld [vmem:[%s7 + $0x8] sm:$0xff]
        %v706 = vld [vmem:[%s7 + $0x10] sm:$0xff]
        %v707 = vld [vmem:[%s7 + $0x18] sm:$0xff]
        %v708 = vld [vmem:[%s7 + $0x20] sm:$0xff]
        %v709 = vld [vmem:[%s7 + $0x28] sm:$0xff]
        %v710 = vld [vmem:[%s7 + $0x30] sm:$0xff]
        %v711 = vld [vmem:[%s7 + $0x38] sm:$0xff]
        %v712 = vld [vmem:[%s8] sm:$0x1]
        %v714 = vperm.slane %v712, 0
        %vm716 = vcmask 523264
        %v718 = vsel %vm716, %v701, 0
        %720 = vmatpush.msra.mxu0 0.0
        %721 = vmatpush.msra.mxu0 0.0
        %722 = vmatpush.msra.mxu0 0.0
        %723 = vmatpush.msra.mxu0 0.0
        %724 = vmatpush.msra.mxu0 0.0
        %725 = vmatpush.msra.mxu0 0.0
        %726 = vmatpush.msra.mxu0 0.0
        %727 = vmatpush.msra.mxu0 0.0
        %728 = vmatpush.msra.mxu0 %v711
        %729 = vmatpush.msra.mxu0 %v710
        %730 = vmatpush.msra.mxu0 %v709
        %731 = vmatpush.msra.mxu0 %v708
        %732 = vmatpush.msra.mxu0 %v707
        %733 = vmatpush.msra.mxu0 %v706
        %734 = vmatpush.msra.mxu0 %v705
        %735 = vmatpush.msra.mxu0 %v704
        %736 = vmatmul.f32.gmra.mxu0 %v718
        %v737 = vpop.f32.mrf.mxu0
        %v738 = vadd.f32 %v714, %v737
        %739 = vdwg.mxu0
        %v741 = vrot.slane %v738, 1
        %v742 = vrot.slane %v738, 2
        %v743 = vrot.slane %v738, 3
        %v744 = vperm.slane %v738, 0
        %v745 = vperm.slane %v741, 0
        %v746 = vperm.slane %v742, 0
        %v747 = vperm.slane %v743, 0
        %v752 = vadd.f32 %v695, %v744
        %v753 = vadd.f32 %v696, %v745
        %v754 = vadd.f32 %v697, %v746
        %v755 = vadd.f32 %v698, %v747
        %v756 = vmax.f32 %v752, 0.0
        %v757 = vmax.f32 %v753, 0.0
        %v758 = vmax.f32 %v754, 0.0
        %v759 = vmax.f32 %v755, 0.0
        %v760 = vld [vmem:[%s9] sm:$0x1]
        %v762 = vperm.slane %v760, 0
        %v764 = vmul.f32 %v756, %v762
        %v765 = vmul.f32 %v757, %v762
        %v766 = vmul.f32 %v758, %v762
        %v767 = vmul.f32 %v759, %v762
        %vm768 = vcmask 257024
        %v769 = vsel %vm768, %v764, 0.0
        %770 = vadd.xlane.f32.xlu0 %v769
        %v771 = vpop.xlane.xlu0 %770
        %v772 = vsel %vm768, %v765, 0.0
        %773 = vadd.xlane.f32.xlu0 %v772
        %v774 = vpop.xlane.xlu0 %773
        %v775 = vsel %vm768, %v766, 0.0
        %776 = vadd.xlane.f32.xlu0 %v775
        %v777 = vpop.xlane.xlu0 %776
        %v778 = vsel %vm768, %v767, 0.0
        %779 = vadd.xlane.f32.xlu0 %v778
        %v780 = vpop.xlane.xlu0 %779
        %v781 = vld [vmem:[#allocation4] sm:$0x1]
        %v783 = vperm.slane %v781, 0
        %784 = vset.pattern.permute.xlu0 0
        %785 = vperm.xlu0 %784, %v783
        %v786 = vpop.permute.xlu0 %785
        %v788 = vadd.f32 %v771, %v786
        %v789 = vadd.f32 %v774, %v786
        %v790 = vadd.f32 %v777, %v786
        %v791 = vadd.f32 %v780, %v786
        %v796 = vlaneseq
        %v797 = vand.u32 %v796, 127
        %v798 = vperm.slane %v788, %v797
        %v799 = vperm.slane %v789, %v797
        %v800 = vperm.slane %v790, %v797
        %v801 = vperm.slane %v791, %v797
        %vm802 = vcmask 1041409
        %v803 = vsel %vm802, %v799, %v798
        %vm804 = vcmask 1042434
        %v805 = vsel %vm804, %v800, %v803
        %vm806 = vcmask 1043459
        %v807 = vsel %vm806, %v801, %v805
        %vm809 = vcmask 27648
        %v810 = vsel %vm809, %v807, -inf
        %811 = vmax.xlane.f32.xlu0 %v810
        %v812 = vpop.xlane.xlu0 %811
        %v814 = vperm.slane %v812, 0
        %v815 = vperm.slane %v812, 1
        %v816 = vperm.slane %v812, 2
        %v817 = vperm.slane %v812, 3
        %v822 = vsub.f32 %v788, %v814
        %v823 = vsub.f32 %v789, %v815
        %v824 = vsub.f32 %v790, %v816
        %v825 = vsub.f32 %v791, %v817
        %v826 = vmul.f32 %v822, 1.442695
        %v827 = vpow.pop %v826
        %v828 = vmul.f32 %v823, 1.442695
        %v829 = vpow.pop %v828
        %v830 = vmul.f32 %v824, 1.442695
        %v831 = vpow.pop %v830
        %v832 = vmul.f32 %v825, 1.442695
        %v833 = vpow.pop %v832
        %838 = vset.pattern.permute.xlu0 0
        %839 = vperm.xlu0 %838, %v827
        %v840 = vpop.permute.xlu0 %839
        %841 = vset.pattern.permute.xlu0 0
        %842 = vperm.xlu0 %841, %v829
        %v843 = vpop.permute.xlu0 %842
        %844 = vset.pattern.permute.xlu0 0
        %845 = vperm.xlu0 %844, %v831
        %v846 = vpop.permute.xlu0 %845
        %847 = vset.pattern.permute.xlu0 0
        %848 = vperm.xlu0 %847, %v833
        %v849 = vpop.permute.xlu0 %848
        %v850 = vperm.slane %v840, %v797
        %v851 = vperm.slane %v843, %v797
        %v852 = vperm.slane %v846, %v797
        %v853 = vperm.slane %v849, %v797
        %v854 = vsel %vm802, %v851, %v850
        %v855 = vsel %vm804, %v852, %v854
        %v856 = vsel %vm806, %v853, %v855
        %v858 = vsel %vm809, %v856, 0.0
        %859 = vadd.xlane.f32.xlu0 %v858
        %v860 = vpop.xlane.xlu0 %859
        %v861 = vrcp.pop %v860
        %v863 = vperm.slane %v861, 0
        %v864 = vperm.slane %v861, 1
        %v865 = vperm.slane %v861, 2
        %v866 = vperm.slane %v861, 3
        %v871 = vmul.f32 %v827, %v863
        %v872 = vmul.f32 %v829, %v864
        %v873 = vmul.f32 %v831, %v865
        %v874 = vmul.f32 %v833, %v866
        %876 = vset.pattern.permute.xlu0 0
        %877 = vperm.xlu0 %876, %v871
        %v878 = vpop.permute.xlu0 %877
        %v879 = vperm.slane %v878, %v797
        %vm880 = vcmask 31744
        %v881 = vsel %vm880, %v879, 0
        %vm883 = vcmask 1043456
        %v885 = vsel %vm883, %v691, 0
        %887 = vmatpush.msra.mxu0 0.0
        %888 = vmatpush.msra.mxu0 0.0
        %889 = vmatpush.msra.mxu0 0.0
        %890 = vmatpush.msra.mxu0 0.0
        %891 = vmatpush.msra.mxu0 0.0
        %892 = vmatpush.msra.mxu0 0.0
        %893 = vmatpush.msra.mxu0 0.0
        %894 = vmatpush.msra.mxu0 0.0
        %895 = vmatpush.msra.mxu0 0.0
        %896 = vmatpush.msra.mxu0 0.0
        %897 = vmatpush.msra.mxu0 0.0
        %898 = vmatpush.msra.mxu0 0.0
        %899 = vmatpush.msra.mxu0 0.0
        %900 = vmatpush.msra.mxu0 0.0
        %901 = vmatpush.msra.mxu0 0.0
        %902 = vmatpush.msra.mxu0 %v885
        %903 = vmatmul.f32.gmra.mxu0 %v881
        %v904 = vpop.f32.mrf.mxu0
        %v905 = vadd.f32 0.0, %v904
        %906 = vdwg.mxu0
        %908 = vset.pattern.permute.xlu0 0
        %909 = vperm.xlu0 %908, %v872
        %v910 = vpop.permute.xlu0 %909
        %v911 = vperm.slane %v910, %v797
        %v912 = vsel %vm880, %v911, 0
        %v915 = vsel %vm883, %v692, 0
        %917 = vmatpush.msra.mxu0 0.0
        %918 = vmatpush.msra.mxu0 0.0
        %919 = vmatpush.msra.mxu0 0.0
        %920 = vmatpush.msra.mxu0 0.0
        %921 = vmatpush.msra.mxu0 0.0
        %922 = vmatpush.msra.mxu0 0.0
        %923 = vmatpush.msra.mxu0 0.0
        %924 = vmatpush.msra.mxu0 0.0
        %925 = vmatpush.msra.mxu0 0.0
        %926 = vmatpush.msra.mxu0 0.0
        %927 = vmatpush.msra.mxu0 0.0
        %928 = vmatpush.msra.mxu0 0.0
        %929 = vmatpush.msra.mxu0 0.0
        %930 = vmatpush.msra.mxu0 0.0
        %931 = vmatpush.msra.mxu0 0.0
        %932 = vmatpush.msra.mxu0 %v915
        %933 = vmatmul.f32.gmra.mxu0 %v912
        %v934 = vpop.f32.mrf.mxu0
        %v935 = vadd.f32 0.0, %v934
        %936 = vdwg.mxu0
        %938 = vset.pattern.permute.xlu0 0
        %939 = vperm.xlu0 %938, %v873
        %v940 = vpop.permute.xlu0 %939
        %v941 = vperm.slane %v940, %v797
        %v942 = vsel %vm880, %v941, 0
        %v945 = vsel %vm883, %v693, 0
        %947 = vmatpush.msra.mxu0 0.0
        %948 = vmatpush.msra.mxu0 0.0
        %949 = vmatpush.msra.mxu0 0.0
        %950 = vmatpush.msra.mxu0 0.0
        %951 = vmatpush.msra.mxu0 0.0
        %952 = vmatpush.msra.mxu0 0.0
        %953 = vmatpush.msra.mxu0 0.0
        %954 = vmatpush.msra.mxu0 0.0
        %955 = vmatpush.msra.mxu0 0.0
        %956 = vmatpush.msra.mxu0 0.0
        %957 = vmatpush.msra.mxu0 0.0
        %958 = vmatpush.msra.mxu0 0.0
        %959 = vmatpush.msra.mxu0 0.0
        %960 = vmatpush.msra.mxu0 0.0
        %961 = vmatpush.msra.mxu0 0.0
        %962 = vmatpush.msra.mxu0 %v945
        %963 = vmatmul.f32.gmra.mxu0 %v942
        %v964 = vpop.f32.mrf.mxu0
        %v965 = vadd.f32 0.0, %v964
        %966 = vdwg.mxu0
        %968 = vset.pattern.permute.xlu0 0
        %969 = vperm.xlu0 %968, %v874
        %v970 = vpop.permute.xlu0 %969
        %v971 = vperm.slane %v970, %v797
        %v972 = vsel %vm880, %v971, 0
        %v975 = vsel %vm883, %v694, 0
        %977 = vmatpush.msra.mxu0 0.0
        %978 = vmatpush.msra.mxu0 0.0
        %979 = vmatpush.msra.mxu0 0.0
        %980 = vmatpush.msra.mxu0 0.0
        %981 = vmatpush.msra.mxu0 0.0
        %982 = vmatpush.msra.mxu0 0.0
        %983 = vmatpush.msra.mxu0 0.0
        %984 = vmatpush.msra.mxu0 0.0
        %985 = vmatpush.msra.mxu0 0.0
        %986 = vmatpush.msra.mxu0 0.0
        %987 = vmatpush.msra.mxu0 0.0
        %988 = vmatpush.msra.mxu0 0.0
        %989 = vmatpush.msra.mxu0 0.0
        %990 = vmatpush.msra.mxu0 0.0
        %991 = vmatpush.msra.mxu0 0.0
        %992 = vmatpush.msra.mxu0 %v975
        %993 = vmatmul.f32.gmra.mxu0 %v972
        %v994 = vpop.f32.mrf.mxu0
        %v995 = vadd.f32 0.0, %v994
        %996 = vdwg.mxu0
        %v997 = vld [vmem:[%s11] sm:$0xff]
        %v998 = vld [vmem:[%s11 + $0x8] sm:$0xff]
        %v999 = vld [vmem:[%s11 + $0x10] sm:$0xff]
        %v1000 = vld [vmem:[%s11 + $0x18] sm:$0xff]
        %v1001 = vld [vmem:[%s11 + $0x20] sm:$0xff]
        %v1002 = vld [vmem:[%s11 + $0x28] sm:$0xff]
        %v1003 = vld [vmem:[%s11 + $0x30] sm:$0xff]
        %v1004 = vld [vmem:[%s11 + $0x38] sm:$0xff]
        %v1005 = vld [vmem:[%s12] sm:$0x1]
        %v1007 = vperm.slane %v1005, 0
        %1009 = vmatpush.msra.mxu0 0.0
        %1010 = vmatpush.msra.mxu0 0.0
        %1011 = vmatpush.msra.mxu0 0.0
        %1012 = vmatpush.msra.mxu0 0.0
        %1013 = vmatpush.msra.mxu0 0.0
        %1014 = vmatpush.msra.mxu0 0.0
        %1015 = vmatpush.msra.mxu0 0.0
        %1016 = vmatpush.msra.mxu0 0.0
        %1017 = vmatpush.msra.mxu0 %v1004
        %1018 = vmatpush.msra.mxu0 %v1003
        %1019 = vmatpush.msra.mxu0 %v1002
        %1020 = vmatpush.msra.mxu0 %v1001
        %1021 = vmatpush.msra.mxu0 %v1000
        %1022 = vmatpush.msra.mxu0 %v999
        %1023 = vmatpush.msra.mxu0 %v998
        %1024 = vmatpush.msra.mxu0 %v997
        %1025 = vmatmul.f32.gmra.mxu0 %v718
        %v1026 = vpop.f32.mrf.mxu0
        %v1027 = vadd.f32 %v1007, %v1026
        %1028 = vdwg.mxu0
        %v1029 = vxor.u32 %v1027, 2147483648
        %v1030 = vmul.f32 %v1029, 1.442695
        %v1031 = vpow.pop %v1030
        %v1032 = vadd.f32 %v1031, 1.0
        %v1033 = vrcp.pop %v1032
        %v1034 = vmul.f32 %v1032, %v1033
        %v1035 = vsub.f32 1.0, %v1034
        %v1036 = vmul.f32 %v1033, %v1035
        %v1037 = vadd.f32 %v1033, %v1036
        %vm1038 = vweird.f32 %v1032
        %vm1039 = vweird.f32 %v1033
        %vm1040 = vmor %vm1038, %vm1039
        %v1041 = vsel %vm1040, %v1033, %v1037
        %v1042 = vand.u32 2147483647, %v1032
        %vm1043 = vcmp.eq.f32.partialorder %v1042, 8.507059e+37
        %v1044 = vand.u32 %v1032, 2147483648
        %v1045 = vor.u32 1.1754944e-38, %v1044
        %v1046 = vsel %vm1043, %v1045, %v1041
        %v1047 = vmul.f32 1.0, %v1046
        %v1052 = vrot.slane %v935, 7
        %v1053 = vsel %vm802, %v1052, %v905
        %v1054 = vrot.slane %v965, 6
        %v1055 = vsel %vm804, %v1054, %v1053
        %v1056 = vrot.slane %v995, 5
        %v1057 = vsel %vm806, %v1056, %v1055
        %v1059 = vmul.f32 %v1047, %v1057
        %v1060 = vld [vmem:[%s679] sm:$0xf]
        %1062 = vrot.lane.b32.xlu0 %v1059, 32
        %v1063 = vpop.permute.xlu0 %1062
        %1065 = vrot.lane.b32.xlu0 %v701, 64
        %v1066 = vpop.permute.xlu0 %1065
        %vm1068 = vcmask 261120
        %v1069 = vsel %vm1068, %v1060, %v1063
        %v1070 = vsel %vm716, %v1069, %v1066
        %v1071 = vld [vmem:[#allocation5] sm:$0xff]
        %v1072 = vld [vmem:[#allocation5 + $0x8] sm:$0xff]
        %v1073 = vld [vmem:[#allocation5 + $0x10] sm:$0xff]
        %v1074 = vld [vmem:[#allocation5 + $0x18] sm:$0xff]
        %v1075 = vld [vmem:[#allocation5 + $0x20] sm:$0xff]
        %v1076 = vld [vmem:[#allocation5 + $0x28] sm:$0xff]
        %v1077 = vld [vmem:[#allocation5 + $0x30] sm:$0xff]
        %v1078 = vld [vmem:[#allocation5 + $0x38] sm:$0xff]
        %v1079 = vld [vmem:[#allocation5 + $0x40] sm:$0xff]
        %v1080 = vld [vmem:[#allocation5 + $0x48] sm:$0xff]
        %v1081 = vld [vmem:[#allocation5 + $0x50] sm:$0xff]
        %v1082 = vld [vmem:[#allocation5 + $0x58] sm:$0xff]
        %v1083 = vld [vmem:[#allocation5 + $0x60] sm:$0xff]
        %v1084 = vld [vmem:[#allocation5 + $0x68] sm:$0xff]
        %v1085 = vld [vmem:[#allocation5 + $0x70] sm:$0xff]
        %v1086 = vld [vmem:[#allocation5 + $0x78] sm:$0xff]
        %v1087 = vld [vmem:[#allocation5 + $0x80] sm:$0xff]
        %v1088 = vld [vmem:[#allocation5 + $0x88] sm:$0xff]
        %v1089 = vld [vmem:[#allocation5 + $0x90] sm:$0xff]
        %v1090 = vld [vmem:[#allocation5 + $0x98] sm:$0xff]
        %v1091 = vld [vmem:[#allocation5 + $0xa0] sm:$0xff]
        %v1092 = vld [vmem:[#allocation5 + $0xa8] sm:$0xff]
        %v1093 = vld [vmem:[#allocation5 + $0xb0] sm:$0xff]
        %v1094 = vld [vmem:[#allocation5 + $0xb8] sm:$0xff]
        %v1095 = vld [vmem:[#allocation5 + $0xc0] sm:$0xff]
        %v1096 = vld [vmem:[#allocation5 + $0xc8] sm:$0xff]
        %v1097 = vld [vmem:[#allocation5 + $0xd0] sm:$0xff]
        %v1098 = vld [vmem:[#allocation5 + $0xd8] sm:$0xff]
        %v1099 = vld [vmem:[#allocation5 + $0xe0] sm:$0xff]
        %v1100 = vld [vmem:[#allocation5 + $0xe8] sm:$0xff]
        %v1101 = vld [vmem:[#allocation5 + $0xf0] sm:$0xff]
        %v1102 = vld [vmem:[#allocation5 + $0xf8] sm:$0xff]
        %1104 = vst [vmem:[#allocation1] ss:$2 sm:$0xff] %v699
        %v1105 = vld.sshfl [vmem:[#allocation1] sm:$0xff pattern:$0x75316420]
        %v1106 = vld.sshfl [vmem:[#allocation1 + $0x8] sm:$0xff pattern:$0x75316420]
        %1109 = vmatpush.msra.mxu0 %v1101
        %1110 = vmatpush.msra.mxu0 %v1099
        %1111 = vmatpush.msra.mxu0 %v1097
        %1112 = vmatpush.msra.mxu0 %v1095
        %1113 = vmatpush.msra.mxu0 %v1093
        %1114 = vmatpush.msra.mxu0 %v1091
        %1115 = vmatpush.msra.mxu0 %v1089
        %1116 = vmatpush.msra.mxu0 %v1087
        %1117 = vmatpush.msra.mxu0 %v1085
        %1118 = vmatpush.msra.mxu0 %v1083
        %1119 = vmatpush.msra.mxu0 %v1081
        %1120 = vmatpush.msra.mxu0 %v1079
        %1121 = vmatpush.msra.mxu0 %v1077
        %1122 = vmatpush.msra.mxu0 %v1075
        %1123 = vmatpush.msra.mxu0 %v1073
        %1124 = vmatpush.msra.mxu0 %v1071
        %1125 = vmatmul.f32.gmra.mxu0 %v1070
        %v1126 = vpop.f32.mrf.mxu0
        %v1127 = vadd.f32 %v1105, %v1126
        %1128 = vdwg.mxu0
        %1129 = vmatpush.msra.mxu0 %v1102
        %1130 = vmatpush.msra.mxu0 %v1100
        %1131 = vmatpush.msra.mxu0 %v1098
        %1132 = vmatpush.msra.mxu0 %v1096
        %1133 = vmatpush.msra.mxu0 %v1094
        %1134 = vmatpush.msra.mxu0 %v1092
        %1135 = vmatpush.msra.mxu0 %v1090
        %1136 = vmatpush.msra.mxu0 %v1088
        %1137 = vmatpush.msra.mxu0 %v1086
        %1138 = vmatpush.msra.mxu0 %v1084
        %1139 = vmatpush.msra.mxu0 %v1082
        %1140 = vmatpush.msra.mxu0 %v1080
        %1141 = vmatpush.msra.mxu0 %v1078
        %1142 = vmatpush.msra.mxu0 %v1076
        %1143 = vmatpush.msra.mxu0 %v1074
        %1144 = vmatpush.msra.mxu0 %v1072
        %1145 = vmatmul.f32.gmra.mxu0 %v1070
        %v1146 = vpop.f32.mrf.mxu0
        %v1147 = vadd.f32 %v1106, %v1146
        %1148 = vdwg.mxu0
        %v1149 = vxor.u32 %v1127, 2147483648
        %v1150 = vmul.f32 %v1149, 1.442695
        %v1151 = vpow.pop %v1150
        %v1152 = vadd.f32 %v1151, 1.0
        %v1153 = vrcp.pop %v1152
        %v1154 = vmul.f32 %v1152, %v1153
        %v1155 = vsub.f32 1.0, %v1154
        %v1156 = vmul.f32 %v1153, %v1155
        %v1157 = vadd.f32 %v1153, %v1156
        %vm1158 = vweird.f32 %v1152
        %vm1159 = vweird.f32 %v1153
        %vm1160 = vmor %vm1158, %vm1159
        %v1161 = vsel %vm1160, %v1153, %v1157
        %v1162 = vand.u32 2147483647, %v1152
        %vm1163 = vcmp.eq.f32.partialorder %v1162, 8.507059e+37
        %v1164 = vand.u32 %v1152, 2147483648
        %v1165 = vor.u32 1.1754944e-38, %v1164
        %v1166 = vsel %vm1163, %v1165, %v1161
        %v1167 = vmul.f32 1.0, %v1166
        %v1168 = vtanh.pop %v1147
        %v1169 = vxor.u32 %v1147, 2147483648
        %v1170 = vmul.f32 %v1169, 1.442695
        %v1171 = vpow.pop %v1170
        %v1172 = vadd.f32 %v1171, 1.0
        %v1173 = vrcp.pop %v1172
        %v1174 = vmul.f32 %v1172, %v1173
        %v1175 = vsub.f32 1.0, %v1174
        %v1176 = vmul.f32 %v1173, %v1175
        %v1177 = vadd.f32 %v1173, %v1176
        %vm1178 = vweird.f32 %v1172
        %vm1179 = vweird.f32 %v1173
        %vm1180 = vmor %vm1178, %vm1179
        %v1181 = vsel %vm1180, %v1173, %v1177
        %v1182 = vand.u32 2147483647, %v1172
        %vm1183 = vcmp.eq.f32.partialorder %v1182, 8.507059e+37
        %v1184 = vand.u32 %v1172, 2147483648
        %v1185 = vor.u32 1.1754944e-38, %v1184
        %v1186 = vsel %vm1183, %v1185, %v1181
        %v1187 = vmul.f32 1.0, %v1186
        %1189 = vrot.lane.b32.xlu0 %v702, 64
        %v1190 = vpop.permute.xlu0 %1189
        %v1192 = vmul.f32 %v1167, %v1190
        %v1193 = vmul.f32 %v1167, %v1168
        %1195 = vrot.lane.b32.xlu0 %v1193, 64
        %v1196 = vpop.permute.xlu0 %1195
        %v1198 = vadd.f32 %v1192, %v1196
        %v1199 = vtanh.pop %v1198
        %v1200 = vmul.f32 %v1187, %v1199
        %v1201 = vld [vmem:[%s14] sm:$0xff]
        %v1202 = vld [vmem:[%s14 + $0x8] sm:$0xff]
        %v1203 = vld [vmem:[%s14 + $0x10] sm:$0xff]
        %v1204 = vld [vmem:[%s14 + $0x18] sm:$0xff]
        %v1205 = vld [vmem:[%s14 + $0x20] sm:$0xff]
        %v1206 = vld [vmem:[%s14 + $0x28] sm:$0xff]
        %v1207 = vld [vmem:[%s14 + $0x30] sm:$0xff]
        %v1208 = vld [vmem:[%s14 + $0x38] sm:$0xff]
        %v1209 = vld [vmem:[%s15] sm:$0x1]
        %v1211 = vperm.slane %v1209, 0
        %1214 = vrot.lane.b32.xlu0 %v1200, 64
        %v1215 = vpop.permute.xlu0 %1214
        %v1216 = vsel %vm716, %v1215, 0
        %1218 = vmatpush.msra.mxu0 0.0
        %1219 = vmatpush.msra.mxu0 0.0
        %1220 = vmatpush.msra.mxu0 0.0
        %1221 = vmatpush.msra.mxu0 0.0
        %1222 = vmatpush.msra.mxu0 0.0
        %1223 = vmatpush.msra.mxu0 0.0
        %1224 = vmatpush.msra.mxu0 0.0
        %1225 = vmatpush.msra.mxu0 0.0
        %1226 = vmatpush.msra.mxu0 %v1208
        %1227 = vmatpush.msra.mxu0 %v1207
        %1228 = vmatpush.msra.mxu0 %v1206
        %1229 = vmatpush.msra.mxu0 %v1205
        %1230 = vmatpush.msra.mxu0 %v1204
        %1231 = vmatpush.msra.mxu0 %v1203
        %1232 = vmatpush.msra.mxu0 %v1202
        %1233 = vmatpush.msra.mxu0 %v1201
        %1234 = vmatmul.f32.gmra.mxu0 %v1216
        %v1235 = vpop.f32.mrf.mxu0
        %v1236 = vadd.f32 %v1211, %v1235
        %1237 = vdwg.mxu0
        %v1238 = vstv %s703
        %vm1239 = vcmp.gt.s32.totalorder %v700, %v1238
        %v1240 = vsel %vm1239, 1, 0
        %1241 = vset.pattern.permute.xlu0 0
        %1242 = vperm.xlu0 %1241, %v1240
        %v1243 = vpop.permute.xlu0 %1242
        %vm1244 = vcmp.eq.s32.totalorder %v1243, 1
        %v1245 = vsel %vm1244, %v1236, 0.0
        %1246 = vst [vmem:[%s642] sm:$0xf] %v1245
        %s1247 = sadd.s32 %s703, 1
        %v1248 = vld [vmem:[%s7] sm:$0xff]
        %v1249 = vld [vmem:[%s7 + $0x8] sm:$0xff]
        %v1250 = vld [vmem:[%s7 + $0x10] sm:$0xff]
        %v1251 = vld [vmem:[%s7 + $0x18] sm:$0xff]
        %v1252 = vld [vmem:[%s7 + $0x20] sm:$0xff]
        %v1253 = vld [vmem:[%s7 + $0x28] sm:$0xff]
        %v1254 = vld [vmem:[%s7 + $0x30] sm:$0xff]
        %v1255 = vld [vmem:[%s7 + $0x38] sm:$0xff]
        %v1256 = vld [vmem:[%s8] sm:$0x1]
        %v1258 = vperm.slane %v1256, 0
        %1260 = vmatpush.msra.mxu0 0.0
        %1261 = vmatpush.msra.mxu0 0.0
        %1262 = vmatpush.msra.mxu0 0.0
        %1263 = vmatpush.msra.mxu0 0.0
        %1264 = vmatpush.msra.mxu0 0.0
        %1265 = vmatpush.msra.mxu0 0.0
        %1266 = vmatpush.msra.mxu0 0.0
        %1267 = vmatpush.msra.mxu0 0.0
        %1268 = vmatpush.msra.mxu0 %v1255
        %1269 = vmatpush.msra.mxu0 %v1254
        %1270 = vmatpush.msra.mxu0 %v1253
        %1271 = vmatpush.msra.mxu0 %v1252
        %1272 = vmatpush.msra.mxu0 %v1251
        %1273 = vmatpush.msra.mxu0 %v1250
        %1274 = vmatpush.msra.mxu0 %v1249
        %1275 = vmatpush.msra.mxu0 %v1248
        %1276 = vmatmul.f32.gmra.mxu0 %v1216
        %v1277 = vpop.f32.mrf.mxu0
        %v1278 = vadd.f32 %v1258, %v1277
        %1279 = vdwg.mxu0
        %v1281 = vrot.slane %v1278, 1
        %v1282 = vrot.slane %v1278, 2
        %v1283 = vrot.slane %v1278, 3
        %v1284 = vperm.slane %v1278, 0
        %v1285 = vperm.slane %v1281, 0
        %v1286 = vperm.slane %v1282, 0
        %v1287 = vperm.slane %v1283, 0
        %v1292 = vadd.f32 %v695, %v1284
        %v1293 = vadd.f32 %v696, %v1285
        %v1294 = vadd.f32 %v697, %v1286
        %v1295 = vadd.f32 %v698, %v1287
        %v1296 = vmax.f32 %v1292, 0.0
        %v1297 = vmax.f32 %v1293, 0.0
        %v1298 = vmax.f32 %v1294, 0.0
        %v1299 = vmax.f32 %v1295, 0.0
        %v1300 = vld [vmem:[%s9] sm:$0x1]
        %v1302 = vperm.slane %v1300, 0
        %v1304 = vmul.f32 %v1296, %v1302
        %v1305 = vmul.f32 %v1297, %v1302
        %v1306 = vmul.f32 %v1298, %v1302
        %v1307 = vmul.f32 %v1299, %v1302
        %v1308 = vsel %vm768, %v1304, 0.0
        %1309 = vadd.xlane.f32.xlu0 %v1308
        %v1310 = vpop.xlane.xlu0 %1309
        %v1311 = vsel %vm768, %v1305, 0.0
        %1312 = vadd.xlane.f32.xlu0 %v1311
        %v1313 = vpop.xlane.xlu0 %1312
        %v1314 = vsel %vm768, %v1306, 0.0
        %1315 = vadd.xlane.f32.xlu0 %v1314
        %v1316 = vpop.xlane.xlu0 %1315
        %v1317 = vsel %vm768, %v1307, 0.0
        %1318 = vadd.xlane.f32.xlu0 %v1317
        %v1319 = vpop.xlane.xlu0 %1318
        %v1320 = vld [vmem:[#allocation4] sm:$0x1]
        %v1322 = vperm.slane %v1320, 0
        %1323 = vset.pattern.permute.xlu0 0
        %1324 = vperm.xlu0 %1323, %v1322
        %v1325 = vpop.permute.xlu0 %1324
        %v1327 = vadd.f32 %v1310, %v1325
        %v1328 = vadd.f32 %v1313, %v1325
        %v1329 = vadd.f32 %v1316, %v1325
        %v1330 = vadd.f32 %v1319, %v1325
        %v1335 = vperm.slane %v1327, %v797
        %v1336 = vperm.slane %v1328, %v797
        %v1337 = vperm.slane %v1329, %v797
        %v1338 = vperm.slane %v1330, %v797
        %v1339 = vsel %vm802, %v1336, %v1335
        %v1340 = vsel %vm804, %v1337, %v1339
        %v1341 = vsel %vm806, %v1338, %v1340
        %v1343 = vsel %vm809, %v1341, -inf
        %1344 = vmax.xlane.f32.xlu0 %v1343
        %v1345 = vpop.xlane.xlu0 %1344
        %v1347 = vperm.slane %v1345, 0
        %v1348 = vperm.slane %v1345, 1
        %v1349 = vperm.slane %v1345, 2
        %v1350 = vperm.slane %v1345, 3
        %v1355 = vsub.f32 %v1327, %v1347
        %v1356 = vsub.f32 %v1328, %v1348
        %v1357 = vsub.f32 %v1329, %v1349
        %v1358 = vsub.f32 %v1330, %v1350
        %v1359 = vmul.f32 %v1355, 1.442695
        %v1360 = vpow.pop %v1359
        %v1361 = vmul.f32 %v1356, 1.442695
        %v1362 = vpow.pop %v1361
        %v1363 = vmul.f32 %v1357, 1.442695
        %v1364 = vpow.pop %v1363
        %v1365 = vmul.f32 %v1358, 1.442695
        %v1366 = vpow.pop %v1365
        %1371 = vset.pattern.permute.xlu0 0
        %1372 = vperm.xlu0 %1371, %v1360
        %v1373 = vpop.permute.xlu0 %1372
        %1374 = vset.pattern.permute.xlu0 0
        %1375 = vperm.xlu0 %1374, %v1362
        %v1376 = vpop.permute.xlu0 %1375
        %1377 = vset.pattern.permute.xlu0 0
        %1378 = vperm.xlu0 %1377, %v1364
        %v1379 = vpop.permute.xlu0 %1378
        %1380 = vset.pattern.permute.xlu0 0
        %1381 = vperm.xlu0 %1380, %v1366
        %v1382 = vpop.permute.xlu0 %1381
        %v1383 = vperm.slane %v1373, %v797
        %v1384 = vperm.slane %v1376, %v797
        %v1385 = vperm.slane %v1379, %v797
        %v1386 = vperm.slane %v1382, %v797
        %v1387 = vsel %vm802, %v1384, %v1383
        %v1388 = vsel %vm804, %v1385, %v1387
        %v1389 = vsel %vm806, %v1386, %v1388
        %v1391 = vsel %vm809, %v1389, 0.0
        %1392 = vadd.xlane.f32.xlu0 %v1391
        %v1393 = vpop.xlane.xlu0 %1392
        %v1394 = vrcp.pop %v1393
        %v1396 = vperm.slane %v1394, 0
        %v1397 = vperm.slane %v1394, 1
        %v1398 = vperm.slane %v1394, 2
        %v1399 = vperm.slane %v1394, 3
        %v1404 = vmul.f32 %v1360, %v1396
        %v1405 = vmul.f32 %v1362, %v1397
        %v1406 = vmul.f32 %v1364, %v1398
        %v1407 = vmul.f32 %v1366, %v1399
        %1409 = vset.pattern.permute.xlu0 0
        %1410 = vperm.xlu0 %1409, %v1404
        %v1411 = vpop.permute.xlu0 %1410
        %v1412 = vperm.slane %v1411, %v797
        %v1413 = vsel %vm880, %v1412, 0
        %1415 = vmatpush.msra.mxu0 0.0
        %1416 = vmatpush.msra.mxu0 0.0
        %1417 = vmatpush.msra.mxu0 0.0
        %1418 = vmatpush.msra.mxu0 0.0
        %1419 = vmatpush.msra.mxu0 0.0
        %1420 = vmatpush.msra.mxu0 0.0
        %1421 = vmatpush.msra.mxu0 0.0
        %1422 = vmatpush.msra.mxu0 0.0
        %1423 = vmatpush.msra.mxu0 0.0
        %1424 = vmatpush.msra.mxu0 0.0
        %1425 = vmatpush.msra.mxu0 0.0
        %1426 = vmatpush.msra.mxu0 0.0
        %1427 = vmatpush.msra.mxu0 0.0
        %1428 = vmatpush.msra.mxu0 0.0
        %1429 = vmatpush.msra.mxu0 0.0
        %1430 = vmatpush.msra.mxu0 %v885
        %1431 = vmatmul.f32.gmra.mxu0 %v1413
        %v1432 = vpop.f32.mrf.mxu0
        %v1433 = vadd.f32 0.0, %v1432
        %1434 = vdwg.mxu0
        %1436 = vset.pattern.permute.xlu0 0
        %1437 = vperm.xlu0 %1436, %v1405
        %v1438 = vpop.permute.xlu0 %1437
        %v1439 = vperm.slane %v1438, %v797
        %v1440 = vsel %vm880, %v1439, 0
        %1442 = vmatpush.msra.mxu0 0.0
        %1443 = vmatpush.msra.mxu0 0.0
        %1444 = vmatpush.msra.mxu0 0.0
        %1445 = vmatpush.msra.mxu0 0.0
        %1446 = vmatpush.msra.mxu0 0.0
        %1447 = vmatpush.msra.mxu0 0.0
        %1448 = vmatpush.msra.mxu0 0.0
        %1449 = vmatpush.msra.mxu0 0.0
        %1450 = vmatpush.msra.mxu0 0.0
        %1451 = vmatpush.msra.mxu0 0.0
        %1452 = vmatpush.msra.mxu0 0.0
        %1453 = vmatpush.msra.mxu0 0.0
        %1454 = vmatpush.msra.mxu0 0.0
        %1455 = vmatpush.msra.mxu0 0.0
        %1456 = vmatpush.msra.mxu0 0.0
        %1457 = vmatpush.msra.mxu0 %v915
        %1458 = vmatmul.f32.gmra.mxu0 %v1440
        %v1459 = vpop.f32.mrf.mxu0
        %v1460 = vadd.f32 0.0, %v1459
        %1461 = vdwg.mxu0
        %1463 = vset.pattern.permute.xlu0 0
        %1464 = vperm.xlu0 %1463, %v1406
        %v1465 = vpop.permute.xlu0 %1464
        %v1466 = vperm.slane %v1465, %v797
        %v1467 = vsel %vm880, %v1466, 0
        %1469 = vmatpush.msra.mxu0 0.0
        %1470 = vmatpush.msra.mxu0 0.0
        %1471 = vmatpush.msra.mxu0 0.0
        %1472 = vmatpush.msra.mxu0 0.0
        %1473 = vmatpush.msra.mxu0 0.0
        %1474 = vmatpush.msra.mxu0 0.0
        %1475 = vmatpush.msra.mxu0 0.0
        %1476 = vmatpush.msra.mxu0 0.0
        %1477 = vmatpush.msra.mxu0 0.0
        %1478 = vmatpush.msra.mxu0 0.0
        %1479 = vmatpush.msra.mxu0 0.0
        %1480 = vmatpush.msra.mxu0 0.0
        %1481 = vmatpush.msra.mxu0 0.0
        %1482 = vmatpush.msra.mxu0 0.0
        %1483 = vmatpush.msra.mxu0 0.0
        %1484 = vmatpush.msra.mxu0 %v945
        %1485 = vmatmul.f32.gmra.mxu0 %v1467
        %v1486 = vpop.f32.mrf.mxu0
        %v1487 = vadd.f32 0.0, %v1486
        %1488 = vdwg.mxu0
        %1490 = vset.pattern.permute.xlu0 0
        %1491 = vperm.xlu0 %1490, %v1407
        %v1492 = vpop.permute.xlu0 %1491
        %v1493 = vperm.slane %v1492, %v797
        %v1494 = vsel %vm880, %v1493, 0
        %1496 = vmatpush.msra.mxu0 0.0
        %1497 = vmatpush.msra.mxu0 0.0
        %1498 = vmatpush.msra.mxu0 0.0
        %1499 = vmatpush.msra.mxu0 0.0
        %1500 = vmatpush.msra.mxu0 0.0
        %1501 = vmatpush.msra.mxu0 0.0
        %1502 = vmatpush.msra.mxu0 0.0
        %1503 = vmatpush.msra.mxu0 0.0
        %1504 = vmatpush.msra.mxu0 0.0
        %1505 = vmatpush.msra.mxu0 0.0
        %1506 = vmatpush.msra.mxu0 0.0
        %1507 = vmatpush.msra.mxu0 0.0
        %1508 = vmatpush.msra.mxu0 0.0
        %1509 = vmatpush.msra.mxu0 0.0
        %1510 = vmatpush.msra.mxu0 0.0
        %1511 = vmatpush.msra.mxu0 %v975
        %1512 = vmatmul.f32.gmra.mxu0 %v1494
        %v1513 = vpop.f32.mrf.mxu0
        %v1514 = vadd.f32 0.0, %v1513
        %1515 = vdwg.mxu0
        %v1516 = vld [vmem:[%s11] sm:$0xff]
        %v1517 = vld [vmem:[%s11 + $0x8] sm:$0xff]
        %v1518 = vld [vmem:[%s11 + $0x10] sm:$0xff]
        %v1519 = vld [vmem:[%s11 + $0x18] sm:$0xff]
        %v1520 = vld [vmem:[%s11 + $0x20] sm:$0xff]
        %v1521 = vld [vmem:[%s11 + $0x28] sm:$0xff]
        %v1522 = vld [vmem:[%s11 + $0x30] sm:$0xff]
        %v1523 = vld [vmem:[%s11 + $0x38] sm:$0xff]
        %v1524 = vld [vmem:[%s12] sm:$0x1]
        %v1526 = vperm.slane %v1524, 0
        %1528 = vmatpush.msra.mxu0 0.0
        %1529 = vmatpush.msra.mxu0 0.0
        %1530 = vmatpush.msra.mxu0 0.0
        %1531 = vmatpush.msra.mxu0 0.0
        %1532 = vmatpush.msra.mxu0 0.0
        %1533 = vmatpush.msra.mxu0 0.0
        %1534 = vmatpush.msra.mxu0 0.0
        %1535 = vmatpush.msra.mxu0 0.0
        %1536 = vmatpush.msra.mxu0 %v1523
        %1537 = vmatpush.msra.mxu0 %v1522
        %1538 = vmatpush.msra.mxu0 %v1521
        %1539 = vmatpush.msra.mxu0 %v1520
        %1540 = vmatpush.msra.mxu0 %v1519
        %1541 = vmatpush.msra.mxu0 %v1518
        %1542 = vmatpush.msra.mxu0 %v1517
        %1543 = vmatpush.msra.mxu0 %v1516
        %1544 = vmatmul.f32.gmra.mxu0 %v1216
        %v1545 = vpop.f32.mrf.mxu0
        %v1546 = vadd.f32 %v1526, %v1545
        %1547 = vdwg.mxu0
        %v1548 = vxor.u32 %v1546, 2147483648
        %v1549 = vmul.f32 %v1548, 1.442695
        %v1550 = vpow.pop %v1549
        %v1551 = vadd.f32 %v1550, 1.0
        %v1552 = vrcp.pop %v1551
        %v1553 = vmul.f32 %v1551, %v1552
        %v1554 = vsub.f32 1.0, %v1553
        %v1555 = vmul.f32 %v1552, %v1554
        %v1556 = vadd.f32 %v1552, %v1555
        %vm1557 = vweird.f32 %v1551
        %vm1558 = vweird.f32 %v1552
        %vm1559 = vmor %vm1557, %vm1558
        %v1560 = vsel %vm1559, %v1552, %v1556
        %v1561 = vand.u32 2147483647, %v1551
        %vm1562 = vcmp.eq.f32.partialorder %v1561, 8.507059e+37
        %v1563 = vand.u32 %v1551, 2147483648
        %v1564 = vor.u32 1.1754944e-38, %v1563
        %v1565 = vsel %vm1562, %v1564, %v1560
        %v1566 = vmul.f32 1.0, %v1565
        %v1571 = vrot.slane %v1460, 7
        %v1572 = vsel %vm802, %v1571, %v1433
        %v1573 = vrot.slane %v1487, 6
        %v1574 = vsel %vm804, %v1573, %v1572
        %v1575 = vrot.slane %v1514, 5
        %v1576 = vsel %vm806, %v1575, %v1574
        %v1578 = vmul.f32 %v1566, %v1576
        %s1579 = scalar_lea.vmem %s679, 4
        %v1580 = vld [vmem:[%s1579] sm:$0xf]
        %1582 = vrot.lane.b32.xlu0 %v1578, 32
        %v1583 = vpop.permute.xlu0 %1582
        %v1585 = vsel %vm1068, %v1580, %v1583
        %v1586 = vsel %vm716, %v1585, %v1200
        %v1587 = vld [vmem:[#allocation5] sm:$0xff]
        %v1588 = vld [vmem:[#allocation5 + $0x8] sm:$0xff]
        %v1589 = vld [vmem:[#allocation5 + $0x10] sm:$0xff]
        %v1590 = vld [vmem:[#allocation5 + $0x18] sm:$0xff]
        %v1591 = vld [vmem:[#allocation5 + $0x20] sm:$0xff]
        %v1592 = vld [vmem:[#allocation5 + $0x28] sm:$0xff]
        %v1593 = vld [vmem:[#allocation5 + $0x30] sm:$0xff]
        %v1594 = vld [vmem:[#allocation5 + $0x38] sm:$0xff]
        %v1595 = vld [vmem:[#allocation5 + $0x40] sm:$0xff]
        %v1596 = vld [vmem:[#allocation5 + $0x48] sm:$0xff]
        %v1597 = vld [vmem:[#allocation5 + $0x50] sm:$0xff]
        %v1598 = vld [vmem:[#allocation5 + $0x58] sm:$0xff]
        %v1599 = vld [vmem:[#allocation5 + $0x60] sm:$0xff]
        %v1600 = vld [vmem:[#allocation5 + $0x68] sm:$0xff]
        %v1601 = vld [vmem:[#allocation5 + $0x70] sm:$0xff]
        %v1602 = vld [vmem:[#allocation5 + $0x78] sm:$0xff]
        %v1603 = vld [vmem:[#allocation5 + $0x80] sm:$0xff]
        %v1604 = vld [vmem:[#allocation5 + $0x88] sm:$0xff]
        %v1605 = vld [vmem:[#allocation5 + $0x90] sm:$0xff]
        %v1606 = vld [vmem:[#allocation5 + $0x98] sm:$0xff]
        %v1607 = vld [vmem:[#allocation5 + $0xa0] sm:$0xff]
        %v1608 = vld [vmem:[#allocation5 + $0xa8] sm:$0xff]
        %v1609 = vld [vmem:[#allocation5 + $0xb0] sm:$0xff]
        %v1610 = vld [vmem:[#allocation5 + $0xb8] sm:$0xff]
        %v1611 = vld [vmem:[#allocation5 + $0xc0] sm:$0xff]
        %v1612 = vld [vmem:[#allocation5 + $0xc8] sm:$0xff]
        %v1613 = vld [vmem:[#allocation5 + $0xd0] sm:$0xff]
        %v1614 = vld [vmem:[#allocation5 + $0xd8] sm:$0xff]
        %v1615 = vld [vmem:[#allocation5 + $0xe0] sm:$0xff]
        %v1616 = vld [vmem:[#allocation5 + $0xe8] sm:$0xff]
        %v1617 = vld [vmem:[#allocation5 + $0xf0] sm:$0xff]
        %v1618 = vld [vmem:[#allocation5 + $0xf8] sm:$0xff]
        %1619 = vst [vmem:[#allocation1] ss:$2 sm:$0xff] %v699
        %v1620 = vld.sshfl [vmem:[#allocation1] sm:$0xff pattern:$0x75316420]
        %v1621 = vld.sshfl [vmem:[#allocation1 + $0x8] sm:$0xff pattern:$0x75316420]
        %1624 = vmatpush.msra.mxu0 %v1617
        %1625 = vmatpush.msra.mxu0 %v1615
        %1626 = vmatpush.msra.mxu0 %v1613
        %1627 = vmatpush.msra.mxu0 %v1611
        %1628 = vmatpush.msra.mxu0 %v1609
        %1629 = vmatpush.msra.mxu0 %v1607
        %1630 = vmatpush.msra.mxu0 %v1605
        %1631 = vmatpush.msra.mxu0 %v1603
        %1632 = vmatpush.msra.mxu0 %v1601
        %1633 = vmatpush.msra.mxu0 %v1599
        %1634 = vmatpush.msra.mxu0 %v1597
        %1635 = vmatpush.msra.mxu0 %v1595
        %1636 = vmatpush.msra.mxu0 %v1593
        %1637 = vmatpush.msra.mxu0 %v1591
        %1638 = vmatpush.msra.mxu0 %v1589
        %1639 = vmatpush.msra.mxu0 %v1587
        %1640 = vmatmul.f32.gmra.mxu0 %v1586
        %v1641 = vpop.f32.mrf.mxu0
        %v1642 = vadd.f32 %v1620, %v1641
        %1643 = vdwg.mxu0
        %1644 = vmatpush.msra.mxu0 %v1618
        %1645 = vmatpush.msra.mxu0 %v1616
        %1646 = vmatpush.msra.mxu0 %v1614
        %1647 = vmatpush.msra.mxu0 %v1612
        %1648 = vmatpush.msra.mxu0 %v1610
        %1649 = vmatpush.msra.mxu0 %v1608
        %1650 = vmatpush.msra.mxu0 %v1606
        %1651 = vmatpush.msra.mxu0 %v1604
        %1652 = vmatpush.msra.mxu0 %v1602
        %1653 = vmatpush.msra.mxu0 %v1600
        %1654 = vmatpush.msra.mxu0 %v1598
        %1655 = vmatpush.msra.mxu0 %v1596
        %1656 = vmatpush.msra.mxu0 %v1594
        %1657 = vmatpush.msra.mxu0 %v1592
        %1658 = vmatpush.msra.mxu0 %v1590
        %1659 = vmatpush.msra.mxu0 %v1588
        %1660 = vmatmul.f32.gmra.mxu0 %v1586
        %v1661 = vpop.f32.mrf.mxu0
        %v1662 = vadd.f32 %v1621, %v1661
        %1663 = vdwg.mxu0
        %v1664 = vxor.u32 %v1642, 2147483648
        %v1665 = vmul.f32 %v1664, 1.442695
        %v1666 = vpow.pop %v1665
        %v1667 = vadd.f32 %v1666, 1.0
        %v1668 = vrcp.pop %v1667
        %v1669 = vmul.f32 %v1667, %v1668
        %v1670 = vsub.f32 1.0, %v1669
        %v1671 = vmul.f32 %v1668, %v1670
        %v1672 = vadd.f32 %v1668, %v1671
        %vm1673 = vweird.f32 %v1667
        %vm1674 = vweird.f32 %v1668
        %vm1675 = vmor %vm1673, %vm1674
        %v1676 = vsel %vm1675, %v1668, %v1672
        %v1677 = vand.u32 2147483647, %v1667
        %vm1678 = vcmp.eq.f32.partialorder %v1677, 8.507059e+37
        %v1679 = vand.u32 %v1667, 2147483648
        %v1680 = vor.u32 1.1754944e-38, %v1679
        %v1681 = vsel %vm1678, %v1680, %v1676
        %v1682 = vmul.f32 1.0, %v1681
        %v1683 = vtanh.pop %v1662
        %v1684 = vxor.u32 %v1662, 2147483648
        %v1685 = vmul.f32 %v1684, 1.442695
        %v1686 = vpow.pop %v1685
        %v1687 = vadd.f32 %v1686, 1.0
        %v1688 = vrcp.pop %v1687
        %v1689 = vmul.f32 %v1687, %v1688
        %v1690 = vsub.f32 1.0, %v1689
        %v1691 = vmul.f32 %v1688, %v1690
        %v1692 = vadd.f32 %v1688, %v1691
        %vm1693 = vweird.f32 %v1687
        %vm1694 = vweird.f32 %v1688
        %vm1695 = vmor %vm1693, %vm1694
        %v1696 = vsel %vm1695, %v1688, %v1692
        %v1697 = vand.u32 2147483647, %v1687
        %vm1698 = vcmp.eq.f32.partialorder %v1697, 8.507059e+37
        %v1699 = vand.u32 %v1687, 2147483648
        %v1700 = vor.u32 1.1754944e-38, %v1699
        %v1701 = vsel %vm1698, %v1700, %v1696
        %v1702 = vmul.f32 1.0, %v1701
        %v1703 = vmul.f32 %v1682, %v1198
        %v1704 = vmul.f32 %v1682, %v1683
        %1706 = vrot.lane.b32.xlu0 %v1704, 64
        %v1707 = vpop.permute.xlu0 %1706
        %v1709 = vadd.f32 %v1703, %v1707
        %v1710 = vtanh.pop %v1709
        %v1711 = vmul.f32 %v1702, %v1710
        %v1712 = vld [vmem:[%s14] sm:$0xff]
        %v1713 = vld [vmem:[%s14 + $0x8] sm:$0xff]
        %v1714 = vld [vmem:[%s14 + $0x10] sm:$0xff]
        %v1715 = vld [vmem:[%s14 + $0x18] sm:$0xff]
        %v1716 = vld [vmem:[%s14 + $0x20] sm:$0xff]
        %v1717 = vld [vmem:[%s14 + $0x28] sm:$0xff]
        %v1718 = vld [vmem:[%s14 + $0x30] sm:$0xff]
        %v1719 = vld [vmem:[%s14 + $0x38] sm:$0xff]
        %v1720 = vld [vmem:[%s15] sm:$0x1]
        %v1722 = vperm.slane %v1720, 0
        %1725 = vrot.lane.b32.xlu0 %v1711, 64
        %v1726 = vpop.permute.xlu0 %1725
        %v1727 = vsel %vm716, %v1726, 0
        %1729 = vmatpush.msra.mxu0 0.0
        %1730 = vmatpush.msra.mxu0 0.0
        %1731 = vmatpush.msra.mxu0 0.0
        %1732 = vmatpush.msra.mxu0 0.0
        %1733 = vmatpush.msra.mxu0 0.0
        %1734 = vmatpush.msra.mxu0 0.0
        %1735 = vmatpush.msra.mxu0 0.0
        %1736 = vmatpush.msra.mxu0 0.0
        %1737 = vmatpush.msra.mxu0 %v1719
        %1738 = vmatpush.msra.mxu0 %v1718
        %1739 = vmatpush.msra.mxu0 %v1717
        %1740 = vmatpush.msra.mxu0 %v1716
        %1741 = vmatpush.msra.mxu0 %v1715
        %1742 = vmatpush.msra.mxu0 %v1714
        %1743 = vmatpush.msra.mxu0 %v1713
        %1744 = vmatpush.msra.mxu0 %v1712
        %1745 = vmatmul.f32.gmra.mxu0 %v1727
        %v1746 = vpop.f32.mrf.mxu0
        %v1747 = vadd.f32 %v1722, %v1746
        %1748 = vdwg.mxu0
        %v1749 = vstv %s1247
        %vm1750 = vcmp.gt.s32.totalorder %v700, %v1749
        %v1751 = vsel %vm1750, 1, 0
        %1752 = vset.pattern.permute.xlu0 0
        %1753 = vperm.xlu0 %1752, %v1751
        %v1754 = vpop.permute.xlu0 %1753
        %vm1755 = vcmp.eq.s32.totalorder %v1754, 1
        %v1756 = vsel %vm1755, %v1747, 0.0
        %s1757 = scalar_lea.vmem %s642, 4 [#allocation8]
        %1758 = vst [vmem:[%s1757] sm:$0xf] %v1756
        %s1759 = sadd.s32 %s703, 2
        %v1760 = vld [vmem:[%s7] sm:$0xff]
        %v1761 = vld [vmem:[%s7 + $0x8] sm:$0xff]
        %v1762 = vld [vmem:[%s7 + $0x10] sm:$0xff]
        %v1763 = vld [vmem:[%s7 + $0x18] sm:$0xff]
        %v1764 = vld [vmem:[%s7 + $0x20] sm:$0xff]
        %v1765 = vld [vmem:[%s7 + $0x28] sm:$0xff]
        %v1766 = vld [vmem:[%s7 + $0x30] sm:$0xff]
        %v1767 = vld [vmem:[%s7 + $0x38] sm:$0xff]
        %v1768 = vld [vmem:[%s8] sm:$0x1]
        %v1770 = vperm.slane %v1768, 0
        %1772 = vmatpush.msra.mxu0 0.0
        %1773 = vmatpush.msra.mxu0 0.0
        %1774 = vmatpush.msra.mxu0 0.0
        %1775 = vmatpush.msra.mxu0 0.0
        %1776 = vmatpush.msra.mxu0 0.0
        %1777 = vmatpush.msra.mxu0 0.0
        %1778 = vmatpush.msra.mxu0 0.0
        %1779 = vmatpush.msra.mxu0 0.0
        %1780 = vmatpush.msra.mxu0 %v1767
        %1781 = vmatpush.msra.mxu0 %v1766
        %1782 = vmatpush.msra.mxu0 %v1765
        %1783 = vmatpush.msra.mxu0 %v1764
        %1784 = vmatpush.msra.mxu0 %v1763
        %1785 = vmatpush.msra.mxu0 %v1762
        %1786 = vmatpush.msra.mxu0 %v1761
        %1787 = vmatpush.msra.mxu0 %v1760
        %1788 = vmatmul.f32.gmra.mxu0 %v1727
        %v1789 = vpop.f32.mrf.mxu0
        %v1790 = vadd.f32 %v1770, %v1789
        %1791 = vdwg.mxu0
        %v1793 = vrot.slane %v1790, 1
        %v1794 = vrot.slane %v1790, 2
        %v1795 = vrot.slane %v1790, 3
        %v1796 = vperm.slane %v1790, 0
        %v1797 = vperm.slane %v1793, 0
        %v1798 = vperm.slane %v1794, 0
        %v1799 = vperm.slane %v1795, 0
        %v1804 = vadd.f32 %v695, %v1796
        %v1805 = vadd.f32 %v696, %v1797
        %v1806 = vadd.f32 %v697, %v1798
        %v1807 = vadd.f32 %v698, %v1799
        %v1808 = vmax.f32 %v1804, 0.0
        %v1809 = vmax.f32 %v1805, 0.0
        %v1810 = vmax.f32 %v1806, 0.0
        %v1811 = vmax.f32 %v1807, 0.0
        %v1812 = vld [vmem:[%s9] sm:$0x1]
        %v1814 = vperm.slane %v1812, 0
        %v1816 = vmul.f32 %v1808, %v1814
        %v1817 = vmul.f32 %v1809, %v1814
        %v1818 = vmul.f32 %v1810, %v1814
        %v1819 = vmul.f32 %v1811, %v1814
        %v1820 = vsel %vm768, %v1816, 0.0
        %1821 = vadd.xlane.f32.xlu0 %v1820
        %v1822 = vpop.xlane.xlu0 %1821
        %v1823 = vsel %vm768, %v1817, 0.0
        %1824 = vadd.xlane.f32.xlu0 %v1823
        %v1825 = vpop.xlane.xlu0 %1824
        %v1826 = vsel %vm768, %v1818, 0.0
        %1827 = vadd.xlane.f32.xlu0 %v1826
        %v1828 = vpop.xlane.xlu0 %1827
        %v1829 = vsel %vm768, %v1819, 0.0
        %1830 = vadd.xlane.f32.xlu0 %v1829
        %v1831 = vpop.xlane.xlu0 %1830
        %v1832 = vld [vmem:[#allocation4] sm:$0x1]
        %v1834 = vperm.slane %v1832, 0
        %1835 = vset.pattern.permute.xlu0 0
        %1836 = vperm.xlu0 %1835, %v1834
        %v1837 = vpop.permute.xlu0 %1836
        %v1839 = vadd.f32 %v1822, %v1837
        %v1840 = vadd.f32 %v1825, %v1837
        %v1841 = vadd.f32 %v1828, %v1837
        %v1842 = vadd.f32 %v1831, %v1837
        %v1847 = vperm.slane %v1839, %v797
        %v1848 = vperm.slane %v1840, %v797
        %v1849 = vperm.slane %v1841, %v797
        %v1850 = vperm.slane %v1842, %v797
        %v1851 = vsel %vm802, %v1848, %v1847
        %v1852 = vsel %vm804, %v1849, %v1851
        %v1853 = vsel %vm806, %v1850, %v1852
        %v1855 = vsel %vm809, %v1853, -inf
        %1856 = vmax.xlane.f32.xlu0 %v1855
        %v1857 = vpop.xlane.xlu0 %1856
        %v1859 = vperm.slane %v1857, 0
        %v1860 = vperm.slane %v1857, 1
        %v1861 = vperm.slane %v1857, 2
        %v1862 = vperm.slane %v1857, 3
        %v1867 = vsub.f32 %v1839, %v1859
        %v1868 = vsub.f32 %v1840, %v1860
        %v1869 = vsub.f32 %v1841, %v1861
        %v1870 = vsub.f32 %v1842, %v1862
        %v1871 = vmul.f32 %v1867, 1.442695
        %v1872 = vpow.pop %v1871
        %v1873 = vmul.f32 %v1868, 1.442695
        %v1874 = vpow.pop %v1873
        %v1875 = vmul.f32 %v1869, 1.442695
        %v1876 = vpow.pop %v1875
        %v1877 = vmul.f32 %v1870, 1.442695
        %v1878 = vpow.pop %v1877
        %1883 = vset.pattern.permute.xlu0 0
        %1884 = vperm.xlu0 %1883, %v1872
        %v1885 = vpop.permute.xlu0 %1884
        %1886 = vset.pattern.permute.xlu0 0
        %1887 = vperm.xlu0 %1886, %v1874
        %v1888 = vpop.permute.xlu0 %1887
        %1889 = vset.pattern.permute.xlu0 0
        %1890 = vperm.xlu0 %1889, %v1876
        %v1891 = vpop.permute.xlu0 %1890
        %1892 = vset.pattern.permute.xlu0 0
        %1893 = vperm.xlu0 %1892, %v1878
        %v1894 = vpop.permute.xlu0 %1893
        %v1895 = vperm.slane %v1885, %v797
        %v1896 = vperm.slane %v1888, %v797
        %v1897 = vperm.slane %v1891, %v797
        %v1898 = vperm.slane %v1894, %v797
        %v1899 = vsel %vm802, %v1896, %v1895
        %v1900 = vsel %vm804, %v1897, %v1899
        %v1901 = vsel %vm806, %v1898, %v1900
        %v1903 = vsel %vm809, %v1901, 0.0
        %1904 = vadd.xlane.f32.xlu0 %v1903
        %v1905 = vpop.xlane.xlu0 %1904
        %v1906 = vrcp.pop %v1905
        %v1908 = vperm.slane %v1906, 0
        %v1909 = vperm.slane %v1906, 1
        %v1910 = vperm.slane %v1906, 2
        %v1911 = vperm.slane %v1906, 3
        %v1916 = vmul.f32 %v1872, %v1908
        %v1917 = vmul.f32 %v1874, %v1909
        %v1918 = vmul.f32 %v1876, %v1910
        %v1919 = vmul.f32 %v1878, %v1911
        %1921 = vset.pattern.permute.xlu0 0
        %1922 = vperm.xlu0 %1921, %v1916
        %v1923 = vpop.permute.xlu0 %1922
        %v1924 = vperm.slane %v1923, %v797
        %v1925 = vsel %vm880, %v1924, 0
        %1927 = vmatpush.msra.mxu0 0.0
        %1928 = vmatpush.msra.mxu0 0.0
        %1929 = vmatpush.msra.mxu0 0.0
        %1930 = vmatpush.msra.mxu0 0.0
        %1931 = vmatpush.msra.mxu0 0.0
        %1932 = vmatpush.msra.mxu0 0.0
        %1933 = vmatpush.msra.mxu0 0.0
        %1934 = vmatpush.msra.mxu0 0.0
        %1935 = vmatpush.msra.mxu0 0.0
        %1936 = vmatpush.msra.mxu0 0.0
        %1937 = vmatpush.msra.mxu0 0.0
        %1938 = vmatpush.msra.mxu0 0.0
        %1939 = vmatpush.msra.mxu0 0.0
        %1940 = vmatpush.msra.mxu0 0.0
        %1941 = vmatpush.msra.mxu0 0.0
        %1942 = vmatpush.msra.mxu0 %v885
        %1943 = vmatmul.f32.gmra.mxu0 %v1925
        %v1944 = vpop.f32.mrf.mxu0
        %v1945 = vadd.f32 0.0, %v1944
        %1946 = vdwg.mxu0
        %1948 = vset.pattern.permute.xlu0 0
        %1949 = vperm.xlu0 %1948, %v1917
        %v1950 = vpop.permute.xlu0 %1949
        %v1951 = vperm.slane %v1950, %v797
        %v1952 = vsel %vm880, %v1951, 0
        %1954 = vmatpush.msra.mxu0 0.0
        %1955 = vmatpush.msra.mxu0 0.0
        %1956 = vmatpush.msra.mxu0 0.0
        %1957 = vmatpush.msra.mxu0 0.0
        %1958 = vmatpush.msra.mxu0 0.0
        %1959 = vmatpush.msra.mxu0 0.0
        %1960 = vmatpush.msra.mxu0 0.0
        %1961 = vmatpush.msra.mxu0 0.0
        %1962 = vmatpush.msra.mxu0 0.0
        %1963 = vmatpush.msra.mxu0 0.0
        %1964 = vmatpush.msra.mxu0 0.0
        %1965 = vmatpush.msra.mxu0 0.0
        %1966 = vmatpush.msra.mxu0 0.0
        %1967 = vmatpush.msra.mxu0 0.0
        %1968 = vmatpush.msra.mxu0 0.0
        %1969 = vmatpush.msra.mxu0 %v915
        %1970 = vmatmul.f32.gmra.mxu0 %v1952
        %v1971 = vpop.f32.mrf.mxu0
        %v1972 = vadd.f32 0.0, %v1971
        %1973 = vdwg.mxu0
        %1975 = vset.pattern.permute.xlu0 0
        %1976 = vperm.xlu0 %1975, %v1918
        %v1977 = vpop.permute.xlu0 %1976
        %v1978 = vperm.slane %v1977, %v797
        %v1979 = vsel %vm880, %v1978, 0
        %1981 = vmatpush.msra.mxu0 0.0
        %1982 = vmatpush.msra.mxu0 0.0
        %1983 = vmatpush.msra.mxu0 0.0
        %1984 = vmatpush.msra.mxu0 0.0
        %1985 = vmatpush.msra.mxu0 0.0
        %1986 = vmatpush.msra.mxu0 0.0
        %1987 = vmatpush.msra.mxu0 0.0
        %1988 = vmatpush.msra.mxu0 0.0
        %1989 = vmatpush.msra.mxu0 0.0
        %1990 = vmatpush.msra.mxu0 0.0
        %1991 = vmatpush.msra.mxu0 0.0
        %1992 = vmatpush.msra.mxu0 0.0
        %1993 = vmatpush.msra.mxu0 0.0
        %1994 = vmatpush.msra.mxu0 0.0
        %1995 = vmatpush.msra.mxu0 0.0
        %1996 = vmatpush.msra.mxu0 %v945
        %1997 = vmatmul.f32.gmra.mxu0 %v1979
        %v1998 = vpop.f32.mrf.mxu0
        %v1999 = vadd.f32 0.0, %v1998
        %2000 = vdwg.mxu0
        %2002 = vset.pattern.permute.xlu0 0
        %2003 = vperm.xlu0 %2002, %v1919
        %v2004 = vpop.permute.xlu0 %2003
        %v2005 = vperm.slane %v2004, %v797
        %v2006 = vsel %vm880, %v2005, 0
        %2008 = vmatpush.msra.mxu0 0.0
        %2009 = vmatpush.msra.mxu0 0.0
        %2010 = vmatpush.msra.mxu0 0.0
        %2011 = vmatpush.msra.mxu0 0.0
        %2012 = vmatpush.msra.mxu0 0.0
        %2013 = vmatpush.msra.mxu0 0.0
        %2014 = vmatpush.msra.mxu0 0.0
        %2015 = vmatpush.msra.mxu0 0.0
        %2016 = vmatpush.msra.mxu0 0.0
        %2017 = vmatpush.msra.mxu0 0.0
        %2018 = vmatpush.msra.mxu0 0.0
        %2019 = vmatpush.msra.mxu0 0.0
        %2020 = vmatpush.msra.mxu0 0.0
        %2021 = vmatpush.msra.mxu0 0.0
        %2022 = vmatpush.msra.mxu0 0.0
        %2023 = vmatpush.msra.mxu0 %v975
        %2024 = vmatmul.f32.gmra.mxu0 %v2006
        %v2025 = vpop.f32.mrf.mxu0
        %v2026 = vadd.f32 0.0, %v2025
        %2027 = vdwg.mxu0
        %v2028 = vld [vmem:[%s11] sm:$0xff]
        %v2029 = vld [vmem:[%s11 + $0x8] sm:$0xff]
        %v2030 = vld [vmem:[%s11 + $0x10] sm:$0xff]
        %v2031 = vld [vmem:[%s11 + $0x18] sm:$0xff]
        %v2032 = vld [vmem:[%s11 + $0x20] sm:$0xff]
        %v2033 = vld [vmem:[%s11 + $0x28] sm:$0xff]
        %v2034 = vld [vmem:[%s11 + $0x30] sm:$0xff]
        %v2035 = vld [vmem:[%s11 + $0x38] sm:$0xff]
        %v2036 = vld [vmem:[%s12] sm:$0x1]
        %v2038 = vperm.slane %v2036, 0
        %2040 = vmatpush.msra.mxu0 0.0
        %2041 = vmatpush.msra.mxu0 0.0
        %2042 = vmatpush.msra.mxu0 0.0
        %2043 = vmatpush.msra.mxu0 0.0
        %2044 = vmatpush.msra.mxu0 0.0
        %2045 = vmatpush.msra.mxu0 0.0
        %2046 = vmatpush.msra.mxu0 0.0
        %2047 = vmatpush.msra.mxu0 0.0
        %2048 = vmatpush.msra.mxu0 %v2035
        %2049 = vmatpush.msra.mxu0 %v2034
        %2050 = vmatpush.msra.mxu0 %v2033
        %2051 = vmatpush.msra.mxu0 %v2032
        %2052 = vmatpush.msra.mxu0 %v2031
        %2053 = vmatpush.msra.mxu0 %v2030
        %2054 = vmatpush.msra.mxu0 %v2029
        %2055 = vmatpush.msra.mxu0 %v2028
        %2056 = vmatmul.f32.gmra.mxu0 %v1727
        %v2057 = vpop.f32.mrf.mxu0
        %v2058 = vadd.f32 %v2038, %v2057
        %2059 = vdwg.mxu0
        %v2060 = vxor.u32 %v2058, 2147483648
        %v2061 = vmul.f32 %v2060, 1.442695
        %v2062 = vpow.pop %v2061
        %v2063 = vadd.f32 %v2062, 1.0
        %v2064 = vrcp.pop %v2063
        %v2065 = vmul.f32 %v2063, %v2064
        %v2066 = vsub.f32 1.0, %v2065
        %v2067 = vmul.f32 %v2064, %v2066
        %v2068 = vadd.f32 %v2064, %v2067
        %vm2069 = vweird.f32 %v2063
        %vm2070 = vweird.f32 %v2064
        %vm2071 = vmor %vm2069, %vm2070
        %v2072 = vsel %vm2071, %v2064, %v2068
        %v2073 = vand.u32 2147483647, %v2063
        %vm2074 = vcmp.eq.f32.partialorder %v2073, 8.507059e+37
        %v2075 = vand.u32 %v2063, 2147483648
        %v2076 = vor.u32 1.1754944e-38, %v2075
        %v2077 = vsel %vm2074, %v2076, %v2072
        %v2078 = vmul.f32 1.0, %v2077
        %v2083 = vrot.slane %v1972, 7
        %v2084 = vsel %vm802, %v2083, %v1945
        %v2085 = vrot.slane %v1999, 6
        %v2086 = vsel %vm804, %v2085, %v2084
        %v2087 = vrot.slane %v2026, 5
        %v2088 = vsel %vm806, %v2087, %v2086
        %v2090 = vmul.f32 %v2078, %v2088
        %s2091 = scalar_lea.vmem %s679, 8
        %v2092 = vld [vmem:[%s2091] sm:$0xf]
        %2094 = vrot.lane.b32.xlu0 %v2090, 32
        %v2095 = vpop.permute.xlu0 %2094
        %v2097 = vsel %vm1068, %v2092, %v2095
        %v2098 = vsel %vm716, %v2097, %v1711
        %v2099 = vld [vmem:[#allocation5] sm:$0xff]
        %v2100 = vld [vmem:[#allocation5 + $0x8] sm:$0xff]
        %v2101 = vld [vmem:[#allocation5 + $0x10] sm:$0xff]
        %v2102 = vld [vmem:[#allocation5 + $0x18] sm:$0xff]
        %v2103 = vld [vmem:[#allocation5 + $0x20] sm:$0xff]
        %v2104 = vld [vmem:[#allocation5 + $0x28] sm:$0xff]
        %v2105 = vld [vmem:[#allocation5 + $0x30] sm:$0xff]
        %v2106 = vld [vmem:[#allocation5 + $0x38] sm:$0xff]
        %v2107 = vld [vmem:[#allocation5 + $0x40] sm:$0xff]
        %v2108 = vld [vmem:[#allocation5 + $0x48] sm:$0xff]
        %v2109 = vld [vmem:[#allocation5 + $0x50] sm:$0xff]
        %v2110 = vld [vmem:[#allocation5 + $0x58] sm:$0xff]
        %v2111 = vld [vmem:[#allocation5 + $0x60] sm:$0xff]
        %v2112 = vld [vmem:[#allocation5 + $0x68] sm:$0xff]
        %v2113 = vld [vmem:[#allocation5 + $0x70] sm:$0xff]
        %v2114 = vld [vmem:[#allocation5 + $0x78] sm:$0xff]
        %v2115 = vld [vmem:[#allocation5 + $0x80] sm:$0xff]
        %v2116 = vld [vmem:[#allocation5 + $0x88] sm:$0xff]
        %v2117 = vld [vmem:[#allocation5 + $0x90] sm:$0xff]
        %v2118 = vld [vmem:[#allocation5 + $0x98] sm:$0xff]
        %v2119 = vld [vmem:[#allocation5 + $0xa0] sm:$0xff]
        %v2120 = vld [vmem:[#allocation5 + $0xa8] sm:$0xff]
        %v2121 = vld [vmem:[#allocation5 + $0xb0] sm:$0xff]
        %v2122 = vld [vmem:[#allocation5 + $0xb8] sm:$0xff]
        %v2123 = vld [vmem:[#allocation5 + $0xc0] sm:$0xff]
        %v2124 = vld [vmem:[#allocation5 + $0xc8] sm:$0xff]
        %v2125 = vld [vmem:[#allocation5 + $0xd0] sm:$0xff]
        %v2126 = vld [vmem:[#allocation5 + $0xd8] sm:$0xff]
        %v2127 = vld [vmem:[#allocation5 + $0xe0] sm:$0xff]
        %v2128 = vld [vmem:[#allocation5 + $0xe8] sm:$0xff]
        %v2129 = vld [vmem:[#allocation5 + $0xf0] sm:$0xff]
        %v2130 = vld [vmem:[#allocation5 + $0xf8] sm:$0xff]
        %2131 = vst [vmem:[#allocation1] ss:$2 sm:$0xff] %v699
        %v2132 = vld.sshfl [vmem:[#allocation1] sm:$0xff pattern:$0x75316420]
        %v2133 = vld.sshfl [vmem:[#allocation1 + $0x8] sm:$0xff pattern:$0x75316420]
        %2136 = vmatpush.msra.mxu0 %v2129
        %2137 = vmatpush.msra.mxu0 %v2127
        %2138 = vmatpush.msra.mxu0 %v2125
        %2139 = vmatpush.msra.mxu0 %v2123
        %2140 = vmatpush.msra.mxu0 %v2121
        %2141 = vmatpush.msra.mxu0 %v2119
        %2142 = vmatpush.msra.mxu0 %v2117
        %2143 = vmatpush.msra.mxu0 %v2115
        %2144 = vmatpush.msra.mxu0 %v2113
        %2145 = vmatpush.msra.mxu0 %v2111
        %2146 = vmatpush.msra.mxu0 %v2109
        %2147 = vmatpush.msra.mxu0 %v2107
        %2148 = vmatpush.msra.mxu0 %v2105
        %2149 = vmatpush.msra.mxu0 %v2103
        %2150 = vmatpush.msra.mxu0 %v2101
        %2151 = vmatpush.msra.mxu0 %v2099
        %2152 = vmatmul.f32.gmra.mxu0 %v2098
        %v2153 = vpop.f32.mrf.mxu0
        %v2154 = vadd.f32 %v2132, %v2153
        %2155 = vdwg.mxu0
        %2156 = vmatpush.msra.mxu0 %v2130
        %2157 = vmatpush.msra.mxu0 %v2128
        %2158 = vmatpush.msra.mxu0 %v2126
        %2159 = vmatpush.msra.mxu0 %v2124
        %2160 = vmatpush.msra.mxu0 %v2122
        %2161 = vmatpush.msra.mxu0 %v2120
        %2162 = vmatpush.msra.mxu0 %v2118
        %2163 = vmatpush.msra.mxu0 %v2116
        %2164 = vmatpush.msra.mxu0 %v2114
        %2165 = vmatpush.msra.mxu0 %v2112
        %2166 = vmatpush.msra.mxu0 %v2110
        %2167 = vmatpush.msra.mxu0 %v2108
        %2168 = vmatpush.msra.mxu0 %v2106
        %2169 = vmatpush.msra.mxu0 %v2104
        %2170 = vmatpush.msra.mxu0 %v2102
        %2171 = vmatpush.msra.mxu0 %v2100
        %2172 = vmatmul.f32.gmra.mxu0 %v2098
        %v2173 = vpop.f32.mrf.mxu0
        %v2174 = vadd.f32 %v2133, %v2173
        %2175 = vdwg.mxu0
        %v2176 = vxor.u32 %v2154, 2147483648
        %v2177 = vmul.f32 %v2176, 1.442695
        %v2178 = vpow.pop %v2177
        %v2179 = vadd.f32 %v2178, 1.0
        %v2180 = vrcp.pop %v2179
        %v2181 = vmul.f32 %v2179, %v2180
        %v2182 = vsub.f32 1.0, %v2181
        %v2183 = vmul.f32 %v2180, %v2182
        %v2184 = vadd.f32 %v2180, %v2183
        %vm2185 = vweird.f32 %v2179
        %vm2186 = vweird.f32 %v2180
        %vm2187 = vmor %vm2185, %vm2186
        %v2188 = vsel %vm2187, %v2180, %v2184
        %v2189 = vand.u32 2147483647, %v2179
        %vm2190 = vcmp.eq.f32.partialorder %v2189, 8.507059e+37
        %v2191 = vand.u32 %v2179, 2147483648
        %v2192 = vor.u32 1.1754944e-38, %v2191
        %v2193 = vsel %vm2190, %v2192, %v2188
        %v2194 = vmul.f32 1.0, %v2193
        %v2195 = vtanh.pop %v2174
        %v2196 = vxor.u32 %v2174, 2147483648
        %v2197 = vmul.f32 %v2196, 1.442695
        %v2198 = vpow.pop %v2197
        %v2199 = vadd.f32 %v2198, 1.0
        %v2200 = vrcp.pop %v2199
        %v2201 = vmul.f32 %v2199, %v2200
        %v2202 = vsub.f32 1.0, %v2201
        %v2203 = vmul.f32 %v2200, %v2202
        %v2204 = vadd.f32 %v2200, %v2203
        %vm2205 = vweird.f32 %v2199
        %vm2206 = vweird.f32 %v2200
        %vm2207 = vmor %vm2205, %vm2206
        %v2208 = vsel %vm2207, %v2200, %v2204
        %v2209 = vand.u32 2147483647, %v2199
        %vm2210 = vcmp.eq.f32.partialorder %v2209, 8.507059e+37
        %v2211 = vand.u32 %v2199, 2147483648
        %v2212 = vor.u32 1.1754944e-38, %v2211
        %v2213 = vsel %vm2210, %v2212, %v2208
        %v2214 = vmul.f32 1.0, %v2213
        %v2215 = vmul.f32 %v2194, %v1709
        %v2216 = vmul.f32 %v2194, %v2195
        %2218 = vrot.lane.b32.xlu0 %v2216, 64
        %v2219 = vpop.permute.xlu0 %2218
        %v2221 = vadd.f32 %v2215, %v2219
        %v2222 = vtanh.pop %v2221
        %v2223 = vmul.f32 %v2214, %v2222
        %v2224 = vld [vmem:[%s14] sm:$0xff]
        %v2225 = vld [vmem:[%s14 + $0x8] sm:$0xff]
        %v2226 = vld [vmem:[%s14 + $0x10] sm:$0xff]
        %v2227 = vld [vmem:[%s14 + $0x18] sm:$0xff]
        %v2228 = vld [vmem:[%s14 + $0x20] sm:$0xff]
        %v2229 = vld [vmem:[%s14 + $0x28] sm:$0xff]
        %v2230 = vld [vmem:[%s14 + $0x30] sm:$0xff]
        %v2231 = vld [vmem:[%s14 + $0x38] sm:$0xff]
        %v2232 = vld [vmem:[%s15] sm:$0x1]
        %v2234 = vperm.slane %v2232, 0
        %2237 = vrot.lane.b32.xlu0 %v2223, 64
        %v2238 = vpop.permute.xlu0 %2237
        %v2239 = vsel %vm716, %v2238, 0
        %2241 = vmatpush.msra.mxu0 0.0
        %2242 = vmatpush.msra.mxu0 0.0
        %2243 = vmatpush.msra.mxu0 0.0
        %2244 = vmatpush.msra.mxu0 0.0
        %2245 = vmatpush.msra.mxu0 0.0
        %2246 = vmatpush.msra.mxu0 0.0
        %2247 = vmatpush.msra.mxu0 0.0
        %2248 = vmatpush.msra.mxu0 0.0
        %2249 = vmatpush.msra.mxu0 %v2231
        %2250 = vmatpush.msra.mxu0 %v2230
        %2251 = vmatpush.msra.mxu0 %v2229
        %2252 = vmatpush.msra.mxu0 %v2228
        %2253 = vmatpush.msra.mxu0 %v2227
        %2254 = vmatpush.msra.mxu0 %v2226
        %2255 = vmatpush.msra.mxu0 %v2225
        %2256 = vmatpush.msra.mxu0 %v2224
        %2257 = vmatmul.f32.gmra.mxu0 %v2239
        %v2258 = vpop.f32.mrf.mxu0
        %v2259 = vadd.f32 %v2234, %v2258
        %2260 = vdwg.mxu0
        %v2261 = vstv %s1759
        %vm2262 = vcmp.gt.s32.totalorder %v700, %v2261
        %v2263 = vsel %vm2262, 1, 0
        %2264 = vset.pattern.permute.xlu0 0
        %2265 = vperm.xlu0 %2264, %v2263
        %v2266 = vpop.permute.xlu0 %2265
        %vm2267 = vcmp.eq.s32.totalorder %v2266, 1
        %v2268 = vsel %vm2267, %v2259, 0.0
        %s2269 = scalar_lea.vmem %s642, 8 [#allocation8]
        %2270 = vst [vmem:[%s2269] sm:$0xf] %v2268
        %s2271 = sadd.s32 %s703, 3
        %v2272 = vld [vmem:[%s7] sm:$0xff]
        %v2273 = vld [vmem:[%s7 + $0x8] sm:$0xff]
        %v2274 = vld [vmem:[%s7 + $0x10] sm:$0xff]
        %v2275 = vld [vmem:[%s7 + $0x18] sm:$0xff]
        %v2276 = vld [vmem:[%s7 + $0x20] sm:$0xff]
        %v2277 = vld [vmem:[%s7 + $0x28] sm:$0xff]
        %v2278 = vld [vmem:[%s7 + $0x30] sm:$0xff]
        %v2279 = vld [vmem:[%s7 + $0x38] sm:$0xff]
        %v2280 = vld [vmem:[%s8] sm:$0x1]
        %v2282 = vperm.slane %v2280, 0
        %2284 = vmatpush.msra.mxu0 0.0
        %2285 = vmatpush.msra.mxu0 0.0
        %2286 = vmatpush.msra.mxu0 0.0
        %2287 = vmatpush.msra.mxu0 0.0
        %2288 = vmatpush.msra.mxu0 0.0
        %2289 = vmatpush.msra.mxu0 0.0
        %2290 = vmatpush.msra.mxu0 0.0
        %2291 = vmatpush.msra.mxu0 0.0
        %2292 = vmatpush.msra.mxu0 %v2279
        %2293 = vmatpush.msra.mxu0 %v2278
        %2294 = vmatpush.msra.mxu0 %v2277
        %2295 = vmatpush.msra.mxu0 %v2276
        %2296 = vmatpush.msra.mxu0 %v2275
        %2297 = vmatpush.msra.mxu0 %v2274
        %2298 = vmatpush.msra.mxu0 %v2273
        %2299 = vmatpush.msra.mxu0 %v2272
        %2300 = vmatmul.f32.gmra.mxu0 %v2239
        %v2301 = vpop.f32.mrf.mxu0
        %v2302 = vadd.f32 %v2282, %v2301
        %2303 = vdwg.mxu0
        %v2305 = vrot.slane %v2302, 1
        %v2306 = vrot.slane %v2302, 2
        %v2307 = vrot.slane %v2302, 3
        %v2308 = vperm.slane %v2302, 0
        %v2309 = vperm.slane %v2305, 0
        %v2310 = vperm.slane %v2306, 0
        %v2311 = vperm.slane %v2307, 0
        %v2316 = vadd.f32 %v695, %v2308
        %v2317 = vadd.f32 %v696, %v2309
        %v2318 = vadd.f32 %v697, %v2310
        %v2319 = vadd.f32 %v698, %v2311
        %v2320 = vmax.f32 %v2316, 0.0
        %v2321 = vmax.f32 %v2317, 0.0
        %v2322 = vmax.f32 %v2318, 0.0
        %v2323 = vmax.f32 %v2319, 0.0
        %v2324 = vld [vmem:[%s9] sm:$0x1]
        %v2326 = vperm.slane %v2324, 0
        %v2328 = vmul.f32 %v2320, %v2326
        %v2329 = vmul.f32 %v2321, %v2326
        %v2330 = vmul.f32 %v2322, %v2326
        %v2331 = vmul.f32 %v2323, %v2326
        %v2332 = vsel %vm768, %v2328, 0.0
        %2333 = vadd.xlane.f32.xlu0 %v2332
        %v2334 = vpop.xlane.xlu0 %2333
        %v2335 = vsel %vm768, %v2329, 0.0
        %2336 = vadd.xlane.f32.xlu0 %v2335
        %v2337 = vpop.xlane.xlu0 %2336
        %v2338 = vsel %vm768, %v2330, 0.0
        %2339 = vadd.xlane.f32.xlu0 %v2338
        %v2340 = vpop.xlane.xlu0 %2339
        %v2341 = vsel %vm768, %v2331, 0.0
        %2342 = vadd.xlane.f32.xlu0 %v2341
        %v2343 = vpop.xlane.xlu0 %2342
        %v2344 = vld [vmem:[#allocation4] sm:$0x1]
        %v2346 = vperm.slane %v2344, 0
        %2347 = vset.pattern.permute.xlu0 0
        %2348 = vperm.xlu0 %2347, %v2346
        %v2349 = vpop.permute.xlu0 %2348
        %v2351 = vadd.f32 %v2334, %v2349
        %v2352 = vadd.f32 %v2337, %v2349
        %v2353 = vadd.f32 %v2340, %v2349
        %v2354 = vadd.f32 %v2343, %v2349
        %v2359 = vperm.slane %v2351, %v797
        %v2360 = vperm.slane %v2352, %v797
        %v2361 = vperm.slane %v2353, %v797
        %v2362 = vperm.slane %v2354, %v797
        %v2363 = vsel %vm802, %v2360, %v2359
        %v2364 = vsel %vm804, %v2361, %v2363
        %v2365 = vsel %vm806, %v2362, %v2364
        %v2367 = vsel %vm809, %v2365, -inf
        %2368 = vmax.xlane.f32.xlu0 %v2367
        %v2369 = vpop.xlane.xlu0 %2368
        %v2371 = vperm.slane %v2369, 0
        %v2372 = vperm.slane %v2369, 1
        %v2373 = vperm.slane %v2369, 2
        %v2374 = vperm.slane %v2369, 3
        %v2379 = vsub.f32 %v2351, %v2371
        %v2380 = vsub.f32 %v2352, %v2372
        %v2381 = vsub.f32 %v2353, %v2373
        %v2382 = vsub.f32 %v2354, %v2374
        %v2383 = vmul.f32 %v2379, 1.442695
        %v2384 = vpow.pop %v2383
        %v2385 = vmul.f32 %v2380, 1.442695
        %v2386 = vpow.pop %v2385
        %v2387 = vmul.f32 %v2381, 1.442695
        %v2388 = vpow.pop %v2387
        %v2389 = vmul.f32 %v2382, 1.442695
        %v2390 = vpow.pop %v2389
        %2395 = vset.pattern.permute.xlu0 0
        %2396 = vperm.xlu0 %2395, %v2384
        %v2397 = vpop.permute.xlu0 %2396
        %2398 = vset.pattern.permute.xlu0 0
        %2399 = vperm.xlu0 %2398, %v2386
        %v2400 = vpop.permute.xlu0 %2399
        %2401 = vset.pattern.permute.xlu0 0
        %2402 = vperm.xlu0 %2401, %v2388
        %v2403 = vpop.permute.xlu0 %2402
        %2404 = vset.pattern.permute.xlu0 0
        %2405 = vperm.xlu0 %2404, %v2390
        %v2406 = vpop.permute.xlu0 %2405
        %v2407 = vperm.slane %v2397, %v797
        %v2408 = vperm.slane %v2400, %v797
        %v2409 = vperm.slane %v2403, %v797
        %v2410 = vperm.slane %v2406, %v797
        %v2411 = vsel %vm802, %v2408, %v2407
        %v2412 = vsel %vm804, %v2409, %v2411
        %v2413 = vsel %vm806, %v2410, %v2412
        %v2415 = vsel %vm809, %v2413, 0.0
        %2416 = vadd.xlane.f32.xlu0 %v2415
        %v2417 = vpop.xlane.xlu0 %2416
        %v2418 = vrcp.pop %v2417
        %v2420 = vperm.slane %v2418, 0
        %v2421 = vperm.slane %v2418, 1
        %v2422 = vperm.slane %v2418, 2
        %v2423 = vperm.slane %v2418, 3
        %v2428 = vmul.f32 %v2384, %v2420
        %v2429 = vmul.f32 %v2386, %v2421
        %v2430 = vmul.f32 %v2388, %v2422
        %v2431 = vmul.f32 %v2390, %v2423
        %2433 = vset.pattern.permute.xlu0 0
        %2434 = vperm.xlu0 %2433, %v2428
        %v2435 = vpop.permute.xlu0 %2434
        %v2436 = vperm.slane %v2435, %v797
        %v2437 = vsel %vm880, %v2436, 0
        %2439 = vmatpush.msra.mxu0 0.0
        %2440 = vmatpush.msra.mxu0 0.0
        %2441 = vmatpush.msra.mxu0 0.0
        %2442 = vmatpush.msra.mxu0 0.0
        %2443 = vmatpush.msra.mxu0 0.0
        %2444 = vmatpush.msra.mxu0 0.0
        %2445 = vmatpush.msra.mxu0 0.0
        %2446 = vmatpush.msra.mxu0 0.0
        %2447 = vmatpush.msra.mxu0 0.0
        %2448 = vmatpush.msra.mxu0 0.0
        %2449 = vmatpush.msra.mxu0 0.0
        %2450 = vmatpush.msra.mxu0 0.0
        %2451 = vmatpush.msra.mxu0 0.0
        %2452 = vmatpush.msra.mxu0 0.0
        %2453 = vmatpush.msra.mxu0 0.0
        %2454 = vmatpush.msra.mxu0 %v885
        %2455 = vmatmul.f32.gmra.mxu0 %v2437
        %v2456 = vpop.f32.mrf.mxu0
        %v2457 = vadd.f32 0.0, %v2456
        %2458 = vdwg.mxu0
        %2460 = vset.pattern.permute.xlu0 0
        %2461 = vperm.xlu0 %2460, %v2429
        %v2462 = vpop.permute.xlu0 %2461
        %v2463 = vperm.slane %v2462, %v797
        %v2464 = vsel %vm880, %v2463, 0
        %2466 = vmatpush.msra.mxu0 0.0
        %2467 = vmatpush.msra.mxu0 0.0
        %2468 = vmatpush.msra.mxu0 0.0
        %2469 = vmatpush.msra.mxu0 0.0
        %2470 = vmatpush.msra.mxu0 0.0
        %2471 = vmatpush.msra.mxu0 0.0
        %2472 = vmatpush.msra.mxu0 0.0
        %2473 = vmatpush.msra.mxu0 0.0
        %2474 = vmatpush.msra.mxu0 0.0
        %2475 = vmatpush.msra.mxu0 0.0
        %2476 = vmatpush.msra.mxu0 0.0
        %2477 = vmatpush.msra.mxu0 0.0
        %2478 = vmatpush.msra.mxu0 0.0
        %2479 = vmatpush.msra.mxu0 0.0
        %2480 = vmatpush.msra.mxu0 0.0
        %2481 = vmatpush.msra.mxu0 %v915
        %2482 = vmatmul.f32.gmra.mxu0 %v2464
        %v2483 = vpop.f32.mrf.mxu0
        %v2484 = vadd.f32 0.0, %v2483
        %2485 = vdwg.mxu0
        %2487 = vset.pattern.permute.xlu0 0
        %2488 = vperm.xlu0 %2487, %v2430
        %v2489 = vpop.permute.xlu0 %2488
        %v2490 = vperm.slane %v2489, %v797
        %v2491 = vsel %vm880, %v2490, 0
        %2493 = vmatpush.msra.mxu0 0.0
        %2494 = vmatpush.msra.mxu0 0.0
        %2495 = vmatpush.msra.mxu0 0.0
        %2496 = vmatpush.msra.mxu0 0.0
        %2497 = vmatpush.msra.mxu0 0.0
        %2498 = vmatpush.msra.mxu0 0.0
        %2499 = vmatpush.msra.mxu0 0.0
        %2500 = vmatpush.msra.mxu0 0.0
        %2501 = vmatpush.msra.mxu0 0.0
        %2502 = vmatpush.msra.mxu0 0.0
        %2503 = vmatpush.msra.mxu0 0.0
        %2504 = vmatpush.msra.mxu0 0.0
        %2505 = vmatpush.msra.mxu0 0.0
        %2506 = vmatpush.msra.mxu0 0.0
        %2507 = vmatpush.msra.mxu0 0.0
        %2508 = vmatpush.msra.mxu0 %v945
        %2509 = vmatmul.f32.gmra.mxu0 %v2491
        %v2510 = vpop.f32.mrf.mxu0
        %v2511 = vadd.f32 0.0, %v2510
        %2512 = vdwg.mxu0
        %2514 = vset.pattern.permute.xlu0 0
        %2515 = vperm.xlu0 %2514, %v2431
        %v2516 = vpop.permute.xlu0 %2515
        %v2517 = vperm.slane %v2516, %v797
        %v2518 = vsel %vm880, %v2517, 0
        %2520 = vmatpush.msra.mxu0 0.0
        %2521 = vmatpush.msra.mxu0 0.0
        %2522 = vmatpush.msra.mxu0 0.0
        %2523 = vmatpush.msra.mxu0 0.0
        %2524 = vmatpush.msra.mxu0 0.0
        %2525 = vmatpush.msra.mxu0 0.0
        %2526 = vmatpush.msra.mxu0 0.0
        %2527 = vmatpush.msra.mxu0 0.0
        %2528 = vmatpush.msra.mxu0 0.0
        %2529 = vmatpush.msra.mxu0 0.0
        %2530 = vmatpush.msra.mxu0 0.0
        %2531 = vmatpush.msra.mxu0 0.0
        %2532 = vmatpush.msra.mxu0 0.0
        %2533 = vmatpush.msra.mxu0 0.0
        %2534 = vmatpush.msra.mxu0 0.0
        %2535 = vmatpush.msra.mxu0 %v975
        %2536 = vmatmul.f32.gmra.mxu0 %v2518
        %v2537 = vpop.f32.mrf.mxu0
        %v2538 = vadd.f32 0.0, %v2537
        %2539 = vdwg.mxu0
        %v2540 = vld [vmem:[%s11] sm:$0xff]
        %v2541 = vld [vmem:[%s11 + $0x8] sm:$0xff]
        %v2542 = vld [vmem:[%s11 + $0x10] sm:$0xff]
        %v2543 = vld [vmem:[%s11 + $0x18] sm:$0xff]
        %v2544 = vld [vmem:[%s11 + $0x20] sm:$0xff]
        %v2545 = vld [vmem:[%s11 + $0x28] sm:$0xff]
        %v2546 = vld [vmem:[%s11 + $0x30] sm:$0xff]
        %v2547 = vld [vmem:[%s11 + $0x38] sm:$0xff]
        %v2548 = vld [vmem:[%s12] sm:$0x1]
        %v2550 = vperm.slane %v2548, 0
        %2552 = vmatpush.msra.mxu0 0.0
        %2553 = vmatpush.msra.mxu0 0.0
        %2554 = vmatpush.msra.mxu0 0.0
        %2555 = vmatpush.msra.mxu0 0.0
        %2556 = vmatpush.msra.mxu0 0.0
        %2557 = vmatpush.msra.mxu0 0.0
        %2558 = vmatpush.msra.mxu0 0.0
        %2559 = vmatpush.msra.mxu0 0.0
        %2560 = vmatpush.msra.mxu0 %v2547
        %2561 = vmatpush.msra.mxu0 %v2546
        %2562 = vmatpush.msra.mxu0 %v2545
        %2563 = vmatpush.msra.mxu0 %v2544
        %2564 = vmatpush.msra.mxu0 %v2543
        %2565 = vmatpush.msra.mxu0 %v2542
        %2566 = vmatpush.msra.mxu0 %v2541
        %2567 = vmatpush.msra.mxu0 %v2540
        %2568 = vmatmul.f32.gmra.mxu0 %v2239
        %v2569 = vpop.f32.mrf.mxu0
        %v2570 = vadd.f32 %v2550, %v2569
        %2571 = vdwg.mxu0
        %v2572 = vxor.u32 %v2570, 2147483648
        %v2573 = vmul.f32 %v2572, 1.442695
        %v2574 = vpow.pop %v2573
        %v2575 = vadd.f32 %v2574, 1.0
        %v2576 = vrcp.pop %v2575
        %v2577 = vmul.f32 %v2575, %v2576
        %v2578 = vsub.f32 1.0, %v2577
        %v2579 = vmul.f32 %v2576, %v2578
        %v2580 = vadd.f32 %v2576, %v2579
        %vm2581 = vweird.f32 %v2575
        %vm2582 = vweird.f32 %v2576
        %vm2583 = vmor %vm2581, %vm2582
        %v2584 = vsel %vm2583, %v2576, %v2580
        %v2585 = vand.u32 2147483647, %v2575
        %vm2586 = vcmp.eq.f32.partialorder %v2585, 8.507059e+37
        %v2587 = vand.u32 %v2575, 2147483648
        %v2588 = vor.u32 1.1754944e-38, %v2587
        %v2589 = vsel %vm2586, %v2588, %v2584
        %v2590 = vmul.f32 1.0, %v2589
        %v2595 = vrot.slane %v2484, 7
        %v2596 = vsel %vm802, %v2595, %v2457
        %v2597 = vrot.slane %v2511, 6
        %v2598 = vsel %vm804, %v2597, %v2596
        %v2599 = vrot.slane %v2538, 5
        %v2600 = vsel %vm806, %v2599, %v2598
        %v2602 = vmul.f32 %v2590, %v2600
        %s2603 = scalar_lea.vmem %s679, 12
        %v2604 = vld [vmem:[%s2603] sm:$0xf]
        %2606 = vrot.lane.b32.xlu0 %v2602, 32
        %v2607 = vpop.permute.xlu0 %2606
        %v2609 = vsel %vm1068, %v2604, %v2607
        %v2610 = vsel %vm716, %v2609, %v2223
        %v2611 = vld [vmem:[#allocation5] sm:$0xff]
        %v2612 = vld [vmem:[#allocation5 + $0x8] sm:$0xff]
        %v2613 = vld [vmem:[#allocation5 + $0x10] sm:$0xff]
        %v2614 = vld [vmem:[#allocation5 + $0x18] sm:$0xff]
        %v2615 = vld [vmem:[#allocation5 + $0x20] sm:$0xff]
        %v2616 = vld [vmem:[#allocation5 + $0x28] sm:$0xff]
        %v2617 = vld [vmem:[#allocation5 + $0x30] sm:$0xff]
        %v2618 = vld [vmem:[#allocation5 + $0x38] sm:$0xff]
        %v2619 = vld [vmem:[#allocation5 + $0x40] sm:$0xff]
        %v2620 = vld [vmem:[#allocation5 + $0x48] sm:$0xff]
        %v2621 = vld [vmem:[#allocation5 + $0x50] sm:$0xff]
        %v2622 = vld [vmem:[#allocation5 + $0x58] sm:$0xff]
        %v2623 = vld [vmem:[#allocation5 + $0x60] sm:$0xff]
        %v2624 = vld [vmem:[#allocation5 + $0x68] sm:$0xff]
        %v2625 = vld [vmem:[#allocation5 + $0x70] sm:$0xff]
        %v2626 = vld [vmem:[#allocation5 + $0x78] sm:$0xff]
        %v2627 = vld [vmem:[#allocation5 + $0x80] sm:$0xff]
        %v2628 = vld [vmem:[#allocation5 + $0x88] sm:$0xff]
        %v2629 = vld [vmem:[#allocation5 + $0x90] sm:$0xff]
        %v2630 = vld [vmem:[#allocation5 + $0x98] sm:$0xff]
        %v2631 = vld [vmem:[#allocation5 + $0xa0] sm:$0xff]
        %v2632 = vld [vmem:[#allocation5 + $0xa8] sm:$0xff]
        %v2633 = vld [vmem:[#allocation5 + $0xb0] sm:$0xff]
        %v2634 = vld [vmem:[#allocation5 + $0xb8] sm:$0xff]
        %v2635 = vld [vmem:[#allocation5 + $0xc0] sm:$0xff]
        %v2636 = vld [vmem:[#allocation5 + $0xc8] sm:$0xff]
        %v2637 = vld [vmem:[#allocation5 + $0xd0] sm:$0xff]
        %v2638 = vld [vmem:[#allocation5 + $0xd8] sm:$0xff]
        %v2639 = vld [vmem:[#allocation5 + $0xe0] sm:$0xff]
        %v2640 = vld [vmem:[#allocation5 + $0xe8] sm:$0xff]
        %v2641 = vld [vmem:[#allocation5 + $0xf0] sm:$0xff]
        %v2642 = vld [vmem:[#allocation5 + $0xf8] sm:$0xff]
        %2643 = vst [vmem:[#allocation1] ss:$2 sm:$0xff] %v699
        %v2644 = vld.sshfl [vmem:[#allocation1] sm:$0xff pattern:$0x75316420]
        %v2645 = vld.sshfl [vmem:[#allocation1 + $0x8] sm:$0xff pattern:$0x75316420]
        %2648 = vmatpush.msra.mxu0 %v2641
        %2649 = vmatpush.msra.mxu0 %v2639
        %2650 = vmatpush.msra.mxu0 %v2637
        %2651 = vmatpush.msra.mxu0 %v2635
        %2652 = vmatpush.msra.mxu0 %v2633
        %2653 = vmatpush.msra.mxu0 %v2631
        %2654 = vmatpush.msra.mxu0 %v2629
        %2655 = vmatpush.msra.mxu0 %v2627
        %2656 = vmatpush.msra.mxu0 %v2625
        %2657 = vmatpush.msra.mxu0 %v2623
        %2658 = vmatpush.msra.mxu0 %v2621
        %2659 = vmatpush.msra.mxu0 %v2619
        %2660 = vmatpush.msra.mxu0 %v2617
        %2661 = vmatpush.msra.mxu0 %v2615
        %2662 = vmatpush.msra.mxu0 %v2613
        %2663 = vmatpush.msra.mxu0 %v2611
        %2664 = vmatmul.f32.gmra.mxu0 %v2610
        %v2665 = vpop.f32.mrf.mxu0
        %v2666 = vadd.f32 %v2644, %v2665
        %2667 = vdwg.mxu0
        %2668 = vmatpush.msra.mxu0 %v2642
        %2669 = vmatpush.msra.mxu0 %v2640
        %2670 = vmatpush.msra.mxu0 %v2638
        %2671 = vmatpush.msra.mxu0 %v2636
        %2672 = vmatpush.msra.mxu0 %v2634
        %2673 = vmatpush.msra.mxu0 %v2632
        %2674 = vmatpush.msra.mxu0 %v2630
        %2675 = vmatpush.msra.mxu0 %v2628
        %2676 = vmatpush.msra.mxu0 %v2626
        %2677 = vmatpush.msra.mxu0 %v2624
        %2678 = vmatpush.msra.mxu0 %v2622
        %2679 = vmatpush.msra.mxu0 %v2620
        %2680 = vmatpush.msra.mxu0 %v2618
        %2681 = vmatpush.msra.mxu0 %v2616
        %2682 = vmatpush.msra.mxu0 %v2614
        %2683 = vmatpush.msra.mxu0 %v2612
        %2684 = vmatmul.f32.gmra.mxu0 %v2610
        %v2685 = vpop.f32.mrf.mxu0
        %v2686 = vadd.f32 %v2645, %v2685
        %2687 = vdwg.mxu0
        %v2688 = vxor.u32 %v2666, 2147483648
        %v2689 = vmul.f32 %v2688, 1.442695
        %v2690 = vpow.pop %v2689
        %v2691 = vadd.f32 %v2690, 1.0
        %v2692 = vrcp.pop %v2691
        %v2693 = vmul.f32 %v2691, %v2692
        %v2694 = vsub.f32 1.0, %v2693
        %v2695 = vmul.f32 %v2692, %v2694
        %v2696 = vadd.f32 %v2692, %v2695
        %vm2697 = vweird.f32 %v2691
        %vm2698 = vweird.f32 %v2692
        %vm2699 = vmor %vm2697, %vm2698
        %v2700 = vsel %vm2699, %v2692, %v2696
        %v2701 = vand.u32 2147483647, %v2691
        %vm2702 = vcmp.eq.f32.partialorder %v2701, 8.507059e+37
        %v2703 = vand.u32 %v2691, 2147483648
        %v2704 = vor.u32 1.1754944e-38, %v2703
        %v2705 = vsel %vm2702, %v2704, %v2700
        %v2706 = vmul.f32 1.0, %v2705
        %v2707 = vtanh.pop %v2686
        %v2708 = vxor.u32 %v2686, 2147483648
        %v2709 = vmul.f32 %v2708, 1.442695
        %v2710 = vpow.pop %v2709
        %v2711 = vadd.f32 %v2710, 1.0
        %v2712 = vrcp.pop %v2711
        %v2713 = vmul.f32 %v2711, %v2712
        %v2714 = vsub.f32 1.0, %v2713
        %v2715 = vmul.f32 %v2712, %v2714
        %v2716 = vadd.f32 %v2712, %v2715
        %vm2717 = vweird.f32 %v2711
        %vm2718 = vweird.f32 %v2712
        %vm2719 = vmor %vm2717, %vm2718
        %v2720 = vsel %vm2719, %v2712, %v2716
        %v2721 = vand.u32 2147483647, %v2711
        %vm2722 = vcmp.eq.f32.partialorder %v2721, 8.507059e+37
        %v2723 = vand.u32 %v2711, 2147483648
        %v2724 = vor.u32 1.1754944e-38, %v2723
        %v2725 = vsel %vm2722, %v2724, %v2720
        %v2726 = vmul.f32 1.0, %v2725
        %v2727 = vmul.f32 %v2706, %v2221
        %v2728 = vmul.f32 %v2706, %v2707
        %2730 = vrot.lane.b32.xlu0 %v2728, 64
        %v2731 = vpop.permute.xlu0 %2730
        %v2733 = vadd.f32 %v2727, %v2731
        %v2734 = vtanh.pop %v2733
        %v2735 = vmul.f32 %v2726, %v2734
        %v2736 = vld [vmem:[%s14] sm:$0xff]
        %v2737 = vld [vmem:[%s14 + $0x8] sm:$0xff]
        %v2738 = vld [vmem:[%s14 + $0x10] sm:$0xff]
        %v2739 = vld [vmem:[%s14 + $0x18] sm:$0xff]
        %v2740 = vld [vmem:[%s14 + $0x20] sm:$0xff]
        %v2741 = vld [vmem:[%s14 + $0x28] sm:$0xff]
        %v2742 = vld [vmem:[%s14 + $0x30] sm:$0xff]
        %v2743 = vld [vmem:[%s14 + $0x38] sm:$0xff]
        %v2744 = vld [vmem:[%s15] sm:$0x1]
        %v2746 = vperm.slane %v2744, 0
        %2749 = vrot.lane.b32.xlu0 %v2735, 64
        %v2750 = vpop.permute.xlu0 %2749
        %v2751 = vsel %vm716, %v2750, 0
        %2753 = vmatpush.msra.mxu0 0.0
        %2754 = vmatpush.msra.mxu0 0.0
        %2755 = vmatpush.msra.mxu0 0.0
        %2756 = vmatpush.msra.mxu0 0.0
        %2757 = vmatpush.msra.mxu0 0.0
        %2758 = vmatpush.msra.mxu0 0.0
        %2759 = vmatpush.msra.mxu0 0.0
        %2760 = vmatpush.msra.mxu0 0.0
        %2761 = vmatpush.msra.mxu0 %v2743
        %2762 = vmatpush.msra.mxu0 %v2742
        %2763 = vmatpush.msra.mxu0 %v2741
        %2764 = vmatpush.msra.mxu0 %v2740
        %2765 = vmatpush.msra.mxu0 %v2739
        %2766 = vmatpush.msra.mxu0 %v2738
        %2767 = vmatpush.msra.mxu0 %v2737
        %2768 = vmatpush.msra.mxu0 %v2736
        %2769 = vmatmul.f32.gmra.mxu0 %v2751
        %v2770 = vpop.f32.mrf.mxu0
        %v2771 = vadd.f32 %v2746, %v2770
        %2772 = vdwg.mxu0
        %v2773 = vstv %s2271
        %vm2774 = vcmp.gt.s32.totalorder %v700, %v2773
        %v2775 = vsel %vm2774, 1, 0
        %2776 = vset.pattern.permute.xlu0 0
        %2777 = vperm.xlu0 %2776, %v2775
        %v2778 = vpop.permute.xlu0 %2777
        %vm2779 = vcmp.eq.s32.totalorder %v2778, 1
        %v2780 = vsel %vm2779, %v2771, 0.0
        %s2781 = scalar_lea.vmem %s642, 12 [#allocation8]
        %2782 = vst [vmem:[%s2781] sm:$0xf] %v2780
        %vm2784 = vcmask 519168
        %2785 = vst.msk [vmem:[#allocation2] sm:$0xf] %vm2784, %v2750
        %2787 = vrot.lane.b32.xlu0 %v2733, 64
        %v2788 = vpop.permute.xlu0 %2787
        %2790 = vst.msk [vmem:[#allocation3] sm:$0xf] %vm2784, %v2788
        %s2791 = sand.u32 %s428, 1
        %s2792 = scalar_lea.sflag [#allocation7], %s2791
        %s2793 = sand.u32 %s428, 1
        %s2794 = smul.addr %s2793, 16
        %s2795 = scalar_lea.vmem [#allocation8], %s2794
        // Predicated region
        $region93: #{tpu_custom_call.1} parent=83 // pred_check
          %p2796 = pneg %p438
        $region94: #{tpu_custom_call.1} parent=83 // pred_check_branch
          %2798 = sbr.rel (%p2796) target = $region96
        $region95: #{tpu_custom_call.1} parent=83 // pred_region
          %s2799 = smul.u32 4, %s38
          %2801 = vsyncadd %s2792, 0
          %s2802 = sadd.s32 %s37, %s2799
          %s2803 = smul.addr %s2802, 4
          %s2804 = scalar_lea.hbm %s16, %s2803
          %s2805 = sshll.u32 %s2795, 4
          %s2806 = int_to_ptr.vmem [resolvable:$true] %s2805
          %s2807 = sshll.u32 %s2804, 4
          %s2808 = int_to_ptr.hbm [resolvable:$true] %s2807
          %2813 = dma.vmem_to_hbm [thread:$0]  %s2806, 256, %s2808, %s2792, 64, 64, 4
        $region96: #{tpu_custom_call.1} parent=83 // pred_fallthru
          _
      $region84: #{tpu_custom_call.1} parent=5 // pred_fallthru
        _
      %p2814 = scmp.le.s32.totalorder 2, %s28
      // Predicated region
      $region97: #{tpu_custom_call.1} parent=5 // pred_check
        %p2815 = pneg %p2814
      $region98: #{tpu_custom_call.1} parent=5 // pred_check_branch
        %2817 = sbr.rel (%p2815) target = $region100
      $region99: #{tpu_custom_call.1} parent=5 // pred_region
        %s2818 = ssub.s32 %s28, 2
        // Predicated region
        $region101: #{tpu_custom_call.1} parent=99 // pred_check
          %p2819 = pneg %p444
        $region102: #{tpu_custom_call.1} parent=99 // pred_check_branch
          %2821 = sbr.rel (%p2819) target = $region104
        $region103: #{tpu_custom_call.1} parent=99 // pred_region
          %s2822 = sand.u32 %s429, 1
          %s2823 = scalar_lea.sflag [#allocation7], %s2822
          %s2824 = sand.u32 %s429, 1
          %s2825 = smul.addr %s2824, 16
          %s2826 = scalar_lea.vmem [#allocation8], %s2825
          %2828 = dma.done %s2823, 256
        $region104: #{tpu_custom_call.1} parent=99 // pred_fallthru
          _
      $region100: #{tpu_custom_call.1} parent=5 // pred_fallthru
        _
    $region6: #{tpu_custom_call.1} parent=1 // loop_footer
      %s32 = sadd.s32 1, %s28
    $region7: #{tpu_custom_call.1} parent=1 // loop_footer_branch
      %27 = sbr.rel target = $region3
    $region8: #{tpu_custom_call.1} parent=1 // loop_exit
      _
    %2829 = vsyncpa [#allocation6], 1
    %s2830 = scalar_lea.sflag [#allocation6], 1
    %2831 = vsyncpa %s2830, 1
    %2832 = vsyncpa [#allocation7], 1
    %s2833 = scalar_lea.sflag [#allocation7], 1
    %2834 = vsyncpa %s2833, 1

</llo_original>
